<compile_context>
chip_gen: v7x
topology: tpu7x:2x2x1
jax: 0.10.0
libtpu: 0.0.40
codegen_flags: <defaults>
</compile_context>

<pallas_src>
import numpy as np

import jax
import jax.numpy as jnp
from jax.experimental import pallas as pl
from jax.experimental.pallas import tpu as pltpu


# ---------------------------------------------------------------------------
# Fixed geometry implied by the PyTorch module (CIFAR-like 3x32x32 input).
# ---------------------------------------------------------------------------
C1, H1, W1 = 3, 32, 32
K = 5
OC1, OC2 = 6, 16
H2 = W2 = (H1 - K + 1) // 2          # 14  (pooled conv1 map)
P2 = (H2 - K + 1) // 2               # 5   (pooled conv2 map)
NF = OC2 * P2 * P2                   # 400
F1, F2, F3 = 120, 84, 10
HW1 = H1 * W1                        # 1024
HW2 = H2 * W2                        # 196


# ---------------------------------------------------------------------------
# 0/1 pooling-selection matrices (numpy, built once in prepare_params)
# ---------------------------------------------------------------------------
def _pool_select_single(h_in, w_in, ph, pw):
    """(h_in*w_in, ph*pw): column (i,j) selects source column 2i*w_in + 2j."""
    g = np.zeros((h_in * w_in, ph * pw), np.float32)
    for i in range(ph):
        for j in range(pw):
            g[(2 * i) * w_in + (2 * j), i * pw + j] = 1.0
    return g


def _pool_select_batched(b_sz, h_in, w_in, ph, pw):
    """(B*h_in*w_in, ph*pw*B): batched version; output columns ordered
    pixel-major / batch-minor (q*B + b) so the FC flatten copies (OC2, B)
    blocks per pooled pixel."""
    g = np.zeros((b_sz * h_in * w_in, ph * pw * b_sz), np.float32)
    for b in range(b_sz):
        for i in range(ph):
            for j in range(pw):
                g[b * h_in * w_in + (2 * i) * w_in + (2 * j),
                  (i * pw + j) * b_sz + b] = 1.0
    return g


# ---------------------------------------------------------------------------
# One-time parameter re-layout (review item 8: hoisted out of the forward)
# ---------------------------------------------------------------------------
def prepare_params(p, batch):
    f32, bf16 = jnp.float32, jnp.bfloat16
    # conv weights flattened with column order (kh, kw, c) -> kh-grouped dots
    # can slice contiguous 15/30-column blocks.
    w1m = jnp.transpose(p["conv1_w"], (0, 2, 3, 1)).reshape(OC1, K * K * C1).astype(f32)
    w2m = jnp.transpose(p["conv2_w"], (0, 2, 3, 1)).reshape(OC2, K * K * OC1).astype(f32)
    b1c = p["conv1_b"].reshape(OC1, 1).astype(f32)
    b2c = p["conv2_b"].reshape(OC2, 1).astype(f32)
    # fc1 columns permuted from (c*25 + q) to (q*16 + c) to match the in-kernel
    # pixel-major / channel-minor flatten of the pooled conv2 output.
    f1w = jnp.transpose(p["fc1_w"].reshape(F1, OC2, P2 * P2),
                        (0, 2, 1)).reshape(F1, NF).astype(f32)
    f1b = p["fc1_b"].reshape(F1, 1).astype(f32)
    f2w = p["fc2_w"].astype(f32)
    f2b = p["fc2_b"].reshape(F2, 1).astype(f32)
    f3w = p["fc3_w"].astype(f32)
    f3b = p["fc3_b"].reshape(F3, 1).astype(f32)
    # 0/1 selection matrices: exact in bf16 -> half the HBM bytes (item 1/7).
    g1 = jnp.asarray(_pool_select_single(H1, W1, H2, W2), dtype=bf16)      # (1024, 196)
    g2 = jnp.asarray(_pool_select_batched(batch, H2, W2, P2, P2), dtype=bf16)  # (B*196, 25B)
    return dict(w1m=w1m, b1c=b1c, w2m=w2m, b2c=b2c,
                f1w=f1w, f1b=f1b, f2w=f2w, f2b=f2b, f3w=f3w, f3b=f3b,
                g1=g1, g2=g2)


# ---------------------------------------------------------------------------
# Fused forward pass (single pallas_call)
# ---------------------------------------------------------------------------
def net_forward(pp, x):
    B = x.shape[0]
    N1 = B * HW1                         # flat conv1 pixel columns
    N1E = N1 + 2 * W1                    # conv1 GEMM width (>= N1 + W1 + 1)
    NP1 = N1E + (K - 1) * W1 + (K - 1)   # padded conv1 input width
    N2 = B * HW2                         # flat conv2 pixel columns
    N2E = N2 + 2 * W2                    # conv2 GEMM width
    NP2 = N2E + (K - 1) * W2 + (K - 1)   # conv2 input scratch width

    assert pp["g2"].shape[0] == N2, "prepare_params batch must match x"

    # per-call input prep only: (B,3,32,32) -> (3, B*1024), zero tail pad.
    xt = jnp.transpose(x, (1, 0, 2, 3)).reshape(C1, N1).astype(jnp.float32)
    xin = jnp.pad(xt, ((0, 0), (0, NP1 - N1)))

    def kernel(x_ref, w1_ref, b1_ref, w2_ref, b2_ref,
               f1b_ref, f2w_ref, f2b_ref, f3w_ref, f3b_ref,
               g1_hbm, g2_hbm, f1w_hbm,
               o_ref,
               x2_ref, xf_ref, g1_vmem, g2_vmem, f1w_vmem, sem):
        f32 = jnp.float32

        # -- (4) start the late-use DMAs now; they hide behind conv1 compute --
        cp_g1 = pltpu.make_async_copy(g1_hbm, g1_vmem, sem.at[0])
        cp_g2 = pltpu.make_async_copy(g2_hbm, g2_vmem, sem.at[1])
        cp_f1 = pltpu.make_async_copy(f1w_hbm, f1w_vmem, sem.at[2])
        cp_g1.start()
        cp_g2.start()
        cp_f1.start()

        # -- conv1: 5 kh-grouped dots of K = 5*C1 = 15 (item 3) --
        x_all = x_ref[...]                                   # (3, NP1)
        acc1 = None
        for kh in range(K):
            base = kh * W1
            slab = jnp.concatenate(
                [x_all[:, base + kw: base + kw + N1E] for kw in range(K)],
                axis=0)                                      # (15, N1E)
            part = jnp.dot(w1_ref[:, kh * K * C1:(kh + 1) * K * C1], slab,
                           preferred_element_type=f32)
            acc1 = part if acc1 is None else acc1 + part     # no zero-init (6)
        a1 = jnp.maximum(acc1 + b1_ref[...], 0.0)            # (6, N1E)

        # fused ReLU + MaxPool(2,2): 4-way shifted max
        m1 = jnp.maximum(
            jnp.maximum(a1[:, 0:N1], a1[:, 1:N1 + 1]),
            jnp.maximum(a1[:, W1:W1 + N1], a1[:, W1 + 1:W1 + 1 + N1]))

        # -- (2) batched pooling compaction: ONE matmul against g1 --
        cp_g1.wait()
        g1f = g1_vmem[...].astype(f32)                       # exact 0/1
        lhs = jnp.concatenate(
            [m1[:, b * HW1:(b + 1) * HW1] for b in range(B)], axis=0)  # (B*6, 1024)
        pooled1 = jnp.dot(lhs, g1f, preferred_element_type=f32)        # (B*6, 196)
        for b in range(B):
            x2_ref[:, b * HW2:(b + 1) * HW2] = pooled1[b * OC1:(b + 1) * OC1, :]
        # (6) zero only the pad tail actually read by conv2's shifted windows;
        # those reads feed garbage output columns g2 never selects, but they
        # must stay finite.
        x2_ref[:, N2:NP2] = jnp.zeros((OC1, NP2 - N2), f32)

        # -- conv2: 5 kh-grouped dots of K = 5*OC1 = 30 --
        x2_all = x2_ref[...]                                 # (6, NP2)
        acc2 = None
        for kh in range(K):
            base = kh * W2
            slab = jnp.concatenate(
                [x2_all[:, base + kw: base + kw + N2E] for kw in range(K)],
                axis=0)                                      # (30, N2E)
            part = jnp.dot(w2_ref[:, kh * K * OC1:(kh + 1) * K * OC1], slab,
                           preferred_element_type=f32)
            acc2 = part if acc2 is None else acc2 + part
        a2 = jnp.maximum(acc2 + b2_ref[...], 0.0)            # (16, N2E)

        m2 = jnp.maximum(
            jnp.maximum(a2[:, 0:N2], a2[:, 1:N2 + 1]),
            jnp.maximum(a2[:, W2:W2 + N2], a2[:, W2 + 1:W2 + 1 + N2]))

        cp_g2.wait()
        pooled2 = jnp.dot(m2, g2_vmem[...].astype(f32),
                          preferred_element_type=f32)        # (16, 25*B)

        # flatten to (400, B): pixel-major / channel-minor (matches f1w perm).
        # TODO(synk): a single-relayout alternative needs a sublane-collapsing
        # reshape Mosaic handles poorly; 25 small (16,B) copies stay.
        for q in range(P2 * P2):
            xf_ref[q * OC2:(q + 1) * OC2, :] = pooled2[:, q * B:(q + 1) * B]

        # -- fused FC stack (features on sublanes, batch on lanes) --
        cp_f1.wait()
        h = jnp.maximum(jnp.dot(f1w_vmem[...], xf_ref[...],
                                preferred_element_type=f32) + f1b_ref[...], 0.0)
        h = jnp.maximum(jnp.dot(f2w_ref[...], h,
                                preferred_element_type=f32) + f2b_ref[...], 0.0)
        o_ref[...] = jnp.dot(f3w_ref[...], h,
                             preferred_element_type=f32) + f3b_ref[...]

    vmem_ops = (xin, pp["w1m"], pp["b1c"], pp["w2m"], pp["b2c"],
                pp["f1b"], pp["f2w"], pp["f2b"], pp["f3w"], pp["f3b"])
    any_ops = (pp["g1"], pp["g2"], pp["f1w"])

    out = pl.pallas_call(
        kernel,
        out_shape=jax.ShapeDtypeStruct((F3, B), jnp.float32),
        grid=(1,),
        in_specs=([pl.BlockSpec(op.shape, lambda i: (0, 0)) for op in vmem_ops]
                  + [pl.BlockSpec(memory_space=pl.ANY) for _ in any_ops]),
        out_specs=pl.BlockSpec((F3, B), lambda i: (0, 0)),
        scratch_shapes=[
            pltpu.VMEM((OC1, NP2), jnp.float32),      # conv2 input (pooled conv1)
            pltpu.VMEM((NF, B), jnp.float32),         # fc input (400, B)
            pltpu.VMEM(pp["g1"].shape, jnp.bfloat16),  # g1 landing buffer
            pltpu.VMEM(pp["g2"].shape, jnp.bfloat16),  # g2 landing buffer
            pltpu.VMEM(pp["f1w"].shape, jnp.float32),  # fc1 weight landing buffer
            pltpu.SemaphoreType.DMA((3,)),
        ],
        compiler_params=pltpu.CompilerParams(
            dimension_semantics=("arbitrary",)),
    )(*vmem_ops, *any_ops)
    return out.T                                             # (B, 10)


# ---------------------------------------------------------------------------
# Parameters (deterministic, PyTorch-default-style uniform init)
# ---------------------------------------------------------------------------
def init_params(key):
    def uni(k, shape, fan_in):
        bound = 1.0 / jnp.sqrt(jnp.float32(fan_in))
        return jax.random.uniform(k, shape, jnp.float32, -bound, bound)

    ks = jax.random.split(key, 10)
    return {
        "conv1_w": uni(ks[0], (6, 3, 5, 5), 3 * 5 * 5),
        "conv1_b": uni(ks[1], (6,), 3 * 5 * 5),
        "conv2_w": uni(ks[2], (16, 6, 5, 5), 6 * 5 * 5),
        "conv2_b": uni(ks[3], (16,), 6 * 5 * 5),
        "fc1_w": uni(ks[4], (120, 16 * 5 * 5), 16 * 5 * 5),
        "fc1_b": uni(ks[5], (120,), 16 * 5 * 5),
        "fc2_w": uni(ks[6], (84, 120), 120),
        "fc2_b": uni(ks[7], (84,), 120),
        "fc3_w": uni(ks[8], (10, 84), 84),
        "fc3_b": uni(ks[9], (10,), 84),
    }


# ---------------------------------------------------------------------------
# Pure-JAX reference (f32, highest precision) for correctness checking
# ---------------------------------------------------------------------------
def net_forward_ref(p, x):
    hp = jax.lax.Precision.HIGHEST

    def conv_ref(x, w, b):
        out = jax.lax.conv_general_dilated(
            x, w, window_strides=(1, 1), padding="VALID",
            dimension_numbers=("NCHW", "OIHW", "NCHW"), precision=hp)
        return jax.nn.relu(out + b[None, :, None, None])

    def pool_ref(x):
        B, C, H, W = x.shape
        return x.reshape(B, C, H // 2, 2, W // 2, 2).max(axis=(3, 5))

    x = pool_ref(conv_ref(x, p["conv1_w"], p["conv1_b"]))
    x = pool_ref(conv_ref(x, p["conv2_w"], p["conv2_b"]))
    x = x.reshape(-1, 16 * 5 * 5)
    x = jax.nn.relu(jnp.dot(x, p["fc1_w"].T, precision=hp) + p["fc1_b"])
    x = jax.nn.relu(jnp.dot(x, p["fc2_w"].T, precision=hp) + p["fc2_b"])
    return jnp.dot(x, p["fc3_w"].T, precision=hp) + p["fc3_b"]


if __name__ == "__main__":
    key = jax.random.PRNGKey(0)
    pkey, xkey = jax.random.split(key)
    params = init_params(pkey)
    # Input implied by fc1 = Linear(16*5*5, ...): (B=2, C=3, H=32, W=32), NCHW.
    x = jax.random.normal(xkey, (2, 3, 32, 32), jnp.float32)

    prepped = prepare_params(params, batch=x.shape[0])   # one-time prep (item 8)
    fwd = jax.jit(net_forward)

    out = jax.block_until_ready(fwd(prepped, x))
    assert out.shape == (2, 10), out.shape

    ref = jax.block_until_ready(net_forward_ref(params, x))
    max_err = float(jnp.max(jnp.abs(out - ref)))
    assert jnp.allclose(out, ref, atol=5e-4, rtol=5e-4), max_err

    print("KERNEL_OK")
</pallas_src>

<mosaic_0001>
module attributes {stable_mosaic.version = 11 : i64} {
  func.func @kernel(%arg0: i32, %arg1: memref<3x2244xf32, #tpu.memory_space<vmem>>, %arg2: memref<6x75xf32, #tpu.memory_space<vmem>>, %arg3: memref<6x1xf32, #tpu.memory_space<vmem>>, %arg4: memref<16x150xf32, #tpu.memory_space<vmem>>, %arg5: memref<16x1xf32, #tpu.memory_space<vmem>>, %arg6: memref<120x1xf32, #tpu.memory_space<vmem>>, %arg7: memref<84x120xf32, #tpu.memory_space<vmem>>, %arg8: memref<84x1xf32, #tpu.memory_space<vmem>>, %arg9: memref<10x84xf32, #tpu.memory_space<vmem>>, %arg10: memref<10x1xf32, #tpu.memory_space<vmem>>, %arg11: memref<1024x196xbf16, #tpu.memory_space<any>>, %arg12: memref<392x50xbf16, #tpu.memory_space<any>>, %arg13: memref<120x400xf32, #tpu.memory_space<any>>, %arg14: memref<10x2xf32, #tpu.memory_space<vmem>>, %arg15: memref<6x480xf32, #tpu.memory_space<vmem>>, %arg16: memref<400x2xf32, #tpu.memory_space<vmem>>, %arg17: memref<1024x196xbf16, #tpu.memory_space<vmem>>, %arg18: memref<392x50xbf16, #tpu.memory_space<vmem>>, %arg19: memref<120x400xf32, #tpu.memory_space<vmem>>, %arg20: memref<3x!tpu.dma_semaphore, #tpu.memory_space<semaphore_mem>>) attributes {dimension_semantics = [#tpu.dimension_semantics<arbitrary>], iteration_bounds = array<i64: 1>, scalar_prefetch = 0 : i64, scratch_operands = 6 : i64, tpu.core_type = #tpu.core_type<tc>, window_params = [{pipeline_mode = #tpu.pipeline_mode<synchronous>, transform_indices = @transform_0, window_bounds = array<i64: 3, 2244>}, {pipeline_mode = #tpu.pipeline_mode<synchronous>, transform_indices = @transform_1, window_bounds = array<i64: 6, 75>}, {pipeline_mode = #tpu.pipeline_mode<synchronous>, transform_indices = @transform_2, window_bounds = array<i64: 6, 1>}, {pipeline_mode = #tpu.pipeline_mode<synchronous>, transform_indices = @transform_3, window_bounds = array<i64: 16, 150>}, {pipeline_mode = #tpu.pipeline_mode<synchronous>, transform_indices = @transform_4, window_bounds = array<i64: 16, 1>}, {pipeline_mode = #tpu.pipeline_mode<synchronous>, transform_indices = @transform_5, window_bounds = array<i64: 120, 1>}, {pipeline_mode = #tpu.pipeline_mode<synchronous>, transform_indices = @transform_6, window_bounds = array<i64: 84, 120>}, {pipeline_mode = #tpu.pipeline_mode<synchronous>, transform_indices = @transform_7, window_bounds = array<i64: 84, 1>}, {pipeline_mode = #tpu.pipeline_mode<synchronous>, transform_indices = @transform_8, window_bounds = array<i64: 10, 84>}, {pipeline_mode = #tpu.pipeline_mode<synchronous>, transform_indices = @transform_9, window_bounds = array<i64: 10, 1>}, {}, {}, {}, {pipeline_mode = #tpu.pipeline_mode<synchronous>, transform_indices = @transform_13, window_bounds = array<i64: 10, 2>}]} {
    %c0_i32 = arith.constant 0 : i32
    %0 = tpu.memref_slice %arg20[%c0_i32] : memref<3x!tpu.dma_semaphore, #tpu.memory_space<semaphore_mem>> -> memref<1x!tpu.dma_semaphore, #tpu.memory_space<semaphore_mem>>
    %1 = tpu.memref_squeeze %0 : memref<1x!tpu.dma_semaphore, #tpu.memory_space<semaphore_mem>> -> memref<!tpu.dma_semaphore, #tpu.memory_space<semaphore_mem>>
    tpu.enqueue_dma source(%arg11 : memref<1024x196xbf16, #tpu.memory_space<any>>) target(%arg17 : memref<1024x196xbf16, #tpu.memory_space<vmem>>) target_semaphore(%1 : memref<!tpu.dma_semaphore, #tpu.memory_space<semaphore_mem>>)
    %c1_i32 = arith.constant 1 : i32
    %2 = tpu.memref_slice %arg20[%c1_i32] : memref<3x!tpu.dma_semaphore, #tpu.memory_space<semaphore_mem>> -> memref<1x!tpu.dma_semaphore, #tpu.memory_space<semaphore_mem>>
    %3 = tpu.memref_squeeze %2 : memref<1x!tpu.dma_semaphore, #tpu.memory_space<semaphore_mem>> -> memref<!tpu.dma_semaphore, #tpu.memory_space<semaphore_mem>>
    tpu.enqueue_dma source(%arg12 : memref<392x50xbf16, #tpu.memory_space<any>>) target(%arg18 : memref<392x50xbf16, #tpu.memory_space<vmem>>) target_semaphore(%3 : memref<!tpu.dma_semaphore, #tpu.memory_space<semaphore_mem>>)
    %c2_i32 = arith.constant 2 : i32
    %4 = tpu.memref_slice %arg20[%c2_i32] : memref<3x!tpu.dma_semaphore, #tpu.memory_space<semaphore_mem>> -> memref<1x!tpu.dma_semaphore, #tpu.memory_space<semaphore_mem>>
    %5 = tpu.memref_squeeze %4 : memref<1x!tpu.dma_semaphore, #tpu.memory_space<semaphore_mem>> -> memref<!tpu.dma_semaphore, #tpu.memory_space<semaphore_mem>>
    tpu.enqueue_dma source(%arg13 : memref<120x400xf32, #tpu.memory_space<any>>) target(%arg19 : memref<120x400xf32, #tpu.memory_space<vmem>>) target_semaphore(%5 : memref<!tpu.dma_semaphore, #tpu.memory_space<semaphore_mem>>)
    %c0 = arith.constant 0 : index
    %c0_0 = arith.constant 0 : index
    %6 = vector.load %arg1[%c0, %c0_0] : memref<3x2244xf32, #tpu.memory_space<vmem>>, vector<3x2244xf32>
    %7 = vector.extract_strided_slice %6 {offsets = [0, 0], sizes = [3, 2112], strides = [1, 1]} : vector<3x2244xf32> to vector<3x2112xf32>
    %8 = vector.extract_strided_slice %6 {offsets = [0, 1], sizes = [3, 2112], strides = [1, 1]} : vector<3x2244xf32> to vector<3x2112xf32>
    %9 = vector.extract_strided_slice %6 {offsets = [0, 2], sizes = [3, 2112], strides = [1, 1]} : vector<3x2244xf32> to vector<3x2112xf32>
    %10 = vector.extract_strided_slice %6 {offsets = [0, 3], sizes = [3, 2112], strides = [1, 1]} : vector<3x2244xf32> to vector<3x2112xf32>
    %11 = vector.extract_strided_slice %6 {offsets = [0, 4], sizes = [3, 2112], strides = [1, 1]} : vector<3x2244xf32> to vector<3x2112xf32>
    %12 = tpu.concatenate %7, %8, %9, %10, %11 in 0 : vector<3x2112xf32>, vector<3x2112xf32>, vector<3x2112xf32>, vector<3x2112xf32>, vector<3x2112xf32> -> vector<15x2112xf32>
    %c0_1 = arith.constant 0 : index
    %c0_2 = arith.constant 0 : index
    %13 = vector.load %arg2[%c0_1, %c0_2] : memref<6x75xf32, #tpu.memory_space<vmem>>, vector<6x15xf32>
    %cst = arith.constant dense<0.000000e+00> : vector<6x2112xf32>
    %14 = tpu.matmul %13, %12, %cst {dimension_numbers = #tpu.dot_dimension_numbers<[1], [0], [0], [1], [0, 0, 1, 1], [], []>} : vector<6x15xf32>, vector<15x2112xf32>, vector<6x2112xf32> -> vector<6x2112xf32>
    %15 = vector.extract_strided_slice %6 {offsets = [0, 32], sizes = [3, 2112], strides = [1, 1]} : vector<3x2244xf32> to vector<3x2112xf32>
    %16 = vector.extract_strided_slice %6 {offsets = [0, 33], sizes = [3, 2112], strides = [1, 1]} : vector<3x2244xf32> to vector<3x2112xf32>
    %17 = vector.extract_strided_slice %6 {offsets = [0, 34], sizes = [3, 2112], strides = [1, 1]} : vector<3x2244xf32> to vector<3x2112xf32>
    %18 = vector.extract_strided_slice %6 {offsets = [0, 35], sizes = [3, 2112], strides = [1, 1]} : vector<3x2244xf32> to vector<3x2112xf32>
    %19 = vector.extract_strided_slice %6 {offsets = [0, 36], sizes = [3, 2112], strides = [1, 1]} : vector<3x2244xf32> to vector<3x2112xf32>
    %20 = tpu.concatenate %15, %16, %17, %18, %19 in 0 : vector<3x2112xf32>, vector<3x2112xf32>, vector<3x2112xf32>, vector<3x2112xf32>, vector<3x2112xf32> -> vector<15x2112xf32>
    %c0_3 = arith.constant 0 : index
    %c15 = arith.constant 15 : index
    %21 = vector.load %arg2[%c0_3, %c15] : memref<6x75xf32, #tpu.memory_space<vmem>>, vector<6x15xf32>
    %cst_4 = arith.constant dense<0.000000e+00> : vector<6x2112xf32>
    %22 = tpu.matmul %21, %20, %cst_4 {dimension_numbers = #tpu.dot_dimension_numbers<[1], [0], [0], [1], [0, 0, 1, 1], [], []>} : vector<6x15xf32>, vector<15x2112xf32>, vector<6x2112xf32> -> vector<6x2112xf32>
    %23 = arith.addf %14, %22 : vector<6x2112xf32>
    %24 = vector.extract_strided_slice %6 {offsets = [0, 64], sizes = [3, 2112], strides = [1, 1]} : vector<3x2244xf32> to vector<3x2112xf32>
    %25 = vector.extract_strided_slice %6 {offsets = [0, 65], sizes = [3, 2112], strides = [1, 1]} : vector<3x2244xf32> to vector<3x2112xf32>
    %26 = vector.extract_strided_slice %6 {offsets = [0, 66], sizes = [3, 2112], strides = [1, 1]} : vector<3x2244xf32> to vector<3x2112xf32>
    %27 = vector.extract_strided_slice %6 {offsets = [0, 67], sizes = [3, 2112], strides = [1, 1]} : vector<3x2244xf32> to vector<3x2112xf32>
    %28 = vector.extract_strided_slice %6 {offsets = [0, 68], sizes = [3, 2112], strides = [1, 1]} : vector<3x2244xf32> to vector<3x2112xf32>
    %29 = tpu.concatenate %24, %25, %26, %27, %28 in 0 : vector<3x2112xf32>, vector<3x2112xf32>, vector<3x2112xf32>, vector<3x2112xf32>, vector<3x2112xf32> -> vector<15x2112xf32>
    %c0_5 = arith.constant 0 : index
    %c30 = arith.constant 30 : index
    %30 = vector.load %arg2[%c0_5, %c30] : memref<6x75xf32, #tpu.memory_space<vmem>>, vector<6x15xf32>
    %cst_6 = arith.constant dense<0.000000e+00> : vector<6x2112xf32>
    %31 = tpu.matmul %30, %29, %cst_6 {dimension_numbers = #tpu.dot_dimension_numbers<[1], [0], [0], [1], [0, 0, 1, 1], [], []>} : vector<6x15xf32>, vector<15x2112xf32>, vector<6x2112xf32> -> vector<6x2112xf32>
    %32 = arith.addf %23, %31 : vector<6x2112xf32>
    %33 = vector.extract_strided_slice %6 {offsets = [0, 96], sizes = [3, 2112], strides = [1, 1]} : vector<3x2244xf32> to vector<3x2112xf32>
    %34 = vector.extract_strided_slice %6 {offsets = [0, 97], sizes = [3, 2112], strides = [1, 1]} : vector<3x2244xf32> to vector<3x2112xf32>
    %35 = vector.extract_strided_slice %6 {offsets = [0, 98], sizes = [3, 2112], strides = [1, 1]} : vector<3x2244xf32> to vector<3x2112xf32>
    %36 = vector.extract_strided_slice %6 {offsets = [0, 99], sizes = [3, 2112], strides = [1, 1]} : vector<3x2244xf32> to vector<3x2112xf32>
    %37 = vector.extract_strided_slice %6 {offsets = [0, 100], sizes = [3, 2112], strides = [1, 1]} : vector<3x2244xf32> to vector<3x2112xf32>
    %38 = tpu.concatenate %33, %34, %35, %36, %37 in 0 : vector<3x2112xf32>, vector<3x2112xf32>, vector<3x2112xf32>, vector<3x2112xf32>, vector<3x2112xf32> -> vector<15x2112xf32>
    %c0_7 = arith.constant 0 : index
    %c45 = arith.constant 45 : index
    %39 = vector.load %arg2[%c0_7, %c45] : memref<6x75xf32, #tpu.memory_space<vmem>>, vector<6x15xf32>
    %cst_8 = arith.constant dense<0.000000e+00> : vector<6x2112xf32>
    %40 = tpu.matmul %39, %38, %cst_8 {dimension_numbers = #tpu.dot_dimension_numbers<[1], [0], [0], [1], [0, 0, 1, 1], [], []>} : vector<6x15xf32>, vector<15x2112xf32>, vector<6x2112xf32> -> vector<6x2112xf32>
    %41 = arith.addf %32, %40 : vector<6x2112xf32>
    %42 = vector.extract_strided_slice %6 {offsets = [0, 128], sizes = [3, 2112], strides = [1, 1]} : vector<3x2244xf32> to vector<3x2112xf32>
    %43 = vector.extract_strided_slice %6 {offsets = [0, 129], sizes = [3, 2112], strides = [1, 1]} : vector<3x2244xf32> to vector<3x2112xf32>
    %44 = vector.extract_strided_slice %6 {offsets = [0, 130], sizes = [3, 2112], strides = [1, 1]} : vector<3x2244xf32> to vector<3x2112xf32>
    %45 = vector.extract_strided_slice %6 {offsets = [0, 131], sizes = [3, 2112], strides = [1, 1]} : vector<3x2244xf32> to vector<3x2112xf32>
    %46 = vector.extract_strided_slice %6 {offsets = [0, 132], sizes = [3, 2112], strides = [1, 1]} : vector<3x2244xf32> to vector<3x2112xf32>
    %47 = tpu.concatenate %42, %43, %44, %45, %46 in 0 : vector<3x2112xf32>, vector<3x2112xf32>, vector<3x2112xf32>, vector<3x2112xf32>, vector<3x2112xf32> -> vector<15x2112xf32>
    %c0_9 = arith.constant 0 : index
    %c60 = arith.constant 60 : index
    %48 = vector.load %arg2[%c0_9, %c60] : memref<6x75xf32, #tpu.memory_space<vmem>>, vector<6x15xf32>
    %cst_10 = arith.constant dense<0.000000e+00> : vector<6x2112xf32>
    %49 = tpu.matmul %48, %47, %cst_10 {dimension_numbers = #tpu.dot_dimension_numbers<[1], [0], [0], [1], [0, 0, 1, 1], [], []>} : vector<6x15xf32>, vector<15x2112xf32>, vector<6x2112xf32> -> vector<6x2112xf32>
    %50 = arith.addf %41, %49 : vector<6x2112xf32>
    %c0_11 = arith.constant 0 : index
    %c0_12 = arith.constant 0 : index
    %51 = vector.load %arg3[%c0_11, %c0_12] : memref<6x1xf32, #tpu.memory_space<vmem>>, vector<6x1xf32>
    %52 = vector.broadcast %51 : vector<6x1xf32> to vector<6x2112xf32>
    %53 = arith.addf %50, %52 : vector<6x2112xf32>
    %cst_13 = arith.constant 0.000000e+00 : f32
    %54 = vector.broadcast %cst_13 : f32 to vector<6x2112xf32>
    %55 = arith.maximumf %53, %54 : vector<6x2112xf32>
    %56 = vector.extract_strided_slice %55 {offsets = [0, 0], sizes = [6, 2048], strides = [1, 1]} : vector<6x2112xf32> to vector<6x2048xf32>
    %57 = vector.extract_strided_slice %55 {offsets = [0, 1], sizes = [6, 2048], strides = [1, 1]} : vector<6x2112xf32> to vector<6x2048xf32>
    %58 = arith.maximumf %56, %57 : vector<6x2048xf32>
    %59 = vector.extract_strided_slice %55 {offsets = [0, 32], sizes = [6, 2048], strides = [1, 1]} : vector<6x2112xf32> to vector<6x2048xf32>
    %60 = vector.extract_strided_slice %55 {offsets = [0, 33], sizes = [6, 2048], strides = [1, 1]} : vector<6x2112xf32> to vector<6x2048xf32>
    %61 = arith.maximumf %59, %60 : vector<6x2048xf32>
    %62 = arith.maximumf %58, %61 : vector<6x2048xf32>
    %c0_i32_14 = arith.constant 0 : i32
    %63 = tpu.memref_slice %arg20[%c0_i32_14] : memref<3x!tpu.dma_semaphore, #tpu.memory_space<semaphore_mem>> -> memref<1x!tpu.dma_semaphore, #tpu.memory_space<semaphore_mem>>
    %64 = tpu.memref_squeeze %63 : memref<1x!tpu.dma_semaphore, #tpu.memory_space<semaphore_mem>> -> memref<!tpu.dma_semaphore, #tpu.memory_space<semaphore_mem>>
    tpu.wait_dma2 semaphore(%64 : memref<!tpu.dma_semaphore, #tpu.memory_space<semaphore_mem>>) src(%arg11 : memref<1024x196xbf16, #tpu.memory_space<any>>) dst(%arg17 : memref<1024x196xbf16, #tpu.memory_space<vmem>>)
    %c0_15 = arith.constant 0 : index
    %c0_16 = arith.constant 0 : index
    %65 = vector.load %arg17[%c0_15, %c0_16] : memref<1024x196xbf16, #tpu.memory_space<vmem>>, vector<1024x196xbf16>
    %66 = arith.extf %65 : vector<1024x196xbf16> to vector<1024x196xf32>
    %67 = vector.extract_strided_slice %62 {offsets = [0, 0], sizes = [6, 1024], strides = [1, 1]} : vector<6x2048xf32> to vector<6x1024xf32>
    %68 = vector.extract_strided_slice %62 {offsets = [0, 1024], sizes = [6, 1024], strides = [1, 1]} : vector<6x2048xf32> to vector<6x1024xf32>
    %69 = tpu.concatenate %67, %68 in 0 : vector<6x1024xf32>, vector<6x1024xf32> -> vector<12x1024xf32>
    %cst_17 = arith.constant dense<0.000000e+00> : vector<12x196xf32>
    %70 = tpu.matmul %69, %66, %cst_17 {dimension_numbers = #tpu.dot_dimension_numbers<[1], [0], [0], [1], [0, 0, 1, 1], [], []>} : vector<12x1024xf32>, vector<1024x196xf32>, vector<12x196xf32> -> vector<12x196xf32>
    %71 = vector.extract_strided_slice %70 {offsets = [0, 0], sizes = [6, 196], strides = [1, 1]} : vector<12x196xf32> to vector<6x196xf32>
    %c0_18 = arith.constant 0 : index
    %c0_19 = arith.constant 0 : index
    %72 = vector.load %arg15[%c0_18, %c0_19] : memref<6x480xf32, #tpu.memory_space<vmem>>, vector<6x196xf32>
    tpu.vector_store %arg15[%c0_18, %c0_19], %71 {strides = array<i32>} : memref<6x480xf32, #tpu.memory_space<vmem>>, vector<6x196xf32>,
    %73 = vector.extract_strided_slice %70 {offsets = [6, 0], sizes = [6, 196], strides = [1, 1]} : vector<12x196xf32> to vector<6x196xf32>
    %c0_20 = arith.constant 0 : index
    %c196 = arith.constant 196 : index
    %74 = vector.load %arg15[%c0_20, %c196] : memref<6x480xf32, #tpu.memory_space<vmem>>, vector<6x196xf32>
    tpu.vector_store %arg15[%c0_20, %c196], %73 {strides = array<i32>} : memref<6x480xf32, #tpu.memory_space<vmem>>, vector<6x196xf32>,
    %cst_21 = arith.constant 0.000000e+00 : f32
    %75 = vector.broadcast %cst_21 : f32 to vector<6x88xf32>
    %c0_22 = arith.constant 0 : index
    %c392 = arith.constant 392 : index
    %76 = vector.load %arg15[%c0_22, %c392] : memref<6x480xf32, #tpu.memory_space<vmem>>, vector<6x88xf32>
    tpu.vector_store %arg15[%c0_22, %c392], %75 {strides = array<i32>} : memref<6x480xf32, #tpu.memory_space<vmem>>, vector<6x88xf32>,
    %c0_23 = arith.constant 0 : index
    %c0_24 = arith.constant 0 : index
    %77 = vector.load %arg15[%c0_23, %c0_24] : memref<6x480xf32, #tpu.memory_space<vmem>>, vector<6x480xf32>
    %78 = vector.extract_strided_slice %77 {offsets = [0, 0], sizes = [6, 420], strides = [1, 1]} : vector<6x480xf32> to vector<6x420xf32>
    %79 = vector.extract_strided_slice %77 {offsets = [0, 1], sizes = [6, 420], strides = [1, 1]} : vector<6x480xf32> to vector<6x420xf32>
    %80 = vector.extract_strided_slice %77 {offsets = [0, 2], sizes = [6, 420], strides = [1, 1]} : vector<6x480xf32> to vector<6x420xf32>
    %81 = vector.extract_strided_slice %77 {offsets = [0, 3], sizes = [6, 420], strides = [1, 1]} : vector<6x480xf32> to vector<6x420xf32>
    %82 = vector.extract_strided_slice %77 {offsets = [0, 4], sizes = [6, 420], strides = [1, 1]} : vector<6x480xf32> to vector<6x420xf32>
    %83 = tpu.concatenate %78, %79, %80, %81, %82 in 0 : vector<6x420xf32>, vector<6x420xf32>, vector<6x420xf32>, vector<6x420xf32>, vector<6x420xf32> -> vector<30x420xf32>
    %c0_25 = arith.constant 0 : index
    %c0_26 = arith.constant 0 : index
    %84 = vector.load %arg4[%c0_25, %c0_26] : memref<16x150xf32, #tpu.memory_space<vmem>>, vector<16x30xf32>
    %cst_27 = arith.constant dense<0.000000e+00> : vector<16x420xf32>
    %85 = tpu.matmul %84, %83, %cst_27 {dimension_numbers = #tpu.dot_dimension_numbers<[1], [0], [0], [1], [0, 0, 1, 1], [], []>} : vector<16x30xf32>, vector<30x420xf32>, vector<16x420xf32> -> vector<16x420xf32>
    %86 = vector.extract_strided_slice %77 {offsets = [0, 14], sizes = [6, 420], strides = [1, 1]} : vector<6x480xf32> to vector<6x420xf32>
    %87 = vector.extract_strided_slice %77 {offsets = [0, 15], sizes = [6, 420], strides = [1, 1]} : vector<6x480xf32> to vector<6x420xf32>
    %88 = vector.extract_strided_slice %77 {offsets = [0, 16], sizes = [6, 420], strides = [1, 1]} : vector<6x480xf32> to vector<6x420xf32>
    %89 = vector.extract_strided_slice %77 {offsets = [0, 17], sizes = [6, 420], strides = [1, 1]} : vector<6x480xf32> to vector<6x420xf32>
    %90 = vector.extract_strided_slice %77 {offsets = [0, 18], sizes = [6, 420], strides = [1, 1]} : vector<6x480xf32> to vector<6x420xf32>
    %91 = tpu.concatenate %86, %87, %88, %89, %90 in 0 : vector<6x420xf32>, vector<6x420xf32>, vector<6x420xf32>, vector<6x420xf32>, vector<6x420xf32> -> vector<30x420xf32>
    %c0_28 = arith.constant 0 : index
    %c30_29 = arith.constant 30 : index
    %92 = vector.load %arg4[%c0_28, %c30_29] : memref<16x150xf32, #tpu.memory_space<vmem>>, vector<16x30xf32>
    %cst_30 = arith.constant dense<0.000000e+00> : vector<16x420xf32>
    %93 = tpu.matmul %92, %91, %cst_30 {dimension_numbers = #tpu.dot_dimension_numbers<[1], [0], [0], [1], [0, 0, 1, 1], [], []>} : vector<16x30xf32>, vector<30x420xf32>, vector<16x420xf32> -> vector<16x420xf32>
    %94 = arith.addf %85, %93 : vector<16x420xf32>
    %95 = vector.extract_strided_slice %77 {offsets = [0, 28], sizes = [6, 420], strides = [1, 1]} : vector<6x480xf32> to vector<6x420xf32>
    %96 = vector.extract_strided_slice %77 {offsets = [0, 29], sizes = [6, 420], strides = [1, 1]} : vector<6x480xf32> to vector<6x420xf32>
    %97 = vector.extract_strided_slice %77 {offsets = [0, 30], sizes = [6, 420], strides = [1, 1]} : vector<6x480xf32> to vector<6x420xf32>
    %98 = vector.extract_strided_slice %77 {offsets = [0, 31], sizes = [6, 420], strides = [1, 1]} : vector<6x480xf32> to vector<6x420xf32>
    %99 = vector.extract_strided_slice %77 {offsets = [0, 32], sizes = [6, 420], strides = [1, 1]} : vector<6x480xf32> to vector<6x420xf32>
    %100 = tpu.concatenate %95, %96, %97, %98, %99 in 0 : vector<6x420xf32>, vector<6x420xf32>, vector<6x420xf32>, vector<6x420xf32>, vector<6x420xf32> -> vector<30x420xf32>
    %c0_31 = arith.constant 0 : index
    %c60_32 = arith.constant 60 : index
    %101 = vector.load %arg4[%c0_31, %c60_32] : memref<16x150xf32, #tpu.memory_space<vmem>>, vector<16x30xf32>
    %cst_33 = arith.constant dense<0.000000e+00> : vector<16x420xf32>
    %102 = tpu.matmul %101, %100, %cst_33 {dimension_numbers = #tpu.dot_dimension_numbers<[1], [0], [0], [1], [0, 0, 1, 1], [], []>} : vector<16x30xf32>, vector<30x420xf32>, vector<16x420xf32> -> vector<16x420xf32>
    %103 = arith.addf %94, %102 : vector<16x420xf32>
    %104 = vector.extract_strided_slice %77 {offsets = [0, 42], sizes = [6, 420], strides = [1, 1]} : vector<6x480xf32> to vector<6x420xf32>
    %105 = vector.extract_strided_slice %77 {offsets = [0, 43], sizes = [6, 420], strides = [1, 1]} : vector<6x480xf32> to vector<6x420xf32>
    %106 = vector.extract_strided_slice %77 {offsets = [0, 44], sizes = [6, 420], strides = [1, 1]} : vector<6x480xf32> to vector<6x420xf32>
    %107 = vector.extract_strided_slice %77 {offsets = [0, 45], sizes = [6, 420], strides = [1, 1]} : vector<6x480xf32> to vector<6x420xf32>
    %108 = vector.extract_strided_slice %77 {offsets = [0, 46], sizes = [6, 420], strides = [1, 1]} : vector<6x480xf32> to vector<6x420xf32>
    %109 = tpu.concatenate %104, %105, %106, %107, %108 in 0 : vector<6x420xf32>, vector<6x420xf32>, vector<6x420xf32>, vector<6x420xf32>, vector<6x420xf32> -> vector<30x420xf32>
    %c0_34 = arith.constant 0 : index
    %c90 = arith.constant 90 : index
    %110 = vector.load %arg4[%c0_34, %c90] : memref<16x150xf32, #tpu.memory_space<vmem>>, vector<16x30xf32>
    %cst_35 = arith.constant dense<0.000000e+00> : vector<16x420xf32>
    %111 = tpu.matmul %110, %109, %cst_35 {dimension_numbers = #tpu.dot_dimension_numbers<[1], [0], [0], [1], [0, 0, 1, 1], [], []>} : vector<16x30xf32>, vector<30x420xf32>, vector<16x420xf32> -> vector<16x420xf32>
    %112 = arith.addf %103, %111 : vector<16x420xf32>
    %113 = vector.extract_strided_slice %77 {offsets = [0, 56], sizes = [6, 420], strides = [1, 1]} : vector<6x480xf32> to vector<6x420xf32>
    %114 = vector.extract_strided_slice %77 {offsets = [0, 57], sizes = [6, 420], strides = [1, 1]} : vector<6x480xf32> to vector<6x420xf32>
    %115 = vector.extract_strided_slice %77 {offsets = [0, 58], sizes = [6, 420], strides = [1, 1]} : vector<6x480xf32> to vector<6x420xf32>
    %116 = vector.extract_strided_slice %77 {offsets = [0, 59], sizes = [6, 420], strides = [1, 1]} : vector<6x480xf32> to vector<6x420xf32>
    %117 = vector.extract_strided_slice %77 {offsets = [0, 60], sizes = [6, 420], strides = [1, 1]} : vector<6x480xf32> to vector<6x420xf32>
    %118 = tpu.concatenate %113, %114, %115, %116, %117 in 0 : vector<6x420xf32>, vector<6x420xf32>, vector<6x420xf32>, vector<6x420xf32>, vector<6x420xf32> -> vector<30x420xf32>
    %c0_36 = arith.constant 0 : index
    %c120 = arith.constant 120 : index
    %119 = vector.load %arg4[%c0_36, %c120] : memref<16x150xf32, #tpu.memory_space<vmem>>, vector<16x30xf32>
    %cst_37 = arith.constant dense<0.000000e+00> : vector<16x420xf32>
    %120 = tpu.matmul %119, %118, %cst_37 {dimension_numbers = #tpu.dot_dimension_numbers<[1], [0], [0], [1], [0, 0, 1, 1], [], []>} : vector<16x30xf32>, vector<30x420xf32>, vector<16x420xf32> -> vector<16x420xf32>
    %121 = arith.addf %112, %120 : vector<16x420xf32>
    %c0_38 = arith.constant 0 : index
    %c0_39 = arith.constant 0 : index
    %122 = vector.load %arg5[%c0_38, %c0_39] : memref<16x1xf32, #tpu.memory_space<vmem>>, vector<16x1xf32>
    %123 = vector.broadcast %122 : vector<16x1xf32> to vector<16x420xf32>
    %124 = arith.addf %121, %123 : vector<16x420xf32>
    %cst_40 = arith.constant 0.000000e+00 : f32
    %125 = vector.broadcast %cst_40 : f32 to vector<16x420xf32>
    %126 = arith.maximumf %124, %125 : vector<16x420xf32>
    %127 = vector.extract_strided_slice %126 {offsets = [0, 0], sizes = [16, 392], strides = [1, 1]} : vector<16x420xf32> to vector<16x392xf32>
    %128 = vector.extract_strided_slice %126 {offsets = [0, 1], sizes = [16, 392], strides = [1, 1]} : vector<16x420xf32> to vector<16x392xf32>
    %129 = arith.maximumf %127, %128 : vector<16x392xf32>
    %130 = vector.extract_strided_slice %126 {offsets = [0, 14], sizes = [16, 392], strides = [1, 1]} : vector<16x420xf32> to vector<16x392xf32>
    %131 = vector.extract_strided_slice %126 {offsets = [0, 15], sizes = [16, 392], strides = [1, 1]} : vector<16x420xf32> to vector<16x392xf32>
    %132 = arith.maximumf %130, %131 : vector<16x392xf32>
    %133 = arith.maximumf %129, %132 : vector<16x392xf32>
    %c1_i32_41 = arith.constant 1 : i32
    %134 = tpu.memref_slice %arg20[%c1_i32_41] : memref<3x!tpu.dma_semaphore, #tpu.memory_space<semaphore_mem>> -> memref<1x!tpu.dma_semaphore, #tpu.memory_space<semaphore_mem>>
    %135 = tpu.memref_squeeze %134 : memref<1x!tpu.dma_semaphore, #tpu.memory_space<semaphore_mem>> -> memref<!tpu.dma_semaphore, #tpu.memory_space<semaphore_mem>>
    tpu.wait_dma2 semaphore(%135 : memref<!tpu.dma_semaphore, #tpu.memory_space<semaphore_mem>>) src(%arg12 : memref<392x50xbf16, #tpu.memory_space<any>>) dst(%arg18 : memref<392x50xbf16, #tpu.memory_space<vmem>>)
    %c0_42 = arith.constant 0 : index
    %c0_43 = arith.constant 0 : index
    %136 = vector.load %arg18[%c0_42, %c0_43] : memref<392x50xbf16, #tpu.memory_space<vmem>>, vector<392x50xbf16>
    %137 = arith.extf %136 : vector<392x50xbf16> to vector<392x50xf32>
    %cst_44 = arith.constant dense<0.000000e+00> : vector<16x50xf32>
    %138 = tpu.matmul %133, %137, %cst_44 {dimension_numbers = #tpu.dot_dimension_numbers<[1], [0], [0], [1], [0, 0, 1, 1], [], []>} : vector<16x392xf32>, vector<392x50xf32>, vector<16x50xf32> -> vector<16x50xf32>
    %139 = vector.extract_strided_slice %138 {offsets = [0, 0], sizes = [16, 2], strides = [1, 1]} : vector<16x50xf32> to vector<16x2xf32>
    %c0_45 = arith.constant 0 : index
    %c0_46 = arith.constant 0 : index
    %140 = vector.load %arg16[%c0_45, %c0_46] : memref<400x2xf32, #tpu.memory_space<vmem>>, vector<16x2xf32>
    tpu.vector_store %arg16[%c0_45, %c0_46], %139 {strides = array<i32>} : memref<400x2xf32, #tpu.memory_space<vmem>>, vector<16x2xf32>,
    %141 = vector.extract_strided_slice %138 {offsets = [0, 2], sizes = [16, 2], strides = [1, 1]} : vector<16x50xf32> to vector<16x2xf32>
    %c16 = arith.constant 16 : index
    %c0_47 = arith.constant 0 : index
    %142 = vector.load %arg16[%c16, %c0_47] : memref<400x2xf32, #tpu.memory_space<vmem>>, vector<16x2xf32>
    tpu.vector_store %arg16[%c16, %c0_47], %141 {strides = array<i32>} : memref<400x2xf32, #tpu.memory_space<vmem>>, vector<16x2xf32>,
    %143 = vector.extract_strided_slice %138 {offsets = [0, 4], sizes = [16, 2], strides = [1, 1]} : vector<16x50xf32> to vector<16x2xf32>
    %c32 = arith.constant 32 : index
    %c0_48 = arith.constant 0 : index
    %144 = vector.load %arg16[%c32, %c0_48] : memref<400x2xf32, #tpu.memory_space<vmem>>, vector<16x2xf32>
    tpu.vector_store %arg16[%c32, %c0_48], %143 {strides = array<i32>} : memref<400x2xf32, #tpu.memory_space<vmem>>, vector<16x2xf32>,
    %145 = vector.extract_strided_slice %138 {offsets = [0, 6], sizes = [16, 2], strides = [1, 1]} : vector<16x50xf32> to vector<16x2xf32>
    %c48 = arith.constant 48 : index
    %c0_49 = arith.constant 0 : index
    %146 = vector.load %arg16[%c48, %c0_49] : memref<400x2xf32, #tpu.memory_space<vmem>>, vector<16x2xf32>
    tpu.vector_store %arg16[%c48, %c0_49], %145 {strides = array<i32>} : memref<400x2xf32, #tpu.memory_space<vmem>>, vector<16x2xf32>,
    %147 = vector.extract_strided_slice %138 {offsets = [0, 8], sizes = [16, 2], strides = [1, 1]} : vector<16x50xf32> to vector<16x2xf32>
    %c64 = arith.constant 64 : index
    %c0_50 = arith.constant 0 : index
    %148 = vector.load %arg16[%c64, %c0_50] : memref<400x2xf32, #tpu.memory_space<vmem>>, vector<16x2xf32>
    tpu.vector_store %arg16[%c64, %c0_50], %147 {strides = array<i32>} : memref<400x2xf32, #tpu.memory_space<vmem>>, vector<16x2xf32>,
    %149 = vector.extract_strided_slice %138 {offsets = [0, 10], sizes = [16, 2], strides = [1, 1]} : vector<16x50xf32> to vector<16x2xf32>
    %c80 = arith.constant 80 : index
    %c0_51 = arith.constant 0 : index
    %150 = vector.load %arg16[%c80, %c0_51] : memref<400x2xf32, #tpu.memory_space<vmem>>, vector<16x2xf32>
    tpu.vector_store %arg16[%c80, %c0_51], %149 {strides = array<i32>} : memref<400x2xf32, #tpu.memory_space<vmem>>, vector<16x2xf32>,
    %151 = vector.extract_strided_slice %138 {offsets = [0, 12], sizes = [16, 2], strides = [1, 1]} : vector<16x50xf32> to vector<16x2xf32>
    %c96 = arith.constant 96 : index
    %c0_52 = arith.constant 0 : index
    %152 = vector.load %arg16[%c96, %c0_52] : memref<400x2xf32, #tpu.memory_space<vmem>>, vector<16x2xf32>
    tpu.vector_store %arg16[%c96, %c0_52], %151 {strides = array<i32>} : memref<400x2xf32, #tpu.memory_space<vmem>>, vector<16x2xf32>,
    %153 = vector.extract_strided_slice %138 {offsets = [0, 14], sizes = [16, 2], strides = [1, 1]} : vector<16x50xf32> to vector<16x2xf32>
    %c112 = arith.constant 112 : index
    %c0_53 = arith.constant 0 : index
    %154 = vector.load %arg16[%c112, %c0_53] : memref<400x2xf32, #tpu.memory_space<vmem>>, vector<16x2xf32>
    tpu.vector_store %arg16[%c112, %c0_53], %153 {strides = array<i32>} : memref<400x2xf32, #tpu.memory_space<vmem>>, vector<16x2xf32>,
    %155 = vector.extract_strided_slice %138 {offsets = [0, 16], sizes = [16, 2], strides = [1, 1]} : vector<16x50xf32> to vector<16x2xf32>
    %c128 = arith.constant 128 : index
    %c0_54 = arith.constant 0 : index
    %156 = vector.load %arg16[%c128, %c0_54] : memref<400x2xf32, #tpu.memory_space<vmem>>, vector<16x2xf32>
    tpu.vector_store %arg16[%c128, %c0_54], %155 {strides = array<i32>} : memref<400x2xf32, #tpu.memory_space<vmem>>, vector<16x2xf32>,
    %157 = vector.extract_strided_slice %138 {offsets = [0, 18], sizes = [16, 2], strides = [1, 1]} : vector<16x50xf32> to vector<16x2xf32>
    %c144 = arith.constant 144 : index
    %c0_55 = arith.constant 0 : index
    %158 = vector.load %arg16[%c144, %c0_55] : memref<400x2xf32, #tpu.memory_space<vmem>>, vector<16x2xf32>
    tpu.vector_store %arg16[%c144, %c0_55], %157 {strides = array<i32>} : memref<400x2xf32, #tpu.memory_space<vmem>>, vector<16x2xf32>,
    %159 = vector.extract_strided_slice %138 {offsets = [0, 20], sizes = [16, 2], strides = [1, 1]} : vector<16x50xf32> to vector<16x2xf32>
    %c160 = arith.constant 160 : index
    %c0_56 = arith.constant 0 : index
    %160 = vector.load %arg16[%c160, %c0_56] : memref<400x2xf32, #tpu.memory_space<vmem>>, vector<16x2xf32>
    tpu.vector_store %arg16[%c160, %c0_56], %159 {strides = array<i32>} : memref<400x2xf32, #tpu.memory_space<vmem>>, vector<16x2xf32>,
    %161 = vector.extract_strided_slice %138 {offsets = [0, 22], sizes = [16, 2], strides = [1, 1]} : vector<16x50xf32> to vector<16x2xf32>
    %c176 = arith.constant 176 : index
    %c0_57 = arith.constant 0 : index
    %162 = vector.load %arg16[%c176, %c0_57] : memref<400x2xf32, #tpu.memory_space<vmem>>, vector<16x2xf32>
    tpu.vector_store %arg16[%c176, %c0_57], %161 {strides = array<i32>} : memref<400x2xf32, #tpu.memory_space<vmem>>, vector<16x2xf32>,
    %163 = vector.extract_strided_slice %138 {offsets = [0, 24], sizes = [16, 2], strides = [1, 1]} : vector<16x50xf32> to vector<16x2xf32>
    %c192 = arith.constant 192 : index
    %c0_58 = arith.constant 0 : index
    %164 = vector.load %arg16[%c192, %c0_58] : memref<400x2xf32, #tpu.memory_space<vmem>>, vector<16x2xf32>
    tpu.vector_store %arg16[%c192, %c0_58], %163 {strides = array<i32>} : memref<400x2xf32, #tpu.memory_space<vmem>>, vector<16x2xf32>,
    %165 = vector.extract_strided_slice %138 {offsets = [0, 26], sizes = [16, 2], strides = [1, 1]} : vector<16x50xf32> to vector<16x2xf32>
    %c208 = arith.constant 208 : index
    %c0_59 = arith.constant 0 : index
    %166 = vector.load %arg16[%c208, %c0_59] : memref<400x2xf32, #tpu.memory_space<vmem>>, vector<16x2xf32>
    tpu.vector_store %arg16[%c208, %c0_59], %165 {strides = array<i32>} : memref<400x2xf32, #tpu.memory_space<vmem>>, vector<16x2xf32>,
    %167 = vector.extract_strided_slice %138 {offsets = [0, 28], sizes = [16, 2], strides = [1, 1]} : vector<16x50xf32> to vector<16x2xf32>
    %c224 = arith.constant 224 : index
    %c0_60 = arith.constant 0 : index
    %168 = vector.load %arg16[%c224, %c0_60] : memref<400x2xf32, #tpu.memory_space<vmem>>, vector<16x2xf32>
    tpu.vector_store %arg16[%c224, %c0_60], %167 {strides = array<i32>} : memref<400x2xf32, #tpu.memory_space<vmem>>, vector<16x2xf32>,
    %169 = vector.extract_strided_slice %138 {offsets = [0, 30], sizes = [16, 2], strides = [1, 1]} : vector<16x50xf32> to vector<16x2xf32>
    %c240 = arith.constant 240 : index
    %c0_61 = arith.constant 0 : index
    %170 = vector.load %arg16[%c240, %c0_61] : memref<400x2xf32, #tpu.memory_space<vmem>>, vector<16x2xf32>
    tpu.vector_store %arg16[%c240, %c0_61], %169 {strides = array<i32>} : memref<400x2xf32, #tpu.memory_space<vmem>>, vector<16x2xf32>,
    %171 = vector.extract_strided_slice %138 {offsets = [0, 32], sizes = [16, 2], strides = [1, 1]} : vector<16x50xf32> to vector<16x2xf32>
    %c256 = arith.constant 256 : index
    %c0_62 = arith.constant 0 : index
    %172 = vector.load %arg16[%c256, %c0_62] : memref<400x2xf32, #tpu.memory_space<vmem>>, vector<16x2xf32>
    tpu.vector_store %arg16[%c256, %c0_62], %171 {strides = array<i32>} : memref<400x2xf32, #tpu.memory_space<vmem>>, vector<16x2xf32>,
    %173 = vector.extract_strided_slice %138 {offsets = [0, 34], sizes = [16, 2], strides = [1, 1]} : vector<16x50xf32> to vector<16x2xf32>
    %c272 = arith.constant 272 : index
    %c0_63 = arith.constant 0 : index
    %174 = vector.load %arg16[%c272, %c0_63] : memref<400x2xf32, #tpu.memory_space<vmem>>, vector<16x2xf32>
    tpu.vector_store %arg16[%c272, %c0_63], %173 {strides = array<i32>} : memref<400x2xf32, #tpu.memory_space<vmem>>, vector<16x2xf32>,
    %175 = vector.extract_strided_slice %138 {offsets = [0, 36], sizes = [16, 2], strides = [1, 1]} : vector<16x50xf32> to vector<16x2xf32>
    %c288 = arith.constant 288 : index
    %c0_64 = arith.constant 0 : index
    %176 = vector.load %arg16[%c288, %c0_64] : memref<400x2xf32, #tpu.memory_space<vmem>>, vector<16x2xf32>
    tpu.vector_store %arg16[%c288, %c0_64], %175 {strides = array<i32>} : memref<400x2xf32, #tpu.memory_space<vmem>>, vector<16x2xf32>,
    %177 = vector.extract_strided_slice %138 {offsets = [0, 38], sizes = [16, 2], strides = [1, 1]} : vector<16x50xf32> to vector<16x2xf32>
    %c304 = arith.constant 304 : index
    %c0_65 = arith.constant 0 : index
    %178 = vector.load %arg16[%c304, %c0_65] : memref<400x2xf32, #tpu.memory_space<vmem>>, vector<16x2xf32>
    tpu.vector_store %arg16[%c304, %c0_65], %177 {strides = array<i32>} : memref<400x2xf32, #tpu.memory_space<vmem>>, vector<16x2xf32>,
    %179 = vector.extract_strided_slice %138 {offsets = [0, 40], sizes = [16, 2], strides = [1, 1]} : vector<16x50xf32> to vector<16x2xf32>
    %c320 = arith.constant 320 : index
    %c0_66 = arith.constant 0 : index
    %180 = vector.load %arg16[%c320, %c0_66] : memref<400x2xf32, #tpu.memory_space<vmem>>, vector<16x2xf32>
    tpu.vector_store %arg16[%c320, %c0_66], %179 {strides = array<i32>} : memref<400x2xf32, #tpu.memory_space<vmem>>, vector<16x2xf32>,
    %181 = vector.extract_strided_slice %138 {offsets = [0, 42], sizes = [16, 2], strides = [1, 1]} : vector<16x50xf32> to vector<16x2xf32>
    %c336 = arith.constant 336 : index
    %c0_67 = arith.constant 0 : index
    %182 = vector.load %arg16[%c336, %c0_67] : memref<400x2xf32, #tpu.memory_space<vmem>>, vector<16x2xf32>
    tpu.vector_store %arg16[%c336, %c0_67], %181 {strides = array<i32>} : memref<400x2xf32, #tpu.memory_space<vmem>>, vector<16x2xf32>,
    %183 = vector.extract_strided_slice %138 {offsets = [0, 44], sizes = [16, 2], strides = [1, 1]} : vector<16x50xf32> to vector<16x2xf32>
    %c352 = arith.constant 352 : index
    %c0_68 = arith.constant 0 : index
    %184 = vector.load %arg16[%c352, %c0_68] : memref<400x2xf32, #tpu.memory_space<vmem>>, vector<16x2xf32>
    tpu.vector_store %arg16[%c352, %c0_68], %183 {strides = array<i32>} : memref<400x2xf32, #tpu.memory_space<vmem>>, vector<16x2xf32>,
    %185 = vector.extract_strided_slice %138 {offsets = [0, 46], sizes = [16, 2], strides = [1, 1]} : vector<16x50xf32> to vector<16x2xf32>
    %c368 = arith.constant 368 : index
    %c0_69 = arith.constant 0 : index
    %186 = vector.load %arg16[%c368, %c0_69] : memref<400x2xf32, #tpu.memory_space<vmem>>, vector<16x2xf32>
    tpu.vector_store %arg16[%c368, %c0_69], %185 {strides = array<i32>} : memref<400x2xf32, #tpu.memory_space<vmem>>, vector<16x2xf32>,
    %187 = vector.extract_strided_slice %138 {offsets = [0, 48], sizes = [16, 2], strides = [1, 1]} : vector<16x50xf32> to vector<16x2xf32>
    %c384 = arith.constant 384 : index
    %c0_70 = arith.constant 0 : index
    %188 = vector.load %arg16[%c384, %c0_70] : memref<400x2xf32, #tpu.memory_space<vmem>>, vector<16x2xf32>
    tpu.vector_store %arg16[%c384, %c0_70], %187 {strides = array<i32>} : memref<400x2xf32, #tpu.memory_space<vmem>>, vector<16x2xf32>,
    %c2_i32_71 = arith.constant 2 : i32
    %189 = tpu.memref_slice %arg20[%c2_i32_71] : memref<3x!tpu.dma_semaphore, #tpu.memory_space<semaphore_mem>> -> memref<1x!tpu.dma_semaphore, #tpu.memory_space<semaphore_mem>>
    %190 = tpu.memref_squeeze %189 : memref<1x!tpu.dma_semaphore, #tpu.memory_space<semaphore_mem>> -> memref<!tpu.dma_semaphore, #tpu.memory_space<semaphore_mem>>
    tpu.wait_dma2 semaphore(%190 : memref<!tpu.dma_semaphore, #tpu.memory_space<semaphore_mem>>) src(%arg13 : memref<120x400xf32, #tpu.memory_space<any>>) dst(%arg19 : memref<120x400xf32, #tpu.memory_space<vmem>>)
    %c0_72 = arith.constant 0 : index
    %c0_73 = arith.constant 0 : index
    %191 = vector.load %arg19[%c0_72, %c0_73] : memref<120x400xf32, #tpu.memory_space<vmem>>, vector<120x400xf32>
    %c0_74 = arith.constant 0 : index
    %c0_75 = arith.constant 0 : index
    %192 = vector.load %arg16[%c0_74, %c0_75] : memref<400x2xf32, #tpu.memory_space<vmem>>, vector<400x2xf32>
    %cst_76 = arith.constant dense<0.000000e+00> : vector<120x2xf32>
    %193 = tpu.matmul %191, %192, %cst_76 {dimension_numbers = #tpu.dot_dimension_numbers<[1], [0], [0], [1], [0, 0, 1, 1], [], []>} : vector<120x400xf32>, vector<400x2xf32>, vector<120x2xf32> -> vector<120x2xf32>
    %c0_77 = arith.constant 0 : index
    %c0_78 = arith.constant 0 : index
    %194 = vector.load %arg6[%c0_77, %c0_78] : memref<120x1xf32, #tpu.memory_space<vmem>>, vector<120x1xf32>
    %195 = vector.broadcast %194 : vector<120x1xf32> to vector<120x2xf32>
    %196 = arith.addf %193, %195 : vector<120x2xf32>
    %cst_79 = arith.constant 0.000000e+00 : f32
    %197 = vector.broadcast %cst_79 : f32 to vector<120x2xf32>
    %198 = arith.maximumf %196, %197 : vector<120x2xf32>
    %c0_80 = arith.constant 0 : index
    %c0_81 = arith.constant 0 : index
    %199 = vector.load %arg7[%c0_80, %c0_81] : memref<84x120xf32, #tpu.memory_space<vmem>>, vector<84x120xf32>
    %cst_82 = arith.constant dense<0.000000e+00> : vector<84x2xf32>
    %200 = tpu.matmul %199, %198, %cst_82 {dimension_numbers = #tpu.dot_dimension_numbers<[1], [0], [0], [1], [0, 0, 1, 1], [], []>} : vector<84x120xf32>, vector<120x2xf32>, vector<84x2xf32> -> vector<84x2xf32>
    %c0_83 = arith.constant 0 : index
    %c0_84 = arith.constant 0 : index
    %201 = vector.load %arg8[%c0_83, %c0_84] : memref<84x1xf32, #tpu.memory_space<vmem>>, vector<84x1xf32>
    %202 = vector.broadcast %201 : vector<84x1xf32> to vector<84x2xf32>
    %203 = arith.addf %200, %202 : vector<84x2xf32>
    %cst_85 = arith.constant 0.000000e+00 : f32
    %204 = vector.broadcast %cst_85 : f32 to vector<84x2xf32>
    %205 = arith.maximumf %203, %204 : vector<84x2xf32>
    %c0_86 = arith.constant 0 : index
    %c0_87 = arith.constant 0 : index
    %206 = vector.load %arg9[%c0_86, %c0_87] : memref<10x84xf32, #tpu.memory_space<vmem>>, vector<10x84xf32>
    %cst_88 = arith.constant dense<0.000000e+00> : vector<10x2xf32>
    %207 = tpu.matmul %206, %205, %cst_88 {dimension_numbers = #tpu.dot_dimension_numbers<[1], [0], [0], [1], [0, 0, 1, 1], [], []>} : vector<10x84xf32>, vector<84x2xf32>, vector<10x2xf32> -> vector<10x2xf32>
    %c0_89 = arith.constant 0 : index
    %c0_90 = arith.constant 0 : index
    %208 = vector.load %arg10[%c0_89, %c0_90] : memref<10x1xf32, #tpu.memory_space<vmem>>, vector<10x1xf32>
    %209 = vector.broadcast %208 : vector<10x1xf32> to vector<10x2xf32>
    %210 = arith.addf %207, %209 : vector<10x2xf32>
    %c0_91 = arith.constant 0 : index
    %c0_92 = arith.constant 0 : index
    %211 = vector.load %arg14[%c0_91, %c0_92] : memref<10x2xf32, #tpu.memory_space<vmem>>, vector<10x2xf32>
    tpu.vector_store %arg14[%c0_91, %c0_92], %210 {strides = array<i32>} : memref<10x2xf32, #tpu.memory_space<vmem>>, vector<10x2xf32>,
    return
  }
  func.func @transform_0(%arg0: i32) -> (i32, i32) {
    %c0_i32 = arith.constant 0 : i32
    %c0_i32_0 = arith.constant 0 : i32
    %c0_i32_1 = arith.constant 0 : i32
    return %c0_i32, %c0_i32_0 : i32, i32
  }
  func.func @transform_1(%arg0: i32) -> (i32, i32) {
    %c0_i32 = arith.constant 0 : i32
    %c0_i32_0 = arith.constant 0 : i32
    %c0_i32_1 = arith.constant 0 : i32
    return %c0_i32, %c0_i32_0 : i32, i32
  }
  func.func @transform_2(%arg0: i32) -> (i32, i32) {
    %c0_i32 = arith.constant 0 : i32
    %c0_i32_0 = arith.constant 0 : i32
    %c0_i32_1 = arith.constant 0 : i32
    return %c0_i32, %c0_i32_0 : i32, i32
  }
  func.func @transform_3(%arg0: i32) -> (i32, i32) {
    %c0_i32 = arith.constant 0 : i32
    %c0_i32_0 = arith.constant 0 : i32
    %c0_i32_1 = arith.constant 0 : i32
    return %c0_i32, %c0_i32_0 : i32, i32
  }
  func.func @transform_4(%arg0: i32) -> (i32, i32) {
    %c0_i32 = arith.constant 0 : i32
    %c0_i32_0 = arith.constant 0 : i32
    %c0_i32_1 = arith.constant 0 : i32
    return %c0_i32, %c0_i32_0 : i32, i32
  }
  func.func @transform_5(%arg0: i32) -> (i32, i32) {
    %c0_i32 = arith.constant 0 : i32
    %c0_i32_0 = arith.constant 0 : i32
    %c0_i32_1 = arith.constant 0 : i32
    return %c0_i32, %c0_i32_0 : i32, i32
  }
  func.func @transform_6(%arg0: i32) -> (i32, i32) {
    %c0_i32 = arith.constant 0 : i32
    %c0_i32_0 = arith.constant 0 : i32
    %c0_i32_1 = arith.constant 0 : i32
    return %c0_i32, %c0_i32_0 : i32, i32
  }
  func.func @transform_7(%arg0: i32) -> (i32, i32) {
    %c0_i32 = arith.constant 0 : i32
    %c0_i32_0 = arith.constant 0 : i32
    %c0_i32_1 = arith.constant 0 : i32
    return %c0_i32, %c0_i32_0 : i32, i32
  }
  func.func @transform_8(%arg0: i32) -> (i32, i32) {
    %c0_i32 = arith.constant 0 : i32
    %c0_i32_0 = arith.constant 0 : i32
    %c0_i32_1 = arith.constant 0 : i32
    return %c0_i32, %c0_i32_0 : i32, i32
  }
  func.func @transform_9(%arg0: i32) -> (i32, i32) {
    %c0_i32 = arith.constant 0 : i32
    %c0_i32_0 = arith.constant 0 : i32
    %c0_i32_1 = arith.constant 0 : i32
    return %c0_i32, %c0_i32_0 : i32, i32
  }
  func.func @transform_13(%arg0: i32) -> (i32, i32) {
    %c0_i32 = arith.constant 0 : i32
    %c0_i32_0 = arith.constant 0 : i32
    %c0_i32_1 = arith.constant 0 : i32
    return %c0_i32, %c0_i32_0 : i32, i32
  }
}

</mosaic_0001>

<llo_original>
// kernel: net_forward.1
$region0: #{net_forward.1}
  #allocation0 [shape = 'u32[]', space=smem, size = 0x4, offset = 0x4, fixed_abs, tag = 'smem constant byte address 0x4 - core index']
  #allocation1 [shape = 'u32[144,128]{1,0:T(1,128)}', space=vmem, size = 0x12000, scoped, tag = 'internal scratch']
  #allocation2 [shape = 'f32[6,480]{1,0:T(8,128)}', space=vmem, size = 0x4000, scoped, tag = 'scratch operand']
  #allocation3 [shape = 'f32[400,2]{1,0:T(8,128)}', space=vmem, size = 0x32000, scoped, tag = 'scratch operand']
  #allocation4 [shape = 'bf16[1024,196]{1,0:T(16,128)(2,1)}', space=vmem, size = 0x80000, scoped, tag = 'scratch operand']
  #allocation5 [shape = 'bf16[392,50]{1,0:T(8,128)(2,1)}', space=vmem, size = 0x18800, scoped, tag = 'scratch operand']
  #allocation6 [shape = 'f32[120,400]{1,0:T(8,128)}', space=vmem, size = 0x3c000, scoped, tag = 'scratch operand']
  #allocation7 [shape = 's32[3]{0}', space=sflag, size = 0xc, scoped, tag = 'scratch operand']
  #allocation8 [shape = 's32[]', space=sflag, size = 0x4, offset = 0, fixed_abs, tag = 'sflag constant byte address 0x0 - dummy sync flag']
  #allocation9 [shape = 's32[]', space=sflag, size = 0x4, offset = 0, fixed_abs, tag = 'sflag constant byte address 0x0 - dummy sync flag']
  #allocation10 [shape = 's32[]', space=sflag, size = 0x4, offset = 0, fixed_abs, tag = 'sflag constant byte address 0x0 - dummy sync flag']
  %s0 = inlined_call_operand.vmem [shape: f32[3,2244], index: 0, kind: input, shape index: {}]
  %s1 = inlined_call_operand.vmem [shape: f32[6,75], index: 1, kind: input, shape index: {}]
  %s2 = inlined_call_operand.vmem [shape: f32[6,1], index: 2, kind: input, shape index: {}]
  %s3 = inlined_call_operand.vmem [shape: f32[16,150], index: 3, kind: input, shape index: {}]
  %s4 = inlined_call_operand.vmem [shape: f32[16,1], index: 4, kind: input, shape index: {}]
  %s5 = inlined_call_operand.vmem [shape: f32[120,1], index: 5, kind: input, shape index: {}]
  %s6 = inlined_call_operand.vmem [shape: f32[84,120], index: 6, kind: input, shape index: {}]
  %s7 = inlined_call_operand.vmem [shape: f32[84,1], index: 7, kind: input, shape index: {}]
  %s8 = inlined_call_operand.vmem [shape: f32[10,84], index: 8, kind: input, shape index: {}]
  %s9 = inlined_call_operand.vmem [shape: f32[10,1], index: 9, kind: input, shape index: {}]
  %s10 = inlined_call_operand.vmem [shape: bf16[1024,196], index: 10, kind: input, shape index: {}]
  %s11 = inlined_call_operand.vmem [shape: bf16[392,50], index: 11, kind: input, shape index: {}]
  %s12 = inlined_call_operand.vmem [shape: f32[120,400], index: 12, kind: input, shape index: {}]
  %s13 = inlined_call_operand.vmem [shape: f32[10,2], index: 13, kind: output, shape index: {}]
  %s14 = sld [smem:[#allocation0]]
  $region158: #{net_forward.1} parent=0
    _
  %s16 = ssub.s32 1, %s14
  %s17 = scalar_select 0, %s16, %s14
  // Predicated region
  $region2: #{net_forward.1} parent=0 // pred_check
    _
  $region3: #{net_forward.1} parent=0 // pred_check_branch
    %19 = sbr.rel (0) target = $region5
  $region4: #{net_forward.1} parent=0 // pred_region
    _
  $region5: #{net_forward.1} parent=0 // pred_fallthru
    _
  // Predicated region
  $region6: #{net_forward.1} parent=0 // pred_check
    _
  $region7: #{net_forward.1} parent=0 // pred_check_branch
    %21 = sbr.rel (0) target = $region9
  $region8: #{net_forward.1} parent=0 // pred_region
    _
  $region9: #{net_forward.1} parent=0 // pred_fallthru
    _
  // Predicated region
  $region10: #{net_forward.1} parent=0 // pred_check
    _
  $region11: #{net_forward.1} parent=0 // pred_check_branch
    %23 = sbr.rel (0) target = $region13
  $region12: #{net_forward.1} parent=0 // pred_region
    _
  $region13: #{net_forward.1} parent=0 // pred_fallthru
    _
  // Predicated region
  $region14: #{net_forward.1} parent=0 // pred_check
    _
  $region15: #{net_forward.1} parent=0 // pred_check_branch
    %25 = sbr.rel (0) target = $region17
  $region16: #{net_forward.1} parent=0 // pred_region
    _
  $region17: #{net_forward.1} parent=0 // pred_fallthru
    _
  // Predicated region
  $region18: #{net_forward.1} parent=0 // pred_check
    _
  $region19: #{net_forward.1} parent=0 // pred_check_branch
    %27 = sbr.rel (0) target = $region21
  $region20: #{net_forward.1} parent=0 // pred_region
    _
  $region21: #{net_forward.1} parent=0 // pred_fallthru
    _
  // Predicated region
  $region22: #{net_forward.1} parent=0 // pred_check
    _
  $region23: #{net_forward.1} parent=0 // pred_check_branch
    %29 = sbr.rel (0) target = $region25
  $region24: #{net_forward.1} parent=0 // pred_region
    _
  $region25: #{net_forward.1} parent=0 // pred_fallthru
    _
  // Predicated region
  $region26: #{net_forward.1} parent=0 // pred_check
    _
  $region27: #{net_forward.1} parent=0 // pred_check_branch
    %31 = sbr.rel (0) target = $region29
  $region28: #{net_forward.1} parent=0 // pred_region
    _
  $region29: #{net_forward.1} parent=0 // pred_fallthru
    _
  // Predicated region
  $region30: #{net_forward.1} parent=0 // pred_check
    _
  $region31: #{net_forward.1} parent=0 // pred_check_branch
    %33 = sbr.rel (0) target = $region33
  $region32: #{net_forward.1} parent=0 // pred_region
    _
  $region33: #{net_forward.1} parent=0 // pred_fallthru
    _
  // Predicated region
  $region34: #{net_forward.1} parent=0 // pred_check
    _
  $region35: #{net_forward.1} parent=0 // pred_check_branch
    %35 = sbr.rel (0) target = $region37
  $region36: #{net_forward.1} parent=0 // pred_region
    _
  $region37: #{net_forward.1} parent=0 // pred_fallthru
    _
  // Predicated region
  $region38: #{net_forward.1} parent=0 // pred_check
    _
  $region39: #{net_forward.1} parent=0 // pred_check_branch
    %37 = sbr.rel (0) target = $region41
  $region40: #{net_forward.1} parent=0 // pred_region
    _
  $region41: #{net_forward.1} parent=0 // pred_fallthru
    _
  %p39 = scmp.lt.u32.totalorder 4, 8
  %p40 = pneg %p39
  // Predicated region
  $region42: #{net_forward.1} parent=0 // pred_check
    _
  $region43: #{net_forward.1} parent=0 // pred_check_branch
    %42 = sbr.rel (%p39) target = $region45
  $region44: #{net_forward.1} parent=0 // pred_region
    %s567 = sand.u32 4, 7
    %p568 = scmp.eq.s32.totalorder %s567, 0
    %p569 = pneg %p568
    // Predicated region
    $region57: #{net_forward.1} parent=44 // pred_check
      _
    $region58: #{net_forward.1} parent=44 // pred_check_branch
      %571 = sbr.rel (%p568) target = $region60
    $region59: #{net_forward.1} parent=44 // pred_region
      %s572 = sand.u32 4, 7
      %s573 = ssub.s32 4, %s572
      %s574 = scalar_lea.vmem %s10, %s573
      %s575 = ssub.s32 4, %s572
      %s576 = scalar_lea.vmem [#allocation4], %s575
      loop: start=0, step=1, limit=1
      $region61: #{net_forward.1} parent=59 // loop_pre_header
        _
      $region62: #{net_forward.1} parent=59 // loop_header
        %s578 = sphi 0, %s582
        %p579 = scmp.ge.s32.totalorder %s578, 1
        %s583 = sphi %s10, %s10
        %s584 = sphi [#allocation4], [#allocation4]
      $region63: #{net_forward.1} parent=59 // loop_header_branch
        %581 = sbr.rel (%p579) target = $region67
      $region64: #{net_forward.1} parent=59 // loop_body
        _
      $region65: #{net_forward.1} parent=59 // loop_footer
        %s582 = sadd.s32 1, %s578
      $region66: #{net_forward.1} parent=59 // loop_footer_branch
        %577 = sbr.rel target = $region62
      $region67: #{net_forward.1} parent=59 // loop_exit
        _
      %s585 = sshllo.u32 0, %s572
      loop: start=0, step=1, limit=1
      $region68: #{net_forward.1} parent=59 // loop_pre_header
        _
      $region69: #{net_forward.1} parent=59 // loop_header
        %s587 = sphi 0, %s591
        %p588 = scmp.ge.s32.totalorder %s587, 1
        %s592 = sphi %s574, %s574
        %s593 = sphi %s576, %s576
      $region70: #{net_forward.1} parent=59 // loop_header_branch
        %590 = sbr.rel (%p588) target = $region74
      $region71: #{net_forward.1} parent=59 // loop_body
        %v594 = vld [vmem:[%s592] sm:%s585]
        %595 = vst [vmem:[%s593] sm:%s585] %v594
        %v596 = vld [vmem:[%s592 + $0x8] sm:%s585]
        %597 = vst [vmem:[%s593 + $0x4] sm:%s585] %v596
        %v598 = vld [vmem:[%s592 + $0x4] sm:%s585]
        %599 = vst [vmem:[%s593 + $0x8] sm:%s585] %v598
        %v600 = vld [vmem:[%s592 + $0xc] sm:%s585]
        %601 = vst [vmem:[%s593 + $0xc] sm:%s585] %v600
        %v602 = vld [vmem:[%s592 + $0x10] sm:%s585]
        %603 = vst [vmem:[%s593 + $0x10] sm:%s585] %v602
        %v604 = vld [vmem:[%s592 + $0x18] sm:%s585]
        %605 = vst [vmem:[%s593 + $0x14] sm:%s585] %v604
        %v606 = vld [vmem:[%s592 + $0x14] sm:%s585]
        %607 = vst [vmem:[%s593 + $0x18] sm:%s585] %v606
        %v608 = vld [vmem:[%s592 + $0x1c] sm:%s585]
        %609 = vst [vmem:[%s593 + $0x1c] sm:%s585] %v608
        %v610 = vld [vmem:[%s592 + $0x20] sm:%s585]
        %611 = vst [vmem:[%s593 + $0x20] sm:%s585] %v610
        %v612 = vld [vmem:[%s592 + $0x28] sm:%s585]
        %613 = vst [vmem:[%s593 + $0x24] sm:%s585] %v612
        %v614 = vld [vmem:[%s592 + $0x24] sm:%s585]
        %615 = vst [vmem:[%s593 + $0x28] sm:%s585] %v614
        %v616 = vld [vmem:[%s592 + $0x2c] sm:%s585]
        %617 = vst [vmem:[%s593 + $0x2c] sm:%s585] %v616
        %v618 = vld [vmem:[%s592 + $0x30] sm:%s585]
        %619 = vst [vmem:[%s593 + $0x30] sm:%s585] %v618
        %v620 = vld [vmem:[%s592 + $0x38] sm:%s585]
        %621 = vst [vmem:[%s593 + $0x34] sm:%s585] %v620
        %v622 = vld [vmem:[%s592 + $0x34] sm:%s585]
        %623 = vst [vmem:[%s593 + $0x38] sm:%s585] %v622
        %v624 = vld [vmem:[%s592 + $0x3c] sm:%s585]
        %625 = vst [vmem:[%s593 + $0x3c] sm:%s585] %v624
        %v626 = vld [vmem:[%s592 + $0x40] sm:%s585]
        %627 = vst [vmem:[%s593 + $0x40] sm:%s585] %v626
        %v628 = vld [vmem:[%s592 + $0x48] sm:%s585]
        %629 = vst [vmem:[%s593 + $0x44] sm:%s585] %v628
        %v630 = vld [vmem:[%s592 + $0x44] sm:%s585]
        %631 = vst [vmem:[%s593 + $0x48] sm:%s585] %v630
        %v632 = vld [vmem:[%s592 + $0x4c] sm:%s585]
        %633 = vst [vmem:[%s593 + $0x4c] sm:%s585] %v632
        %v634 = vld [vmem:[%s592 + $0x50] sm:%s585]
        %635 = vst [vmem:[%s593 + $0x50] sm:%s585] %v634
        %v636 = vld [vmem:[%s592 + $0x58] sm:%s585]
        %637 = vst [vmem:[%s593 + $0x54] sm:%s585] %v636
        %v638 = vld [vmem:[%s592 + $0x54] sm:%s585]
        %639 = vst [vmem:[%s593 + $0x58] sm:%s585] %v638
        %v640 = vld [vmem:[%s592 + $0x5c] sm:%s585]
        %641 = vst [vmem:[%s593 + $0x5c] sm:%s585] %v640
        %v642 = vld [vmem:[%s592 + $0x60] sm:%s585]
        %643 = vst [vmem:[%s593 + $0x60] sm:%s585] %v642
        %v644 = vld [vmem:[%s592 + $0x68] sm:%s585]
        %645 = vst [vmem:[%s593 + $0x64] sm:%s585] %v644
        %v646 = vld [vmem:[%s592 + $0x64] sm:%s585]
        %647 = vst [vmem:[%s593 + $0x68] sm:%s585] %v646
        %v648 = vld [vmem:[%s592 + $0x6c] sm:%s585]
        %649 = vst [vmem:[%s593 + $0x6c] sm:%s585] %v648
        %v650 = vld [vmem:[%s592 + $0x70] sm:%s585]
        %651 = vst [vmem:[%s593 + $0x70] sm:%s585] %v650
        %v652 = vld [vmem:[%s592 + $0x78] sm:%s585]
        %653 = vst [vmem:[%s593 + $0x74] sm:%s585] %v652
        %v654 = vld [vmem:[%s592 + $0x74] sm:%s585]
        %655 = vst [vmem:[%s593 + $0x78] sm:%s585] %v654
        %v656 = vld [vmem:[%s592 + $0x7c] sm:%s585]
        %657 = vst [vmem:[%s593 + $0x7c] sm:%s585] %v656
        %v658 = vld [vmem:[%s592 + $0x80] sm:%s585]
        %659 = vst [vmem:[%s593 + $0x80] sm:%s585] %v658
        %v660 = vld [vmem:[%s592 + $0x88] sm:%s585]
        %661 = vst [vmem:[%s593 + $0x84] sm:%s585] %v660
        %v662 = vld [vmem:[%s592 + $0x84] sm:%s585]
        %663 = vst [vmem:[%s593 + $0x88] sm:%s585] %v662
        %v664 = vld [vmem:[%s592 + $0x8c] sm:%s585]
        %665 = vst [vmem:[%s593 + $0x8c] sm:%s585] %v664
        %v666 = vld [vmem:[%s592 + $0x90] sm:%s585]
        %667 = vst [vmem:[%s593 + $0x90] sm:%s585] %v666
        %v668 = vld [vmem:[%s592 + $0x98] sm:%s585]
        %669 = vst [vmem:[%s593 + $0x94] sm:%s585] %v668
        %v670 = vld [vmem:[%s592 + $0x94] sm:%s585]
        %671 = vst [vmem:[%s593 + $0x98] sm:%s585] %v670
        %v672 = vld [vmem:[%s592 + $0x9c] sm:%s585]
        %673 = vst [vmem:[%s593 + $0x9c] sm:%s585] %v672
        %v674 = vld [vmem:[%s592 + $0xa0] sm:%s585]
        %675 = vst [vmem:[%s593 + $0xa0] sm:%s585] %v674
        %v676 = vld [vmem:[%s592 + $0xa8] sm:%s585]
        %677 = vst [vmem:[%s593 + $0xa4] sm:%s585] %v676
        %v678 = vld [vmem:[%s592 + $0xa4] sm:%s585]
        %679 = vst [vmem:[%s593 + $0xa8] sm:%s585] %v678
        %v680 = vld [vmem:[%s592 + $0xac] sm:%s585]
        %681 = vst [vmem:[%s593 + $0xac] sm:%s585] %v680
        %v682 = vld [vmem:[%s592 + $0xb0] sm:%s585]
        %683 = vst [vmem:[%s593 + $0xb0] sm:%s585] %v682
        %v684 = vld [vmem:[%s592 + $0xb8] sm:%s585]
        %685 = vst [vmem:[%s593 + $0xb4] sm:%s585] %v684
        %v686 = vld [vmem:[%s592 + $0xb4] sm:%s585]
        %687 = vst [vmem:[%s593 + $0xb8] sm:%s585] %v686
        %v688 = vld [vmem:[%s592 + $0xbc] sm:%s585]
        %689 = vst [vmem:[%s593 + $0xbc] sm:%s585] %v688
        %v690 = vld [vmem:[%s592 + $0xc0] sm:%s585]
        %691 = vst [vmem:[%s593 + $0xc0] sm:%s585] %v690
        %v692 = vld [vmem:[%s592 + $0xc8] sm:%s585]
        %693 = vst [vmem:[%s593 + $0xc4] sm:%s585] %v692
        %v694 = vld [vmem:[%s592 + $0xc4] sm:%s585]
        %695 = vst [vmem:[%s593 + $0xc8] sm:%s585] %v694
        %v696 = vld [vmem:[%s592 + $0xcc] sm:%s585]
        %697 = vst [vmem:[%s593 + $0xcc] sm:%s585] %v696
        %v698 = vld [vmem:[%s592 + $0xd0] sm:%s585]
        %699 = vst [vmem:[%s593 + $0xd0] sm:%s585] %v698
        %v700 = vld [vmem:[%s592 + $0xd8] sm:%s585]
        %701 = vst [vmem:[%s593 + $0xd4] sm:%s585] %v700
        %v702 = vld [vmem:[%s592 + $0xd4] sm:%s585]
        %703 = vst [vmem:[%s593 + $0xd8] sm:%s585] %v702
        %v704 = vld [vmem:[%s592 + $0xdc] sm:%s585]
        %705 = vst [vmem:[%s593 + $0xdc] sm:%s585] %v704
        %v706 = vld [vmem:[%s592 + $0xe0] sm:%s585]
        %707 = vst [vmem:[%s593 + $0xe0] sm:%s585] %v706
        %v708 = vld [vmem:[%s592 + $0xe8] sm:%s585]
        %709 = vst [vmem:[%s593 + $0xe4] sm:%s585] %v708
        %v710 = vld [vmem:[%s592 + $0xe4] sm:%s585]
        %711 = vst [vmem:[%s593 + $0xe8] sm:%s585] %v710
        %v712 = vld [vmem:[%s592 + $0xec] sm:%s585]
        %713 = vst [vmem:[%s593 + $0xec] sm:%s585] %v712
        %v714 = vld [vmem:[%s592 + $0xf0] sm:%s585]
        %715 = vst [vmem:[%s593 + $0xf0] sm:%s585] %v714
        %v716 = vld [vmem:[%s592 + $0xf8] sm:%s585]
        %717 = vst [vmem:[%s593 + $0xf4] sm:%s585] %v716
        %v718 = vld [vmem:[%s592 + $0xf4] sm:%s585]
        %719 = vst [vmem:[%s593 + $0xf8] sm:%s585] %v718
        %v720 = vld [vmem:[%s592 + $0xfc] sm:%s585]
        %721 = vst [vmem:[%s593 + $0xfc] sm:%s585] %v720
        %v722 = vld [vmem:[%s592 + $0x100] sm:%s585]
        %723 = vst [vmem:[%s593 + $0x100] sm:%s585] %v722
        %v724 = vld [vmem:[%s592 + $0x108] sm:%s585]
        %725 = vst [vmem:[%s593 + $0x104] sm:%s585] %v724
        %v726 = vld [vmem:[%s592 + $0x104] sm:%s585]
        %727 = vst [vmem:[%s593 + $0x108] sm:%s585] %v726
        %v728 = vld [vmem:[%s592 + $0x10c] sm:%s585]
        %729 = vst [vmem:[%s593 + $0x10c] sm:%s585] %v728
        %v730 = vld [vmem:[%s592 + $0x110] sm:%s585]
        %731 = vst [vmem:[%s593 + $0x110] sm:%s585] %v730
        %v732 = vld [vmem:[%s592 + $0x118] sm:%s585]
        %733 = vst [vmem:[%s593 + $0x114] sm:%s585] %v732
        %v734 = vld [vmem:[%s592 + $0x114] sm:%s585]
        %735 = vst [vmem:[%s593 + $0x118] sm:%s585] %v734
        %v736 = vld [vmem:[%s592 + $0x11c] sm:%s585]
        %737 = vst [vmem:[%s593 + $0x11c] sm:%s585] %v736
        %v738 = vld [vmem:[%s592 + $0x120] sm:%s585]
        %739 = vst [vmem:[%s593 + $0x120] sm:%s585] %v738
        %v740 = vld [vmem:[%s592 + $0x128] sm:%s585]
        %741 = vst [vmem:[%s593 + $0x124] sm:%s585] %v740
        %v742 = vld [vmem:[%s592 + $0x124] sm:%s585]
        %743 = vst [vmem:[%s593 + $0x128] sm:%s585] %v742
        %v744 = vld [vmem:[%s592 + $0x12c] sm:%s585]
        %745 = vst [vmem:[%s593 + $0x12c] sm:%s585] %v744
        %v746 = vld [vmem:[%s592 + $0x130] sm:%s585]
        %747 = vst [vmem:[%s593 + $0x130] sm:%s585] %v746
        %v748 = vld [vmem:[%s592 + $0x138] sm:%s585]
        %749 = vst [vmem:[%s593 + $0x134] sm:%s585] %v748
        %v750 = vld [vmem:[%s592 + $0x134] sm:%s585]
        %751 = vst [vmem:[%s593 + $0x138] sm:%s585] %v750
        %v752 = vld [vmem:[%s592 + $0x13c] sm:%s585]
        %753 = vst [vmem:[%s593 + $0x13c] sm:%s585] %v752
        %v754 = vld [vmem:[%s592 + $0x140] sm:%s585]
        %755 = vst [vmem:[%s593 + $0x140] sm:%s585] %v754
        %v756 = vld [vmem:[%s592 + $0x148] sm:%s585]
        %757 = vst [vmem:[%s593 + $0x144] sm:%s585] %v756
        %v758 = vld [vmem:[%s592 + $0x144] sm:%s585]
        %759 = vst [vmem:[%s593 + $0x148] sm:%s585] %v758
        %v760 = vld [vmem:[%s592 + $0x14c] sm:%s585]
        %761 = vst [vmem:[%s593 + $0x14c] sm:%s585] %v760
        %v762 = vld [vmem:[%s592 + $0x150] sm:%s585]
        %763 = vst [vmem:[%s593 + $0x150] sm:%s585] %v762
        %v764 = vld [vmem:[%s592 + $0x158] sm:%s585]
        %765 = vst [vmem:[%s593 + $0x154] sm:%s585] %v764
        %v766 = vld [vmem:[%s592 + $0x154] sm:%s585]
        %767 = vst [vmem:[%s593 + $0x158] sm:%s585] %v766
        %v768 = vld [vmem:[%s592 + $0x15c] sm:%s585]
        %769 = vst [vmem:[%s593 + $0x15c] sm:%s585] %v768
        %v770 = vld [vmem:[%s592 + $0x160] sm:%s585]
        %771 = vst [vmem:[%s593 + $0x160] sm:%s585] %v770
        %v772 = vld [vmem:[%s592 + $0x168] sm:%s585]
        %773 = vst [vmem:[%s593 + $0x164] sm:%s585] %v772
        %v774 = vld [vmem:[%s592 + $0x164] sm:%s585]
        %775 = vst [vmem:[%s593 + $0x168] sm:%s585] %v774
        %v776 = vld [vmem:[%s592 + $0x16c] sm:%s585]
        %777 = vst [vmem:[%s593 + $0x16c] sm:%s585] %v776
        %v778 = vld [vmem:[%s592 + $0x170] sm:%s585]
        %779 = vst [vmem:[%s593 + $0x170] sm:%s585] %v778
        %v780 = vld [vmem:[%s592 + $0x178] sm:%s585]
        %781 = vst [vmem:[%s593 + $0x174] sm:%s585] %v780
        %v782 = vld [vmem:[%s592 + $0x174] sm:%s585]
        %783 = vst [vmem:[%s593 + $0x178] sm:%s585] %v782
        %v784 = vld [vmem:[%s592 + $0x17c] sm:%s585]
        %785 = vst [vmem:[%s593 + $0x17c] sm:%s585] %v784
        %v786 = vld [vmem:[%s592 + $0x180] sm:%s585]
        %787 = vst [vmem:[%s593 + $0x180] sm:%s585] %v786
        %v788 = vld [vmem:[%s592 + $0x188] sm:%s585]
        %789 = vst [vmem:[%s593 + $0x184] sm:%s585] %v788
        %v790 = vld [vmem:[%s592 + $0x184] sm:%s585]
        %791 = vst [vmem:[%s593 + $0x188] sm:%s585] %v790
        %v792 = vld [vmem:[%s592 + $0x18c] sm:%s585]
        %793 = vst [vmem:[%s593 + $0x18c] sm:%s585] %v792
        %v794 = vld [vmem:[%s592 + $0x190] sm:%s585]
        %795 = vst [vmem:[%s593 + $0x190] sm:%s585] %v794
        %v796 = vld [vmem:[%s592 + $0x198] sm:%s585]
        %797 = vst [vmem:[%s593 + $0x194] sm:%s585] %v796
        %v798 = vld [vmem:[%s592 + $0x194] sm:%s585]
        %799 = vst [vmem:[%s593 + $0x198] sm:%s585] %v798
        %v800 = vld [vmem:[%s592 + $0x19c] sm:%s585]
        %801 = vst [vmem:[%s593 + $0x19c] sm:%s585] %v800
        %v802 = vld [vmem:[%s592 + $0x1a0] sm:%s585]
        %803 = vst [vmem:[%s593 + $0x1a0] sm:%s585] %v802
        %v804 = vld [vmem:[%s592 + $0x1a8] sm:%s585]
        %805 = vst [vmem:[%s593 + $0x1a4] sm:%s585] %v804
        %v806 = vld [vmem:[%s592 + $0x1a4] sm:%s585]
        %807 = vst [vmem:[%s593 + $0x1a8] sm:%s585] %v806
        %v808 = vld [vmem:[%s592 + $0x1ac] sm:%s585]
        %809 = vst [vmem:[%s593 + $0x1ac] sm:%s585] %v808
        %v810 = vld [vmem:[%s592 + $0x1b0] sm:%s585]
        %811 = vst [vmem:[%s593 + $0x1b0] sm:%s585] %v810
        %v812 = vld [vmem:[%s592 + $0x1b8] sm:%s585]
        %813 = vst [vmem:[%s593 + $0x1b4] sm:%s585] %v812
        %v814 = vld [vmem:[%s592 + $0x1b4] sm:%s585]
        %815 = vst [vmem:[%s593 + $0x1b8] sm:%s585] %v814
        %v816 = vld [vmem:[%s592 + $0x1bc] sm:%s585]
        %817 = vst [vmem:[%s593 + $0x1bc] sm:%s585] %v816
        %v818 = vld [vmem:[%s592 + $0x1c0] sm:%s585]
        %819 = vst [vmem:[%s593 + $0x1c0] sm:%s585] %v818
        %v820 = vld [vmem:[%s592 + $0x1c8] sm:%s585]
        %821 = vst [vmem:[%s593 + $0x1c4] sm:%s585] %v820
        %v822 = vld [vmem:[%s592 + $0x1c4] sm:%s585]
        %823 = vst [vmem:[%s593 + $0x1c8] sm:%s585] %v822
        %v824 = vld [vmem:[%s592 + $0x1cc] sm:%s585]
        %825 = vst [vmem:[%s593 + $0x1cc] sm:%s585] %v824
        %v826 = vld [vmem:[%s592 + $0x1d0] sm:%s585]
        %827 = vst [vmem:[%s593 + $0x1d0] sm:%s585] %v826
        %v828 = vld [vmem:[%s592 + $0x1d8] sm:%s585]
        %829 = vst [vmem:[%s593 + $0x1d4] sm:%s585] %v828
        %v830 = vld [vmem:[%s592 + $0x1d4] sm:%s585]
        %831 = vst [vmem:[%s593 + $0x1d8] sm:%s585] %v830
        %v832 = vld [vmem:[%s592 + $0x1dc] sm:%s585]
        %833 = vst [vmem:[%s593 + $0x1dc] sm:%s585] %v832
        %v834 = vld [vmem:[%s592 + $0x1e0] sm:%s585]
        %835 = vst [vmem:[%s593 + $0x1e0] sm:%s585] %v834
        %v836 = vld [vmem:[%s592 + $0x1e8] sm:%s585]
        %837 = vst [vmem:[%s593 + $0x1e4] sm:%s585] %v836
        %v838 = vld [vmem:[%s592 + $0x1e4] sm:%s585]
        %839 = vst [vmem:[%s593 + $0x1e8] sm:%s585] %v838
        %v840 = vld [vmem:[%s592 + $0x1ec] sm:%s585]
        %841 = vst [vmem:[%s593 + $0x1ec] sm:%s585] %v840
        %v842 = vld [vmem:[%s592 + $0x1f0] sm:%s585]
        %843 = vst [vmem:[%s593 + $0x1f0] sm:%s585] %v842
        %v844 = vld [vmem:[%s592 + $0x1f8] sm:%s585]
        %845 = vst [vmem:[%s593 + $0x1f4] sm:%s585] %v844
        %v846 = vld [vmem:[%s592 + $0x1f4] sm:%s585]
        %847 = vst [vmem:[%s593 + $0x1f8] sm:%s585] %v846
        %v848 = vld [vmem:[%s592 + $0x1fc] sm:%s585]
        %849 = vst [vmem:[%s593 + $0x1fc] sm:%s585] %v848
        %v850 = vld [vmem:[%s592 + $0x200] sm:%s585]
        %851 = vst [vmem:[%s593 + $0x200] sm:%s585] %v850
        %v852 = vld [vmem:[%s592 + $0x208] sm:%s585]
        %853 = vst [vmem:[%s593 + $0x204] sm:%s585] %v852
        %v854 = vld [vmem:[%s592 + $0x204] sm:%s585]
        %855 = vst [vmem:[%s593 + $0x208] sm:%s585] %v854
        %v856 = vld [vmem:[%s592 + $0x20c] sm:%s585]
        %857 = vst [vmem:[%s593 + $0x20c] sm:%s585] %v856
        %v858 = vld [vmem:[%s592 + $0x210] sm:%s585]
        %859 = vst [vmem:[%s593 + $0x210] sm:%s585] %v858
        %v860 = vld [vmem:[%s592 + $0x218] sm:%s585]
        %861 = vst [vmem:[%s593 + $0x214] sm:%s585] %v860
        %v862 = vld [vmem:[%s592 + $0x214] sm:%s585]
        %863 = vst [vmem:[%s593 + $0x218] sm:%s585] %v862
        %v864 = vld [vmem:[%s592 + $0x21c] sm:%s585]
        %865 = vst [vmem:[%s593 + $0x21c] sm:%s585] %v864
        %v866 = vld [vmem:[%s592 + $0x220] sm:%s585]
        %867 = vst [vmem:[%s593 + $0x220] sm:%s585] %v866
        %v868 = vld [vmem:[%s592 + $0x228] sm:%s585]
        %869 = vst [vmem:[%s593 + $0x224] sm:%s585] %v868
        %v870 = vld [vmem:[%s592 + $0x224] sm:%s585]
        %871 = vst [vmem:[%s593 + $0x228] sm:%s585] %v870
        %v872 = vld [vmem:[%s592 + $0x22c] sm:%s585]
        %873 = vst [vmem:[%s593 + $0x22c] sm:%s585] %v872
        %v874 = vld [vmem:[%s592 + $0x230] sm:%s585]
        %875 = vst [vmem:[%s593 + $0x230] sm:%s585] %v874
        %v876 = vld [vmem:[%s592 + $0x238] sm:%s585]
        %877 = vst [vmem:[%s593 + $0x234] sm:%s585] %v876
        %v878 = vld [vmem:[%s592 + $0x234] sm:%s585]
        %879 = vst [vmem:[%s593 + $0x238] sm:%s585] %v878
        %v880 = vld [vmem:[%s592 + $0x23c] sm:%s585]
        %881 = vst [vmem:[%s593 + $0x23c] sm:%s585] %v880
        %v882 = vld [vmem:[%s592 + $0x240] sm:%s585]
        %883 = vst [vmem:[%s593 + $0x240] sm:%s585] %v882
        %v884 = vld [vmem:[%s592 + $0x248] sm:%s585]
        %885 = vst [vmem:[%s593 + $0x244] sm:%s585] %v884
        %v886 = vld [vmem:[%s592 + $0x244] sm:%s585]
        %887 = vst [vmem:[%s593 + $0x248] sm:%s585] %v886
        %v888 = vld [vmem:[%s592 + $0x24c] sm:%s585]
        %889 = vst [vmem:[%s593 + $0x24c] sm:%s585] %v888
        %v890 = vld [vmem:[%s592 + $0x250] sm:%s585]
        %891 = vst [vmem:[%s593 + $0x250] sm:%s585] %v890
        %v892 = vld [vmem:[%s592 + $0x258] sm:%s585]
        %893 = vst [vmem:[%s593 + $0x254] sm:%s585] %v892
        %v894 = vld [vmem:[%s592 + $0x254] sm:%s585]
        %895 = vst [vmem:[%s593 + $0x258] sm:%s585] %v894
        %v896 = vld [vmem:[%s592 + $0x25c] sm:%s585]
        %897 = vst [vmem:[%s593 + $0x25c] sm:%s585] %v896
        %v898 = vld [vmem:[%s592 + $0x260] sm:%s585]
        %899 = vst [vmem:[%s593 + $0x260] sm:%s585] %v898
        %v900 = vld [vmem:[%s592 + $0x268] sm:%s585]
        %901 = vst [vmem:[%s593 + $0x264] sm:%s585] %v900
        %v902 = vld [vmem:[%s592 + $0x264] sm:%s585]
        %903 = vst [vmem:[%s593 + $0x268] sm:%s585] %v902
        %v904 = vld [vmem:[%s592 + $0x26c] sm:%s585]
        %905 = vst [vmem:[%s593 + $0x26c] sm:%s585] %v904
        %v906 = vld [vmem:[%s592 + $0x270] sm:%s585]
        %907 = vst [vmem:[%s593 + $0x270] sm:%s585] %v906
        %v908 = vld [vmem:[%s592 + $0x278] sm:%s585]
        %909 = vst [vmem:[%s593 + $0x274] sm:%s585] %v908
        %v910 = vld [vmem:[%s592 + $0x274] sm:%s585]
        %911 = vst [vmem:[%s593 + $0x278] sm:%s585] %v910
        %v912 = vld [vmem:[%s592 + $0x27c] sm:%s585]
        %913 = vst [vmem:[%s593 + $0x27c] sm:%s585] %v912
        %v914 = vld [vmem:[%s592 + $0x280] sm:%s585]
        %915 = vst [vmem:[%s593 + $0x280] sm:%s585] %v914
        %v916 = vld [vmem:[%s592 + $0x288] sm:%s585]
        %917 = vst [vmem:[%s593 + $0x284] sm:%s585] %v916
        %v918 = vld [vmem:[%s592 + $0x284] sm:%s585]
        %919 = vst [vmem:[%s593 + $0x288] sm:%s585] %v918
        %v920 = vld [vmem:[%s592 + $0x28c] sm:%s585]
        %921 = vst [vmem:[%s593 + $0x28c] sm:%s585] %v920
        %v922 = vld [vmem:[%s592 + $0x290] sm:%s585]
        %923 = vst [vmem:[%s593 + $0x290] sm:%s585] %v922
        %v924 = vld [vmem:[%s592 + $0x298] sm:%s585]
        %925 = vst [vmem:[%s593 + $0x294] sm:%s585] %v924
        %v926 = vld [vmem:[%s592 + $0x294] sm:%s585]
        %927 = vst [vmem:[%s593 + $0x298] sm:%s585] %v926
        %v928 = vld [vmem:[%s592 + $0x29c] sm:%s585]
        %929 = vst [vmem:[%s593 + $0x29c] sm:%s585] %v928
        %v930 = vld [vmem:[%s592 + $0x2a0] sm:%s585]
        %931 = vst [vmem:[%s593 + $0x2a0] sm:%s585] %v930
        %v932 = vld [vmem:[%s592 + $0x2a8] sm:%s585]
        %933 = vst [vmem:[%s593 + $0x2a4] sm:%s585] %v932
        %v934 = vld [vmem:[%s592 + $0x2a4] sm:%s585]
        %935 = vst [vmem:[%s593 + $0x2a8] sm:%s585] %v934
        %v936 = vld [vmem:[%s592 + $0x2ac] sm:%s585]
        %937 = vst [vmem:[%s593 + $0x2ac] sm:%s585] %v936
        %v938 = vld [vmem:[%s592 + $0x2b0] sm:%s585]
        %939 = vst [vmem:[%s593 + $0x2b0] sm:%s585] %v938
        %v940 = vld [vmem:[%s592 + $0x2b8] sm:%s585]
        %941 = vst [vmem:[%s593 + $0x2b4] sm:%s585] %v940
        %v942 = vld [vmem:[%s592 + $0x2b4] sm:%s585]
        %943 = vst [vmem:[%s593 + $0x2b8] sm:%s585] %v942
        %v944 = vld [vmem:[%s592 + $0x2bc] sm:%s585]
        %945 = vst [vmem:[%s593 + $0x2bc] sm:%s585] %v944
        %v946 = vld [vmem:[%s592 + $0x2c0] sm:%s585]
        %947 = vst [vmem:[%s593 + $0x2c0] sm:%s585] %v946
        %v948 = vld [vmem:[%s592 + $0x2c8] sm:%s585]
        %949 = vst [vmem:[%s593 + $0x2c4] sm:%s585] %v948
        %v950 = vld [vmem:[%s592 + $0x2c4] sm:%s585]
        %951 = vst [vmem:[%s593 + $0x2c8] sm:%s585] %v950
        %v952 = vld [vmem:[%s592 + $0x2cc] sm:%s585]
        %953 = vst [vmem:[%s593 + $0x2cc] sm:%s585] %v952
        %v954 = vld [vmem:[%s592 + $0x2d0] sm:%s585]
        %955 = vst [vmem:[%s593 + $0x2d0] sm:%s585] %v954
        %v956 = vld [vmem:[%s592 + $0x2d8] sm:%s585]
        %957 = vst [vmem:[%s593 + $0x2d4] sm:%s585] %v956
        %v958 = vld [vmem:[%s592 + $0x2d4] sm:%s585]
        %959 = vst [vmem:[%s593 + $0x2d8] sm:%s585] %v958
        %v960 = vld [vmem:[%s592 + $0x2dc] sm:%s585]
        %961 = vst [vmem:[%s593 + $0x2dc] sm:%s585] %v960
        %v962 = vld [vmem:[%s592 + $0x2e0] sm:%s585]
        %963 = vst [vmem:[%s593 + $0x2e0] sm:%s585] %v962
        %v964 = vld [vmem:[%s592 + $0x2e8] sm:%s585]
        %965 = vst [vmem:[%s593 + $0x2e4] sm:%s585] %v964
        %v966 = vld [vmem:[%s592 + $0x2e4] sm:%s585]
        %967 = vst [vmem:[%s593 + $0x2e8] sm:%s585] %v966
        %v968 = vld [vmem:[%s592 + $0x2ec] sm:%s585]
        %969 = vst [vmem:[%s593 + $0x2ec] sm:%s585] %v968
        %v970 = vld [vmem:[%s592 + $0x2f0] sm:%s585]
        %971 = vst [vmem:[%s593 + $0x2f0] sm:%s585] %v970
        %v972 = vld [vmem:[%s592 + $0x2f8] sm:%s585]
        %973 = vst [vmem:[%s593 + $0x2f4] sm:%s585] %v972
        %v974 = vld [vmem:[%s592 + $0x2f4] sm:%s585]
        %975 = vst [vmem:[%s593 + $0x2f8] sm:%s585] %v974
        %v976 = vld [vmem:[%s592 + $0x2fc] sm:%s585]
        %977 = vst [vmem:[%s593 + $0x2fc] sm:%s585] %v976
        %v978 = vld [vmem:[%s592 + $0x300] sm:%s585]
        %979 = vst [vmem:[%s593 + $0x300] sm:%s585] %v978
        %v980 = vld [vmem:[%s592 + $0x308] sm:%s585]
        %981 = vst [vmem:[%s593 + $0x304] sm:%s585] %v980
        %v982 = vld [vmem:[%s592 + $0x304] sm:%s585]
        %983 = vst [vmem:[%s593 + $0x308] sm:%s585] %v982
        %v984 = vld [vmem:[%s592 + $0x30c] sm:%s585]
        %985 = vst [vmem:[%s593 + $0x30c] sm:%s585] %v984
        %v986 = vld [vmem:[%s592 + $0x310] sm:%s585]
        %987 = vst [vmem:[%s593 + $0x310] sm:%s585] %v986
        %v988 = vld [vmem:[%s592 + $0x318] sm:%s585]
        %989 = vst [vmem:[%s593 + $0x314] sm:%s585] %v988
        %v990 = vld [vmem:[%s592 + $0x314] sm:%s585]
        %991 = vst [vmem:[%s593 + $0x318] sm:%s585] %v990
        %v992 = vld [vmem:[%s592 + $0x31c] sm:%s585]
        %993 = vst [vmem:[%s593 + $0x31c] sm:%s585] %v992
        %v994 = vld [vmem:[%s592 + $0x320] sm:%s585]
        %995 = vst [vmem:[%s593 + $0x320] sm:%s585] %v994
        %v996 = vld [vmem:[%s592 + $0x328] sm:%s585]
        %997 = vst [vmem:[%s593 + $0x324] sm:%s585] %v996
        %v998 = vld [vmem:[%s592 + $0x324] sm:%s585]
        %999 = vst [vmem:[%s593 + $0x328] sm:%s585] %v998
        %v1000 = vld [vmem:[%s592 + $0x32c] sm:%s585]
        %1001 = vst [vmem:[%s593 + $0x32c] sm:%s585] %v1000
        %v1002 = vld [vmem:[%s592 + $0x330] sm:%s585]
        %1003 = vst [vmem:[%s593 + $0x330] sm:%s585] %v1002
        %v1004 = vld [vmem:[%s592 + $0x338] sm:%s585]
        %1005 = vst [vmem:[%s593 + $0x334] sm:%s585] %v1004
        %v1006 = vld [vmem:[%s592 + $0x334] sm:%s585]
        %1007 = vst [vmem:[%s593 + $0x338] sm:%s585] %v1006
        %v1008 = vld [vmem:[%s592 + $0x33c] sm:%s585]
        %1009 = vst [vmem:[%s593 + $0x33c] sm:%s585] %v1008
        %v1010 = vld [vmem:[%s592 + $0x340] sm:%s585]
        %1011 = vst [vmem:[%s593 + $0x340] sm:%s585] %v1010
        %v1012 = vld [vmem:[%s592 + $0x348] sm:%s585]
        %1013 = vst [vmem:[%s593 + $0x344] sm:%s585] %v1012
        %v1014 = vld [vmem:[%s592 + $0x344] sm:%s585]
        %1015 = vst [vmem:[%s593 + $0x348] sm:%s585] %v1014
        %v1016 = vld [vmem:[%s592 + $0x34c] sm:%s585]
        %1017 = vst [vmem:[%s593 + $0x34c] sm:%s585] %v1016
        %v1018 = vld [vmem:[%s592 + $0x350] sm:%s585]
        %1019 = vst [vmem:[%s593 + $0x350] sm:%s585] %v1018
        %v1020 = vld [vmem:[%s592 + $0x358] sm:%s585]
        %1021 = vst [vmem:[%s593 + $0x354] sm:%s585] %v1020
        %v1022 = vld [vmem:[%s592 + $0x354] sm:%s585]
        %1023 = vst [vmem:[%s593 + $0x358] sm:%s585] %v1022
        %v1024 = vld [vmem:[%s592 + $0x35c] sm:%s585]
        %1025 = vst [vmem:[%s593 + $0x35c] sm:%s585] %v1024
        %v1026 = vld [vmem:[%s592 + $0x360] sm:%s585]
        %1027 = vst [vmem:[%s593 + $0x360] sm:%s585] %v1026
        %v1028 = vld [vmem:[%s592 + $0x368] sm:%s585]
        %1029 = vst [vmem:[%s593 + $0x364] sm:%s585] %v1028
        %v1030 = vld [vmem:[%s592 + $0x364] sm:%s585]
        %1031 = vst [vmem:[%s593 + $0x368] sm:%s585] %v1030
        %v1032 = vld [vmem:[%s592 + $0x36c] sm:%s585]
        %1033 = vst [vmem:[%s593 + $0x36c] sm:%s585] %v1032
        %v1034 = vld [vmem:[%s592 + $0x370] sm:%s585]
        %1035 = vst [vmem:[%s593 + $0x370] sm:%s585] %v1034
        %v1036 = vld [vmem:[%s592 + $0x378] sm:%s585]
        %1037 = vst [vmem:[%s593 + $0x374] sm:%s585] %v1036
        %v1038 = vld [vmem:[%s592 + $0x374] sm:%s585]
        %1039 = vst [vmem:[%s593 + $0x378] sm:%s585] %v1038
        %v1040 = vld [vmem:[%s592 + $0x37c] sm:%s585]
        %1041 = vst [vmem:[%s593 + $0x37c] sm:%s585] %v1040
        %v1042 = vld [vmem:[%s592 + $0x380] sm:%s585]
        %1043 = vst [vmem:[%s593 + $0x380] sm:%s585] %v1042
        %v1044 = vld [vmem:[%s592 + $0x388] sm:%s585]
        %1045 = vst [vmem:[%s593 + $0x384] sm:%s585] %v1044
        %v1046 = vld [vmem:[%s592 + $0x384] sm:%s585]
        %1047 = vst [vmem:[%s593 + $0x388] sm:%s585] %v1046
        %v1048 = vld [vmem:[%s592 + $0x38c] sm:%s585]
        %1049 = vst [vmem:[%s593 + $0x38c] sm:%s585] %v1048
        %v1050 = vld [vmem:[%s592 + $0x390] sm:%s585]
        %1051 = vst [vmem:[%s593 + $0x390] sm:%s585] %v1050
        %v1052 = vld [vmem:[%s592 + $0x398] sm:%s585]
        %1053 = vst [vmem:[%s593 + $0x394] sm:%s585] %v1052
        %v1054 = vld [vmem:[%s592 + $0x394] sm:%s585]
        %1055 = vst [vmem:[%s593 + $0x398] sm:%s585] %v1054
        %v1056 = vld [vmem:[%s592 + $0x39c] sm:%s585]
        %1057 = vst [vmem:[%s593 + $0x39c] sm:%s585] %v1056
        %v1058 = vld [vmem:[%s592 + $0x3a0] sm:%s585]
        %1059 = vst [vmem:[%s593 + $0x3a0] sm:%s585] %v1058
        %v1060 = vld [vmem:[%s592 + $0x3a8] sm:%s585]
        %1061 = vst [vmem:[%s593 + $0x3a4] sm:%s585] %v1060
        %v1062 = vld [vmem:[%s592 + $0x3a4] sm:%s585]
        %1063 = vst [vmem:[%s593 + $0x3a8] sm:%s585] %v1062
        %v1064 = vld [vmem:[%s592 + $0x3ac] sm:%s585]
        %1065 = vst [vmem:[%s593 + $0x3ac] sm:%s585] %v1064
        %v1066 = vld [vmem:[%s592 + $0x3b0] sm:%s585]
        %1067 = vst [vmem:[%s593 + $0x3b0] sm:%s585] %v1066
        %v1068 = vld [vmem:[%s592 + $0x3b8] sm:%s585]
        %1069 = vst [vmem:[%s593 + $0x3b4] sm:%s585] %v1068
        %v1070 = vld [vmem:[%s592 + $0x3b4] sm:%s585]
        %1071 = vst [vmem:[%s593 + $0x3b8] sm:%s585] %v1070
        %v1072 = vld [vmem:[%s592 + $0x3bc] sm:%s585]
        %1073 = vst [vmem:[%s593 + $0x3bc] sm:%s585] %v1072
        %v1074 = vld [vmem:[%s592 + $0x3c0] sm:%s585]
        %1075 = vst [vmem:[%s593 + $0x3c0] sm:%s585] %v1074
        %v1076 = vld [vmem:[%s592 + $0x3c8] sm:%s585]
        %1077 = vst [vmem:[%s593 + $0x3c4] sm:%s585] %v1076
        %v1078 = vld [vmem:[%s592 + $0x3c4] sm:%s585]
        %1079 = vst [vmem:[%s593 + $0x3c8] sm:%s585] %v1078
        %v1080 = vld [vmem:[%s592 + $0x3cc] sm:%s585]
        %1081 = vst [vmem:[%s593 + $0x3cc] sm:%s585] %v1080
        %v1082 = vld [vmem:[%s592 + $0x3d0] sm:%s585]
        %1083 = vst [vmem:[%s593 + $0x3d0] sm:%s585] %v1082
        %v1084 = vld [vmem:[%s592 + $0x3d8] sm:%s585]
        %1085 = vst [vmem:[%s593 + $0x3d4] sm:%s585] %v1084
        %v1086 = vld [vmem:[%s592 + $0x3d4] sm:%s585]
        %1087 = vst [vmem:[%s593 + $0x3d8] sm:%s585] %v1086
        %v1088 = vld [vmem:[%s592 + $0x3dc] sm:%s585]
        %1089 = vst [vmem:[%s593 + $0x3dc] sm:%s585] %v1088
        %v1090 = vld [vmem:[%s592 + $0x3e0] sm:%s585]
        %1091 = vst [vmem:[%s593 + $0x3e0] sm:%s585] %v1090
        %v1092 = vld [vmem:[%s592 + $0x3e8] sm:%s585]
        %1093 = vst [vmem:[%s593 + $0x3e4] sm:%s585] %v1092
        %v1094 = vld [vmem:[%s592 + $0x3e4] sm:%s585]
        %1095 = vst [vmem:[%s593 + $0x3e8] sm:%s585] %v1094
        %v1096 = vld [vmem:[%s592 + $0x3ec] sm:%s585]
        %1097 = vst [vmem:[%s593 + $0x3ec] sm:%s585] %v1096
        %v1098 = vld [vmem:[%s592 + $0x3f0] sm:%s585]
        %1099 = vst [vmem:[%s593 + $0x3f0] sm:%s585] %v1098
        %v1100 = vld [vmem:[%s592 + $0x3f8] sm:%s585]
        %1101 = vst [vmem:[%s593 + $0x3f4] sm:%s585] %v1100
        %v1102 = vld [vmem:[%s592 + $0x3f4] sm:%s585]
        %1103 = vst [vmem:[%s593 + $0x3f8] sm:%s585] %v1102
        %v1104 = vld [vmem:[%s592 + $0x3fc] sm:%s585]
        %1105 = vst [vmem:[%s593 + $0x3fc] sm:%s585] %v1104
      $region72: #{net_forward.1} parent=59 // loop_footer
        %s591 = sadd.s32 1, %s587
      $region73: #{net_forward.1} parent=59 // loop_footer_branch
        %586 = sbr.rel target = $region69
      $region74: #{net_forward.1} parent=59 // loop_exit
        _
    $region60: #{net_forward.1} parent=44 // pred_fallthru
      _
  $region45: #{net_forward.1} parent=0 // pred_fallthru
    _
  // Predicated region
  $region46: #{net_forward.1} parent=0 // pred_check
    %p43 = pneg %p39
  $region47: #{net_forward.1} parent=0 // pred_check_branch
    %45 = sbr.rel (%p43) target = $region49
  $region48: #{net_forward.1} parent=0 // pred_region
    %s46 = sshllo.u32 0, 4
    loop: start=0, step=1, limit=1
    $region50: #{net_forward.1} parent=48 // loop_pre_header
      _
    $region51: #{net_forward.1} parent=48 // loop_header
      %s48 = sphi 0, %s52
      %p49 = scmp.ge.s32.totalorder %s48, 1
      %s53 = sphi %s10, %s10
      %s54 = sphi [#allocation4], [#allocation4]
    $region52: #{net_forward.1} parent=48 // loop_header_branch
      %51 = sbr.rel (%p49) target = $region56
    $region53: #{net_forward.1} parent=48 // loop_body
      %v55 = vld [vmem:[%s53] sm:%s46]
      %56 = vst [vmem:[%s54] sm:%s46] %v55
      %v57 = vld [vmem:[%s53 + $0x8] sm:%s46]
      %58 = vst [vmem:[%s54 + $0x4] sm:%s46] %v57
      %v59 = vld [vmem:[%s53 + $0x4] sm:%s46]
      %60 = vst [vmem:[%s54 + $0x8] sm:%s46] %v59
      %v61 = vld [vmem:[%s53 + $0xc] sm:%s46]
      %62 = vst [vmem:[%s54 + $0xc] sm:%s46] %v61
      %v63 = vld [vmem:[%s53 + $0x10] sm:%s46]
      %64 = vst [vmem:[%s54 + $0x10] sm:%s46] %v63
      %v65 = vld [vmem:[%s53 + $0x18] sm:%s46]
      %66 = vst [vmem:[%s54 + $0x14] sm:%s46] %v65
      %v67 = vld [vmem:[%s53 + $0x14] sm:%s46]
      %68 = vst [vmem:[%s54 + $0x18] sm:%s46] %v67
      %v69 = vld [vmem:[%s53 + $0x1c] sm:%s46]
      %70 = vst [vmem:[%s54 + $0x1c] sm:%s46] %v69
      %v71 = vld [vmem:[%s53 + $0x20] sm:%s46]
      %72 = vst [vmem:[%s54 + $0x20] sm:%s46] %v71
      %v73 = vld [vmem:[%s53 + $0x28] sm:%s46]
      %74 = vst [vmem:[%s54 + $0x24] sm:%s46] %v73
      %v75 = vld [vmem:[%s53 + $0x24] sm:%s46]
      %76 = vst [vmem:[%s54 + $0x28] sm:%s46] %v75
      %v77 = vld [vmem:[%s53 + $0x2c] sm:%s46]
      %78 = vst [vmem:[%s54 + $0x2c] sm:%s46] %v77
      %v79 = vld [vmem:[%s53 + $0x30] sm:%s46]
      %80 = vst [vmem:[%s54 + $0x30] sm:%s46] %v79
      %v81 = vld [vmem:[%s53 + $0x38] sm:%s46]
      %82 = vst [vmem:[%s54 + $0x34] sm:%s46] %v81
      %v83 = vld [vmem:[%s53 + $0x34] sm:%s46]
      %84 = vst [vmem:[%s54 + $0x38] sm:%s46] %v83
      %v85 = vld [vmem:[%s53 + $0x3c] sm:%s46]
      %86 = vst [vmem:[%s54 + $0x3c] sm:%s46] %v85
      %v87 = vld [vmem:[%s53 + $0x40] sm:%s46]
      %88 = vst [vmem:[%s54 + $0x40] sm:%s46] %v87
      %v89 = vld [vmem:[%s53 + $0x48] sm:%s46]
      %90 = vst [vmem:[%s54 + $0x44] sm:%s46] %v89
      %v91 = vld [vmem:[%s53 + $0x44] sm:%s46]
      %92 = vst [vmem:[%s54 + $0x48] sm:%s46] %v91
      %v93 = vld [vmem:[%s53 + $0x4c] sm:%s46]
      %94 = vst [vmem:[%s54 + $0x4c] sm:%s46] %v93
      %v95 = vld [vmem:[%s53 + $0x50] sm:%s46]
      %96 = vst [vmem:[%s54 + $0x50] sm:%s46] %v95
      %v97 = vld [vmem:[%s53 + $0x58] sm:%s46]
      %98 = vst [vmem:[%s54 + $0x54] sm:%s46] %v97
      %v99 = vld [vmem:[%s53 + $0x54] sm:%s46]
      %100 = vst [vmem:[%s54 + $0x58] sm:%s46] %v99
      %v101 = vld [vmem:[%s53 + $0x5c] sm:%s46]
      %102 = vst [vmem:[%s54 + $0x5c] sm:%s46] %v101
      %v103 = vld [vmem:[%s53 + $0x60] sm:%s46]
      %104 = vst [vmem:[%s54 + $0x60] sm:%s46] %v103
      %v105 = vld [vmem:[%s53 + $0x68] sm:%s46]
      %106 = vst [vmem:[%s54 + $0x64] sm:%s46] %v105
      %v107 = vld [vmem:[%s53 + $0x64] sm:%s46]
      %108 = vst [vmem:[%s54 + $0x68] sm:%s46] %v107
      %v109 = vld [vmem:[%s53 + $0x6c] sm:%s46]
      %110 = vst [vmem:[%s54 + $0x6c] sm:%s46] %v109
      %v111 = vld [vmem:[%s53 + $0x70] sm:%s46]
      %112 = vst [vmem:[%s54 + $0x70] sm:%s46] %v111
      %v113 = vld [vmem:[%s53 + $0x78] sm:%s46]
      %114 = vst [vmem:[%s54 + $0x74] sm:%s46] %v113
      %v115 = vld [vmem:[%s53 + $0x74] sm:%s46]
      %116 = vst [vmem:[%s54 + $0x78] sm:%s46] %v115
      %v117 = vld [vmem:[%s53 + $0x7c] sm:%s46]
      %118 = vst [vmem:[%s54 + $0x7c] sm:%s46] %v117
      %v119 = vld [vmem:[%s53 + $0x80] sm:%s46]
      %120 = vst [vmem:[%s54 + $0x80] sm:%s46] %v119
      %v121 = vld [vmem:[%s53 + $0x88] sm:%s46]
      %122 = vst [vmem:[%s54 + $0x84] sm:%s46] %v121
      %v123 = vld [vmem:[%s53 + $0x84] sm:%s46]
      %124 = vst [vmem:[%s54 + $0x88] sm:%s46] %v123
      %v125 = vld [vmem:[%s53 + $0x8c] sm:%s46]
      %126 = vst [vmem:[%s54 + $0x8c] sm:%s46] %v125
      %v127 = vld [vmem:[%s53 + $0x90] sm:%s46]
      %128 = vst [vmem:[%s54 + $0x90] sm:%s46] %v127
      %v129 = vld [vmem:[%s53 + $0x98] sm:%s46]
      %130 = vst [vmem:[%s54 + $0x94] sm:%s46] %v129
      %v131 = vld [vmem:[%s53 + $0x94] sm:%s46]
      %132 = vst [vmem:[%s54 + $0x98] sm:%s46] %v131
      %v133 = vld [vmem:[%s53 + $0x9c] sm:%s46]
      %134 = vst [vmem:[%s54 + $0x9c] sm:%s46] %v133
      %v135 = vld [vmem:[%s53 + $0xa0] sm:%s46]
      %136 = vst [vmem:[%s54 + $0xa0] sm:%s46] %v135
      %v137 = vld [vmem:[%s53 + $0xa8] sm:%s46]
      %138 = vst [vmem:[%s54 + $0xa4] sm:%s46] %v137
      %v139 = vld [vmem:[%s53 + $0xa4] sm:%s46]
      %140 = vst [vmem:[%s54 + $0xa8] sm:%s46] %v139
      %v141 = vld [vmem:[%s53 + $0xac] sm:%s46]
      %142 = vst [vmem:[%s54 + $0xac] sm:%s46] %v141
      %v143 = vld [vmem:[%s53 + $0xb0] sm:%s46]
      %144 = vst [vmem:[%s54 + $0xb0] sm:%s46] %v143
      %v145 = vld [vmem:[%s53 + $0xb8] sm:%s46]
      %146 = vst [vmem:[%s54 + $0xb4] sm:%s46] %v145
      %v147 = vld [vmem:[%s53 + $0xb4] sm:%s46]
      %148 = vst [vmem:[%s54 + $0xb8] sm:%s46] %v147
      %v149 = vld [vmem:[%s53 + $0xbc] sm:%s46]
      %150 = vst [vmem:[%s54 + $0xbc] sm:%s46] %v149
      %v151 = vld [vmem:[%s53 + $0xc0] sm:%s46]
      %152 = vst [vmem:[%s54 + $0xc0] sm:%s46] %v151
      %v153 = vld [vmem:[%s53 + $0xc8] sm:%s46]
      %154 = vst [vmem:[%s54 + $0xc4] sm:%s46] %v153
      %v155 = vld [vmem:[%s53 + $0xc4] sm:%s46]
      %156 = vst [vmem:[%s54 + $0xc8] sm:%s46] %v155
      %v157 = vld [vmem:[%s53 + $0xcc] sm:%s46]
      %158 = vst [vmem:[%s54 + $0xcc] sm:%s46] %v157
      %v159 = vld [vmem:[%s53 + $0xd0] sm:%s46]
      %160 = vst [vmem:[%s54 + $0xd0] sm:%s46] %v159
      %v161 = vld [vmem:[%s53 + $0xd8] sm:%s46]
      %162 = vst [vmem:[%s54 + $0xd4] sm:%s46] %v161
      %v163 = vld [vmem:[%s53 + $0xd4] sm:%s46]
      %164 = vst [vmem:[%s54 + $0xd8] sm:%s46] %v163
      %v165 = vld [vmem:[%s53 + $0xdc] sm:%s46]
      %166 = vst [vmem:[%s54 + $0xdc] sm:%s46] %v165
      %v167 = vld [vmem:[%s53 + $0xe0] sm:%s46]
      %168 = vst [vmem:[%s54 + $0xe0] sm:%s46] %v167
      %v169 = vld [vmem:[%s53 + $0xe8] sm:%s46]
      %170 = vst [vmem:[%s54 + $0xe4] sm:%s46] %v169
      %v171 = vld [vmem:[%s53 + $0xe4] sm:%s46]
      %172 = vst [vmem:[%s54 + $0xe8] sm:%s46] %v171
      %v173 = vld [vmem:[%s53 + $0xec] sm:%s46]
      %174 = vst [vmem:[%s54 + $0xec] sm:%s46] %v173
      %v175 = vld [vmem:[%s53 + $0xf0] sm:%s46]
      %176 = vst [vmem:[%s54 + $0xf0] sm:%s46] %v175
      %v177 = vld [vmem:[%s53 + $0xf8] sm:%s46]
      %178 = vst [vmem:[%s54 + $0xf4] sm:%s46] %v177
      %v179 = vld [vmem:[%s53 + $0xf4] sm:%s46]
      %180 = vst [vmem:[%s54 + $0xf8] sm:%s46] %v179
      %v181 = vld [vmem:[%s53 + $0xfc] sm:%s46]
      %182 = vst [vmem:[%s54 + $0xfc] sm:%s46] %v181
      %v183 = vld [vmem:[%s53 + $0x100] sm:%s46]
      %184 = vst [vmem:[%s54 + $0x100] sm:%s46] %v183
      %v185 = vld [vmem:[%s53 + $0x108] sm:%s46]
      %186 = vst [vmem:[%s54 + $0x104] sm:%s46] %v185
      %v187 = vld [vmem:[%s53 + $0x104] sm:%s46]
      %188 = vst [vmem:[%s54 + $0x108] sm:%s46] %v187
      %v189 = vld [vmem:[%s53 + $0x10c] sm:%s46]
      %190 = vst [vmem:[%s54 + $0x10c] sm:%s46] %v189
      %v191 = vld [vmem:[%s53 + $0x110] sm:%s46]
      %192 = vst [vmem:[%s54 + $0x110] sm:%s46] %v191
      %v193 = vld [vmem:[%s53 + $0x118] sm:%s46]
      %194 = vst [vmem:[%s54 + $0x114] sm:%s46] %v193
      %v195 = vld [vmem:[%s53 + $0x114] sm:%s46]
      %196 = vst [vmem:[%s54 + $0x118] sm:%s46] %v195
      %v197 = vld [vmem:[%s53 + $0x11c] sm:%s46]
      %198 = vst [vmem:[%s54 + $0x11c] sm:%s46] %v197
      %v199 = vld [vmem:[%s53 + $0x120] sm:%s46]
      %200 = vst [vmem:[%s54 + $0x120] sm:%s46] %v199
      %v201 = vld [vmem:[%s53 + $0x128] sm:%s46]
      %202 = vst [vmem:[%s54 + $0x124] sm:%s46] %v201
      %v203 = vld [vmem:[%s53 + $0x124] sm:%s46]
      %204 = vst [vmem:[%s54 + $0x128] sm:%s46] %v203
      %v205 = vld [vmem:[%s53 + $0x12c] sm:%s46]
      %206 = vst [vmem:[%s54 + $0x12c] sm:%s46] %v205
      %v207 = vld [vmem:[%s53 + $0x130] sm:%s46]
      %208 = vst [vmem:[%s54 + $0x130] sm:%s46] %v207
      %v209 = vld [vmem:[%s53 + $0x138] sm:%s46]
      %210 = vst [vmem:[%s54 + $0x134] sm:%s46] %v209
      %v211 = vld [vmem:[%s53 + $0x134] sm:%s46]
      %212 = vst [vmem:[%s54 + $0x138] sm:%s46] %v211
      %v213 = vld [vmem:[%s53 + $0x13c] sm:%s46]
      %214 = vst [vmem:[%s54 + $0x13c] sm:%s46] %v213
      %v215 = vld [vmem:[%s53 + $0x140] sm:%s46]
      %216 = vst [vmem:[%s54 + $0x140] sm:%s46] %v215
      %v217 = vld [vmem:[%s53 + $0x148] sm:%s46]
      %218 = vst [vmem:[%s54 + $0x144] sm:%s46] %v217
      %v219 = vld [vmem:[%s53 + $0x144] sm:%s46]
      %220 = vst [vmem:[%s54 + $0x148] sm:%s46] %v219
      %v221 = vld [vmem:[%s53 + $0x14c] sm:%s46]
      %222 = vst [vmem:[%s54 + $0x14c] sm:%s46] %v221
      %v223 = vld [vmem:[%s53 + $0x150] sm:%s46]
      %224 = vst [vmem:[%s54 + $0x150] sm:%s46] %v223
      %v225 = vld [vmem:[%s53 + $0x158] sm:%s46]
      %226 = vst [vmem:[%s54 + $0x154] sm:%s46] %v225
      %v227 = vld [vmem:[%s53 + $0x154] sm:%s46]
      %228 = vst [vmem:[%s54 + $0x158] sm:%s46] %v227
      %v229 = vld [vmem:[%s53 + $0x15c] sm:%s46]
      %230 = vst [vmem:[%s54 + $0x15c] sm:%s46] %v229
      %v231 = vld [vmem:[%s53 + $0x160] sm:%s46]
      %232 = vst [vmem:[%s54 + $0x160] sm:%s46] %v231
      %v233 = vld [vmem:[%s53 + $0x168] sm:%s46]
      %234 = vst [vmem:[%s54 + $0x164] sm:%s46] %v233
      %v235 = vld [vmem:[%s53 + $0x164] sm:%s46]
      %236 = vst [vmem:[%s54 + $0x168] sm:%s46] %v235
      %v237 = vld [vmem:[%s53 + $0x16c] sm:%s46]
      %238 = vst [vmem:[%s54 + $0x16c] sm:%s46] %v237
      %v239 = vld [vmem:[%s53 + $0x170] sm:%s46]
      %240 = vst [vmem:[%s54 + $0x170] sm:%s46] %v239
      %v241 = vld [vmem:[%s53 + $0x178] sm:%s46]
      %242 = vst [vmem:[%s54 + $0x174] sm:%s46] %v241
      %v243 = vld [vmem:[%s53 + $0x174] sm:%s46]
      %244 = vst [vmem:[%s54 + $0x178] sm:%s46] %v243
      %v245 = vld [vmem:[%s53 + $0x17c] sm:%s46]
      %246 = vst [vmem:[%s54 + $0x17c] sm:%s46] %v245
      %v247 = vld [vmem:[%s53 + $0x180] sm:%s46]
      %248 = vst [vmem:[%s54 + $0x180] sm:%s46] %v247
      %v249 = vld [vmem:[%s53 + $0x188] sm:%s46]
      %250 = vst [vmem:[%s54 + $0x184] sm:%s46] %v249
      %v251 = vld [vmem:[%s53 + $0x184] sm:%s46]
      %252 = vst [vmem:[%s54 + $0x188] sm:%s46] %v251
      %v253 = vld [vmem:[%s53 + $0x18c] sm:%s46]
      %254 = vst [vmem:[%s54 + $0x18c] sm:%s46] %v253
      %v255 = vld [vmem:[%s53 + $0x190] sm:%s46]
      %256 = vst [vmem:[%s54 + $0x190] sm:%s46] %v255
      %v257 = vld [vmem:[%s53 + $0x198] sm:%s46]
      %258 = vst [vmem:[%s54 + $0x194] sm:%s46] %v257
      %v259 = vld [vmem:[%s53 + $0x194] sm:%s46]
      %260 = vst [vmem:[%s54 + $0x198] sm:%s46] %v259
      %v261 = vld [vmem:[%s53 + $0x19c] sm:%s46]
      %262 = vst [vmem:[%s54 + $0x19c] sm:%s46] %v261
      %v263 = vld [vmem:[%s53 + $0x1a0] sm:%s46]
      %264 = vst [vmem:[%s54 + $0x1a0] sm:%s46] %v263
      %v265 = vld [vmem:[%s53 + $0x1a8] sm:%s46]
      %266 = vst [vmem:[%s54 + $0x1a4] sm:%s46] %v265
      %v267 = vld [vmem:[%s53 + $0x1a4] sm:%s46]
      %268 = vst [vmem:[%s54 + $0x1a8] sm:%s46] %v267
      %v269 = vld [vmem:[%s53 + $0x1ac] sm:%s46]
      %270 = vst [vmem:[%s54 + $0x1ac] sm:%s46] %v269
      %v271 = vld [vmem:[%s53 + $0x1b0] sm:%s46]
      %272 = vst [vmem:[%s54 + $0x1b0] sm:%s46] %v271
      %v273 = vld [vmem:[%s53 + $0x1b8] sm:%s46]
      %274 = vst [vmem:[%s54 + $0x1b4] sm:%s46] %v273
      %v275 = vld [vmem:[%s53 + $0x1b4] sm:%s46]
      %276 = vst [vmem:[%s54 + $0x1b8] sm:%s46] %v275
      %v277 = vld [vmem:[%s53 + $0x1bc] sm:%s46]
      %278 = vst [vmem:[%s54 + $0x1bc] sm:%s46] %v277
      %v279 = vld [vmem:[%s53 + $0x1c0] sm:%s46]
      %280 = vst [vmem:[%s54 + $0x1c0] sm:%s46] %v279
      %v281 = vld [vmem:[%s53 + $0x1c8] sm:%s46]
      %282 = vst [vmem:[%s54 + $0x1c4] sm:%s46] %v281
      %v283 = vld [vmem:[%s53 + $0x1c4] sm:%s46]
      %284 = vst [vmem:[%s54 + $0x1c8] sm:%s46] %v283
      %v285 = vld [vmem:[%s53 + $0x1cc] sm:%s46]
      %286 = vst [vmem:[%s54 + $0x1cc] sm:%s46] %v285
      %v287 = vld [vmem:[%s53 + $0x1d0] sm:%s46]
      %288 = vst [vmem:[%s54 + $0x1d0] sm:%s46] %v287
      %v289 = vld [vmem:[%s53 + $0x1d8] sm:%s46]
      %290 = vst [vmem:[%s54 + $0x1d4] sm:%s46] %v289
      %v291 = vld [vmem:[%s53 + $0x1d4] sm:%s46]
      %292 = vst [vmem:[%s54 + $0x1d8] sm:%s46] %v291
      %v293 = vld [vmem:[%s53 + $0x1dc] sm:%s46]
      %294 = vst [vmem:[%s54 + $0x1dc] sm:%s46] %v293
      %v295 = vld [vmem:[%s53 + $0x1e0] sm:%s46]
      %296 = vst [vmem:[%s54 + $0x1e0] sm:%s46] %v295
      %v297 = vld [vmem:[%s53 + $0x1e8] sm:%s46]
      %298 = vst [vmem:[%s54 + $0x1e4] sm:%s46] %v297
      %v299 = vld [vmem:[%s53 + $0x1e4] sm:%s46]
      %300 = vst [vmem:[%s54 + $0x1e8] sm:%s46] %v299
      %v301 = vld [vmem:[%s53 + $0x1ec] sm:%s46]
      %302 = vst [vmem:[%s54 + $0x1ec] sm:%s46] %v301
      %v303 = vld [vmem:[%s53 + $0x1f0] sm:%s46]
      %304 = vst [vmem:[%s54 + $0x1f0] sm:%s46] %v303
      %v305 = vld [vmem:[%s53 + $0x1f8] sm:%s46]
      %306 = vst [vmem:[%s54 + $0x1f4] sm:%s46] %v305
      %v307 = vld [vmem:[%s53 + $0x1f4] sm:%s46]
      %308 = vst [vmem:[%s54 + $0x1f8] sm:%s46] %v307
      %v309 = vld [vmem:[%s53 + $0x1fc] sm:%s46]
      %310 = vst [vmem:[%s54 + $0x1fc] sm:%s46] %v309
      %v311 = vld [vmem:[%s53 + $0x200] sm:%s46]
      %312 = vst [vmem:[%s54 + $0x200] sm:%s46] %v311
      %v313 = vld [vmem:[%s53 + $0x208] sm:%s46]
      %314 = vst [vmem:[%s54 + $0x204] sm:%s46] %v313
      %v315 = vld [vmem:[%s53 + $0x204] sm:%s46]
      %316 = vst [vmem:[%s54 + $0x208] sm:%s46] %v315
      %v317 = vld [vmem:[%s53 + $0x20c] sm:%s46]
      %318 = vst [vmem:[%s54 + $0x20c] sm:%s46] %v317
      %v319 = vld [vmem:[%s53 + $0x210] sm:%s46]
      %320 = vst [vmem:[%s54 + $0x210] sm:%s46] %v319
      %v321 = vld [vmem:[%s53 + $0x218] sm:%s46]
      %322 = vst [vmem:[%s54 + $0x214] sm:%s46] %v321
      %v323 = vld [vmem:[%s53 + $0x214] sm:%s46]
      %324 = vst [vmem:[%s54 + $0x218] sm:%s46] %v323
      %v325 = vld [vmem:[%s53 + $0x21c] sm:%s46]
      %326 = vst [vmem:[%s54 + $0x21c] sm:%s46] %v325
      %v327 = vld [vmem:[%s53 + $0x220] sm:%s46]
      %328 = vst [vmem:[%s54 + $0x220] sm:%s46] %v327
      %v329 = vld [vmem:[%s53 + $0x228] sm:%s46]
      %330 = vst [vmem:[%s54 + $0x224] sm:%s46] %v329
      %v331 = vld [vmem:[%s53 + $0x224] sm:%s46]
      %332 = vst [vmem:[%s54 + $0x228] sm:%s46] %v331
      %v333 = vld [vmem:[%s53 + $0x22c] sm:%s46]
      %334 = vst [vmem:[%s54 + $0x22c] sm:%s46] %v333
      %v335 = vld [vmem:[%s53 + $0x230] sm:%s46]
      %336 = vst [vmem:[%s54 + $0x230] sm:%s46] %v335
      %v337 = vld [vmem:[%s53 + $0x238] sm:%s46]
      %338 = vst [vmem:[%s54 + $0x234] sm:%s46] %v337
      %v339 = vld [vmem:[%s53 + $0x234] sm:%s46]
      %340 = vst [vmem:[%s54 + $0x238] sm:%s46] %v339
      %v341 = vld [vmem:[%s53 + $0x23c] sm:%s46]
      %342 = vst [vmem:[%s54 + $0x23c] sm:%s46] %v341
      %v343 = vld [vmem:[%s53 + $0x240] sm:%s46]
      %344 = vst [vmem:[%s54 + $0x240] sm:%s46] %v343
      %v345 = vld [vmem:[%s53 + $0x248] sm:%s46]
      %346 = vst [vmem:[%s54 + $0x244] sm:%s46] %v345
      %v347 = vld [vmem:[%s53 + $0x244] sm:%s46]
      %348 = vst [vmem:[%s54 + $0x248] sm:%s46] %v347
      %v349 = vld [vmem:[%s53 + $0x24c] sm:%s46]
      %350 = vst [vmem:[%s54 + $0x24c] sm:%s46] %v349
      %v351 = vld [vmem:[%s53 + $0x250] sm:%s46]
      %352 = vst [vmem:[%s54 + $0x250] sm:%s46] %v351
      %v353 = vld [vmem:[%s53 + $0x258] sm:%s46]
      %354 = vst [vmem:[%s54 + $0x254] sm:%s46] %v353
      %v355 = vld [vmem:[%s53 + $0x254] sm:%s46]
      %356 = vst [vmem:[%s54 + $0x258] sm:%s46] %v355
      %v357 = vld [vmem:[%s53 + $0x25c] sm:%s46]
      %358 = vst [vmem:[%s54 + $0x25c] sm:%s46] %v357
      %v359 = vld [vmem:[%s53 + $0x260] sm:%s46]
      %360 = vst [vmem:[%s54 + $0x260] sm:%s46] %v359
      %v361 = vld [vmem:[%s53 + $0x268] sm:%s46]
      %362 = vst [vmem:[%s54 + $0x264] sm:%s46] %v361
      %v363 = vld [vmem:[%s53 + $0x264] sm:%s46]
      %364 = vst [vmem:[%s54 + $0x268] sm:%s46] %v363
      %v365 = vld [vmem:[%s53 + $0x26c] sm:%s46]
      %366 = vst [vmem:[%s54 + $0x26c] sm:%s46] %v365
      %v367 = vld [vmem:[%s53 + $0x270] sm:%s46]
      %368 = vst [vmem:[%s54 + $0x270] sm:%s46] %v367
      %v369 = vld [vmem:[%s53 + $0x278] sm:%s46]
      %370 = vst [vmem:[%s54 + $0x274] sm:%s46] %v369
      %v371 = vld [vmem:[%s53 + $0x274] sm:%s46]
      %372 = vst [vmem:[%s54 + $0x278] sm:%s46] %v371
      %v373 = vld [vmem:[%s53 + $0x27c] sm:%s46]
      %374 = vst [vmem:[%s54 + $0x27c] sm:%s46] %v373
      %v375 = vld [vmem:[%s53 + $0x280] sm:%s46]
      %376 = vst [vmem:[%s54 + $0x280] sm:%s46] %v375
      %v377 = vld [vmem:[%s53 + $0x288] sm:%s46]
      %378 = vst [vmem:[%s54 + $0x284] sm:%s46] %v377
      %v379 = vld [vmem:[%s53 + $0x284] sm:%s46]
      %380 = vst [vmem:[%s54 + $0x288] sm:%s46] %v379
      %v381 = vld [vmem:[%s53 + $0x28c] sm:%s46]
      %382 = vst [vmem:[%s54 + $0x28c] sm:%s46] %v381
      %v383 = vld [vmem:[%s53 + $0x290] sm:%s46]
      %384 = vst [vmem:[%s54 + $0x290] sm:%s46] %v383
      %v385 = vld [vmem:[%s53 + $0x298] sm:%s46]
      %386 = vst [vmem:[%s54 + $0x294] sm:%s46] %v385
      %v387 = vld [vmem:[%s53 + $0x294] sm:%s46]
      %388 = vst [vmem:[%s54 + $0x298] sm:%s46] %v387
      %v389 = vld [vmem:[%s53 + $0x29c] sm:%s46]
      %390 = vst [vmem:[%s54 + $0x29c] sm:%s46] %v389
      %v391 = vld [vmem:[%s53 + $0x2a0] sm:%s46]
      %392 = vst [vmem:[%s54 + $0x2a0] sm:%s46] %v391
      %v393 = vld [vmem:[%s53 + $0x2a8] sm:%s46]
      %394 = vst [vmem:[%s54 + $0x2a4] sm:%s46] %v393
      %v395 = vld [vmem:[%s53 + $0x2a4] sm:%s46]
      %396 = vst [vmem:[%s54 + $0x2a8] sm:%s46] %v395
      %v397 = vld [vmem:[%s53 + $0x2ac] sm:%s46]
      %398 = vst [vmem:[%s54 + $0x2ac] sm:%s46] %v397
      %v399 = vld [vmem:[%s53 + $0x2b0] sm:%s46]
      %400 = vst [vmem:[%s54 + $0x2b0] sm:%s46] %v399
      %v401 = vld [vmem:[%s53 + $0x2b8] sm:%s46]
      %402 = vst [vmem:[%s54 + $0x2b4] sm:%s46] %v401
      %v403 = vld [vmem:[%s53 + $0x2b4] sm:%s46]
      %404 = vst [vmem:[%s54 + $0x2b8] sm:%s46] %v403
      %v405 = vld [vmem:[%s53 + $0x2bc] sm:%s46]
      %406 = vst [vmem:[%s54 + $0x2bc] sm:%s46] %v405
      %v407 = vld [vmem:[%s53 + $0x2c0] sm:%s46]
      %408 = vst [vmem:[%s54 + $0x2c0] sm:%s46] %v407
      %v409 = vld [vmem:[%s53 + $0x2c8] sm:%s46]
      %410 = vst [vmem:[%s54 + $0x2c4] sm:%s46] %v409
      %v411 = vld [vmem:[%s53 + $0x2c4] sm:%s46]
      %412 = vst [vmem:[%s54 + $0x2c8] sm:%s46] %v411
      %v413 = vld [vmem:[%s53 + $0x2cc] sm:%s46]
      %414 = vst [vmem:[%s54 + $0x2cc] sm:%s46] %v413
      %v415 = vld [vmem:[%s53 + $0x2d0] sm:%s46]
      %416 = vst [vmem:[%s54 + $0x2d0] sm:%s46] %v415
      %v417 = vld [vmem:[%s53 + $0x2d8] sm:%s46]
      %418 = vst [vmem:[%s54 + $0x2d4] sm:%s46] %v417
      %v419 = vld [vmem:[%s53 + $0x2d4] sm:%s46]
      %420 = vst [vmem:[%s54 + $0x2d8] sm:%s46] %v419
      %v421 = vld [vmem:[%s53 + $0x2dc] sm:%s46]
      %422 = vst [vmem:[%s54 + $0x2dc] sm:%s46] %v421
      %v423 = vld [vmem:[%s53 + $0x2e0] sm:%s46]
      %424 = vst [vmem:[%s54 + $0x2e0] sm:%s46] %v423
      %v425 = vld [vmem:[%s53 + $0x2e8] sm:%s46]
      %426 = vst [vmem:[%s54 + $0x2e4] sm:%s46] %v425
      %v427 = vld [vmem:[%s53 + $0x2e4] sm:%s46]
      %428 = vst [vmem:[%s54 + $0x2e8] sm:%s46] %v427
      %v429 = vld [vmem:[%s53 + $0x2ec] sm:%s46]
      %430 = vst [vmem:[%s54 + $0x2ec] sm:%s46] %v429
      %v431 = vld [vmem:[%s53 + $0x2f0] sm:%s46]
      %432 = vst [vmem:[%s54 + $0x2f0] sm:%s46] %v431
      %v433 = vld [vmem:[%s53 + $0x2f8] sm:%s46]
      %434 = vst [vmem:[%s54 + $0x2f4] sm:%s46] %v433
      %v435 = vld [vmem:[%s53 + $0x2f4] sm:%s46]
      %436 = vst [vmem:[%s54 + $0x2f8] sm:%s46] %v435
      %v437 = vld [vmem:[%s53 + $0x2fc] sm:%s46]
      %438 = vst [vmem:[%s54 + $0x2fc] sm:%s46] %v437
      %v439 = vld [vmem:[%s53 + $0x300] sm:%s46]
      %440 = vst [vmem:[%s54 + $0x300] sm:%s46] %v439
      %v441 = vld [vmem:[%s53 + $0x308] sm:%s46]
      %442 = vst [vmem:[%s54 + $0x304] sm:%s46] %v441
      %v443 = vld [vmem:[%s53 + $0x304] sm:%s46]
      %444 = vst [vmem:[%s54 + $0x308] sm:%s46] %v443
      %v445 = vld [vmem:[%s53 + $0x30c] sm:%s46]
      %446 = vst [vmem:[%s54 + $0x30c] sm:%s46] %v445
      %v447 = vld [vmem:[%s53 + $0x310] sm:%s46]
      %448 = vst [vmem:[%s54 + $0x310] sm:%s46] %v447
      %v449 = vld [vmem:[%s53 + $0x318] sm:%s46]
      %450 = vst [vmem:[%s54 + $0x314] sm:%s46] %v449
      %v451 = vld [vmem:[%s53 + $0x314] sm:%s46]
      %452 = vst [vmem:[%s54 + $0x318] sm:%s46] %v451
      %v453 = vld [vmem:[%s53 + $0x31c] sm:%s46]
      %454 = vst [vmem:[%s54 + $0x31c] sm:%s46] %v453
      %v455 = vld [vmem:[%s53 + $0x320] sm:%s46]
      %456 = vst [vmem:[%s54 + $0x320] sm:%s46] %v455
      %v457 = vld [vmem:[%s53 + $0x328] sm:%s46]
      %458 = vst [vmem:[%s54 + $0x324] sm:%s46] %v457
      %v459 = vld [vmem:[%s53 + $0x324] sm:%s46]
      %460 = vst [vmem:[%s54 + $0x328] sm:%s46] %v459
      %v461 = vld [vmem:[%s53 + $0x32c] sm:%s46]
      %462 = vst [vmem:[%s54 + $0x32c] sm:%s46] %v461
      %v463 = vld [vmem:[%s53 + $0x330] sm:%s46]
      %464 = vst [vmem:[%s54 + $0x330] sm:%s46] %v463
      %v465 = vld [vmem:[%s53 + $0x338] sm:%s46]
      %466 = vst [vmem:[%s54 + $0x334] sm:%s46] %v465
      %v467 = vld [vmem:[%s53 + $0x334] sm:%s46]
      %468 = vst [vmem:[%s54 + $0x338] sm:%s46] %v467
      %v469 = vld [vmem:[%s53 + $0x33c] sm:%s46]
      %470 = vst [vmem:[%s54 + $0x33c] sm:%s46] %v469
      %v471 = vld [vmem:[%s53 + $0x340] sm:%s46]
      %472 = vst [vmem:[%s54 + $0x340] sm:%s46] %v471
      %v473 = vld [vmem:[%s53 + $0x348] sm:%s46]
      %474 = vst [vmem:[%s54 + $0x344] sm:%s46] %v473
      %v475 = vld [vmem:[%s53 + $0x344] sm:%s46]
      %476 = vst [vmem:[%s54 + $0x348] sm:%s46] %v475
      %v477 = vld [vmem:[%s53 + $0x34c] sm:%s46]
      %478 = vst [vmem:[%s54 + $0x34c] sm:%s46] %v477
      %v479 = vld [vmem:[%s53 + $0x350] sm:%s46]
      %480 = vst [vmem:[%s54 + $0x350] sm:%s46] %v479
      %v481 = vld [vmem:[%s53 + $0x358] sm:%s46]
      %482 = vst [vmem:[%s54 + $0x354] sm:%s46] %v481
      %v483 = vld [vmem:[%s53 + $0x354] sm:%s46]
      %484 = vst [vmem:[%s54 + $0x358] sm:%s46] %v483
      %v485 = vld [vmem:[%s53 + $0x35c] sm:%s46]
      %486 = vst [vmem:[%s54 + $0x35c] sm:%s46] %v485
      %v487 = vld [vmem:[%s53 + $0x360] sm:%s46]
      %488 = vst [vmem:[%s54 + $0x360] sm:%s46] %v487
      %v489 = vld [vmem:[%s53 + $0x368] sm:%s46]
      %490 = vst [vmem:[%s54 + $0x364] sm:%s46] %v489
      %v491 = vld [vmem:[%s53 + $0x364] sm:%s46]
      %492 = vst [vmem:[%s54 + $0x368] sm:%s46] %v491
      %v493 = vld [vmem:[%s53 + $0x36c] sm:%s46]
      %494 = vst [vmem:[%s54 + $0x36c] sm:%s46] %v493
      %v495 = vld [vmem:[%s53 + $0x370] sm:%s46]
      %496 = vst [vmem:[%s54 + $0x370] sm:%s46] %v495
      %v497 = vld [vmem:[%s53 + $0x378] sm:%s46]
      %498 = vst [vmem:[%s54 + $0x374] sm:%s46] %v497
      %v499 = vld [vmem:[%s53 + $0x374] sm:%s46]
      %500 = vst [vmem:[%s54 + $0x378] sm:%s46] %v499
      %v501 = vld [vmem:[%s53 + $0x37c] sm:%s46]
      %502 = vst [vmem:[%s54 + $0x37c] sm:%s46] %v501
      %v503 = vld [vmem:[%s53 + $0x380] sm:%s46]
      %504 = vst [vmem:[%s54 + $0x380] sm:%s46] %v503
      %v505 = vld [vmem:[%s53 + $0x388] sm:%s46]
      %506 = vst [vmem:[%s54 + $0x384] sm:%s46] %v505
      %v507 = vld [vmem:[%s53 + $0x384] sm:%s46]
      %508 = vst [vmem:[%s54 + $0x388] sm:%s46] %v507
      %v509 = vld [vmem:[%s53 + $0x38c] sm:%s46]
      %510 = vst [vmem:[%s54 + $0x38c] sm:%s46] %v509
      %v511 = vld [vmem:[%s53 + $0x390] sm:%s46]
      %512 = vst [vmem:[%s54 + $0x390] sm:%s46] %v511
      %v513 = vld [vmem:[%s53 + $0x398] sm:%s46]
      %514 = vst [vmem:[%s54 + $0x394] sm:%s46] %v513
      %v515 = vld [vmem:[%s53 + $0x394] sm:%s46]
      %516 = vst [vmem:[%s54 + $0x398] sm:%s46] %v515
      %v517 = vld [vmem:[%s53 + $0x39c] sm:%s46]
      %518 = vst [vmem:[%s54 + $0x39c] sm:%s46] %v517
      %v519 = vld [vmem:[%s53 + $0x3a0] sm:%s46]
      %520 = vst [vmem:[%s54 + $0x3a0] sm:%s46] %v519
      %v521 = vld [vmem:[%s53 + $0x3a8] sm:%s46]
      %522 = vst [vmem:[%s54 + $0x3a4] sm:%s46] %v521
      %v523 = vld [vmem:[%s53 + $0x3a4] sm:%s46]
      %524 = vst [vmem:[%s54 + $0x3a8] sm:%s46] %v523
      %v525 = vld [vmem:[%s53 + $0x3ac] sm:%s46]
      %526 = vst [vmem:[%s54 + $0x3ac] sm:%s46] %v525
      %v527 = vld [vmem:[%s53 + $0x3b0] sm:%s46]
      %528 = vst [vmem:[%s54 + $0x3b0] sm:%s46] %v527
      %v529 = vld [vmem:[%s53 + $0x3b8] sm:%s46]
      %530 = vst [vmem:[%s54 + $0x3b4] sm:%s46] %v529
      %v531 = vld [vmem:[%s53 + $0x3b4] sm:%s46]
      %532 = vst [vmem:[%s54 + $0x3b8] sm:%s46] %v531
      %v533 = vld [vmem:[%s53 + $0x3bc] sm:%s46]
      %534 = vst [vmem:[%s54 + $0x3bc] sm:%s46] %v533
      %v535 = vld [vmem:[%s53 + $0x3c0] sm:%s46]
      %536 = vst [vmem:[%s54 + $0x3c0] sm:%s46] %v535
      %v537 = vld [vmem:[%s53 + $0x3c8] sm:%s46]
      %538 = vst [vmem:[%s54 + $0x3c4] sm:%s46] %v537
      %v539 = vld [vmem:[%s53 + $0x3c4] sm:%s46]
      %540 = vst [vmem:[%s54 + $0x3c8] sm:%s46] %v539
      %v541 = vld [vmem:[%s53 + $0x3cc] sm:%s46]
      %542 = vst [vmem:[%s54 + $0x3cc] sm:%s46] %v541
      %v543 = vld [vmem:[%s53 + $0x3d0] sm:%s46]
      %544 = vst [vmem:[%s54 + $0x3d0] sm:%s46] %v543
      %v545 = vld [vmem:[%s53 + $0x3d8] sm:%s46]
      %546 = vst [vmem:[%s54 + $0x3d4] sm:%s46] %v545
      %v547 = vld [vmem:[%s53 + $0x3d4] sm:%s46]
      %548 = vst [vmem:[%s54 + $0x3d8] sm:%s46] %v547
      %v549 = vld [vmem:[%s53 + $0x3dc] sm:%s46]
      %550 = vst [vmem:[%s54 + $0x3dc] sm:%s46] %v549
      %v551 = vld [vmem:[%s53 + $0x3e0] sm:%s46]
      %552 = vst [vmem:[%s54 + $0x3e0] sm:%s46] %v551
      %v553 = vld [vmem:[%s53 + $0x3e8] sm:%s46]
      %554 = vst [vmem:[%s54 + $0x3e4] sm:%s46] %v553
      %v555 = vld [vmem:[%s53 + $0x3e4] sm:%s46]
      %556 = vst [vmem:[%s54 + $0x3e8] sm:%s46] %v555
      %v557 = vld [vmem:[%s53 + $0x3ec] sm:%s46]
      %558 = vst [vmem:[%s54 + $0x3ec] sm:%s46] %v557
      %v559 = vld [vmem:[%s53 + $0x3f0] sm:%s46]
      %560 = vst [vmem:[%s54 + $0x3f0] sm:%s46] %v559
      %v561 = vld [vmem:[%s53 + $0x3f8] sm:%s46]
      %562 = vst [vmem:[%s54 + $0x3f4] sm:%s46] %v561
      %v563 = vld [vmem:[%s53 + $0x3f4] sm:%s46]
      %564 = vst [vmem:[%s54 + $0x3f8] sm:%s46] %v563
      %v565 = vld [vmem:[%s53 + $0x3fc] sm:%s46]
      %566 = vst [vmem:[%s54 + $0x3fc] sm:%s46] %v565
    $region54: #{net_forward.1} parent=48 // loop_footer
      %s52 = sadd.s32 1, %s48
    $region55: #{net_forward.1} parent=48 // loop_footer_branch
      %47 = sbr.rel target = $region51
    $region56: #{net_forward.1} parent=48 // loop_exit
      _
  $region49: #{net_forward.1} parent=0 // pred_fallthru
    _
  // Predicated region
  $region75: #{net_forward.1} parent=0 // pred_check
    _
  $region76: #{net_forward.1} parent=0 // pred_check_branch
    %1108 = sbr.rel (0) target = $region78
  $region77: #{net_forward.1} parent=0 // pred_region
    %1109 = vsyncadd [#allocation7], 16384
  $region78: #{net_forward.1} parent=0 // pred_fallthru
    _
  %s1110 = scalar_lea.sflag [#allocation7], 1
  %p1112 = scmp.lt.u32.totalorder 196, 8
  %p1113 = pneg %p1112
  // Predicated region
  $region79: #{net_forward.1} parent=0 // pred_check
    _
  $region80: #{net_forward.1} parent=0 // pred_check_branch
    %1115 = sbr.rel (%p1112) target = $region82
  $region81: #{net_forward.1} parent=0 // pred_region
    %s1130 = sand.u32 196, 7
    %p1131 = scmp.eq.s32.totalorder %s1130, 0
    %p1132 = pneg %p1131
    // Predicated region
    $region94: #{net_forward.1} parent=81 // pred_check
      _
    $region95: #{net_forward.1} parent=81 // pred_check_branch
      %1134 = sbr.rel (%p1131) target = $region97
    $region96: #{net_forward.1} parent=81 // pred_region
      %s1135 = sand.u32 196, 7
      %s1136 = ssub.s32 196, %s1135
      %s1137 = scalar_lea.vmem %s11, %s1136
      %s1138 = ssub.s32 196, %s1135
      %s1139 = scalar_lea.vmem [#allocation5], %s1138
      loop: start=0, step=1, limit=1
      $region98: #{net_forward.1} parent=96 // loop_pre_header
        _
      $region99: #{net_forward.1} parent=96 // loop_header
        %s1141 = sphi 0, %s1145
        %p1142 = scmp.ge.s32.totalorder %s1141, 1
        %s1146 = sphi %s11, %s11
        %s1147 = sphi [#allocation5], [#allocation5]
      $region100: #{net_forward.1} parent=96 // loop_header_branch
        %1144 = sbr.rel (%p1142) target = $region104
      $region101: #{net_forward.1} parent=96 // loop_body
        %v1148 = vld [vmem:[%s1146] sm:$0xff]
        %1149 = vst [vmem:[%s1147] sm:$0xff] %v1148
        %v1150 = vld [vmem:[%s1146 + $0x8] sm:$0xff]
        %1151 = vst [vmem:[%s1147 + $0x8] sm:$0xff] %v1150
        %v1152 = vld [vmem:[%s1146 + $0x10] sm:$0xff]
        %1153 = vst [vmem:[%s1147 + $0x10] sm:$0xff] %v1152
        %v1154 = vld [vmem:[%s1146 + $0x18] sm:$0xff]
        %1155 = vst [vmem:[%s1147 + $0x18] sm:$0xff] %v1154
        %v1156 = vld [vmem:[%s1146 + $0x20] sm:$0xff]
        %1157 = vst [vmem:[%s1147 + $0x20] sm:$0xff] %v1156
        %v1158 = vld [vmem:[%s1146 + $0x28] sm:$0xff]
        %1159 = vst [vmem:[%s1147 + $0x28] sm:$0xff] %v1158
        %v1160 = vld [vmem:[%s1146 + $0x30] sm:$0xff]
        %1161 = vst [vmem:[%s1147 + $0x30] sm:$0xff] %v1160
        %v1162 = vld [vmem:[%s1146 + $0x38] sm:$0xff]
        %1163 = vst [vmem:[%s1147 + $0x38] sm:$0xff] %v1162
        %v1164 = vld [vmem:[%s1146 + $0x40] sm:$0xff]
        %1165 = vst [vmem:[%s1147 + $0x40] sm:$0xff] %v1164
        %v1166 = vld [vmem:[%s1146 + $0x48] sm:$0xff]
        %1167 = vst [vmem:[%s1147 + $0x48] sm:$0xff] %v1166
        %v1168 = vld [vmem:[%s1146 + $0x50] sm:$0xff]
        %1169 = vst [vmem:[%s1147 + $0x50] sm:$0xff] %v1168
        %v1170 = vld [vmem:[%s1146 + $0x58] sm:$0xff]
        %1171 = vst [vmem:[%s1147 + $0x58] sm:$0xff] %v1170
        %v1172 = vld [vmem:[%s1146 + $0x60] sm:$0xff]
        %1173 = vst [vmem:[%s1147 + $0x60] sm:$0xff] %v1172
        %v1174 = vld [vmem:[%s1146 + $0x68] sm:$0xff]
        %1175 = vst [vmem:[%s1147 + $0x68] sm:$0xff] %v1174
        %v1176 = vld [vmem:[%s1146 + $0x70] sm:$0xff]
        %1177 = vst [vmem:[%s1147 + $0x70] sm:$0xff] %v1176
        %v1178 = vld [vmem:[%s1146 + $0x78] sm:$0xff]
        %1179 = vst [vmem:[%s1147 + $0x78] sm:$0xff] %v1178
        %v1180 = vld [vmem:[%s1146 + $0x80] sm:$0xff]
        %1181 = vst [vmem:[%s1147 + $0x80] sm:$0xff] %v1180
        %v1182 = vld [vmem:[%s1146 + $0x88] sm:$0xff]
        %1183 = vst [vmem:[%s1147 + $0x88] sm:$0xff] %v1182
        %v1184 = vld [vmem:[%s1146 + $0x90] sm:$0xff]
        %1185 = vst [vmem:[%s1147 + $0x90] sm:$0xff] %v1184
        %v1186 = vld [vmem:[%s1146 + $0x98] sm:$0xff]
        %1187 = vst [vmem:[%s1147 + $0x98] sm:$0xff] %v1186
        %v1188 = vld [vmem:[%s1146 + $0xa0] sm:$0xff]
        %1189 = vst [vmem:[%s1147 + $0xa0] sm:$0xff] %v1188
        %v1190 = vld [vmem:[%s1146 + $0xa8] sm:$0xff]
        %1191 = vst [vmem:[%s1147 + $0xa8] sm:$0xff] %v1190
        %v1192 = vld [vmem:[%s1146 + $0xb0] sm:$0xff]
        %1193 = vst [vmem:[%s1147 + $0xb0] sm:$0xff] %v1192
        %v1194 = vld [vmem:[%s1146 + $0xb8] sm:$0xff]
        %1195 = vst [vmem:[%s1147 + $0xb8] sm:$0xff] %v1194
      $region102: #{net_forward.1} parent=96 // loop_footer
        %s1145 = sadd.s32 1, %s1141
      $region103: #{net_forward.1} parent=96 // loop_footer_branch
        %1140 = sbr.rel target = $region99
      $region104: #{net_forward.1} parent=96 // loop_exit
        _
      %s1196 = sshllo.u32 0, %s1135
      loop: start=0, step=1, limit=1
      $region105: #{net_forward.1} parent=96 // loop_pre_header
        _
      $region106: #{net_forward.1} parent=96 // loop_header
        %s1198 = sphi 0, %s1202
        %p1199 = scmp.ge.s32.totalorder %s1198, 1
        %s1203 = sphi %s1137, %s1137
        %s1204 = sphi %s1139, %s1139
      $region107: #{net_forward.1} parent=96 // loop_header_branch
        %1201 = sbr.rel (%p1199) target = $region111
      $region108: #{net_forward.1} parent=96 // loop_body
        %v1205 = vld [vmem:[%s1203] sm:%s1196]
        %1206 = vst [vmem:[%s1204] sm:%s1196] %v1205
      $region109: #{net_forward.1} parent=96 // loop_footer
        %s1202 = sadd.s32 1, %s1198
      $region110: #{net_forward.1} parent=96 // loop_footer_branch
        %1197 = sbr.rel target = $region106
      $region111: #{net_forward.1} parent=96 // loop_exit
        _
    $region97: #{net_forward.1} parent=81 // pred_fallthru
      _
  $region82: #{net_forward.1} parent=0 // pred_fallthru
    _
  // Predicated region
  $region83: #{net_forward.1} parent=0 // pred_check
    %p1116 = pneg %p1112
  $region84: #{net_forward.1} parent=0 // pred_check_branch
    %1118 = sbr.rel (%p1116) target = $region86
  $region85: #{net_forward.1} parent=0 // pred_region
    %s1119 = sshllo.u32 0, 196
    loop: start=0, step=1, limit=1
    $region87: #{net_forward.1} parent=85 // loop_pre_header
      _
    $region88: #{net_forward.1} parent=85 // loop_header
      %s1121 = sphi 0, %s1125
      %p1122 = scmp.ge.s32.totalorder %s1121, 1
      %s1126 = sphi %s11, %s11
      %s1127 = sphi [#allocation5], [#allocation5]
    $region89: #{net_forward.1} parent=85 // loop_header_branch
      %1124 = sbr.rel (%p1122) target = $region93
    $region90: #{net_forward.1} parent=85 // loop_body
      %v1128 = vld [vmem:[%s1126] sm:%s1119]
      %1129 = vst [vmem:[%s1127] sm:%s1119] %v1128
    $region91: #{net_forward.1} parent=85 // loop_footer
      %s1125 = sadd.s32 1, %s1121
    $region92: #{net_forward.1} parent=85 // loop_footer_branch
      %1120 = sbr.rel target = $region88
    $region93: #{net_forward.1} parent=85 // loop_exit
      _
  $region86: #{net_forward.1} parent=0 // pred_fallthru
    _
  // Predicated region
  $region112: #{net_forward.1} parent=0 // pred_check
    _
  $region113: #{net_forward.1} parent=0 // pred_check_branch
    %1209 = sbr.rel (0) target = $region115
  $region114: #{net_forward.1} parent=0 // pred_region
    %1210 = vsyncadd %s1110, 3136
  $region115: #{net_forward.1} parent=0 // pred_fallthru
    _
  %s1211 = scalar_lea.sflag [#allocation7], 2
  %p1213 = scmp.lt.u32.totalorder 480, 8
  %p1214 = pneg %p1213
  // Predicated region
  $region116: #{net_forward.1} parent=0 // pred_check
    _
  $region117: #{net_forward.1} parent=0 // pred_check_branch
    %1216 = sbr.rel (%p1213) target = $region119
  $region118: #{net_forward.1} parent=0 // pred_region
    %s1231 = sand.u32 480, 7
    %p1232 = scmp.eq.s32.totalorder %s1231, 0
    // Predicated region
    $region131: #{net_forward.1} parent=118 // pred_check
      %p1233 = pneg %p1232
    $region132: #{net_forward.1} parent=118 // pred_check_branch
      %1235 = sbr.rel (%p1233) target = $region134
    $region133: #{net_forward.1} parent=118 // pred_region
      loop: start=0, step=1, limit=1
      $region135: #{net_forward.1} parent=133 // loop_pre_header
        _
      $region136: #{net_forward.1} parent=133 // loop_header
        %s1237 = sphi 0, %s1241
        %p1238 = scmp.ge.s32.totalorder %s1237, 1
        %s1242 = sphi %s12, %s12
        %s1243 = sphi [#allocation6], [#allocation6]
      $region137: #{net_forward.1} parent=133 // loop_header_branch
        %1240 = sbr.rel (%p1238) target = $region141
      $region138: #{net_forward.1} parent=133 // loop_body
        %v1244 = vld [vmem:[%s1242] sm:$0xff]
        %1245 = vst [vmem:[%s1243] sm:$0xff] %v1244
        %v1246 = vld [vmem:[%s1242 + $0x8] sm:$0xff]
        %1247 = vst [vmem:[%s1243 + $0x8] sm:$0xff] %v1246
        %v1248 = vld [vmem:[%s1242 + $0x10] sm:$0xff]
        %1249 = vst [vmem:[%s1243 + $0x10] sm:$0xff] %v1248
        %v1250 = vld [vmem:[%s1242 + $0x18] sm:$0xff]
        %1251 = vst [vmem:[%s1243 + $0x18] sm:$0xff] %v1250
        %v1252 = vld [vmem:[%s1242 + $0x20] sm:$0xff]
        %1253 = vst [vmem:[%s1243 + $0x20] sm:$0xff] %v1252
        %v1254 = vld [vmem:[%s1242 + $0x28] sm:$0xff]
        %1255 = vst [vmem:[%s1243 + $0x28] sm:$0xff] %v1254
        %v1256 = vld [vmem:[%s1242 + $0x30] sm:$0xff]
        %1257 = vst [vmem:[%s1243 + $0x30] sm:$0xff] %v1256
        %v1258 = vld [vmem:[%s1242 + $0x38] sm:$0xff]
        %1259 = vst [vmem:[%s1243 + $0x38] sm:$0xff] %v1258
        %v1260 = vld [vmem:[%s1242 + $0x40] sm:$0xff]
        %1261 = vst [vmem:[%s1243 + $0x40] sm:$0xff] %v1260
        %v1262 = vld [vmem:[%s1242 + $0x48] sm:$0xff]
        %1263 = vst [vmem:[%s1243 + $0x48] sm:$0xff] %v1262
        %v1264 = vld [vmem:[%s1242 + $0x50] sm:$0xff]
        %1265 = vst [vmem:[%s1243 + $0x50] sm:$0xff] %v1264
        %v1266 = vld [vmem:[%s1242 + $0x58] sm:$0xff]
        %1267 = vst [vmem:[%s1243 + $0x58] sm:$0xff] %v1266
        %v1268 = vld [vmem:[%s1242 + $0x60] sm:$0xff]
        %1269 = vst [vmem:[%s1243 + $0x60] sm:$0xff] %v1268
        %v1270 = vld [vmem:[%s1242 + $0x68] sm:$0xff]
        %1271 = vst [vmem:[%s1243 + $0x68] sm:$0xff] %v1270
        %v1272 = vld [vmem:[%s1242 + $0x70] sm:$0xff]
        %1273 = vst [vmem:[%s1243 + $0x70] sm:$0xff] %v1272
        %v1274 = vld [vmem:[%s1242 + $0x78] sm:$0xff]
        %1275 = vst [vmem:[%s1243 + $0x78] sm:$0xff] %v1274
        %v1276 = vld [vmem:[%s1242 + $0x80] sm:$0xff]
        %1277 = vst [vmem:[%s1243 + $0x80] sm:$0xff] %v1276
        %v1278 = vld [vmem:[%s1242 + $0x88] sm:$0xff]
        %1279 = vst [vmem:[%s1243 + $0x88] sm:$0xff] %v1278
        %v1280 = vld [vmem:[%s1242 + $0x90] sm:$0xff]
        %1281 = vst [vmem:[%s1243 + $0x90] sm:$0xff] %v1280
        %v1282 = vld [vmem:[%s1242 + $0x98] sm:$0xff]
        %1283 = vst [vmem:[%s1243 + $0x98] sm:$0xff] %v1282
        %v1284 = vld [vmem:[%s1242 + $0xa0] sm:$0xff]
        %1285 = vst [vmem:[%s1243 + $0xa0] sm:$0xff] %v1284
        %v1286 = vld [vmem:[%s1242 + $0xa8] sm:$0xff]
        %1287 = vst [vmem:[%s1243 + $0xa8] sm:$0xff] %v1286
        %v1288 = vld [vmem:[%s1242 + $0xb0] sm:$0xff]
        %1289 = vst [vmem:[%s1243 + $0xb0] sm:$0xff] %v1288
        %v1290 = vld [vmem:[%s1242 + $0xb8] sm:$0xff]
        %1291 = vst [vmem:[%s1243 + $0xb8] sm:$0xff] %v1290
        %v1292 = vld [vmem:[%s1242 + $0xc0] sm:$0xff]
        %1293 = vst [vmem:[%s1243 + $0xc0] sm:$0xff] %v1292
        %v1294 = vld [vmem:[%s1242 + $0xc8] sm:$0xff]
        %1295 = vst [vmem:[%s1243 + $0xc8] sm:$0xff] %v1294
        %v1296 = vld [vmem:[%s1242 + $0xd0] sm:$0xff]
        %1297 = vst [vmem:[%s1243 + $0xd0] sm:$0xff] %v1296
        %v1298 = vld [vmem:[%s1242 + $0xd8] sm:$0xff]
        %1299 = vst [vmem:[%s1243 + $0xd8] sm:$0xff] %v1298
        %v1300 = vld [vmem:[%s1242 + $0xe0] sm:$0xff]
        %1301 = vst [vmem:[%s1243 + $0xe0] sm:$0xff] %v1300
        %v1302 = vld [vmem:[%s1242 + $0xe8] sm:$0xff]
        %1303 = vst [vmem:[%s1243 + $0xe8] sm:$0xff] %v1302
        %v1304 = vld [vmem:[%s1242 + $0xf0] sm:$0xff]
        %1305 = vst [vmem:[%s1243 + $0xf0] sm:$0xff] %v1304
        %v1306 = vld [vmem:[%s1242 + $0xf8] sm:$0xff]
        %1307 = vst [vmem:[%s1243 + $0xf8] sm:$0xff] %v1306
        %v1308 = vld [vmem:[%s1242 + $0x100] sm:$0xff]
        %1309 = vst [vmem:[%s1243 + $0x100] sm:$0xff] %v1308
        %v1310 = vld [vmem:[%s1242 + $0x108] sm:$0xff]
        %1311 = vst [vmem:[%s1243 + $0x108] sm:$0xff] %v1310
        %v1312 = vld [vmem:[%s1242 + $0x110] sm:$0xff]
        %1313 = vst [vmem:[%s1243 + $0x110] sm:$0xff] %v1312
        %v1314 = vld [vmem:[%s1242 + $0x118] sm:$0xff]
        %1315 = vst [vmem:[%s1243 + $0x118] sm:$0xff] %v1314
        %v1316 = vld [vmem:[%s1242 + $0x120] sm:$0xff]
        %1317 = vst [vmem:[%s1243 + $0x120] sm:$0xff] %v1316
        %v1318 = vld [vmem:[%s1242 + $0x128] sm:$0xff]
        %1319 = vst [vmem:[%s1243 + $0x128] sm:$0xff] %v1318
        %v1320 = vld [vmem:[%s1242 + $0x130] sm:$0xff]
        %1321 = vst [vmem:[%s1243 + $0x130] sm:$0xff] %v1320
        %v1322 = vld [vmem:[%s1242 + $0x138] sm:$0xff]
        %1323 = vst [vmem:[%s1243 + $0x138] sm:$0xff] %v1322
        %v1324 = vld [vmem:[%s1242 + $0x140] sm:$0xff]
        %1325 = vst [vmem:[%s1243 + $0x140] sm:$0xff] %v1324
        %v1326 = vld [vmem:[%s1242 + $0x148] sm:$0xff]
        %1327 = vst [vmem:[%s1243 + $0x148] sm:$0xff] %v1326
        %v1328 = vld [vmem:[%s1242 + $0x150] sm:$0xff]
        %1329 = vst [vmem:[%s1243 + $0x150] sm:$0xff] %v1328
        %v1330 = vld [vmem:[%s1242 + $0x158] sm:$0xff]
        %1331 = vst [vmem:[%s1243 + $0x158] sm:$0xff] %v1330
        %v1332 = vld [vmem:[%s1242 + $0x160] sm:$0xff]
        %1333 = vst [vmem:[%s1243 + $0x160] sm:$0xff] %v1332
        %v1334 = vld [vmem:[%s1242 + $0x168] sm:$0xff]
        %1335 = vst [vmem:[%s1243 + $0x168] sm:$0xff] %v1334
        %v1336 = vld [vmem:[%s1242 + $0x170] sm:$0xff]
        %1337 = vst [vmem:[%s1243 + $0x170] sm:$0xff] %v1336
        %v1338 = vld [vmem:[%s1242 + $0x178] sm:$0xff]
        %1339 = vst [vmem:[%s1243 + $0x178] sm:$0xff] %v1338
        %v1340 = vld [vmem:[%s1242 + $0x180] sm:$0xff]
        %1341 = vst [vmem:[%s1243 + $0x180] sm:$0xff] %v1340
        %v1342 = vld [vmem:[%s1242 + $0x188] sm:$0xff]
        %1343 = vst [vmem:[%s1243 + $0x188] sm:$0xff] %v1342
        %v1344 = vld [vmem:[%s1242 + $0x190] sm:$0xff]
        %1345 = vst [vmem:[%s1243 + $0x190] sm:$0xff] %v1344
        %v1346 = vld [vmem:[%s1242 + $0x198] sm:$0xff]
        %1347 = vst [vmem:[%s1243 + $0x198] sm:$0xff] %v1346
        %v1348 = vld [vmem:[%s1242 + $0x1a0] sm:$0xff]
        %1349 = vst [vmem:[%s1243 + $0x1a0] sm:$0xff] %v1348
        %v1350 = vld [vmem:[%s1242 + $0x1a8] sm:$0xff]
        %1351 = vst [vmem:[%s1243 + $0x1a8] sm:$0xff] %v1350
        %v1352 = vld [vmem:[%s1242 + $0x1b0] sm:$0xff]
        %1353 = vst [vmem:[%s1243 + $0x1b0] sm:$0xff] %v1352
        %v1354 = vld [vmem:[%s1242 + $0x1b8] sm:$0xff]
        %1355 = vst [vmem:[%s1243 + $0x1b8] sm:$0xff] %v1354
        %v1356 = vld [vmem:[%s1242 + $0x1c0] sm:$0xff]
        %1357 = vst [vmem:[%s1243 + $0x1c0] sm:$0xff] %v1356
        %v1358 = vld [vmem:[%s1242 + $0x1c8] sm:$0xff]
        %1359 = vst [vmem:[%s1243 + $0x1c8] sm:$0xff] %v1358
        %v1360 = vld [vmem:[%s1242 + $0x1d0] sm:$0xff]
        %1361 = vst [vmem:[%s1243 + $0x1d0] sm:$0xff] %v1360
        %v1362 = vld [vmem:[%s1242 + $0x1d8] sm:$0xff]
        %1363 = vst [vmem:[%s1243 + $0x1d8] sm:$0xff] %v1362
      $region139: #{net_forward.1} parent=133 // loop_footer
        %s1241 = sadd.s32 1, %s1237
      $region140: #{net_forward.1} parent=133 // loop_footer_branch
        %1236 = sbr.rel target = $region136
      $region141: #{net_forward.1} parent=133 // loop_exit
        _
    $region134: #{net_forward.1} parent=118 // pred_fallthru
      _
    %p1364 = pneg %p1232
    // Predicated region
    $region142: #{net_forward.1} parent=118 // pred_check
      _
    $region143: #{net_forward.1} parent=118 // pred_check_branch
      %1366 = sbr.rel (%p1232) target = $region145
    $region144: #{net_forward.1} parent=118 // pred_region
      %s1367 = sand.u32 480, 7
    $region145: #{net_forward.1} parent=118 // pred_fallthru
      _
  $region119: #{net_forward.1} parent=0 // pred_fallthru
    _
  // Predicated region
  $region120: #{net_forward.1} parent=0 // pred_check
    %p1217 = pneg %p1213
  $region121: #{net_forward.1} parent=0 // pred_check_branch
    %1219 = sbr.rel (%p1217) target = $region123
  $region122: #{net_forward.1} parent=0 // pred_region
    %s1220 = sshllo.u32 0, 480
    loop: start=0, step=1, limit=1
    $region124: #{net_forward.1} parent=122 // loop_pre_header
      _
    $region125: #{net_forward.1} parent=122 // loop_header
      %s1222 = sphi 0, %s1226
      %p1223 = scmp.ge.s32.totalorder %s1222, 1
      %s1227 = sphi %s12, %s12
      %s1228 = sphi [#allocation6], [#allocation6]
    $region126: #{net_forward.1} parent=122 // loop_header_branch
      %1225 = sbr.rel (%p1223) target = $region130
    $region127: #{net_forward.1} parent=122 // loop_body
      %v1229 = vld [vmem:[%s1227] sm:%s1220]
      %1230 = vst [vmem:[%s1228] sm:%s1220] %v1229
    $region128: #{net_forward.1} parent=122 // loop_footer
      %s1226 = sadd.s32 1, %s1222
    $region129: #{net_forward.1} parent=122 // loop_footer_branch
      %1221 = sbr.rel target = $region125
    $region130: #{net_forward.1} parent=122 // loop_exit
      _
  $region123: #{net_forward.1} parent=0 // pred_fallthru
    _
  // Predicated region
  $region146: #{net_forward.1} parent=0 // pred_check
    _
  $region147: #{net_forward.1} parent=0 // pred_check_branch
    %1370 = sbr.rel (0) target = $region149
  $region148: #{net_forward.1} parent=0 // pred_region
    %1371 = vsyncadd %s1211, 7680
  $region149: #{net_forward.1} parent=0 // pred_fallthru
    _
  %v1372 = vld [vmem:[%s0] sm:$0x77]
  %v1373 = vld [vmem:[%s0 + $0x8] sm:$0x77]
  %v1374 = vld [vmem:[%s0 + $0x10] sm:$0x77]
  %v1375 = vld [vmem:[%s0 + $0x18] sm:$0x77]
  %v1376 = vld [vmem:[%s0 + $0x20] sm:$0x77]
  %v1377 = vld [vmem:[%s0 + $0x28] sm:$0x77]
  %v1378 = vld [vmem:[%s0 + $0x30] sm:$0x77]
  %v1379 = vld [vmem:[%s0 + $0x38] sm:$0x77]
  %v1380 = vld [vmem:[%s0 + $0x40] sm:$0x77]
  %v1390 = vcombine.high %v1372, %v1372
  %v1391 = vcombine.high %v1373, %v1373
  %v1392 = vcombine.high %v1374, %v1374
  %v1393 = vcombine.high %v1375, %v1375
  %v1394 = vcombine.high %v1376, %v1376
  %v1395 = vcombine.high %v1377, %v1377
  %v1396 = vcombine.high %v1378, %v1378
  %v1397 = vcombine.high %v1379, %v1379
  %v1406 = vrot.slane %v1372, 5
  %v1407 = vrot.slane %v1390, 5
  %v1408 = vrot.slane %v1373, 5
  %v1409 = vrot.slane %v1391, 5
  %v1410 = vrot.slane %v1374, 5
  %v1411 = vrot.slane %v1392, 5
  %v1412 = vrot.slane %v1375, 5
  %v1413 = vrot.slane %v1393, 5
  %v1414 = vrot.slane %v1376, 5
  %v1415 = vrot.slane %v1394, 5
  %v1416 = vrot.slane %v1377, 5
  %v1417 = vrot.slane %v1395, 5
  %v1418 = vrot.slane %v1378, 5
  %v1419 = vrot.slane %v1396, 5
  %v1420 = vrot.slane %v1379, 5
  %v1421 = vrot.slane %v1397, 5
  %v1422 = vrot.slane %v1380, 5
  %1423 = vrot.lane.b32.xlu0 %v1406, 127
  %v1424 = vpop.permute.xlu0 %1423
  %1425 = vrot.lane.b32.xlu0 %v1407, 127
  %v1426 = vpop.permute.xlu0 %1425
  %1427 = vrot.lane.b32.xlu0 %v1408, 127
  %v1428 = vpop.permute.xlu0 %1427
  %1429 = vrot.lane.b32.xlu0 %v1409, 127
  %v1430 = vpop.permute.xlu0 %1429
  %1431 = vrot.lane.b32.xlu0 %v1410, 127
  %v1432 = vpop.permute.xlu0 %1431
  %1433 = vrot.lane.b32.xlu0 %v1411, 127
  %v1434 = vpop.permute.xlu0 %1433
  %1435 = vrot.lane.b32.xlu0 %v1412, 127
  %v1436 = vpop.permute.xlu0 %1435
  %1437 = vrot.lane.b32.xlu0 %v1413, 127
  %v1438 = vpop.permute.xlu0 %1437
  %1439 = vrot.lane.b32.xlu0 %v1414, 127
  %v1440 = vpop.permute.xlu0 %1439
  %1441 = vrot.lane.b32.xlu0 %v1415, 127
  %v1442 = vpop.permute.xlu0 %1441
  %1443 = vrot.lane.b32.xlu0 %v1416, 127
  %v1444 = vpop.permute.xlu0 %1443
  %1445 = vrot.lane.b32.xlu0 %v1417, 127
  %v1446 = vpop.permute.xlu0 %1445
  %1447 = vrot.lane.b32.xlu0 %v1418, 127
  %v1448 = vpop.permute.xlu0 %1447
  %1449 = vrot.lane.b32.xlu0 %v1419, 127
  %v1450 = vpop.permute.xlu0 %1449
  %1451 = vrot.lane.b32.xlu0 %v1420, 127
  %v1452 = vpop.permute.xlu0 %1451
  %1453 = vrot.lane.b32.xlu0 %v1421, 127
  %v1454 = vpop.permute.xlu0 %1453
  %1455 = vrot.lane.b32.xlu0 %v1422, 127
  %v1456 = vpop.permute.xlu0 %1455
  %vm1457 = vcmask 1039360
  %v1458 = vsel %vm1457, %v1424, %v1426
  %v1459 = vsel %vm1457, %v1426, %v1428
  %v1460 = vsel %vm1457, %v1428, %v1430
  %v1461 = vsel %vm1457, %v1430, %v1432
  %v1462 = vsel %vm1457, %v1432, %v1434
  %v1463 = vsel %vm1457, %v1434, %v1436
  %v1464 = vsel %vm1457, %v1436, %v1438
  %v1465 = vsel %vm1457, %v1438, %v1440
  %v1466 = vsel %vm1457, %v1440, %v1442
  %v1467 = vsel %vm1457, %v1442, %v1444
  %v1468 = vsel %vm1457, %v1444, %v1446
  %v1469 = vsel %vm1457, %v1446, %v1448
  %v1470 = vsel %vm1457, %v1448, %v1450
  %v1471 = vsel %vm1457, %v1450, %v1452
  %v1472 = vsel %vm1457, %v1452, %v1454
  %v1473 = vsel %vm1457, %v1454, %v1456
  %v1491 = vrot.slane %v1372, 2
  %v1492 = vrot.slane %v1390, 2
  %v1493 = vrot.slane %v1373, 2
  %v1494 = vrot.slane %v1391, 2
  %v1495 = vrot.slane %v1374, 2
  %v1496 = vrot.slane %v1392, 2
  %v1497 = vrot.slane %v1375, 2
  %v1498 = vrot.slane %v1393, 2
  %v1499 = vrot.slane %v1376, 2
  %v1500 = vrot.slane %v1394, 2
  %v1501 = vrot.slane %v1377, 2
  %v1502 = vrot.slane %v1395, 2
  %v1503 = vrot.slane %v1378, 2
  %v1504 = vrot.slane %v1396, 2
  %v1505 = vrot.slane %v1379, 2
  %v1506 = vrot.slane %v1397, 2
  %v1507 = vrot.slane %v1380, 2
  %1508 = vrot.lane.b32.xlu0 %v1491, 126
  %v1509 = vpop.permute.xlu0 %1508
  %1510 = vrot.lane.b32.xlu0 %v1492, 126
  %v1511 = vpop.permute.xlu0 %1510
  %1512 = vrot.lane.b32.xlu0 %v1493, 126
  %v1513 = vpop.permute.xlu0 %1512
  %1514 = vrot.lane.b32.xlu0 %v1494, 126
  %v1515 = vpop.permute.xlu0 %1514
  %1516 = vrot.lane.b32.xlu0 %v1495, 126
  %v1517 = vpop.permute.xlu0 %1516
  %1518 = vrot.lane.b32.xlu0 %v1496, 126
  %v1519 = vpop.permute.xlu0 %1518
  %1520 = vrot.lane.b32.xlu0 %v1497, 126
  %v1521 = vpop.permute.xlu0 %1520
  %1522 = vrot.lane.b32.xlu0 %v1498, 126
  %v1523 = vpop.permute.xlu0 %1522
  %1524 = vrot.lane.b32.xlu0 %v1499, 126
  %v1525 = vpop.permute.xlu0 %1524
  %1526 = vrot.lane.b32.xlu0 %v1500, 126
  %v1527 = vpop.permute.xlu0 %1526
  %1528 = vrot.lane.b32.xlu0 %v1501, 126
  %v1529 = vpop.permute.xlu0 %1528
  %1530 = vrot.lane.b32.xlu0 %v1502, 126
  %v1531 = vpop.permute.xlu0 %1530
  %1532 = vrot.lane.b32.xlu0 %v1503, 126
  %v1533 = vpop.permute.xlu0 %1532
  %1534 = vrot.lane.b32.xlu0 %v1504, 126
  %v1535 = vpop.permute.xlu0 %1534
  %1536 = vrot.lane.b32.xlu0 %v1505, 126
  %v1537 = vpop.permute.xlu0 %1536
  %1538 = vrot.lane.b32.xlu0 %v1506, 126
  %v1539 = vpop.permute.xlu0 %1538
  %1540 = vrot.lane.b32.xlu0 %v1507, 126
  %v1541 = vpop.permute.xlu0 %1540
  %vm1542 = vcmask 1031168
  %v1543 = vsel %vm1542, %v1509, %v1511
  %v1544 = vsel %vm1542, %v1511, %v1513
  %v1545 = vsel %vm1542, %v1513, %v1515
  %v1546 = vsel %vm1542, %v1515, %v1517
  %v1547 = vsel %vm1542, %v1517, %v1519
  %v1548 = vsel %vm1542, %v1519, %v1521
  %v1549 = vsel %vm1542, %v1521, %v1523
  %v1550 = vsel %vm1542, %v1523, %v1525
  %v1551 = vsel %vm1542, %v1525, %v1527
  %v1552 = vsel %vm1542, %v1527, %v1529
  %v1553 = vsel %vm1542, %v1529, %v1531
  %v1554 = vsel %vm1542, %v1531, %v1533
  %v1555 = vsel %vm1542, %v1533, %v1535
  %v1556 = vsel %vm1542, %v1535, %v1537
  %v1557 = vsel %vm1542, %v1537, %v1539
  %v1558 = vsel %vm1542, %v1539, %v1541
  %v1576 = vrot.slane %v1372, 7
  %v1577 = vrot.slane %v1390, 7
  %v1578 = vrot.slane %v1373, 7
  %v1579 = vrot.slane %v1391, 7
  %v1580 = vrot.slane %v1374, 7
  %v1581 = vrot.slane %v1392, 7
  %v1582 = vrot.slane %v1375, 7
  %v1583 = vrot.slane %v1393, 7
  %v1584 = vrot.slane %v1376, 7
  %v1585 = vrot.slane %v1394, 7
  %v1586 = vrot.slane %v1377, 7
  %v1587 = vrot.slane %v1395, 7
  %v1588 = vrot.slane %v1378, 7
  %v1589 = vrot.slane %v1396, 7
  %v1590 = vrot.slane %v1379, 7
  %v1591 = vrot.slane %v1397, 7
  %v1592 = vrot.slane %v1380, 7
  %1593 = vrot.lane.b32.xlu0 %v1576, 125
  %v1594 = vpop.permute.xlu0 %1593
  %1595 = vrot.lane.b32.xlu0 %v1577, 125
  %v1596 = vpop.permute.xlu0 %1595
  %1597 = vrot.lane.b32.xlu0 %v1578, 125
  %v1598 = vpop.permute.xlu0 %1597
  %1599 = vrot.lane.b32.xlu0 %v1579, 125
  %v1600 = vpop.permute.xlu0 %1599
  %1601 = vrot.lane.b32.xlu0 %v1580, 125
  %v1602 = vpop.permute.xlu0 %1601
  %1603 = vrot.lane.b32.xlu0 %v1581, 125
  %v1604 = vpop.permute.xlu0 %1603
  %1605 = vrot.lane.b32.xlu0 %v1582, 125
  %v1606 = vpop.permute.xlu0 %1605
  %1607 = vrot.lane.b32.xlu0 %v1583, 125
  %v1608 = vpop.permute.xlu0 %1607
  %1609 = vrot.lane.b32.xlu0 %v1584, 125
  %v1610 = vpop.permute.xlu0 %1609
  %1611 = vrot.lane.b32.xlu0 %v1585, 125
  %v1612 = vpop.permute.xlu0 %1611
  %1613 = vrot.lane.b32.xlu0 %v1586, 125
  %v1614 = vpop.permute.xlu0 %1613
  %1615 = vrot.lane.b32.xlu0 %v1587, 125
  %v1616 = vpop.permute.xlu0 %1615
  %1617 = vrot.lane.b32.xlu0 %v1588, 125
  %v1618 = vpop.permute.xlu0 %1617
  %1619 = vrot.lane.b32.xlu0 %v1589, 125
  %v1620 = vpop.permute.xlu0 %1619
  %1621 = vrot.lane.b32.xlu0 %v1590, 125
  %v1622 = vpop.permute.xlu0 %1621
  %1623 = vrot.lane.b32.xlu0 %v1591, 125
  %v1624 = vpop.permute.xlu0 %1623
  %1625 = vrot.lane.b32.xlu0 %v1592, 125
  %v1626 = vpop.permute.xlu0 %1625
  %vm1627 = vcmask 1022976
  %v1628 = vsel %vm1627, %v1594, %v1596
  %v1629 = vsel %vm1627, %v1596, %v1598
  %v1630 = vsel %vm1627, %v1598, %v1600
  %v1631 = vsel %vm1627, %v1600, %v1602
  %v1632 = vsel %vm1627, %v1602, %v1604
  %v1633 = vsel %vm1627, %v1604, %v1606
  %v1634 = vsel %vm1627, %v1606, %v1608
  %v1635 = vsel %vm1627, %v1608, %v1610
  %v1636 = vsel %vm1627, %v1610, %v1612
  %v1637 = vsel %vm1627, %v1612, %v1614
  %v1638 = vsel %vm1627, %v1614, %v1616
  %v1639 = vsel %vm1627, %v1616, %v1618
  %v1640 = vsel %vm1627, %v1618, %v1620
  %v1641 = vsel %vm1627, %v1620, %v1622
  %v1642 = vsel %vm1627, %v1622, %v1624
  %v1643 = vsel %vm1627, %v1624, %v1626
  %v1661 = vcombine.low %v1372, %v1372
  %v1662 = vcombine.low %v1373, %v1373
  %v1663 = vcombine.low %v1374, %v1374
  %v1664 = vcombine.low %v1375, %v1375
  %v1665 = vcombine.low %v1376, %v1376
  %v1666 = vcombine.low %v1377, %v1377
  %v1667 = vcombine.low %v1378, %v1378
  %v1668 = vcombine.low %v1379, %v1379
  %v1669 = vcombine.low %v1380, %v1380
  %1670 = vrot.lane.b32.xlu0 %v1661, 124
  %v1671 = vpop.permute.xlu0 %1670
  %1672 = vrot.lane.b32.xlu0 %v1372, 124
  %v1673 = vpop.permute.xlu0 %1672
  %1674 = vrot.lane.b32.xlu0 %v1662, 124
  %v1675 = vpop.permute.xlu0 %1674
  %1676 = vrot.lane.b32.xlu0 %v1373, 124
  %v1677 = vpop.permute.xlu0 %1676
  %1678 = vrot.lane.b32.xlu0 %v1663, 124
  %v1679 = vpop.permute.xlu0 %1678
  %1680 = vrot.lane.b32.xlu0 %v1374, 124
  %v1681 = vpop.permute.xlu0 %1680
  %1682 = vrot.lane.b32.xlu0 %v1664, 124
  %v1683 = vpop.permute.xlu0 %1682
  %1684 = vrot.lane.b32.xlu0 %v1375, 124
  %v1685 = vpop.permute.xlu0 %1684
  %1686 = vrot.lane.b32.xlu0 %v1665, 124
  %v1687 = vpop.permute.xlu0 %1686
  %1688 = vrot.lane.b32.xlu0 %v1376, 124
  %v1689 = vpop.permute.xlu0 %1688
  %1690 = vrot.lane.b32.xlu0 %v1666, 124
  %v1691 = vpop.permute.xlu0 %1690
  %1692 = vrot.lane.b32.xlu0 %v1377, 124
  %v1693 = vpop.permute.xlu0 %1692
  %1694 = vrot.lane.b32.xlu0 %v1667, 124
  %v1695 = vpop.permute.xlu0 %1694
  %1696 = vrot.lane.b32.xlu0 %v1378, 124
  %v1697 = vpop.permute.xlu0 %1696
  %1698 = vrot.lane.b32.xlu0 %v1668, 124
  %v1699 = vpop.permute.xlu0 %1698
  %1700 = vrot.lane.b32.xlu0 %v1379, 124
  %v1701 = vpop.permute.xlu0 %1700
  %1702 = vrot.lane.b32.xlu0 %v1669, 124
  %v1703 = vpop.permute.xlu0 %1702
  %vm1704 = vcmask 1014784
  %v1705 = vsel %vm1704, %v1671, %v1673
  %v1706 = vsel %vm1704, %v1673, %v1675
  %v1707 = vsel %vm1704, %v1675, %v1677
  %v1708 = vsel %vm1704, %v1677, %v1679
  %v1709 = vsel %vm1704, %v1679, %v1681
  %v1710 = vsel %vm1704, %v1681, %v1683
  %v1711 = vsel %vm1704, %v1683, %v1685
  %v1712 = vsel %vm1704, %v1685, %v1687
  %v1713 = vsel %vm1704, %v1687, %v1689
  %v1714 = vsel %vm1704, %v1689, %v1691
  %v1715 = vsel %vm1704, %v1691, %v1693
  %v1716 = vsel %vm1704, %v1693, %v1695
  %v1717 = vsel %vm1704, %v1695, %v1697
  %v1718 = vsel %vm1704, %v1697, %v1699
  %v1719 = vsel %vm1704, %v1699, %v1701
  %v1720 = vsel %vm1704, %v1701, %v1703
  %vm1738 = vcmask 1042432
  %v1739 = vsel %vm1738, %v1372, %v1458
  %v1740 = vsel %vm1738, %v1390, %v1459
  %v1741 = vsel %vm1738, %v1373, %v1460
  %v1742 = vsel %vm1738, %v1391, %v1461
  %v1743 = vsel %vm1738, %v1374, %v1462
  %v1744 = vsel %vm1738, %v1392, %v1463
  %v1745 = vsel %vm1738, %v1375, %v1464
  %v1746 = vsel %vm1738, %v1393, %v1465
  %v1747 = vsel %vm1738, %v1376, %v1466
  %v1748 = vsel %vm1738, %v1394, %v1467
  %v1749 = vsel %vm1738, %v1377, %v1468
  %v1750 = vsel %vm1738, %v1395, %v1469
  %v1751 = vsel %vm1738, %v1378, %v1470
  %v1752 = vsel %vm1738, %v1396, %v1471
  %v1753 = vsel %vm1738, %v1379, %v1472
  %v1754 = vsel %vm1738, %v1397, %v1473
  %v1755 = vsel %vm1738, %v1380, %v1456
  %vm1756 = vcmask 1045504
  %v1757 = vsel %vm1756, %v1739, %v1543
  %v1758 = vsel %vm1756, %v1740, %v1544
  %v1759 = vsel %vm1756, %v1741, %v1545
  %v1760 = vsel %vm1756, %v1742, %v1546
  %v1761 = vsel %vm1756, %v1743, %v1547
  %v1762 = vsel %vm1756, %v1744, %v1548
  %v1763 = vsel %vm1756, %v1745, %v1549
  %v1764 = vsel %vm1756, %v1746, %v1550
  %v1765 = vsel %vm1756, %v1747, %v1551
  %v1766 = vsel %vm1756, %v1748, %v1552
  %v1767 = vsel %vm1756, %v1749, %v1553
  %v1768 = vsel %vm1756, %v1750, %v1554
  %v1769 = vsel %vm1756, %v1751, %v1555
  %v1770 = vsel %vm1756, %v1752, %v1556
  %v1771 = vsel %vm1756, %v1753, %v1557
  %v1772 = vsel %vm1756, %v1754, %v1558
  %v1773 = vsel %vm1756, %v1755, %v1541
  %vm1774 = vcmask 1040384
  %v1775 = vsel %vm1774, %v1543, %v1628
  %v1776 = vsel %vm1774, %v1544, %v1629
  %v1777 = vsel %vm1774, %v1545, %v1630
  %v1778 = vsel %vm1774, %v1546, %v1631
  %v1779 = vsel %vm1774, %v1547, %v1632
  %v1780 = vsel %vm1774, %v1548, %v1633
  %v1781 = vsel %vm1774, %v1549, %v1634
  %v1782 = vsel %vm1774, %v1550, %v1635
  %v1783 = vsel %vm1774, %v1551, %v1636
  %v1784 = vsel %vm1774, %v1552, %v1637
  %v1785 = vsel %vm1774, %v1553, %v1638
  %v1786 = vsel %vm1774, %v1554, %v1639
  %v1787 = vsel %vm1774, %v1555, %v1640
  %v1788 = vsel %vm1774, %v1556, %v1641
  %v1789 = vsel %vm1774, %v1557, %v1642
  %v1790 = vsel %vm1774, %v1558, %v1643
  %v1791 = vsel %vm1774, %v1541, %v1626
  %vm1792 = vcmask 1043456
  %v1793 = vsel %vm1792, %v1775, %v1705
  %v1794 = vsel %vm1792, %v1776, %v1706
  %v1795 = vsel %vm1792, %v1777, %v1707
  %v1796 = vsel %vm1792, %v1778, %v1708
  %v1797 = vsel %vm1792, %v1779, %v1709
  %v1798 = vsel %vm1792, %v1780, %v1710
  %v1799 = vsel %vm1792, %v1781, %v1711
  %v1800 = vsel %vm1792, %v1782, %v1712
  %v1801 = vsel %vm1792, %v1783, %v1713
  %v1802 = vsel %vm1792, %v1784, %v1714
  %v1803 = vsel %vm1792, %v1785, %v1715
  %v1804 = vsel %vm1792, %v1786, %v1716
  %v1805 = vsel %vm1792, %v1787, %v1717
  %v1806 = vsel %vm1792, %v1788, %v1718
  %v1807 = vsel %vm1792, %v1789, %v1719
  %v1808 = vsel %vm1792, %v1790, %v1720
  %v1809 = vsel %vm1792, %v1791, %v1703
  %v1810 = vld [vmem:[%s1] sm:$0x3f]
  %1812 = vrot.lane.b32.xlu0 %v1810, 113
  %v1813 = vpop.permute.xlu0 %1812
  %1848 = vrot.lane.b32.xlu0 %v1757, 96
  %v1849 = vpop.permute.xlu0 %1848
  %1850 = vrot.lane.b32.xlu0 %v1758, 96
  %v1851 = vpop.permute.xlu0 %1850
  %1852 = vrot.lane.b32.xlu0 %v1759, 96
  %v1853 = vpop.permute.xlu0 %1852
  %1854 = vrot.lane.b32.xlu0 %v1760, 96
  %v1855 = vpop.permute.xlu0 %1854
  %1856 = vrot.lane.b32.xlu0 %v1761, 96
  %v1857 = vpop.permute.xlu0 %1856
  %1858 = vrot.lane.b32.xlu0 %v1762, 96
  %v1859 = vpop.permute.xlu0 %1858
  %1860 = vrot.lane.b32.xlu0 %v1763, 96
  %v1861 = vpop.permute.xlu0 %1860
  %1862 = vrot.lane.b32.xlu0 %v1764, 96
  %v1863 = vpop.permute.xlu0 %1862
  %1864 = vrot.lane.b32.xlu0 %v1765, 96
  %v1865 = vpop.permute.xlu0 %1864
  %1866 = vrot.lane.b32.xlu0 %v1766, 96
  %v1867 = vpop.permute.xlu0 %1866
  %1868 = vrot.lane.b32.xlu0 %v1767, 96
  %v1869 = vpop.permute.xlu0 %1868
  %1870 = vrot.lane.b32.xlu0 %v1768, 96
  %v1871 = vpop.permute.xlu0 %1870
  %1872 = vrot.lane.b32.xlu0 %v1769, 96
  %v1873 = vpop.permute.xlu0 %1872
  %1874 = vrot.lane.b32.xlu0 %v1770, 96
  %v1875 = vpop.permute.xlu0 %1874
  %1876 = vrot.lane.b32.xlu0 %v1771, 96
  %v1877 = vpop.permute.xlu0 %1876
  %1878 = vrot.lane.b32.xlu0 %v1772, 96
  %v1879 = vpop.permute.xlu0 %1878
  %1880 = vrot.lane.b32.xlu0 %v1773, 96
  %v1881 = vpop.permute.xlu0 %1880
  %1882 = vrot.lane.b32.xlu0 %v1793, 96
  %v1883 = vpop.permute.xlu0 %1882
  %1884 = vrot.lane.b32.xlu0 %v1794, 96
  %v1885 = vpop.permute.xlu0 %1884
  %1886 = vrot.lane.b32.xlu0 %v1795, 96
  %v1887 = vpop.permute.xlu0 %1886
  %1888 = vrot.lane.b32.xlu0 %v1796, 96
  %v1889 = vpop.permute.xlu0 %1888
  %1890 = vrot.lane.b32.xlu0 %v1797, 96
  %v1891 = vpop.permute.xlu0 %1890
  %1892 = vrot.lane.b32.xlu0 %v1798, 96
  %v1893 = vpop.permute.xlu0 %1892
  %1894 = vrot.lane.b32.xlu0 %v1799, 96
  %v1895 = vpop.permute.xlu0 %1894
  %1896 = vrot.lane.b32.xlu0 %v1800, 96
  %v1897 = vpop.permute.xlu0 %1896
  %1898 = vrot.lane.b32.xlu0 %v1801, 96
  %v1899 = vpop.permute.xlu0 %1898
  %1900 = vrot.lane.b32.xlu0 %v1802, 96
  %v1901 = vpop.permute.xlu0 %1900
  %1902 = vrot.lane.b32.xlu0 %v1803, 96
  %v1903 = vpop.permute.xlu0 %1902
  %1904 = vrot.lane.b32.xlu0 %v1804, 96
  %v1905 = vpop.permute.xlu0 %1904
  %1906 = vrot.lane.b32.xlu0 %v1805, 96
  %v1907 = vpop.permute.xlu0 %1906
  %1908 = vrot.lane.b32.xlu0 %v1806, 96
  %v1909 = vpop.permute.xlu0 %1908
  %1910 = vrot.lane.b32.xlu0 %v1807, 96
  %v1911 = vpop.permute.xlu0 %1910
  %1912 = vrot.lane.b32.xlu0 %v1808, 96
  %v1913 = vpop.permute.xlu0 %1912
  %1914 = vrot.lane.b32.xlu0 %v1809, 96
  %v1915 = vpop.permute.xlu0 %1914
  %vm1916 = vcmask 785408
  %v1917 = vsel %vm1916, %v1849, %v1851
  %v1918 = vsel %vm1916, %v1851, %v1853
  %v1919 = vsel %vm1916, %v1853, %v1855
  %v1920 = vsel %vm1916, %v1855, %v1857
  %v1921 = vsel %vm1916, %v1857, %v1859
  %v1922 = vsel %vm1916, %v1859, %v1861
  %v1923 = vsel %vm1916, %v1861, %v1863
  %v1924 = vsel %vm1916, %v1863, %v1865
  %v1925 = vsel %vm1916, %v1865, %v1867
  %v1926 = vsel %vm1916, %v1867, %v1869
  %v1927 = vsel %vm1916, %v1869, %v1871
  %v1928 = vsel %vm1916, %v1871, %v1873
  %v1929 = vsel %vm1916, %v1873, %v1875
  %v1930 = vsel %vm1916, %v1875, %v1877
  %v1931 = vsel %vm1916, %v1877, %v1879
  %v1932 = vsel %vm1916, %v1879, %v1881
  %v1933 = vsel %vm1916, %v1883, %v1885
  %v1934 = vsel %vm1916, %v1885, %v1887
  %v1935 = vsel %vm1916, %v1887, %v1889
  %v1936 = vsel %vm1916, %v1889, %v1891
  %v1937 = vsel %vm1916, %v1891, %v1893
  %v1938 = vsel %vm1916, %v1893, %v1895
  %v1939 = vsel %vm1916, %v1895, %v1897
  %v1940 = vsel %vm1916, %v1897, %v1899
  %v1941 = vsel %vm1916, %v1899, %v1901
  %v1942 = vsel %vm1916, %v1901, %v1903
  %v1943 = vsel %vm1916, %v1903, %v1905
  %v1944 = vsel %vm1916, %v1905, %v1907
  %v1945 = vsel %vm1916, %v1907, %v1909
  %v1946 = vsel %vm1916, %v1909, %v1911
  %v1947 = vsel %vm1916, %v1911, %v1913
  %v1948 = vsel %vm1916, %v1913, %v1915
  %vm1966 = vcmask 121856
  %v1967 = vsel %vm1966, %v1813, 0
  %vm1969 = vcmask 1046528
  %v1970 = vsel %vm1969, %v1933, 0
  %v1972 = vsel %vm1969, %v1934, 0
  %v1974 = vsel %vm1969, %v1935, 0
  %v1976 = vsel %vm1969, %v1936, 0
  %v1978 = vsel %vm1969, %v1937, 0
  %v1980 = vsel %vm1969, %v1938, 0
  %v1982 = vsel %vm1969, %v1939, 0
  %v1984 = vsel %vm1969, %v1940, 0
  %v1986 = vsel %vm1969, %v1941, 0
  %v1988 = vsel %vm1969, %v1942, 0
  %v1990 = vsel %vm1969, %v1943, 0
  %v1992 = vsel %vm1969, %v1944, 0
  %v1994 = vsel %vm1969, %v1945, 0
  %v1996 = vsel %vm1969, %v1946, 0
  %v1998 = vsel %vm1969, %v1947, 0
  %v2000 = vsel %vm1969, %v1948, 0
  %v2002 = vsel %vm1969, %v1915, 0
  %2004 = vmatprep.subr.mxu0 %v1918
  %2005 = vmatpush1.msra.mxu0 %v1917
  %2006 = vmatprep.subr.mxu0 %v1972
  %2007 = vmatpush1.msra.mxu0 %v1970
  %2008 = vmatprep.subr.mxu0 0.0
  %2009 = vmatpush1.msra.mxu0 0.0
  %2010 = vmatprep.subr.mxu0 0.0
  %2011 = vmatpush1.msra.mxu0 0.0
  %2012 = vmatprep.subr.mxu0 0.0
  %2013 = vmatpush1.msra.mxu0 0.0
  %2014 = vmatprep.subr.mxu0 0.0
  %2015 = vmatpush1.msra.mxu0 0.0
  %2016 = vmatprep.subr.mxu0 0.0
  %2017 = vmatpush1.msra.mxu0 0.0
  %2018 = vmatprep.subr.mxu0 0.0
  %2019 = vmatpush1.msra.mxu0 0.0
  %2020 = vmatprep.subr.mxu0 0.0
  %2021 = vmatpush1.msra.mxu0 0.0
  %2022 = vmatprep.subr.mxu0 0.0
  %2023 = vmatpush1.msra.mxu0 0.0
  %2024 = vmatprep.subr.mxu0 0.0
  %2025 = vmatpush1.msra.mxu0 0.0
  %2026 = vmatprep.subr.mxu0 0.0
  %2027 = vmatpush1.msra.mxu0 0.0
  %2028 = vmatprep.subr.mxu0 0.0
  %2029 = vmatpush1.msra.mxu0 0.0
  %2030 = vmatprep.subr.mxu0 0.0
  %2031 = vmatpush1.msra.mxu0 0.0
  %2032 = vmatprep.subr.mxu0 0.0
  %2033 = vmatpush1.msra.mxu0 0.0
  %2034 = vmatprep.subr.mxu0 0.0
  %2035 = vmatpush1.msra.mxu0 0.0
  %2036 = vmatprep.subr.mxu0 0.0
  %2037 = vmatpush1.msra.mxu0 0.0
  %2038 = vmatprep.subr.mxu0 0.0
  %2039 = vmatpush1.msra.mxu0 0.0
  %2040 = vmatprep.subr.mxu0 0.0
  %2041 = vmatpush1.msra.mxu0 0.0
  %2042 = vmatprep.subr.mxu0 0.0
  %2043 = vmatpush1.msra.mxu0 0.0
  %2044 = vmatprep.subr.mxu0 0.0
  %2045 = vmatpush1.msra.mxu0 0.0
  %2046 = vmatprep.subr.mxu0 0.0
  %2047 = vmatpush1.msra.mxu0 0.0
  %2048 = vmatprep.subr.mxu0 0.0
  %2049 = vmatpush1.msra.mxu0 0.0
  %2050 = vmatprep.subr.mxu0 0.0
  %2051 = vmatpush1.msra.mxu0 0.0
  %2052 = vmatprep.subr.mxu0 0.0
  %2053 = vmatpush1.msra.mxu0 0.0
  %2054 = vmatprep.subr.mxu0 0.0
  %2055 = vmatpush1.msra.mxu0 0.0
  %2056 = vmatprep.subr.mxu0 0.0
  %2057 = vmatpush1.msra.mxu0 0.0
  %2058 = vmatprep.subr.mxu0 0.0
  %2059 = vmatpush1.msra.mxu0 0.0
  %2060 = vmatprep.subr.mxu0 0.0
  %2061 = vmatpush1.msra.mxu0 0.0
  %2062 = vmatprep.subr.mxu0 0.0
  %2063 = vmatpush1.msra.mxu0 0.0
  %2064 = vmatprep.subr.mxu0 0.0
  %2065 = vmatpush1.msra.mxu0 0.0
  %2066 = vmatprep.subr.mxu0 0.0
  %2067 = vmatpush1.msra.mxu0 0.0
  %2068 = vmatprep.mubr.f32.mxu0 0.0
  %2069 = vmatmul.mubr.f32.gmra.mrb[0].mxu0 %v1967
  %v2070 = vpop.f32.mrb[0].mxu0
  %v2071 = vadd.f32 0.0, %v2070
  %v2072 = vpop.f32.mrb[0].mxu0
  %v2073 = vadd.f32 0.0, %v2072
  %2074 = vdwg.mxu0
  %2075 = vmatprep.subr.mxu0 %v1920
  %2076 = vmatpush1.msra.mxu0 %v1919
  %2077 = vmatprep.subr.mxu0 %v1976
  %2078 = vmatpush1.msra.mxu0 %v1974
  %2079 = vmatprep.subr.mxu0 0.0
  %2080 = vmatpush1.msra.mxu0 0.0
  %2081 = vmatprep.subr.mxu0 0.0
  %2082 = vmatpush1.msra.mxu0 0.0
  %2083 = vmatprep.subr.mxu0 0.0
  %2084 = vmatpush1.msra.mxu0 0.0
  %2085 = vmatprep.subr.mxu0 0.0
  %2086 = vmatpush1.msra.mxu0 0.0
  %2087 = vmatprep.subr.mxu0 0.0
  %2088 = vmatpush1.msra.mxu0 0.0
  %2089 = vmatprep.subr.mxu0 0.0
  %2090 = vmatpush1.msra.mxu0 0.0
  %2091 = vmatprep.subr.mxu0 0.0
  %2092 = vmatpush1.msra.mxu0 0.0
  %2093 = vmatprep.subr.mxu0 0.0
  %2094 = vmatpush1.msra.mxu0 0.0
  %2095 = vmatprep.subr.mxu0 0.0
  %2096 = vmatpush1.msra.mxu0 0.0
  %2097 = vmatprep.subr.mxu0 0.0
  %2098 = vmatpush1.msra.mxu0 0.0
  %2099 = vmatprep.subr.mxu0 0.0
  %2100 = vmatpush1.msra.mxu0 0.0
  %2101 = vmatprep.subr.mxu0 0.0
  %2102 = vmatpush1.msra.mxu0 0.0
  %2103 = vmatprep.subr.mxu0 0.0
  %2104 = vmatpush1.msra.mxu0 0.0
  %2105 = vmatprep.subr.mxu0 0.0
  %2106 = vmatpush1.msra.mxu0 0.0
  %2107 = vmatprep.subr.mxu0 0.0
  %2108 = vmatpush1.msra.mxu0 0.0
  %2109 = vmatprep.subr.mxu0 0.0
  %2110 = vmatpush1.msra.mxu0 0.0
  %2111 = vmatprep.subr.mxu0 0.0
  %2112 = vmatpush1.msra.mxu0 0.0
  %2113 = vmatprep.subr.mxu0 0.0
  %2114 = vmatpush1.msra.mxu0 0.0
  %2115 = vmatprep.subr.mxu0 0.0
  %2116 = vmatpush1.msra.mxu0 0.0
  %2117 = vmatprep.subr.mxu0 0.0
  %2118 = vmatpush1.msra.mxu0 0.0
  %2119 = vmatprep.subr.mxu0 0.0
  %2120 = vmatpush1.msra.mxu0 0.0
  %2121 = vmatprep.subr.mxu0 0.0
  %2122 = vmatpush1.msra.mxu0 0.0
  %2123 = vmatprep.subr.mxu0 0.0
  %2124 = vmatpush1.msra.mxu0 0.0
  %2125 = vmatprep.subr.mxu0 0.0
  %2126 = vmatpush1.msra.mxu0 0.0
  %2127 = vmatprep.subr.mxu0 0.0
  %2128 = vmatpush1.msra.mxu0 0.0
  %2129 = vmatprep.subr.mxu0 0.0
  %2130 = vmatpush1.msra.mxu0 0.0
  %2131 = vmatprep.subr.mxu0 0.0
  %2132 = vmatpush1.msra.mxu0 0.0
  %2133 = vmatprep.subr.mxu0 0.0
  %2134 = vmatpush1.msra.mxu0 0.0
  %2135 = vmatprep.subr.mxu0 0.0
  %2136 = vmatpush1.msra.mxu0 0.0
  %2137 = vmatprep.subr.mxu0 0.0
  %2138 = vmatpush1.msra.mxu0 0.0
  %2139 = vmatprep.mubr.f32.mxu0 0.0
  %2140 = vmatmul.mubr.f32.gmra.mrb[0].mxu0 %v1967
  %v2141 = vpop.f32.mrb[0].mxu0
  %v2142 = vadd.f32 0.0, %v2141
  %v2143 = vpop.f32.mrb[0].mxu0
  %v2144 = vadd.f32 0.0, %v2143
  %2145 = vdwg.mxu0
  %2146 = vmatprep.subr.mxu0 %v1922
  %2147 = vmatpush1.msra.mxu0 %v1921
  %2148 = vmatprep.subr.mxu0 %v1980
  %2149 = vmatpush1.msra.mxu0 %v1978
  %2150 = vmatprep.subr.mxu0 0.0
  %2151 = vmatpush1.msra.mxu0 0.0
  %2152 = vmatprep.subr.mxu0 0.0
  %2153 = vmatpush1.msra.mxu0 0.0
  %2154 = vmatprep.subr.mxu0 0.0
  %2155 = vmatpush1.msra.mxu0 0.0
  %2156 = vmatprep.subr.mxu0 0.0
  %2157 = vmatpush1.msra.mxu0 0.0
  %2158 = vmatprep.subr.mxu0 0.0
  %2159 = vmatpush1.msra.mxu0 0.0
  %2160 = vmatprep.subr.mxu0 0.0
  %2161 = vmatpush1.msra.mxu0 0.0
  %2162 = vmatprep.subr.mxu0 0.0
  %2163 = vmatpush1.msra.mxu0 0.0
  %2164 = vmatprep.subr.mxu0 0.0
  %2165 = vmatpush1.msra.mxu0 0.0
  %2166 = vmatprep.subr.mxu0 0.0
  %2167 = vmatpush1.msra.mxu0 0.0
  %2168 = vmatprep.subr.mxu0 0.0
  %2169 = vmatpush1.msra.mxu0 0.0
  %2170 = vmatprep.subr.mxu0 0.0
  %2171 = vmatpush1.msra.mxu0 0.0
  %2172 = vmatprep.subr.mxu0 0.0
  %2173 = vmatpush1.msra.mxu0 0.0
  %2174 = vmatprep.subr.mxu0 0.0
  %2175 = vmatpush1.msra.mxu0 0.0
  %2176 = vmatprep.subr.mxu0 0.0
  %2177 = vmatpush1.msra.mxu0 0.0
  %2178 = vmatprep.subr.mxu0 0.0
  %2179 = vmatpush1.msra.mxu0 0.0
  %2180 = vmatprep.subr.mxu0 0.0
  %2181 = vmatpush1.msra.mxu0 0.0
  %2182 = vmatprep.subr.mxu0 0.0
  %2183 = vmatpush1.msra.mxu0 0.0
  %2184 = vmatprep.subr.mxu0 0.0
  %2185 = vmatpush1.msra.mxu0 0.0
  %2186 = vmatprep.subr.mxu0 0.0
  %2187 = vmatpush1.msra.mxu0 0.0
  %2188 = vmatprep.subr.mxu0 0.0
  %2189 = vmatpush1.msra.mxu0 0.0
  %2190 = vmatprep.subr.mxu0 0.0
  %2191 = vmatpush1.msra.mxu0 0.0
  %2192 = vmatprep.subr.mxu0 0.0
  %2193 = vmatpush1.msra.mxu0 0.0
  %2194 = vmatprep.subr.mxu0 0.0
  %2195 = vmatpush1.msra.mxu0 0.0
  %2196 = vmatprep.subr.mxu0 0.0
  %2197 = vmatpush1.msra.mxu0 0.0
  %2198 = vmatprep.subr.mxu0 0.0
  %2199 = vmatpush1.msra.mxu0 0.0
  %2200 = vmatprep.subr.mxu0 0.0
  %2201 = vmatpush1.msra.mxu0 0.0
  %2202 = vmatprep.subr.mxu0 0.0
  %2203 = vmatpush1.msra.mxu0 0.0
  %2204 = vmatprep.subr.mxu0 0.0
  %2205 = vmatpush1.msra.mxu0 0.0
  %2206 = vmatprep.subr.mxu0 0.0
  %2207 = vmatpush1.msra.mxu0 0.0
  %2208 = vmatprep.subr.mxu0 0.0
  %2209 = vmatpush1.msra.mxu0 0.0
  %2210 = vmatprep.mubr.f32.mxu0 0.0
  %2211 = vmatmul.mubr.f32.gmra.mrb[0].mxu0 %v1967
  %v2212 = vpop.f32.mrb[0].mxu0
  %v2213 = vadd.f32 0.0, %v2212
  %v2214 = vpop.f32.mrb[0].mxu0
  %v2215 = vadd.f32 0.0, %v2214
  %2216 = vdwg.mxu0
  %2217 = vmatprep.subr.mxu0 %v1924
  %2218 = vmatpush1.msra.mxu0 %v1923
  %2219 = vmatprep.subr.mxu0 %v1984
  %2220 = vmatpush1.msra.mxu0 %v1982
  %2221 = vmatprep.subr.mxu0 0.0
  %2222 = vmatpush1.msra.mxu0 0.0
  %2223 = vmatprep.subr.mxu0 0.0
  %2224 = vmatpush1.msra.mxu0 0.0
  %2225 = vmatprep.subr.mxu0 0.0
  %2226 = vmatpush1.msra.mxu0 0.0
  %2227 = vmatprep.subr.mxu0 0.0
  %2228 = vmatpush1.msra.mxu0 0.0
  %2229 = vmatprep.subr.mxu0 0.0
  %2230 = vmatpush1.msra.mxu0 0.0
  %2231 = vmatprep.subr.mxu0 0.0
  %2232 = vmatpush1.msra.mxu0 0.0
  %2233 = vmatprep.subr.mxu0 0.0
  %2234 = vmatpush1.msra.mxu0 0.0
  %2235 = vmatprep.subr.mxu0 0.0
  %2236 = vmatpush1.msra.mxu0 0.0
  %2237 = vmatprep.subr.mxu0 0.0
  %2238 = vmatpush1.msra.mxu0 0.0
  %2239 = vmatprep.subr.mxu0 0.0
  %2240 = vmatpush1.msra.mxu0 0.0
  %2241 = vmatprep.subr.mxu0 0.0
  %2242 = vmatpush1.msra.mxu0 0.0
  %2243 = vmatprep.subr.mxu0 0.0
  %2244 = vmatpush1.msra.mxu0 0.0
  %2245 = vmatprep.subr.mxu0 0.0
  %2246 = vmatpush1.msra.mxu0 0.0
  %2247 = vmatprep.subr.mxu0 0.0
  %2248 = vmatpush1.msra.mxu0 0.0
  %2249 = vmatprep.subr.mxu0 0.0
  %2250 = vmatpush1.msra.mxu0 0.0
  %2251 = vmatprep.subr.mxu0 0.0
  %2252 = vmatpush1.msra.mxu0 0.0
  %2253 = vmatprep.subr.mxu0 0.0
  %2254 = vmatpush1.msra.mxu0 0.0
  %2255 = vmatprep.subr.mxu0 0.0
  %2256 = vmatpush1.msra.mxu0 0.0
  %2257 = vmatprep.subr.mxu0 0.0
  %2258 = vmatpush1.msra.mxu0 0.0
  %2259 = vmatprep.subr.mxu0 0.0
  %2260 = vmatpush1.msra.mxu0 0.0
  %2261 = vmatprep.subr.mxu0 0.0
  %2262 = vmatpush1.msra.mxu0 0.0
  %2263 = vmatprep.subr.mxu0 0.0
  %2264 = vmatpush1.msra.mxu0 0.0
  %2265 = vmatprep.subr.mxu0 0.0
  %2266 = vmatpush1.msra.mxu0 0.0
  %2267 = vmatprep.subr.mxu0 0.0
  %2268 = vmatpush1.msra.mxu0 0.0
  %2269 = vmatprep.subr.mxu0 0.0
  %2270 = vmatpush1.msra.mxu0 0.0
  %2271 = vmatprep.subr.mxu0 0.0
  %2272 = vmatpush1.msra.mxu0 0.0
  %2273 = vmatprep.subr.mxu0 0.0
  %2274 = vmatpush1.msra.mxu0 0.0
  %2275 = vmatprep.subr.mxu0 0.0
  %2276 = vmatpush1.msra.mxu0 0.0
  %2277 = vmatprep.subr.mxu0 0.0
  %2278 = vmatpush1.msra.mxu0 0.0
  %2279 = vmatprep.subr.mxu0 0.0
  %2280 = vmatpush1.msra.mxu0 0.0
  %2281 = vmatprep.mubr.f32.mxu0 0.0
  %2282 = vmatmul.mubr.f32.gmra.mrb[0].mxu0 %v1967
  %v2283 = vpop.f32.mrb[0].mxu0
  %v2284 = vadd.f32 0.0, %v2283
  %v2285 = vpop.f32.mrb[0].mxu0
  %v2286 = vadd.f32 0.0, %v2285
  %2287 = vdwg.mxu0
  %2288 = vmatprep.subr.mxu0 %v1926
  %2289 = vmatpush1.msra.mxu0 %v1925
  %2290 = vmatprep.subr.mxu0 %v1988
  %2291 = vmatpush1.msra.mxu0 %v1986
  %2292 = vmatprep.subr.mxu0 0.0
  %2293 = vmatpush1.msra.mxu0 0.0
  %2294 = vmatprep.subr.mxu0 0.0
  %2295 = vmatpush1.msra.mxu0 0.0
  %2296 = vmatprep.subr.mxu0 0.0
  %2297 = vmatpush1.msra.mxu0 0.0
  %2298 = vmatprep.subr.mxu0 0.0
  %2299 = vmatpush1.msra.mxu0 0.0
  %2300 = vmatprep.subr.mxu0 0.0
  %2301 = vmatpush1.msra.mxu0 0.0
  %2302 = vmatprep.subr.mxu0 0.0
  %2303 = vmatpush1.msra.mxu0 0.0
  %2304 = vmatprep.subr.mxu0 0.0
  %2305 = vmatpush1.msra.mxu0 0.0
  %2306 = vmatprep.subr.mxu0 0.0
  %2307 = vmatpush1.msra.mxu0 0.0
  %2308 = vmatprep.subr.mxu0 0.0
  %2309 = vmatpush1.msra.mxu0 0.0
  %2310 = vmatprep.subr.mxu0 0.0
  %2311 = vmatpush1.msra.mxu0 0.0
  %2312 = vmatprep.subr.mxu0 0.0
  %2313 = vmatpush1.msra.mxu0 0.0
  %2314 = vmatprep.subr.mxu0 0.0
  %2315 = vmatpush1.msra.mxu0 0.0
  %2316 = vmatprep.subr.mxu0 0.0
  %2317 = vmatpush1.msra.mxu0 0.0
  %2318 = vmatprep.subr.mxu0 0.0
  %2319 = vmatpush1.msra.mxu0 0.0
  %2320 = vmatprep.subr.mxu0 0.0
  %2321 = vmatpush1.msra.mxu0 0.0
  %2322 = vmatprep.subr.mxu0 0.0
  %2323 = vmatpush1.msra.mxu0 0.0
  %2324 = vmatprep.subr.mxu0 0.0
  %2325 = vmatpush1.msra.mxu0 0.0
  %2326 = vmatprep.subr.mxu0 0.0
  %2327 = vmatpush1.msra.mxu0 0.0
  %2328 = vmatprep.subr.mxu0 0.0
  %2329 = vmatpush1.msra.mxu0 0.0
  %2330 = vmatprep.subr.mxu0 0.0
  %2331 = vmatpush1.msra.mxu0 0.0
  %2332 = vmatprep.subr.mxu0 0.0
  %2333 = vmatpush1.msra.mxu0 0.0
  %2334 = vmatprep.subr.mxu0 0.0
  %2335 = vmatpush1.msra.mxu0 0.0
  %2336 = vmatprep.subr.mxu0 0.0
  %2337 = vmatpush1.msra.mxu0 0.0
  %2338 = vmatprep.subr.mxu0 0.0
  %2339 = vmatpush1.msra.mxu0 0.0
  %2340 = vmatprep.subr.mxu0 0.0
  %2341 = vmatpush1.msra.mxu0 0.0
  %2342 = vmatprep.subr.mxu0 0.0
  %2343 = vmatpush1.msra.mxu0 0.0
  %2344 = vmatprep.subr.mxu0 0.0
  %2345 = vmatpush1.msra.mxu0 0.0
  %2346 = vmatprep.subr.mxu0 0.0
  %2347 = vmatpush1.msra.mxu0 0.0
  %2348 = vmatprep.subr.mxu0 0.0
  %2349 = vmatpush1.msra.mxu0 0.0
  %2350 = vmatprep.subr.mxu0 0.0
  %2351 = vmatpush1.msra.mxu0 0.0
  %2352 = vmatprep.mubr.f32.mxu0 0.0
  %2353 = vmatmul.mubr.f32.gmra.mrb[0].mxu0 %v1967
  %v2354 = vpop.f32.mrb[0].mxu0
  %v2355 = vadd.f32 0.0, %v2354
  %v2356 = vpop.f32.mrb[0].mxu0
  %v2357 = vadd.f32 0.0, %v2356
  %2358 = vdwg.mxu0
  %2359 = vmatprep.subr.mxu0 %v1928
  %2360 = vmatpush1.msra.mxu0 %v1927
  %2361 = vmatprep.subr.mxu0 %v1992
  %2362 = vmatpush1.msra.mxu0 %v1990
  %2363 = vmatprep.subr.mxu0 0.0
  %2364 = vmatpush1.msra.mxu0 0.0
  %2365 = vmatprep.subr.mxu0 0.0
  %2366 = vmatpush1.msra.mxu0 0.0
  %2367 = vmatprep.subr.mxu0 0.0
  %2368 = vmatpush1.msra.mxu0 0.0
  %2369 = vmatprep.subr.mxu0 0.0
  %2370 = vmatpush1.msra.mxu0 0.0
  %2371 = vmatprep.subr.mxu0 0.0
  %2372 = vmatpush1.msra.mxu0 0.0
  %2373 = vmatprep.subr.mxu0 0.0
  %2374 = vmatpush1.msra.mxu0 0.0
  %2375 = vmatprep.subr.mxu0 0.0
  %2376 = vmatpush1.msra.mxu0 0.0
  %2377 = vmatprep.subr.mxu0 0.0
  %2378 = vmatpush1.msra.mxu0 0.0
  %2379 = vmatprep.subr.mxu0 0.0
  %2380 = vmatpush1.msra.mxu0 0.0
  %2381 = vmatprep.subr.mxu0 0.0
  %2382 = vmatpush1.msra.mxu0 0.0
  %2383 = vmatprep.subr.mxu0 0.0
  %2384 = vmatpush1.msra.mxu0 0.0
  %2385 = vmatprep.subr.mxu0 0.0
  %2386 = vmatpush1.msra.mxu0 0.0
  %2387 = vmatprep.subr.mxu0 0.0
  %2388 = vmatpush1.msra.mxu0 0.0
  %2389 = vmatprep.subr.mxu0 0.0
  %2390 = vmatpush1.msra.mxu0 0.0
  %2391 = vmatprep.subr.mxu0 0.0
  %2392 = vmatpush1.msra.mxu0 0.0
  %2393 = vmatprep.subr.mxu0 0.0
  %2394 = vmatpush1.msra.mxu0 0.0
  %2395 = vmatprep.subr.mxu0 0.0
  %2396 = vmatpush1.msra.mxu0 0.0
  %2397 = vmatprep.subr.mxu0 0.0
  %2398 = vmatpush1.msra.mxu0 0.0
  %2399 = vmatprep.subr.mxu0 0.0
  %2400 = vmatpush1.msra.mxu0 0.0
  %2401 = vmatprep.subr.mxu0 0.0
  %2402 = vmatpush1.msra.mxu0 0.0
  %2403 = vmatprep.subr.mxu0 0.0
  %2404 = vmatpush1.msra.mxu0 0.0
  %2405 = vmatprep.subr.mxu0 0.0
  %2406 = vmatpush1.msra.mxu0 0.0
  %2407 = vmatprep.subr.mxu0 0.0
  %2408 = vmatpush1.msra.mxu0 0.0
  %2409 = vmatprep.subr.mxu0 0.0
  %2410 = vmatpush1.msra.mxu0 0.0
  %2411 = vmatprep.subr.mxu0 0.0
  %2412 = vmatpush1.msra.mxu0 0.0
  %2413 = vmatprep.subr.mxu0 0.0
  %2414 = vmatpush1.msra.mxu0 0.0
  %2415 = vmatprep.subr.mxu0 0.0
  %2416 = vmatpush1.msra.mxu0 0.0
  %2417 = vmatprep.subr.mxu0 0.0
  %2418 = vmatpush1.msra.mxu0 0.0
  %2419 = vmatprep.subr.mxu0 0.0
  %2420 = vmatpush1.msra.mxu0 0.0
  %2421 = vmatprep.subr.mxu0 0.0
  %2422 = vmatpush1.msra.mxu0 0.0
  %2423 = vmatprep.mubr.f32.mxu0 0.0
  %2424 = vmatmul.mubr.f32.gmra.mrb[0].mxu0 %v1967
  %v2425 = vpop.f32.mrb[0].mxu0
  %v2426 = vadd.f32 0.0, %v2425
  %v2427 = vpop.f32.mrb[0].mxu0
  %v2428 = vadd.f32 0.0, %v2427
  %2429 = vdwg.mxu0
  %2430 = vmatprep.subr.mxu0 %v1930
  %2431 = vmatpush1.msra.mxu0 %v1929
  %2432 = vmatprep.subr.mxu0 %v1996
  %2433 = vmatpush1.msra.mxu0 %v1994
  %2434 = vmatprep.subr.mxu0 0.0
  %2435 = vmatpush1.msra.mxu0 0.0
  %2436 = vmatprep.subr.mxu0 0.0
  %2437 = vmatpush1.msra.mxu0 0.0
  %2438 = vmatprep.subr.mxu0 0.0
  %2439 = vmatpush1.msra.mxu0 0.0
  %2440 = vmatprep.subr.mxu0 0.0
  %2441 = vmatpush1.msra.mxu0 0.0
  %2442 = vmatprep.subr.mxu0 0.0
  %2443 = vmatpush1.msra.mxu0 0.0
  %2444 = vmatprep.subr.mxu0 0.0
  %2445 = vmatpush1.msra.mxu0 0.0
  %2446 = vmatprep.subr.mxu0 0.0
  %2447 = vmatpush1.msra.mxu0 0.0
  %2448 = vmatprep.subr.mxu0 0.0
  %2449 = vmatpush1.msra.mxu0 0.0
  %2450 = vmatprep.subr.mxu0 0.0
  %2451 = vmatpush1.msra.mxu0 0.0
  %2452 = vmatprep.subr.mxu0 0.0
  %2453 = vmatpush1.msra.mxu0 0.0
  %2454 = vmatprep.subr.mxu0 0.0
  %2455 = vmatpush1.msra.mxu0 0.0
  %2456 = vmatprep.subr.mxu0 0.0
  %2457 = vmatpush1.msra.mxu0 0.0
  %2458 = vmatprep.subr.mxu0 0.0
  %2459 = vmatpush1.msra.mxu0 0.0
  %2460 = vmatprep.subr.mxu0 0.0
  %2461 = vmatpush1.msra.mxu0 0.0
  %2462 = vmatprep.subr.mxu0 0.0
  %2463 = vmatpush1.msra.mxu0 0.0
  %2464 = vmatprep.subr.mxu0 0.0
  %2465 = vmatpush1.msra.mxu0 0.0
  %2466 = vmatprep.subr.mxu0 0.0
  %2467 = vmatpush1.msra.mxu0 0.0
  %2468 = vmatprep.subr.mxu0 0.0
  %2469 = vmatpush1.msra.mxu0 0.0
  %2470 = vmatprep.subr.mxu0 0.0
  %2471 = vmatpush1.msra.mxu0 0.0
  %2472 = vmatprep.subr.mxu0 0.0
  %2473 = vmatpush1.msra.mxu0 0.0
  %2474 = vmatprep.subr.mxu0 0.0
  %2475 = vmatpush1.msra.mxu0 0.0
  %2476 = vmatprep.subr.mxu0 0.0
  %2477 = vmatpush1.msra.mxu0 0.0
  %2478 = vmatprep.subr.mxu0 0.0
  %2479 = vmatpush1.msra.mxu0 0.0
  %2480 = vmatprep.subr.mxu0 0.0
  %2481 = vmatpush1.msra.mxu0 0.0
  %2482 = vmatprep.subr.mxu0 0.0
  %2483 = vmatpush1.msra.mxu0 0.0
  %2484 = vmatprep.subr.mxu0 0.0
  %2485 = vmatpush1.msra.mxu0 0.0
  %2486 = vmatprep.subr.mxu0 0.0
  %2487 = vmatpush1.msra.mxu0 0.0
  %2488 = vmatprep.subr.mxu0 0.0
  %2489 = vmatpush1.msra.mxu0 0.0
  %2490 = vmatprep.subr.mxu0 0.0
  %2491 = vmatpush1.msra.mxu0 0.0
  %2492 = vmatprep.subr.mxu0 0.0
  %2493 = vmatpush1.msra.mxu0 0.0
  %2494 = vmatprep.mubr.f32.mxu0 0.0
  %2495 = vmatmul.mubr.f32.gmra.mrb[0].mxu0 %v1967
  %v2496 = vpop.f32.mrb[0].mxu0
  %v2497 = vadd.f32 0.0, %v2496
  %v2498 = vpop.f32.mrb[0].mxu0
  %v2499 = vadd.f32 0.0, %v2498
  %2500 = vdwg.mxu0
  %2501 = vmatprep.subr.mxu0 %v1932
  %2502 = vmatpush1.msra.mxu0 %v1931
  %2503 = vmatprep.subr.mxu0 %v2000
  %2504 = vmatpush1.msra.mxu0 %v1998
  %2505 = vmatprep.subr.mxu0 0.0
  %2506 = vmatpush1.msra.mxu0 0.0
  %2507 = vmatprep.subr.mxu0 0.0
  %2508 = vmatpush1.msra.mxu0 0.0
  %2509 = vmatprep.subr.mxu0 0.0
  %2510 = vmatpush1.msra.mxu0 0.0
  %2511 = vmatprep.subr.mxu0 0.0
  %2512 = vmatpush1.msra.mxu0 0.0
  %2513 = vmatprep.subr.mxu0 0.0
  %2514 = vmatpush1.msra.mxu0 0.0
  %2515 = vmatprep.subr.mxu0 0.0
  %2516 = vmatpush1.msra.mxu0 0.0
  %2517 = vmatprep.subr.mxu0 0.0
  %2518 = vmatpush1.msra.mxu0 0.0
  %2519 = vmatprep.subr.mxu0 0.0
  %2520 = vmatpush1.msra.mxu0 0.0
  %2521 = vmatprep.subr.mxu0 0.0
  %2522 = vmatpush1.msra.mxu0 0.0
  %2523 = vmatprep.subr.mxu0 0.0
  %2524 = vmatpush1.msra.mxu0 0.0
  %2525 = vmatprep.subr.mxu0 0.0
  %2526 = vmatpush1.msra.mxu0 0.0
  %2527 = vmatprep.subr.mxu0 0.0
  %2528 = vmatpush1.msra.mxu0 0.0
  %2529 = vmatprep.subr.mxu0 0.0
  %2530 = vmatpush1.msra.mxu0 0.0
  %2531 = vmatprep.subr.mxu0 0.0
  %2532 = vmatpush1.msra.mxu0 0.0
  %2533 = vmatprep.subr.mxu0 0.0
  %2534 = vmatpush1.msra.mxu0 0.0
  %2535 = vmatprep.subr.mxu0 0.0
  %2536 = vmatpush1.msra.mxu0 0.0
  %2537 = vmatprep.subr.mxu0 0.0
  %2538 = vmatpush1.msra.mxu0 0.0
  %2539 = vmatprep.subr.mxu0 0.0
  %2540 = vmatpush1.msra.mxu0 0.0
  %2541 = vmatprep.subr.mxu0 0.0
  %2542 = vmatpush1.msra.mxu0 0.0
  %2543 = vmatprep.subr.mxu0 0.0
  %2544 = vmatpush1.msra.mxu0 0.0
  %2545 = vmatprep.subr.mxu0 0.0
  %2546 = vmatpush1.msra.mxu0 0.0
  %2547 = vmatprep.subr.mxu0 0.0
  %2548 = vmatpush1.msra.mxu0 0.0
  %2549 = vmatprep.subr.mxu0 0.0
  %2550 = vmatpush1.msra.mxu0 0.0
  %2551 = vmatprep.subr.mxu0 0.0
  %2552 = vmatpush1.msra.mxu0 0.0
  %2553 = vmatprep.subr.mxu0 0.0
  %2554 = vmatpush1.msra.mxu0 0.0
  %2555 = vmatprep.subr.mxu0 0.0
  %2556 = vmatpush1.msra.mxu0 0.0
  %2557 = vmatprep.subr.mxu0 0.0
  %2558 = vmatpush1.msra.mxu0 0.0
  %2559 = vmatprep.subr.mxu0 0.0
  %2560 = vmatpush1.msra.mxu0 0.0
  %2561 = vmatprep.subr.mxu0 0.0
  %2562 = vmatpush1.msra.mxu0 0.0
  %2563 = vmatprep.subr.mxu0 0.0
  %2564 = vmatpush1.msra.mxu0 0.0
  %2565 = vmatprep.mubr.f32.mxu0 0.0
  %2566 = vmatmul.mubr.f32.gmra.mrb[0].mxu0 %v1967
  %v2567 = vpop.f32.mrb[0].mxu0
  %v2568 = vadd.f32 0.0, %v2567
  %v2569 = vpop.f32.mrb[0].mxu0
  %v2570 = vadd.f32 0.0, %v2569
  %2571 = vdwg.mxu0
  %2572 = vmatprep.subr.mxu0 0.0
  %2573 = vmatpush1.msra.mxu0 %v1881
  %2574 = vmatprep.subr.mxu0 0.0
  %2575 = vmatpush1.msra.mxu0 %v2002
  %2576 = vmatprep.subr.mxu0 0.0
  %2577 = vmatpush1.msra.mxu0 0.0
  %2578 = vmatprep.subr.mxu0 0.0
  %2579 = vmatpush1.msra.mxu0 0.0
  %2580 = vmatprep.subr.mxu0 0.0
  %2581 = vmatpush1.msra.mxu0 0.0
  %2582 = vmatprep.subr.mxu0 0.0
  %2583 = vmatpush1.msra.mxu0 0.0
  %2584 = vmatprep.subr.mxu0 0.0
  %2585 = vmatpush1.msra.mxu0 0.0
  %2586 = vmatprep.subr.mxu0 0.0
  %2587 = vmatpush1.msra.mxu0 0.0
  %2588 = vmatprep.subr.mxu0 0.0
  %2589 = vmatpush1.msra.mxu0 0.0
  %2590 = vmatprep.subr.mxu0 0.0
  %2591 = vmatpush1.msra.mxu0 0.0
  %2592 = vmatprep.subr.mxu0 0.0
  %2593 = vmatpush1.msra.mxu0 0.0
  %2594 = vmatprep.subr.mxu0 0.0
  %2595 = vmatpush1.msra.mxu0 0.0
  %2596 = vmatprep.subr.mxu0 0.0
  %2597 = vmatpush1.msra.mxu0 0.0
  %2598 = vmatprep.subr.mxu0 0.0
  %2599 = vmatpush1.msra.mxu0 0.0
  %2600 = vmatprep.subr.mxu0 0.0
  %2601 = vmatpush1.msra.mxu0 0.0
  %2602 = vmatprep.subr.mxu0 0.0
  %2603 = vmatpush1.msra.mxu0 0.0
  %2604 = vmatprep.subr.mxu0 0.0
  %2605 = vmatpush1.msra.mxu0 0.0
  %2606 = vmatprep.subr.mxu0 0.0
  %2607 = vmatpush1.msra.mxu0 0.0
  %2608 = vmatprep.subr.mxu0 0.0
  %2609 = vmatpush1.msra.mxu0 0.0
  %2610 = vmatprep.subr.mxu0 0.0
  %2611 = vmatpush1.msra.mxu0 0.0
  %2612 = vmatprep.subr.mxu0 0.0
  %2613 = vmatpush1.msra.mxu0 0.0
  %2614 = vmatprep.subr.mxu0 0.0
  %2615 = vmatpush1.msra.mxu0 0.0
  %2616 = vmatprep.subr.mxu0 0.0
  %2617 = vmatpush1.msra.mxu0 0.0
  %2618 = vmatprep.subr.mxu0 0.0
  %2619 = vmatpush1.msra.mxu0 0.0
  %2620 = vmatprep.subr.mxu0 0.0
  %2621 = vmatpush1.msra.mxu0 0.0
  %2622 = vmatprep.subr.mxu0 0.0
  %2623 = vmatpush1.msra.mxu0 0.0
  %2624 = vmatprep.subr.mxu0 0.0
  %2625 = vmatpush1.msra.mxu0 0.0
  %2626 = vmatprep.subr.mxu0 0.0
  %2627 = vmatpush1.msra.mxu0 0.0
  %2628 = vmatprep.subr.mxu0 0.0
  %2629 = vmatpush1.msra.mxu0 0.0
  %2630 = vmatprep.subr.mxu0 0.0
  %2631 = vmatpush1.msra.mxu0 0.0
  %2632 = vmatprep.subr.mxu0 0.0
  %2633 = vmatpush1.msra.mxu0 0.0
  %2634 = vmatprep.subr.mxu0 0.0
  %2635 = vmatpush1.msra.mxu0 0.0
  %2636 = vmatprep.mubr.f32.mxu0 0.0
  %2637 = vmatmul.mubr.f32.gmra.mrb[0].mxu0 %v1967
  %v2638 = vpop.f32.mrb[0].mxu0
  %v2639 = vadd.f32 0.0, %v2638
  %v2640 = vpop.f32.mrb[0].mxu0
  %2641 = vdwg.mxu0
  %v2642 = vsel %vm1966, %v1810, 0
  %v2644 = vsel %vm1969, %v1793, 0
  %v2646 = vsel %vm1969, %v1794, 0
  %v2648 = vsel %vm1969, %v1795, 0
  %v2650 = vsel %vm1969, %v1796, 0
  %v2652 = vsel %vm1969, %v1797, 0
  %v2654 = vsel %vm1969, %v1798, 0
  %v2656 = vsel %vm1969, %v1799, 0
  %v2658 = vsel %vm1969, %v1800, 0
  %v2660 = vsel %vm1969, %v1801, 0
  %v2662 = vsel %vm1969, %v1802, 0
  %v2664 = vsel %vm1969, %v1803, 0
  %v2666 = vsel %vm1969, %v1804, 0
  %v2668 = vsel %vm1969, %v1805, 0
  %v2670 = vsel %vm1969, %v1806, 0
  %v2672 = vsel %vm1969, %v1807, 0
  %v2674 = vsel %vm1969, %v1808, 0
  %v2676 = vsel %vm1969, %v1809, 0
  %2678 = vmatprep.subr.mxu0 %v1758
  %2679 = vmatpush1.msra.mxu0 %v1757
  %2680 = vmatprep.subr.mxu0 %v2646
  %2681 = vmatpush1.msra.mxu0 %v2644
  %2682 = vmatprep.subr.mxu0 0.0
  %2683 = vmatpush1.msra.mxu0 0.0
  %2684 = vmatprep.subr.mxu0 0.0
  %2685 = vmatpush1.msra.mxu0 0.0
  %2686 = vmatprep.subr.mxu0 0.0
  %2687 = vmatpush1.msra.mxu0 0.0
  %2688 = vmatprep.subr.mxu0 0.0
  %2689 = vmatpush1.msra.mxu0 0.0
  %2690 = vmatprep.subr.mxu0 0.0
  %2691 = vmatpush1.msra.mxu0 0.0
  %2692 = vmatprep.subr.mxu0 0.0
  %2693 = vmatpush1.msra.mxu0 0.0
  %2694 = vmatprep.subr.mxu0 0.0
  %2695 = vmatpush1.msra.mxu0 0.0
  %2696 = vmatprep.subr.mxu0 0.0
  %2697 = vmatpush1.msra.mxu0 0.0
  %2698 = vmatprep.subr.mxu0 0.0
  %2699 = vmatpush1.msra.mxu0 0.0
  %2700 = vmatprep.subr.mxu0 0.0
  %2701 = vmatpush1.msra.mxu0 0.0
  %2702 = vmatprep.subr.mxu0 0.0
  %2703 = vmatpush1.msra.mxu0 0.0
  %2704 = vmatprep.subr.mxu0 0.0
  %2705 = vmatpush1.msra.mxu0 0.0
  %2706 = vmatprep.subr.mxu0 0.0
  %2707 = vmatpush1.msra.mxu0 0.0
  %2708 = vmatprep.subr.mxu0 0.0
  %2709 = vmatpush1.msra.mxu0 0.0
  %2710 = vmatprep.subr.mxu0 0.0
  %2711 = vmatpush1.msra.mxu0 0.0
  %2712 = vmatprep.subr.mxu0 0.0
  %2713 = vmatpush1.msra.mxu0 0.0
  %2714 = vmatprep.subr.mxu0 0.0
  %2715 = vmatpush1.msra.mxu0 0.0
  %2716 = vmatprep.subr.mxu0 0.0
  %2717 = vmatpush1.msra.mxu0 0.0
  %2718 = vmatprep.subr.mxu0 0.0
  %2719 = vmatpush1.msra.mxu0 0.0
  %2720 = vmatprep.subr.mxu0 0.0
  %2721 = vmatpush1.msra.mxu0 0.0
  %2722 = vmatprep.subr.mxu0 0.0
  %2723 = vmatpush1.msra.mxu0 0.0
  %2724 = vmatprep.subr.mxu0 0.0
  %2725 = vmatpush1.msra.mxu0 0.0
  %2726 = vmatprep.subr.mxu0 0.0
  %2727 = vmatpush1.msra.mxu0 0.0
  %2728 = vmatprep.subr.mxu0 0.0
  %2729 = vmatpush1.msra.mxu0 0.0
  %2730 = vmatprep.subr.mxu0 0.0
  %2731 = vmatpush1.msra.mxu0 0.0
  %2732 = vmatprep.subr.mxu0 0.0
  %2733 = vmatpush1.msra.mxu0 0.0
  %2734 = vmatprep.subr.mxu0 0.0
  %2735 = vmatpush1.msra.mxu0 0.0
  %2736 = vmatprep.subr.mxu0 0.0
  %2737 = vmatpush1.msra.mxu0 0.0
  %2738 = vmatprep.subr.mxu0 0.0
  %2739 = vmatpush1.msra.mxu0 0.0
  %2740 = vmatprep.subr.mxu0 0.0
  %2741 = vmatpush1.msra.mxu0 0.0
  %2742 = vmatprep.mubr.f32.mxu0 0.0
  %2743 = vmatmul.mubr.f32.gmra.mrb[0].mxu0 %v2642
  %v2744 = vpop.f32.mrb[0].mxu0
  %v2745 = vadd.f32 %v2071, %v2744
  %v2746 = vpop.f32.mrb[0].mxu0
  %v2747 = vadd.f32 %v2073, %v2746
  %2748 = vdwg.mxu0
  %2749 = vmatprep.subr.mxu0 %v1760
  %2750 = vmatpush1.msra.mxu0 %v1759
  %2751 = vmatprep.subr.mxu0 %v2650
  %2752 = vmatpush1.msra.mxu0 %v2648
  %2753 = vmatprep.subr.mxu0 0.0
  %2754 = vmatpush1.msra.mxu0 0.0
  %2755 = vmatprep.subr.mxu0 0.0
  %2756 = vmatpush1.msra.mxu0 0.0
  %2757 = vmatprep.subr.mxu0 0.0
  %2758 = vmatpush1.msra.mxu0 0.0
  %2759 = vmatprep.subr.mxu0 0.0
  %2760 = vmatpush1.msra.mxu0 0.0
  %2761 = vmatprep.subr.mxu0 0.0
  %2762 = vmatpush1.msra.mxu0 0.0
  %2763 = vmatprep.subr.mxu0 0.0
  %2764 = vmatpush1.msra.mxu0 0.0
  %2765 = vmatprep.subr.mxu0 0.0
  %2766 = vmatpush1.msra.mxu0 0.0
  %2767 = vmatprep.subr.mxu0 0.0
  %2768 = vmatpush1.msra.mxu0 0.0
  %2769 = vmatprep.subr.mxu0 0.0
  %2770 = vmatpush1.msra.mxu0 0.0
  %2771 = vmatprep.subr.mxu0 0.0
  %2772 = vmatpush1.msra.mxu0 0.0
  %2773 = vmatprep.subr.mxu0 0.0
  %2774 = vmatpush1.msra.mxu0 0.0
  %2775 = vmatprep.subr.mxu0 0.0
  %2776 = vmatpush1.msra.mxu0 0.0
  %2777 = vmatprep.subr.mxu0 0.0
  %2778 = vmatpush1.msra.mxu0 0.0
  %2779 = vmatprep.subr.mxu0 0.0
  %2780 = vmatpush1.msra.mxu0 0.0
  %2781 = vmatprep.subr.mxu0 0.0
  %2782 = vmatpush1.msra.mxu0 0.0
  %2783 = vmatprep.subr.mxu0 0.0
  %2784 = vmatpush1.msra.mxu0 0.0
  %2785 = vmatprep.subr.mxu0 0.0
  %2786 = vmatpush1.msra.mxu0 0.0
  %2787 = vmatprep.subr.mxu0 0.0
  %2788 = vmatpush1.msra.mxu0 0.0
  %2789 = vmatprep.subr.mxu0 0.0
  %2790 = vmatpush1.msra.mxu0 0.0
  %2791 = vmatprep.subr.mxu0 0.0
  %2792 = vmatpush1.msra.mxu0 0.0
  %2793 = vmatprep.subr.mxu0 0.0
  %2794 = vmatpush1.msra.mxu0 0.0
  %2795 = vmatprep.subr.mxu0 0.0
  %2796 = vmatpush1.msra.mxu0 0.0
  %2797 = vmatprep.subr.mxu0 0.0
  %2798 = vmatpush1.msra.mxu0 0.0
  %2799 = vmatprep.subr.mxu0 0.0
  %2800 = vmatpush1.msra.mxu0 0.0
  %2801 = vmatprep.subr.mxu0 0.0
  %2802 = vmatpush1.msra.mxu0 0.0
  %2803 = vmatprep.subr.mxu0 0.0
  %2804 = vmatpush1.msra.mxu0 0.0
  %2805 = vmatprep.subr.mxu0 0.0
  %2806 = vmatpush1.msra.mxu0 0.0
  %2807 = vmatprep.subr.mxu0 0.0
  %2808 = vmatpush1.msra.mxu0 0.0
  %2809 = vmatprep.subr.mxu0 0.0
  %2810 = vmatpush1.msra.mxu0 0.0
  %2811 = vmatprep.subr.mxu0 0.0
  %2812 = vmatpush1.msra.mxu0 0.0
  %2813 = vmatprep.mubr.f32.mxu0 0.0
  %2814 = vmatmul.mubr.f32.gmra.mrb[0].mxu0 %v2642
  %v2815 = vpop.f32.mrb[0].mxu0
  %v2816 = vadd.f32 %v2142, %v2815
  %v2817 = vpop.f32.mrb[0].mxu0
  %v2818 = vadd.f32 %v2144, %v2817
  %2819 = vdwg.mxu0
  %2820 = vmatprep.subr.mxu0 %v1762
  %2821 = vmatpush1.msra.mxu0 %v1761
  %2822 = vmatprep.subr.mxu0 %v2654
  %2823 = vmatpush1.msra.mxu0 %v2652
  %2824 = vmatprep.subr.mxu0 0.0
  %2825 = vmatpush1.msra.mxu0 0.0
  %2826 = vmatprep.subr.mxu0 0.0
  %2827 = vmatpush1.msra.mxu0 0.0
  %2828 = vmatprep.subr.mxu0 0.0
  %2829 = vmatpush1.msra.mxu0 0.0
  %2830 = vmatprep.subr.mxu0 0.0
  %2831 = vmatpush1.msra.mxu0 0.0
  %2832 = vmatprep.subr.mxu0 0.0
  %2833 = vmatpush1.msra.mxu0 0.0
  %2834 = vmatprep.subr.mxu0 0.0
  %2835 = vmatpush1.msra.mxu0 0.0
  %2836 = vmatprep.subr.mxu0 0.0
  %2837 = vmatpush1.msra.mxu0 0.0
  %2838 = vmatprep.subr.mxu0 0.0
  %2839 = vmatpush1.msra.mxu0 0.0
  %2840 = vmatprep.subr.mxu0 0.0
  %2841 = vmatpush1.msra.mxu0 0.0
  %2842 = vmatprep.subr.mxu0 0.0
  %2843 = vmatpush1.msra.mxu0 0.0
  %2844 = vmatprep.subr.mxu0 0.0
  %2845 = vmatpush1.msra.mxu0 0.0
  %2846 = vmatprep.subr.mxu0 0.0
  %2847 = vmatpush1.msra.mxu0 0.0
  %2848 = vmatprep.subr.mxu0 0.0
  %2849 = vmatpush1.msra.mxu0 0.0
  %2850 = vmatprep.subr.mxu0 0.0
  %2851 = vmatpush1.msra.mxu0 0.0
  %2852 = vmatprep.subr.mxu0 0.0
  %2853 = vmatpush1.msra.mxu0 0.0
  %2854 = vmatprep.subr.mxu0 0.0
  %2855 = vmatpush1.msra.mxu0 0.0
  %2856 = vmatprep.subr.mxu0 0.0
  %2857 = vmatpush1.msra.mxu0 0.0
  %2858 = vmatprep.subr.mxu0 0.0
  %2859 = vmatpush1.msra.mxu0 0.0
  %2860 = vmatprep.subr.mxu0 0.0
  %2861 = vmatpush1.msra.mxu0 0.0
  %2862 = vmatprep.subr.mxu0 0.0
  %2863 = vmatpush1.msra.mxu0 0.0
  %2864 = vmatprep.subr.mxu0 0.0
  %2865 = vmatpush1.msra.mxu0 0.0
  %2866 = vmatprep.subr.mxu0 0.0
  %2867 = vmatpush1.msra.mxu0 0.0
  %2868 = vmatprep.subr.mxu0 0.0
  %2869 = vmatpush1.msra.mxu0 0.0
  %2870 = vmatprep.subr.mxu0 0.0
  %2871 = vmatpush1.msra.mxu0 0.0
  %2872 = vmatprep.subr.mxu0 0.0
  %2873 = vmatpush1.msra.mxu0 0.0
  %2874 = vmatprep.subr.mxu0 0.0
  %2875 = vmatpush1.msra.mxu0 0.0
  %2876 = vmatprep.subr.mxu0 0.0
  %2877 = vmatpush1.msra.mxu0 0.0
  %2878 = vmatprep.subr.mxu0 0.0
  %2879 = vmatpush1.msra.mxu0 0.0
  %2880 = vmatprep.subr.mxu0 0.0
  %2881 = vmatpush1.msra.mxu0 0.0
  %2882 = vmatprep.subr.mxu0 0.0
  %2883 = vmatpush1.msra.mxu0 0.0
  %2884 = vmatprep.mubr.f32.mxu0 0.0
  %2885 = vmatmul.mubr.f32.gmra.mrb[0].mxu0 %v2642
  %v2886 = vpop.f32.mrb[0].mxu0
  %v2887 = vadd.f32 %v2213, %v2886
  %v2888 = vpop.f32.mrb[0].mxu0
  %v2889 = vadd.f32 %v2215, %v2888
  %2890 = vdwg.mxu0
  %2891 = vmatprep.subr.mxu0 %v1764
  %2892 = vmatpush1.msra.mxu0 %v1763
  %2893 = vmatprep.subr.mxu0 %v2658
  %2894 = vmatpush1.msra.mxu0 %v2656
  %2895 = vmatprep.subr.mxu0 0.0
  %2896 = vmatpush1.msra.mxu0 0.0
  %2897 = vmatprep.subr.mxu0 0.0
  %2898 = vmatpush1.msra.mxu0 0.0
  %2899 = vmatprep.subr.mxu0 0.0
  %2900 = vmatpush1.msra.mxu0 0.0
  %2901 = vmatprep.subr.mxu0 0.0
  %2902 = vmatpush1.msra.mxu0 0.0
  %2903 = vmatprep.subr.mxu0 0.0
  %2904 = vmatpush1.msra.mxu0 0.0
  %2905 = vmatprep.subr.mxu0 0.0
  %2906 = vmatpush1.msra.mxu0 0.0
  %2907 = vmatprep.subr.mxu0 0.0
  %2908 = vmatpush1.msra.mxu0 0.0
  %2909 = vmatprep.subr.mxu0 0.0
  %2910 = vmatpush1.msra.mxu0 0.0
  %2911 = vmatprep.subr.mxu0 0.0
  %2912 = vmatpush1.msra.mxu0 0.0
  %2913 = vmatprep.subr.mxu0 0.0
  %2914 = vmatpush1.msra.mxu0 0.0
  %2915 = vmatprep.subr.mxu0 0.0
  %2916 = vmatpush1.msra.mxu0 0.0
  %2917 = vmatprep.subr.mxu0 0.0
  %2918 = vmatpush1.msra.mxu0 0.0
  %2919 = vmatprep.subr.mxu0 0.0
  %2920 = vmatpush1.msra.mxu0 0.0
  %2921 = vmatprep.subr.mxu0 0.0
  %2922 = vmatpush1.msra.mxu0 0.0
  %2923 = vmatprep.subr.mxu0 0.0
  %2924 = vmatpush1.msra.mxu0 0.0
  %2925 = vmatprep.subr.mxu0 0.0
  %2926 = vmatpush1.msra.mxu0 0.0
  %2927 = vmatprep.subr.mxu0 0.0
  %2928 = vmatpush1.msra.mxu0 0.0
  %2929 = vmatprep.subr.mxu0 0.0
  %2930 = vmatpush1.msra.mxu0 0.0
  %2931 = vmatprep.subr.mxu0 0.0
  %2932 = vmatpush1.msra.mxu0 0.0
  %2933 = vmatprep.subr.mxu0 0.0
  %2934 = vmatpush1.msra.mxu0 0.0
  %2935 = vmatprep.subr.mxu0 0.0
  %2936 = vmatpush1.msra.mxu0 0.0
  %2937 = vmatprep.subr.mxu0 0.0
  %2938 = vmatpush1.msra.mxu0 0.0
  %2939 = vmatprep.subr.mxu0 0.0
  %2940 = vmatpush1.msra.mxu0 0.0
  %2941 = vmatprep.subr.mxu0 0.0
  %2942 = vmatpush1.msra.mxu0 0.0
  %2943 = vmatprep.subr.mxu0 0.0
  %2944 = vmatpush1.msra.mxu0 0.0
  %2945 = vmatprep.subr.mxu0 0.0
  %2946 = vmatpush1.msra.mxu0 0.0
  %2947 = vmatprep.subr.mxu0 0.0
  %2948 = vmatpush1.msra.mxu0 0.0
  %2949 = vmatprep.subr.mxu0 0.0
  %2950 = vmatpush1.msra.mxu0 0.0
  %2951 = vmatprep.subr.mxu0 0.0
  %2952 = vmatpush1.msra.mxu0 0.0
  %2953 = vmatprep.subr.mxu0 0.0
  %2954 = vmatpush1.msra.mxu0 0.0
  %2955 = vmatprep.mubr.f32.mxu0 0.0
  %2956 = vmatmul.mubr.f32.gmra.mrb[0].mxu0 %v2642
  %v2957 = vpop.f32.mrb[0].mxu0
  %v2958 = vadd.f32 %v2284, %v2957
  %v2959 = vpop.f32.mrb[0].mxu0
  %v2960 = vadd.f32 %v2286, %v2959
  %2961 = vdwg.mxu0
  %2962 = vmatprep.subr.mxu0 %v1766
  %2963 = vmatpush1.msra.mxu0 %v1765
  %2964 = vmatprep.subr.mxu0 %v2662
  %2965 = vmatpush1.msra.mxu0 %v2660
  %2966 = vmatprep.subr.mxu0 0.0
  %2967 = vmatpush1.msra.mxu0 0.0
  %2968 = vmatprep.subr.mxu0 0.0
  %2969 = vmatpush1.msra.mxu0 0.0
  %2970 = vmatprep.subr.mxu0 0.0
  %2971 = vmatpush1.msra.mxu0 0.0
  %2972 = vmatprep.subr.mxu0 0.0
  %2973 = vmatpush1.msra.mxu0 0.0
  %2974 = vmatprep.subr.mxu0 0.0
  %2975 = vmatpush1.msra.mxu0 0.0
  %2976 = vmatprep.subr.mxu0 0.0
  %2977 = vmatpush1.msra.mxu0 0.0
  %2978 = vmatprep.subr.mxu0 0.0
  %2979 = vmatpush1.msra.mxu0 0.0
  %2980 = vmatprep.subr.mxu0 0.0
  %2981 = vmatpush1.msra.mxu0 0.0
  %2982 = vmatprep.subr.mxu0 0.0
  %2983 = vmatpush1.msra.mxu0 0.0
  %2984 = vmatprep.subr.mxu0 0.0
  %2985 = vmatpush1.msra.mxu0 0.0
  %2986 = vmatprep.subr.mxu0 0.0
  %2987 = vmatpush1.msra.mxu0 0.0
  %2988 = vmatprep.subr.mxu0 0.0
  %2989 = vmatpush1.msra.mxu0 0.0
  %2990 = vmatprep.subr.mxu0 0.0
  %2991 = vmatpush1.msra.mxu0 0.0
  %2992 = vmatprep.subr.mxu0 0.0
  %2993 = vmatpush1.msra.mxu0 0.0
  %2994 = vmatprep.subr.mxu0 0.0
  %2995 = vmatpush1.msra.mxu0 0.0
  %2996 = vmatprep.subr.mxu0 0.0
  %2997 = vmatpush1.msra.mxu0 0.0
  %2998 = vmatprep.subr.mxu0 0.0
  %2999 = vmatpush1.msra.mxu0 0.0
  %3000 = vmatprep.subr.mxu0 0.0
  %3001 = vmatpush1.msra.mxu0 0.0
  %3002 = vmatprep.subr.mxu0 0.0
  %3003 = vmatpush1.msra.mxu0 0.0
  %3004 = vmatprep.subr.mxu0 0.0
  %3005 = vmatpush1.msra.mxu0 0.0
  %3006 = vmatprep.subr.mxu0 0.0
  %3007 = vmatpush1.msra.mxu0 0.0
  %3008 = vmatprep.subr.mxu0 0.0
  %3009 = vmatpush1.msra.mxu0 0.0
  %3010 = vmatprep.subr.mxu0 0.0
  %3011 = vmatpush1.msra.mxu0 0.0
  %3012 = vmatprep.subr.mxu0 0.0
  %3013 = vmatpush1.msra.mxu0 0.0
  %3014 = vmatprep.subr.mxu0 0.0
  %3015 = vmatpush1.msra.mxu0 0.0
  %3016 = vmatprep.subr.mxu0 0.0
  %3017 = vmatpush1.msra.mxu0 0.0
  %3018 = vmatprep.subr.mxu0 0.0
  %3019 = vmatpush1.msra.mxu0 0.0
  %3020 = vmatprep.subr.mxu0 0.0
  %3021 = vmatpush1.msra.mxu0 0.0
  %3022 = vmatprep.subr.mxu0 0.0
  %3023 = vmatpush1.msra.mxu0 0.0
  %3024 = vmatprep.subr.mxu0 0.0
  %3025 = vmatpush1.msra.mxu0 0.0
  %3026 = vmatprep.mubr.f32.mxu0 0.0
  %3027 = vmatmul.mubr.f32.gmra.mrb[0].mxu0 %v2642
  %v3028 = vpop.f32.mrb[0].mxu0
  %v3029 = vadd.f32 %v2355, %v3028
  %v3030 = vpop.f32.mrb[0].mxu0
  %v3031 = vadd.f32 %v2357, %v3030
  %3032 = vdwg.mxu0
  %3033 = vmatprep.subr.mxu0 %v1768
  %3034 = vmatpush1.msra.mxu0 %v1767
  %3035 = vmatprep.subr.mxu0 %v2666
  %3036 = vmatpush1.msra.mxu0 %v2664
  %3037 = vmatprep.subr.mxu0 0.0
  %3038 = vmatpush1.msra.mxu0 0.0
  %3039 = vmatprep.subr.mxu0 0.0
  %3040 = vmatpush1.msra.mxu0 0.0
  %3041 = vmatprep.subr.mxu0 0.0
  %3042 = vmatpush1.msra.mxu0 0.0
  %3043 = vmatprep.subr.mxu0 0.0
  %3044 = vmatpush1.msra.mxu0 0.0
  %3045 = vmatprep.subr.mxu0 0.0
  %3046 = vmatpush1.msra.mxu0 0.0
  %3047 = vmatprep.subr.mxu0 0.0
  %3048 = vmatpush1.msra.mxu0 0.0
  %3049 = vmatprep.subr.mxu0 0.0
  %3050 = vmatpush1.msra.mxu0 0.0
  %3051 = vmatprep.subr.mxu0 0.0
  %3052 = vmatpush1.msra.mxu0 0.0
  %3053 = vmatprep.subr.mxu0 0.0
  %3054 = vmatpush1.msra.mxu0 0.0
  %3055 = vmatprep.subr.mxu0 0.0
  %3056 = vmatpush1.msra.mxu0 0.0
  %3057 = vmatprep.subr.mxu0 0.0
  %3058 = vmatpush1.msra.mxu0 0.0
  %3059 = vmatprep.subr.mxu0 0.0
  %3060 = vmatpush1.msra.mxu0 0.0
  %3061 = vmatprep.subr.mxu0 0.0
  %3062 = vmatpush1.msra.mxu0 0.0
  %3063 = vmatprep.subr.mxu0 0.0
  %3064 = vmatpush1.msra.mxu0 0.0
  %3065 = vmatprep.subr.mxu0 0.0
  %3066 = vmatpush1.msra.mxu0 0.0
  %3067 = vmatprep.subr.mxu0 0.0
  %3068 = vmatpush1.msra.mxu0 0.0
  %3069 = vmatprep.subr.mxu0 0.0
  %3070 = vmatpush1.msra.mxu0 0.0
  %3071 = vmatprep.subr.mxu0 0.0
  %3072 = vmatpush1.msra.mxu0 0.0
  %3073 = vmatprep.subr.mxu0 0.0
  %3074 = vmatpush1.msra.mxu0 0.0
  %3075 = vmatprep.subr.mxu0 0.0
  %3076 = vmatpush1.msra.mxu0 0.0
  %3077 = vmatprep.subr.mxu0 0.0
  %3078 = vmatpush1.msra.mxu0 0.0
  %3079 = vmatprep.subr.mxu0 0.0
  %3080 = vmatpush1.msra.mxu0 0.0
  %3081 = vmatprep.subr.mxu0 0.0
  %3082 = vmatpush1.msra.mxu0 0.0
  %3083 = vmatprep.subr.mxu0 0.0
  %3084 = vmatpush1.msra.mxu0 0.0
  %3085 = vmatprep.subr.mxu0 0.0
  %3086 = vmatpush1.msra.mxu0 0.0
  %3087 = vmatprep.subr.mxu0 0.0
  %3088 = vmatpush1.msra.mxu0 0.0
  %3089 = vmatprep.subr.mxu0 0.0
  %3090 = vmatpush1.msra.mxu0 0.0
  %3091 = vmatprep.subr.mxu0 0.0
  %3092 = vmatpush1.msra.mxu0 0.0
  %3093 = vmatprep.subr.mxu0 0.0
  %3094 = vmatpush1.msra.mxu0 0.0
  %3095 = vmatprep.subr.mxu0 0.0
  %3096 = vmatpush1.msra.mxu0 0.0
  %3097 = vmatprep.mubr.f32.mxu0 0.0
  %3098 = vmatmul.mubr.f32.gmra.mrb[0].mxu0 %v2642
  %v3099 = vpop.f32.mrb[0].mxu0
  %v3100 = vadd.f32 %v2426, %v3099
  %v3101 = vpop.f32.mrb[0].mxu0
  %v3102 = vadd.f32 %v2428, %v3101
  %3103 = vdwg.mxu0
  %3104 = vmatprep.subr.mxu0 %v1770
  %3105 = vmatpush1.msra.mxu0 %v1769
  %3106 = vmatprep.subr.mxu0 %v2670
  %3107 = vmatpush1.msra.mxu0 %v2668
  %3108 = vmatprep.subr.mxu0 0.0
  %3109 = vmatpush1.msra.mxu0 0.0
  %3110 = vmatprep.subr.mxu0 0.0
  %3111 = vmatpush1.msra.mxu0 0.0
  %3112 = vmatprep.subr.mxu0 0.0
  %3113 = vmatpush1.msra.mxu0 0.0
  %3114 = vmatprep.subr.mxu0 0.0
  %3115 = vmatpush1.msra.mxu0 0.0
  %3116 = vmatprep.subr.mxu0 0.0
  %3117 = vmatpush1.msra.mxu0 0.0
  %3118 = vmatprep.subr.mxu0 0.0
  %3119 = vmatpush1.msra.mxu0 0.0
  %3120 = vmatprep.subr.mxu0 0.0
  %3121 = vmatpush1.msra.mxu0 0.0
  %3122 = vmatprep.subr.mxu0 0.0
  %3123 = vmatpush1.msra.mxu0 0.0
  %3124 = vmatprep.subr.mxu0 0.0
  %3125 = vmatpush1.msra.mxu0 0.0
  %3126 = vmatprep.subr.mxu0 0.0
  %3127 = vmatpush1.msra.mxu0 0.0
  %3128 = vmatprep.subr.mxu0 0.0
  %3129 = vmatpush1.msra.mxu0 0.0
  %3130 = vmatprep.subr.mxu0 0.0
  %3131 = vmatpush1.msra.mxu0 0.0
  %3132 = vmatprep.subr.mxu0 0.0
  %3133 = vmatpush1.msra.mxu0 0.0
  %3134 = vmatprep.subr.mxu0 0.0
  %3135 = vmatpush1.msra.mxu0 0.0
  %3136 = vmatprep.subr.mxu0 0.0
  %3137 = vmatpush1.msra.mxu0 0.0
  %3138 = vmatprep.subr.mxu0 0.0
  %3139 = vmatpush1.msra.mxu0 0.0
  %3140 = vmatprep.subr.mxu0 0.0
  %3141 = vmatpush1.msra.mxu0 0.0
  %3142 = vmatprep.subr.mxu0 0.0
  %3143 = vmatpush1.msra.mxu0 0.0
  %3144 = vmatprep.subr.mxu0 0.0
  %3145 = vmatpush1.msra.mxu0 0.0
  %3146 = vmatprep.subr.mxu0 0.0
  %3147 = vmatpush1.msra.mxu0 0.0
  %3148 = vmatprep.subr.mxu0 0.0
  %3149 = vmatpush1.msra.mxu0 0.0
  %3150 = vmatprep.subr.mxu0 0.0
  %3151 = vmatpush1.msra.mxu0 0.0
  %3152 = vmatprep.subr.mxu0 0.0
  %3153 = vmatpush1.msra.mxu0 0.0
  %3154 = vmatprep.subr.mxu0 0.0
  %3155 = vmatpush1.msra.mxu0 0.0
  %3156 = vmatprep.subr.mxu0 0.0
  %3157 = vmatpush1.msra.mxu0 0.0
  %3158 = vmatprep.subr.mxu0 0.0
  %3159 = vmatpush1.msra.mxu0 0.0
  %3160 = vmatprep.subr.mxu0 0.0
  %3161 = vmatpush1.msra.mxu0 0.0
  %3162 = vmatprep.subr.mxu0 0.0
  %3163 = vmatpush1.msra.mxu0 0.0
  %3164 = vmatprep.subr.mxu0 0.0
  %3165 = vmatpush1.msra.mxu0 0.0
  %3166 = vmatprep.subr.mxu0 0.0
  %3167 = vmatpush1.msra.mxu0 0.0
  %3168 = vmatprep.mubr.f32.mxu0 0.0
  %3169 = vmatmul.mubr.f32.gmra.mrb[0].mxu0 %v2642
  %v3170 = vpop.f32.mrb[0].mxu0
  %v3171 = vadd.f32 %v2497, %v3170
  %v3172 = vpop.f32.mrb[0].mxu0
  %v3173 = vadd.f32 %v2499, %v3172
  %3174 = vdwg.mxu0
  %3175 = vmatprep.subr.mxu0 %v1772
  %3176 = vmatpush1.msra.mxu0 %v1771
  %3177 = vmatprep.subr.mxu0 %v2674
  %3178 = vmatpush1.msra.mxu0 %v2672
  %3179 = vmatprep.subr.mxu0 0.0
  %3180 = vmatpush1.msra.mxu0 0.0
  %3181 = vmatprep.subr.mxu0 0.0
  %3182 = vmatpush1.msra.mxu0 0.0
  %3183 = vmatprep.subr.mxu0 0.0
  %3184 = vmatpush1.msra.mxu0 0.0
  %3185 = vmatprep.subr.mxu0 0.0
  %3186 = vmatpush1.msra.mxu0 0.0
  %3187 = vmatprep.subr.mxu0 0.0
  %3188 = vmatpush1.msra.mxu0 0.0
  %3189 = vmatprep.subr.mxu0 0.0
  %3190 = vmatpush1.msra.mxu0 0.0
  %3191 = vmatprep.subr.mxu0 0.0
  %3192 = vmatpush1.msra.mxu0 0.0
  %3193 = vmatprep.subr.mxu0 0.0
  %3194 = vmatpush1.msra.mxu0 0.0
  %3195 = vmatprep.subr.mxu0 0.0
  %3196 = vmatpush1.msra.mxu0 0.0
  %3197 = vmatprep.subr.mxu0 0.0
  %3198 = vmatpush1.msra.mxu0 0.0
  %3199 = vmatprep.subr.mxu0 0.0
  %3200 = vmatpush1.msra.mxu0 0.0
  %3201 = vmatprep.subr.mxu0 0.0
  %3202 = vmatpush1.msra.mxu0 0.0
  %3203 = vmatprep.subr.mxu0 0.0
  %3204 = vmatpush1.msra.mxu0 0.0
  %3205 = vmatprep.subr.mxu0 0.0
  %3206 = vmatpush1.msra.mxu0 0.0
  %3207 = vmatprep.subr.mxu0 0.0
  %3208 = vmatpush1.msra.mxu0 0.0
  %3209 = vmatprep.subr.mxu0 0.0
  %3210 = vmatpush1.msra.mxu0 0.0
  %3211 = vmatprep.subr.mxu0 0.0
  %3212 = vmatpush1.msra.mxu0 0.0
  %3213 = vmatprep.subr.mxu0 0.0
  %3214 = vmatpush1.msra.mxu0 0.0
  %3215 = vmatprep.subr.mxu0 0.0
  %3216 = vmatpush1.msra.mxu0 0.0
  %3217 = vmatprep.subr.mxu0 0.0
  %3218 = vmatpush1.msra.mxu0 0.0
  %3219 = vmatprep.subr.mxu0 0.0
  %3220 = vmatpush1.msra.mxu0 0.0
  %3221 = vmatprep.subr.mxu0 0.0
  %3222 = vmatpush1.msra.mxu0 0.0
  %3223 = vmatprep.subr.mxu0 0.0
  %3224 = vmatpush1.msra.mxu0 0.0
  %3225 = vmatprep.subr.mxu0 0.0
  %3226 = vmatpush1.msra.mxu0 0.0
  %3227 = vmatprep.subr.mxu0 0.0
  %3228 = vmatpush1.msra.mxu0 0.0
  %3229 = vmatprep.subr.mxu0 0.0
  %3230 = vmatpush1.msra.mxu0 0.0
  %3231 = vmatprep.subr.mxu0 0.0
  %3232 = vmatpush1.msra.mxu0 0.0
  %3233 = vmatprep.subr.mxu0 0.0
  %3234 = vmatpush1.msra.mxu0 0.0
  %3235 = vmatprep.subr.mxu0 0.0
  %3236 = vmatpush1.msra.mxu0 0.0
  %3237 = vmatprep.subr.mxu0 0.0
  %3238 = vmatpush1.msra.mxu0 0.0
  %3239 = vmatprep.mubr.f32.mxu0 0.0
  %3240 = vmatmul.mubr.f32.gmra.mrb[0].mxu0 %v2642
  %v3241 = vpop.f32.mrb[0].mxu0
  %v3242 = vadd.f32 %v2568, %v3241
  %v3243 = vpop.f32.mrb[0].mxu0
  %v3244 = vadd.f32 %v2570, %v3243
  %3245 = vdwg.mxu0
  %3246 = vmatprep.subr.mxu0 0.0
  %3247 = vmatpush1.msra.mxu0 %v1773
  %3248 = vmatprep.subr.mxu0 0.0
  %3249 = vmatpush1.msra.mxu0 %v2676
  %3250 = vmatprep.subr.mxu0 0.0
  %3251 = vmatpush1.msra.mxu0 0.0
  %3252 = vmatprep.subr.mxu0 0.0
  %3253 = vmatpush1.msra.mxu0 0.0
  %3254 = vmatprep.subr.mxu0 0.0
  %3255 = vmatpush1.msra.mxu0 0.0
  %3256 = vmatprep.subr.mxu0 0.0
  %3257 = vmatpush1.msra.mxu0 0.0
  %3258 = vmatprep.subr.mxu0 0.0
  %3259 = vmatpush1.msra.mxu0 0.0
  %3260 = vmatprep.subr.mxu0 0.0
  %3261 = vmatpush1.msra.mxu0 0.0
  %3262 = vmatprep.subr.mxu0 0.0
  %3263 = vmatpush1.msra.mxu0 0.0
  %3264 = vmatprep.subr.mxu0 0.0
  %3265 = vmatpush1.msra.mxu0 0.0
  %3266 = vmatprep.subr.mxu0 0.0
  %3267 = vmatpush1.msra.mxu0 0.0
  %3268 = vmatprep.subr.mxu0 0.0
  %3269 = vmatpush1.msra.mxu0 0.0
  %3270 = vmatprep.subr.mxu0 0.0
  %3271 = vmatpush1.msra.mxu0 0.0
  %3272 = vmatprep.subr.mxu0 0.0
  %3273 = vmatpush1.msra.mxu0 0.0
  %3274 = vmatprep.subr.mxu0 0.0
  %3275 = vmatpush1.msra.mxu0 0.0
  %3276 = vmatprep.subr.mxu0 0.0
  %3277 = vmatpush1.msra.mxu0 0.0
  %3278 = vmatprep.subr.mxu0 0.0
  %3279 = vmatpush1.msra.mxu0 0.0
  %3280 = vmatprep.subr.mxu0 0.0
  %3281 = vmatpush1.msra.mxu0 0.0
  %3282 = vmatprep.subr.mxu0 0.0
  %3283 = vmatpush1.msra.mxu0 0.0
  %3284 = vmatprep.subr.mxu0 0.0
  %3285 = vmatpush1.msra.mxu0 0.0
  %3286 = vmatprep.subr.mxu0 0.0
  %3287 = vmatpush1.msra.mxu0 0.0
  %3288 = vmatprep.subr.mxu0 0.0
  %3289 = vmatpush1.msra.mxu0 0.0
  %3290 = vmatprep.subr.mxu0 0.0
  %3291 = vmatpush1.msra.mxu0 0.0
  %3292 = vmatprep.subr.mxu0 0.0
  %3293 = vmatpush1.msra.mxu0 0.0
  %3294 = vmatprep.subr.mxu0 0.0
  %3295 = vmatpush1.msra.mxu0 0.0
  %3296 = vmatprep.subr.mxu0 0.0
  %3297 = vmatpush1.msra.mxu0 0.0
  %3298 = vmatprep.subr.mxu0 0.0
  %3299 = vmatpush1.msra.mxu0 0.0
  %3300 = vmatprep.subr.mxu0 0.0
  %3301 = vmatpush1.msra.mxu0 0.0
  %3302 = vmatprep.subr.mxu0 0.0
  %3303 = vmatpush1.msra.mxu0 0.0
  %3304 = vmatprep.subr.mxu0 0.0
  %3305 = vmatpush1.msra.mxu0 0.0
  %3306 = vmatprep.subr.mxu0 0.0
  %3307 = vmatpush1.msra.mxu0 0.0
  %3308 = vmatprep.subr.mxu0 0.0
  %3309 = vmatpush1.msra.mxu0 0.0
  %3310 = vmatprep.mubr.f32.mxu0 0.0
  %3311 = vmatmul.mubr.f32.gmra.mrb[0].mxu0 %v2642
  %v3312 = vpop.f32.mrb[0].mxu0
  %v3313 = vadd.f32 %v2639, %v3312
  %v3314 = vpop.f32.mrb[0].mxu0
  %3315 = vdwg.mxu0
  %v3316 = vcombine.high %v1380, %v1380
  %v3317 = vrot.slane %v3316, 5
  %3318 = vrot.lane.b32.xlu0 %v3317, 127
  %v3319 = vpop.permute.xlu0 %3318
  %v3320 = vsel %vm1457, %v1456, %v3319
  %v3322 = vrot.slane %v3316, 2
  %3323 = vrot.lane.b32.xlu0 %v3322, 126
  %v3324 = vpop.permute.xlu0 %3323
  %v3325 = vsel %vm1542, %v1541, %v3324
  %v3327 = vrot.slane %v3316, 7
  %3328 = vrot.lane.b32.xlu0 %v3327, 125
  %v3329 = vpop.permute.xlu0 %3328
  %v3330 = vsel %vm1627, %v1626, %v3329
  %3332 = vrot.lane.b32.xlu0 %v1380, 124
  %v3333 = vpop.permute.xlu0 %3332
  %v3334 = vsel %vm1704, %v1703, %v3333
  %v3336 = vsel %vm1738, %v1380, %v3320
  %v3337 = vsel %vm1756, %v3336, %v3325
  %v3338 = vsel %vm1774, %v3325, %v3330
  %v3339 = vsel %vm1792, %v3338, %v3334
  %v3340 = vld [vmem:[%s1] sm:$0x3f]
  %3342 = vrot.lane.b32.xlu0 %v3340, 98
  %v3343 = vpop.permute.xlu0 %3342
  %3346 = vrot.lane.b32.xlu0 %v1757, 64
  %v3347 = vpop.permute.xlu0 %3346
  %3348 = vrot.lane.b32.xlu0 %v1758, 64
  %v3349 = vpop.permute.xlu0 %3348
  %3350 = vrot.lane.b32.xlu0 %v1759, 64
  %v3351 = vpop.permute.xlu0 %3350
  %3352 = vrot.lane.b32.xlu0 %v1760, 64
  %v3353 = vpop.permute.xlu0 %3352
  %3354 = vrot.lane.b32.xlu0 %v1761, 64
  %v3355 = vpop.permute.xlu0 %3354
  %3356 = vrot.lane.b32.xlu0 %v1762, 64
  %v3357 = vpop.permute.xlu0 %3356
  %3358 = vrot.lane.b32.xlu0 %v1763, 64
  %v3359 = vpop.permute.xlu0 %3358
  %3360 = vrot.lane.b32.xlu0 %v1764, 64
  %v3361 = vpop.permute.xlu0 %3360
  %3362 = vrot.lane.b32.xlu0 %v1765, 64
  %v3363 = vpop.permute.xlu0 %3362
  %3364 = vrot.lane.b32.xlu0 %v1766, 64
  %v3365 = vpop.permute.xlu0 %3364
  %3366 = vrot.lane.b32.xlu0 %v1767, 64
  %v3367 = vpop.permute.xlu0 %3366
  %3368 = vrot.lane.b32.xlu0 %v1768, 64
  %v3369 = vpop.permute.xlu0 %3368
  %3370 = vrot.lane.b32.xlu0 %v1769, 64
  %v3371 = vpop.permute.xlu0 %3370
  %3372 = vrot.lane.b32.xlu0 %v1770, 64
  %v3373 = vpop.permute.xlu0 %3372
  %3374 = vrot.lane.b32.xlu0 %v1771, 64
  %v3375 = vpop.permute.xlu0 %3374
  %3376 = vrot.lane.b32.xlu0 %v1772, 64
  %v3377 = vpop.permute.xlu0 %3376
  %3378 = vrot.lane.b32.xlu0 %v3337, 64
  %v3379 = vpop.permute.xlu0 %3378
  %3380 = vrot.lane.b32.xlu0 %v1793, 64
  %v3381 = vpop.permute.xlu0 %3380
  %3382 = vrot.lane.b32.xlu0 %v1794, 64
  %v3383 = vpop.permute.xlu0 %3382
  %3384 = vrot.lane.b32.xlu0 %v1795, 64
  %v3385 = vpop.permute.xlu0 %3384
  %3386 = vrot.lane.b32.xlu0 %v1796, 64
  %v3387 = vpop.permute.xlu0 %3386
  %3388 = vrot.lane.b32.xlu0 %v1797, 64
  %v3389 = vpop.permute.xlu0 %3388
  %3390 = vrot.lane.b32.xlu0 %v1798, 64
  %v3391 = vpop.permute.xlu0 %3390
  %3392 = vrot.lane.b32.xlu0 %v1799, 64
  %v3393 = vpop.permute.xlu0 %3392
  %3394 = vrot.lane.b32.xlu0 %v1800, 64
  %v3395 = vpop.permute.xlu0 %3394
  %3396 = vrot.lane.b32.xlu0 %v1801, 64
  %v3397 = vpop.permute.xlu0 %3396
  %3398 = vrot.lane.b32.xlu0 %v1802, 64
  %v3399 = vpop.permute.xlu0 %3398
  %3400 = vrot.lane.b32.xlu0 %v1803, 64
  %v3401 = vpop.permute.xlu0 %3400
  %3402 = vrot.lane.b32.xlu0 %v1804, 64
  %v3403 = vpop.permute.xlu0 %3402
  %3404 = vrot.lane.b32.xlu0 %v1805, 64
  %v3405 = vpop.permute.xlu0 %3404
  %3406 = vrot.lane.b32.xlu0 %v1806, 64
  %v3407 = vpop.permute.xlu0 %3406
  %3408 = vrot.lane.b32.xlu0 %v1807, 64
  %v3409 = vpop.permute.xlu0 %3408
  %3410 = vrot.lane.b32.xlu0 %v1808, 64
  %v3411 = vpop.permute.xlu0 %3410
  %3412 = vrot.lane.b32.xlu0 %v3339, 64
  %v3413 = vpop.permute.xlu0 %3412
  %vm3414 = vcmask 523264
  %v3415 = vsel %vm3414, %v3347, %v3349
  %v3416 = vsel %vm3414, %v3349, %v3351
  %v3417 = vsel %vm3414, %v3351, %v3353
  %v3418 = vsel %vm3414, %v3353, %v3355
  %v3419 = vsel %vm3414, %v3355, %v3357
  %v3420 = vsel %vm3414, %v3357, %v3359
  %v3421 = vsel %vm3414, %v3359, %v3361
  %v3422 = vsel %vm3414, %v3361, %v3363
  %v3423 = vsel %vm3414, %v3363, %v3365
  %v3424 = vsel %vm3414, %v3365, %v3367
  %v3425 = vsel %vm3414, %v3367, %v3369
  %v3426 = vsel %vm3414, %v3369, %v3371
  %v3427 = vsel %vm3414, %v3371, %v3373
  %v3428 = vsel %vm3414, %v3373, %v3375
  %v3429 = vsel %vm3414, %v3375, %v3377
  %v3430 = vsel %vm3414, %v3377, %v3379
  %v3431 = vsel %vm3414, %v3381, %v3383
  %v3432 = vsel %vm3414, %v3383, %v3385
  %v3433 = vsel %vm3414, %v3385, %v3387
  %v3434 = vsel %vm3414, %v3387, %v3389
  %v3435 = vsel %vm3414, %v3389, %v3391
  %v3436 = vsel %vm3414, %v3391, %v3393
  %v3437 = vsel %vm3414, %v3393, %v3395
  %v3438 = vsel %vm3414, %v3395, %v3397
  %v3439 = vsel %vm3414, %v3397, %v3399
  %v3440 = vsel %vm3414, %v3399, %v3401
  %v3441 = vsel %vm3414, %v3401, %v3403
  %v3442 = vsel %vm3414, %v3403, %v3405
  %v3443 = vsel %vm3414, %v3405, %v3407
  %v3444 = vsel %vm3414, %v3407, %v3409
  %v3445 = vsel %vm3414, %v3409, %v3411
  %v3446 = vsel %vm3414, %v3411, %v3413
  %v3464 = vsel %vm1966, %v3343, 0
  %v3466 = vsel %vm1969, %v3431, 0
  %v3468 = vsel %vm1969, %v3432, 0
  %v3470 = vsel %vm1969, %v3433, 0
  %v3472 = vsel %vm1969, %v3434, 0
  %v3474 = vsel %vm1969, %v3435, 0
  %v3476 = vsel %vm1969, %v3436, 0
  %v3478 = vsel %vm1969, %v3437, 0
  %v3480 = vsel %vm1969, %v3438, 0
  %v3482 = vsel %vm1969, %v3439, 0
  %v3484 = vsel %vm1969, %v3440, 0
  %v3486 = vsel %vm1969, %v3441, 0
  %v3488 = vsel %vm1969, %v3442, 0
  %v3490 = vsel %vm1969, %v3443, 0
  %v3492 = vsel %vm1969, %v3444, 0
  %v3494 = vsel %vm1969, %v3445, 0
  %v3496 = vsel %vm1969, %v3446, 0
  %v3498 = vsel %vm1969, %v3413, 0
  %3500 = vmatprep.subr.mxu0 %v3416
  %3501 = vmatpush1.msra.mxu0 %v3415
  %3502 = vmatprep.subr.mxu0 %v3468
  %3503 = vmatpush1.msra.mxu0 %v3466
  %3504 = vmatprep.subr.mxu0 0.0
  %3505 = vmatpush1.msra.mxu0 0.0
  %3506 = vmatprep.subr.mxu0 0.0
  %3507 = vmatpush1.msra.mxu0 0.0
  %3508 = vmatprep.subr.mxu0 0.0
  %3509 = vmatpush1.msra.mxu0 0.0
  %3510 = vmatprep.subr.mxu0 0.0
  %3511 = vmatpush1.msra.mxu0 0.0
  %3512 = vmatprep.subr.mxu0 0.0
  %3513 = vmatpush1.msra.mxu0 0.0
  %3514 = vmatprep.subr.mxu0 0.0
  %3515 = vmatpush1.msra.mxu0 0.0
  %3516 = vmatprep.subr.mxu0 0.0
  %3517 = vmatpush1.msra.mxu0 0.0
  %3518 = vmatprep.subr.mxu0 0.0
  %3519 = vmatpush1.msra.mxu0 0.0
  %3520 = vmatprep.subr.mxu0 0.0
  %3521 = vmatpush1.msra.mxu0 0.0
  %3522 = vmatprep.subr.mxu0 0.0
  %3523 = vmatpush1.msra.mxu0 0.0
  %3524 = vmatprep.subr.mxu0 0.0
  %3525 = vmatpush1.msra.mxu0 0.0
  %3526 = vmatprep.subr.mxu0 0.0
  %3527 = vmatpush1.msra.mxu0 0.0
  %3528 = vmatprep.subr.mxu0 0.0
  %3529 = vmatpush1.msra.mxu0 0.0
  %3530 = vmatprep.subr.mxu0 0.0
  %3531 = vmatpush1.msra.mxu0 0.0
  %3532 = vmatprep.subr.mxu0 0.0
  %3533 = vmatpush1.msra.mxu0 0.0
  %3534 = vmatprep.subr.mxu0 0.0
  %3535 = vmatpush1.msra.mxu0 0.0
  %3536 = vmatprep.subr.mxu0 0.0
  %3537 = vmatpush1.msra.mxu0 0.0
  %3538 = vmatprep.subr.mxu0 0.0
  %3539 = vmatpush1.msra.mxu0 0.0
  %3540 = vmatprep.subr.mxu0 0.0
  %3541 = vmatpush1.msra.mxu0 0.0
  %3542 = vmatprep.subr.mxu0 0.0
  %3543 = vmatpush1.msra.mxu0 0.0
  %3544 = vmatprep.subr.mxu0 0.0
  %3545 = vmatpush1.msra.mxu0 0.0
  %3546 = vmatprep.subr.mxu0 0.0
  %3547 = vmatpush1.msra.mxu0 0.0
  %3548 = vmatprep.subr.mxu0 0.0
  %3549 = vmatpush1.msra.mxu0 0.0
  %3550 = vmatprep.subr.mxu0 0.0
  %3551 = vmatpush1.msra.mxu0 0.0
  %3552 = vmatprep.subr.mxu0 0.0
  %3553 = vmatpush1.msra.mxu0 0.0
  %3554 = vmatprep.subr.mxu0 0.0
  %3555 = vmatpush1.msra.mxu0 0.0
  %3556 = vmatprep.subr.mxu0 0.0
  %3557 = vmatpush1.msra.mxu0 0.0
  %3558 = vmatprep.subr.mxu0 0.0
  %3559 = vmatpush1.msra.mxu0 0.0
  %3560 = vmatprep.subr.mxu0 0.0
  %3561 = vmatpush1.msra.mxu0 0.0
  %3562 = vmatprep.subr.mxu0 0.0
  %3563 = vmatpush1.msra.mxu0 0.0
  %3564 = vmatprep.mubr.f32.mxu0 0.0
  %3565 = vmatmul.mubr.f32.gmra.mrb[0].mxu0 %v3464
  %v3566 = vpop.f32.mrb[0].mxu0
  %v3567 = vadd.f32 0.0, %v3566
  %v3568 = vpop.f32.mrb[0].mxu0
  %v3569 = vadd.f32 0.0, %v3568
  %3570 = vdwg.mxu0
  %3571 = vmatprep.subr.mxu0 %v3418
  %3572 = vmatpush1.msra.mxu0 %v3417
  %3573 = vmatprep.subr.mxu0 %v3472
  %3574 = vmatpush1.msra.mxu0 %v3470
  %3575 = vmatprep.subr.mxu0 0.0
  %3576 = vmatpush1.msra.mxu0 0.0
  %3577 = vmatprep.subr.mxu0 0.0
  %3578 = vmatpush1.msra.mxu0 0.0
  %3579 = vmatprep.subr.mxu0 0.0
  %3580 = vmatpush1.msra.mxu0 0.0
  %3581 = vmatprep.subr.mxu0 0.0
  %3582 = vmatpush1.msra.mxu0 0.0
  %3583 = vmatprep.subr.mxu0 0.0
  %3584 = vmatpush1.msra.mxu0 0.0
  %3585 = vmatprep.subr.mxu0 0.0
  %3586 = vmatpush1.msra.mxu0 0.0
  %3587 = vmatprep.subr.mxu0 0.0
  %3588 = vmatpush1.msra.mxu0 0.0
  %3589 = vmatprep.subr.mxu0 0.0
  %3590 = vmatpush1.msra.mxu0 0.0
  %3591 = vmatprep.subr.mxu0 0.0
  %3592 = vmatpush1.msra.mxu0 0.0
  %3593 = vmatprep.subr.mxu0 0.0
  %3594 = vmatpush1.msra.mxu0 0.0
  %3595 = vmatprep.subr.mxu0 0.0
  %3596 = vmatpush1.msra.mxu0 0.0
  %3597 = vmatprep.subr.mxu0 0.0
  %3598 = vmatpush1.msra.mxu0 0.0
  %3599 = vmatprep.subr.mxu0 0.0
  %3600 = vmatpush1.msra.mxu0 0.0
  %3601 = vmatprep.subr.mxu0 0.0
  %3602 = vmatpush1.msra.mxu0 0.0
  %3603 = vmatprep.subr.mxu0 0.0
  %3604 = vmatpush1.msra.mxu0 0.0
  %3605 = vmatprep.subr.mxu0 0.0
  %3606 = vmatpush1.msra.mxu0 0.0
  %3607 = vmatprep.subr.mxu0 0.0
  %3608 = vmatpush1.msra.mxu0 0.0
  %3609 = vmatprep.subr.mxu0 0.0
  %3610 = vmatpush1.msra.mxu0 0.0
  %3611 = vmatprep.subr.mxu0 0.0
  %3612 = vmatpush1.msra.mxu0 0.0
  %3613 = vmatprep.subr.mxu0 0.0
  %3614 = vmatpush1.msra.mxu0 0.0
  %3615 = vmatprep.subr.mxu0 0.0
  %3616 = vmatpush1.msra.mxu0 0.0
  %3617 = vmatprep.subr.mxu0 0.0
  %3618 = vmatpush1.msra.mxu0 0.0
  %3619 = vmatprep.subr.mxu0 0.0
  %3620 = vmatpush1.msra.mxu0 0.0
  %3621 = vmatprep.subr.mxu0 0.0
  %3622 = vmatpush1.msra.mxu0 0.0
  %3623 = vmatprep.subr.mxu0 0.0
  %3624 = vmatpush1.msra.mxu0 0.0
  %3625 = vmatprep.subr.mxu0 0.0
  %3626 = vmatpush1.msra.mxu0 0.0
  %3627 = vmatprep.subr.mxu0 0.0
  %3628 = vmatpush1.msra.mxu0 0.0
  %3629 = vmatprep.subr.mxu0 0.0
  %3630 = vmatpush1.msra.mxu0 0.0
  %3631 = vmatprep.subr.mxu0 0.0
  %3632 = vmatpush1.msra.mxu0 0.0
  %3633 = vmatprep.subr.mxu0 0.0
  %3634 = vmatpush1.msra.mxu0 0.0
  %3635 = vmatprep.mubr.f32.mxu0 0.0
  %3636 = vmatmul.mubr.f32.gmra.mrb[0].mxu0 %v3464
  %v3637 = vpop.f32.mrb[0].mxu0
  %v3638 = vadd.f32 0.0, %v3637
  %v3639 = vpop.f32.mrb[0].mxu0
  %v3640 = vadd.f32 0.0, %v3639
  %3641 = vdwg.mxu0
  %3642 = vmatprep.subr.mxu0 %v3420
  %3643 = vmatpush1.msra.mxu0 %v3419
  %3644 = vmatprep.subr.mxu0 %v3476
  %3645 = vmatpush1.msra.mxu0 %v3474
  %3646 = vmatprep.subr.mxu0 0.0
  %3647 = vmatpush1.msra.mxu0 0.0
  %3648 = vmatprep.subr.mxu0 0.0
  %3649 = vmatpush1.msra.mxu0 0.0
  %3650 = vmatprep.subr.mxu0 0.0
  %3651 = vmatpush1.msra.mxu0 0.0
  %3652 = vmatprep.subr.mxu0 0.0
  %3653 = vmatpush1.msra.mxu0 0.0
  %3654 = vmatprep.subr.mxu0 0.0
  %3655 = vmatpush1.msra.mxu0 0.0
  %3656 = vmatprep.subr.mxu0 0.0
  %3657 = vmatpush1.msra.mxu0 0.0
  %3658 = vmatprep.subr.mxu0 0.0
  %3659 = vmatpush1.msra.mxu0 0.0
  %3660 = vmatprep.subr.mxu0 0.0
  %3661 = vmatpush1.msra.mxu0 0.0
  %3662 = vmatprep.subr.mxu0 0.0
  %3663 = vmatpush1.msra.mxu0 0.0
  %3664 = vmatprep.subr.mxu0 0.0
  %3665 = vmatpush1.msra.mxu0 0.0
  %3666 = vmatprep.subr.mxu0 0.0
  %3667 = vmatpush1.msra.mxu0 0.0
  %3668 = vmatprep.subr.mxu0 0.0
  %3669 = vmatpush1.msra.mxu0 0.0
  %3670 = vmatprep.subr.mxu0 0.0
  %3671 = vmatpush1.msra.mxu0 0.0
  %3672 = vmatprep.subr.mxu0 0.0
  %3673 = vmatpush1.msra.mxu0 0.0
  %3674 = vmatprep.subr.mxu0 0.0
  %3675 = vmatpush1.msra.mxu0 0.0
  %3676 = vmatprep.subr.mxu0 0.0
  %3677 = vmatpush1.msra.mxu0 0.0
  %3678 = vmatprep.subr.mxu0 0.0
  %3679 = vmatpush1.msra.mxu0 0.0
  %3680 = vmatprep.subr.mxu0 0.0
  %3681 = vmatpush1.msra.mxu0 0.0
  %3682 = vmatprep.subr.mxu0 0.0
  %3683 = vmatpush1.msra.mxu0 0.0
  %3684 = vmatprep.subr.mxu0 0.0
  %3685 = vmatpush1.msra.mxu0 0.0
  %3686 = vmatprep.subr.mxu0 0.0
  %3687 = vmatpush1.msra.mxu0 0.0
  %3688 = vmatprep.subr.mxu0 0.0
  %3689 = vmatpush1.msra.mxu0 0.0
  %3690 = vmatprep.subr.mxu0 0.0
  %3691 = vmatpush1.msra.mxu0 0.0
  %3692 = vmatprep.subr.mxu0 0.0
  %3693 = vmatpush1.msra.mxu0 0.0
  %3694 = vmatprep.subr.mxu0 0.0
  %3695 = vmatpush1.msra.mxu0 0.0
  %3696 = vmatprep.subr.mxu0 0.0
  %3697 = vmatpush1.msra.mxu0 0.0
  %3698 = vmatprep.subr.mxu0 0.0
  %3699 = vmatpush1.msra.mxu0 0.0
  %3700 = vmatprep.subr.mxu0 0.0
  %3701 = vmatpush1.msra.mxu0 0.0
  %3702 = vmatprep.subr.mxu0 0.0
  %3703 = vmatpush1.msra.mxu0 0.0
  %3704 = vmatprep.subr.mxu0 0.0
  %3705 = vmatpush1.msra.mxu0 0.0
  %3706 = vmatprep.mubr.f32.mxu0 0.0
  %3707 = vmatmul.mubr.f32.gmra.mrb[0].mxu0 %v3464
  %v3708 = vpop.f32.mrb[0].mxu0
  %v3709 = vadd.f32 0.0, %v3708
  %v3710 = vpop.f32.mrb[0].mxu0
  %v3711 = vadd.f32 0.0, %v3710
  %3712 = vdwg.mxu0
  %3713 = vmatprep.subr.mxu0 %v3422
  %3714 = vmatpush1.msra.mxu0 %v3421
  %3715 = vmatprep.subr.mxu0 %v3480
  %3716 = vmatpush1.msra.mxu0 %v3478
  %3717 = vmatprep.subr.mxu0 0.0
  %3718 = vmatpush1.msra.mxu0 0.0
  %3719 = vmatprep.subr.mxu0 0.0
  %3720 = vmatpush1.msra.mxu0 0.0
  %3721 = vmatprep.subr.mxu0 0.0
  %3722 = vmatpush1.msra.mxu0 0.0
  %3723 = vmatprep.subr.mxu0 0.0
  %3724 = vmatpush1.msra.mxu0 0.0
  %3725 = vmatprep.subr.mxu0 0.0
  %3726 = vmatpush1.msra.mxu0 0.0
  %3727 = vmatprep.subr.mxu0 0.0
  %3728 = vmatpush1.msra.mxu0 0.0
  %3729 = vmatprep.subr.mxu0 0.0
  %3730 = vmatpush1.msra.mxu0 0.0
  %3731 = vmatprep.subr.mxu0 0.0
  %3732 = vmatpush1.msra.mxu0 0.0
  %3733 = vmatprep.subr.mxu0 0.0
  %3734 = vmatpush1.msra.mxu0 0.0
  %3735 = vmatprep.subr.mxu0 0.0
  %3736 = vmatpush1.msra.mxu0 0.0
  %3737 = vmatprep.subr.mxu0 0.0
  %3738 = vmatpush1.msra.mxu0 0.0
  %3739 = vmatprep.subr.mxu0 0.0
  %3740 = vmatpush1.msra.mxu0 0.0
  %3741 = vmatprep.subr.mxu0 0.0
  %3742 = vmatpush1.msra.mxu0 0.0
  %3743 = vmatprep.subr.mxu0 0.0
  %3744 = vmatpush1.msra.mxu0 0.0
  %3745 = vmatprep.subr.mxu0 0.0
  %3746 = vmatpush1.msra.mxu0 0.0
  %3747 = vmatprep.subr.mxu0 0.0
  %3748 = vmatpush1.msra.mxu0 0.0
  %3749 = vmatprep.subr.mxu0 0.0
  %3750 = vmatpush1.msra.mxu0 0.0
  %3751 = vmatprep.subr.mxu0 0.0
  %3752 = vmatpush1.msra.mxu0 0.0
  %3753 = vmatprep.subr.mxu0 0.0
  %3754 = vmatpush1.msra.mxu0 0.0
  %3755 = vmatprep.subr.mxu0 0.0
  %3756 = vmatpush1.msra.mxu0 0.0
  %3757 = vmatprep.subr.mxu0 0.0
  %3758 = vmatpush1.msra.mxu0 0.0
  %3759 = vmatprep.subr.mxu0 0.0
  %3760 = vmatpush1.msra.mxu0 0.0
  %3761 = vmatprep.subr.mxu0 0.0
  %3762 = vmatpush1.msra.mxu0 0.0
  %3763 = vmatprep.subr.mxu0 0.0
  %3764 = vmatpush1.msra.mxu0 0.0
  %3765 = vmatprep.subr.mxu0 0.0
  %3766 = vmatpush1.msra.mxu0 0.0
  %3767 = vmatprep.subr.mxu0 0.0
  %3768 = vmatpush1.msra.mxu0 0.0
  %3769 = vmatprep.subr.mxu0 0.0
  %3770 = vmatpush1.msra.mxu0 0.0
  %3771 = vmatprep.subr.mxu0 0.0
  %3772 = vmatpush1.msra.mxu0 0.0
  %3773 = vmatprep.subr.mxu0 0.0
  %3774 = vmatpush1.msra.mxu0 0.0
  %3775 = vmatprep.subr.mxu0 0.0
  %3776 = vmatpush1.msra.mxu0 0.0
  %3777 = vmatprep.mubr.f32.mxu0 0.0
  %3778 = vmatmul.mubr.f32.gmra.mrb[0].mxu0 %v3464
  %v3779 = vpop.f32.mrb[0].mxu0
  %v3780 = vadd.f32 0.0, %v3779
  %v3781 = vpop.f32.mrb[0].mxu0
  %v3782 = vadd.f32 0.0, %v3781
  %3783 = vdwg.mxu0
  %3784 = vmatprep.subr.mxu0 %v3424
  %3785 = vmatpush1.msra.mxu0 %v3423
  %3786 = vmatprep.subr.mxu0 %v3484
  %3787 = vmatpush1.msra.mxu0 %v3482
  %3788 = vmatprep.subr.mxu0 0.0
  %3789 = vmatpush1.msra.mxu0 0.0
  %3790 = vmatprep.subr.mxu0 0.0
  %3791 = vmatpush1.msra.mxu0 0.0
  %3792 = vmatprep.subr.mxu0 0.0
  %3793 = vmatpush1.msra.mxu0 0.0
  %3794 = vmatprep.subr.mxu0 0.0
  %3795 = vmatpush1.msra.mxu0 0.0
  %3796 = vmatprep.subr.mxu0 0.0
  %3797 = vmatpush1.msra.mxu0 0.0
  %3798 = vmatprep.subr.mxu0 0.0
  %3799 = vmatpush1.msra.mxu0 0.0
  %3800 = vmatprep.subr.mxu0 0.0
  %3801 = vmatpush1.msra.mxu0 0.0
  %3802 = vmatprep.subr.mxu0 0.0
  %3803 = vmatpush1.msra.mxu0 0.0
  %3804 = vmatprep.subr.mxu0 0.0
  %3805 = vmatpush1.msra.mxu0 0.0
  %3806 = vmatprep.subr.mxu0 0.0
  %3807 = vmatpush1.msra.mxu0 0.0
  %3808 = vmatprep.subr.mxu0 0.0
  %3809 = vmatpush1.msra.mxu0 0.0
  %3810 = vmatprep.subr.mxu0 0.0
  %3811 = vmatpush1.msra.mxu0 0.0
  %3812 = vmatprep.subr.mxu0 0.0
  %3813 = vmatpush1.msra.mxu0 0.0
  %3814 = vmatprep.subr.mxu0 0.0
  %3815 = vmatpush1.msra.mxu0 0.0
  %3816 = vmatprep.subr.mxu0 0.0
  %3817 = vmatpush1.msra.mxu0 0.0
  %3818 = vmatprep.subr.mxu0 0.0
  %3819 = vmatpush1.msra.mxu0 0.0
  %3820 = vmatprep.subr.mxu0 0.0
  %3821 = vmatpush1.msra.mxu0 0.0
  %3822 = vmatprep.subr.mxu0 0.0
  %3823 = vmatpush1.msra.mxu0 0.0
  %3824 = vmatprep.subr.mxu0 0.0
  %3825 = vmatpush1.msra.mxu0 0.0
  %3826 = vmatprep.subr.mxu0 0.0
  %3827 = vmatpush1.msra.mxu0 0.0
  %3828 = vmatprep.subr.mxu0 0.0
  %3829 = vmatpush1.msra.mxu0 0.0
  %3830 = vmatprep.subr.mxu0 0.0
  %3831 = vmatpush1.msra.mxu0 0.0
  %3832 = vmatprep.subr.mxu0 0.0
  %3833 = vmatpush1.msra.mxu0 0.0
  %3834 = vmatprep.subr.mxu0 0.0
  %3835 = vmatpush1.msra.mxu0 0.0
  %3836 = vmatprep.subr.mxu0 0.0
  %3837 = vmatpush1.msra.mxu0 0.0
  %3838 = vmatprep.subr.mxu0 0.0
  %3839 = vmatpush1.msra.mxu0 0.0
  %3840 = vmatprep.subr.mxu0 0.0
  %3841 = vmatpush1.msra.mxu0 0.0
  %3842 = vmatprep.subr.mxu0 0.0
  %3843 = vmatpush1.msra.mxu0 0.0
  %3844 = vmatprep.subr.mxu0 0.0
  %3845 = vmatpush1.msra.mxu0 0.0
  %3846 = vmatprep.subr.mxu0 0.0
  %3847 = vmatpush1.msra.mxu0 0.0
  %3848 = vmatprep.mubr.f32.mxu0 0.0
  %3849 = vmatmul.mubr.f32.gmra.mrb[0].mxu0 %v3464
  %v3850 = vpop.f32.mrb[0].mxu0
  %v3851 = vadd.f32 0.0, %v3850
  %v3852 = vpop.f32.mrb[0].mxu0
  %v3853 = vadd.f32 0.0, %v3852
  %3854 = vdwg.mxu0
  %3855 = vmatprep.subr.mxu0 %v3426
  %3856 = vmatpush1.msra.mxu0 %v3425
  %3857 = vmatprep.subr.mxu0 %v3488
  %3858 = vmatpush1.msra.mxu0 %v3486
  %3859 = vmatprep.subr.mxu0 0.0
  %3860 = vmatpush1.msra.mxu0 0.0
  %3861 = vmatprep.subr.mxu0 0.0
  %3862 = vmatpush1.msra.mxu0 0.0
  %3863 = vmatprep.subr.mxu0 0.0
  %3864 = vmatpush1.msra.mxu0 0.0
  %3865 = vmatprep.subr.mxu0 0.0
  %3866 = vmatpush1.msra.mxu0 0.0
  %3867 = vmatprep.subr.mxu0 0.0
  %3868 = vmatpush1.msra.mxu0 0.0
  %3869 = vmatprep.subr.mxu0 0.0
  %3870 = vmatpush1.msra.mxu0 0.0
  %3871 = vmatprep.subr.mxu0 0.0
  %3872 = vmatpush1.msra.mxu0 0.0
  %3873 = vmatprep.subr.mxu0 0.0
  %3874 = vmatpush1.msra.mxu0 0.0
  %3875 = vmatprep.subr.mxu0 0.0
  %3876 = vmatpush1.msra.mxu0 0.0
  %3877 = vmatprep.subr.mxu0 0.0
  %3878 = vmatpush1.msra.mxu0 0.0
  %3879 = vmatprep.subr.mxu0 0.0
  %3880 = vmatpush1.msra.mxu0 0.0
  %3881 = vmatprep.subr.mxu0 0.0
  %3882 = vmatpush1.msra.mxu0 0.0
  %3883 = vmatprep.subr.mxu0 0.0
  %3884 = vmatpush1.msra.mxu0 0.0
  %3885 = vmatprep.subr.mxu0 0.0
  %3886 = vmatpush1.msra.mxu0 0.0
  %3887 = vmatprep.subr.mxu0 0.0
  %3888 = vmatpush1.msra.mxu0 0.0
  %3889 = vmatprep.subr.mxu0 0.0
  %3890 = vmatpush1.msra.mxu0 0.0
  %3891 = vmatprep.subr.mxu0 0.0
  %3892 = vmatpush1.msra.mxu0 0.0
  %3893 = vmatprep.subr.mxu0 0.0
  %3894 = vmatpush1.msra.mxu0 0.0
  %3895 = vmatprep.subr.mxu0 0.0
  %3896 = vmatpush1.msra.mxu0 0.0
  %3897 = vmatprep.subr.mxu0 0.0
  %3898 = vmatpush1.msra.mxu0 0.0
  %3899 = vmatprep.subr.mxu0 0.0
  %3900 = vmatpush1.msra.mxu0 0.0
  %3901 = vmatprep.subr.mxu0 0.0
  %3902 = vmatpush1.msra.mxu0 0.0
  %3903 = vmatprep.subr.mxu0 0.0
  %3904 = vmatpush1.msra.mxu0 0.0
  %3905 = vmatprep.subr.mxu0 0.0
  %3906 = vmatpush1.msra.mxu0 0.0
  %3907 = vmatprep.subr.mxu0 0.0
  %3908 = vmatpush1.msra.mxu0 0.0
  %3909 = vmatprep.subr.mxu0 0.0
  %3910 = vmatpush1.msra.mxu0 0.0
  %3911 = vmatprep.subr.mxu0 0.0
  %3912 = vmatpush1.msra.mxu0 0.0
  %3913 = vmatprep.subr.mxu0 0.0
  %3914 = vmatpush1.msra.mxu0 0.0
  %3915 = vmatprep.subr.mxu0 0.0
  %3916 = vmatpush1.msra.mxu0 0.0
  %3917 = vmatprep.subr.mxu0 0.0
  %3918 = vmatpush1.msra.mxu0 0.0
  %3919 = vmatprep.mubr.f32.mxu0 0.0
  %3920 = vmatmul.mubr.f32.gmra.mrb[0].mxu0 %v3464
  %v3921 = vpop.f32.mrb[0].mxu0
  %v3922 = vadd.f32 0.0, %v3921
  %v3923 = vpop.f32.mrb[0].mxu0
  %v3924 = vadd.f32 0.0, %v3923
  %3925 = vdwg.mxu0
  %3926 = vmatprep.subr.mxu0 %v3428
  %3927 = vmatpush1.msra.mxu0 %v3427
  %3928 = vmatprep.subr.mxu0 %v3492
  %3929 = vmatpush1.msra.mxu0 %v3490
  %3930 = vmatprep.subr.mxu0 0.0
  %3931 = vmatpush1.msra.mxu0 0.0
  %3932 = vmatprep.subr.mxu0 0.0
  %3933 = vmatpush1.msra.mxu0 0.0
  %3934 = vmatprep.subr.mxu0 0.0
  %3935 = vmatpush1.msra.mxu0 0.0
  %3936 = vmatprep.subr.mxu0 0.0
  %3937 = vmatpush1.msra.mxu0 0.0
  %3938 = vmatprep.subr.mxu0 0.0
  %3939 = vmatpush1.msra.mxu0 0.0
  %3940 = vmatprep.subr.mxu0 0.0
  %3941 = vmatpush1.msra.mxu0 0.0
  %3942 = vmatprep.subr.mxu0 0.0
  %3943 = vmatpush1.msra.mxu0 0.0
  %3944 = vmatprep.subr.mxu0 0.0
  %3945 = vmatpush1.msra.mxu0 0.0
  %3946 = vmatprep.subr.mxu0 0.0
  %3947 = vmatpush1.msra.mxu0 0.0
  %3948 = vmatprep.subr.mxu0 0.0
  %3949 = vmatpush1.msra.mxu0 0.0
  %3950 = vmatprep.subr.mxu0 0.0
  %3951 = vmatpush1.msra.mxu0 0.0
  %3952 = vmatprep.subr.mxu0 0.0
  %3953 = vmatpush1.msra.mxu0 0.0
  %3954 = vmatprep.subr.mxu0 0.0
  %3955 = vmatpush1.msra.mxu0 0.0
  %3956 = vmatprep.subr.mxu0 0.0
  %3957 = vmatpush1.msra.mxu0 0.0
  %3958 = vmatprep.subr.mxu0 0.0
  %3959 = vmatpush1.msra.mxu0 0.0
  %3960 = vmatprep.subr.mxu0 0.0
  %3961 = vmatpush1.msra.mxu0 0.0
  %3962 = vmatprep.subr.mxu0 0.0
  %3963 = vmatpush1.msra.mxu0 0.0
  %3964 = vmatprep.subr.mxu0 0.0
  %3965 = vmatpush1.msra.mxu0 0.0
  %3966 = vmatprep.subr.mxu0 0.0
  %3967 = vmatpush1.msra.mxu0 0.0
  %3968 = vmatprep.subr.mxu0 0.0
  %3969 = vmatpush1.msra.mxu0 0.0
  %3970 = vmatprep.subr.mxu0 0.0
  %3971 = vmatpush1.msra.mxu0 0.0
  %3972 = vmatprep.subr.mxu0 0.0
  %3973 = vmatpush1.msra.mxu0 0.0
  %3974 = vmatprep.subr.mxu0 0.0
  %3975 = vmatpush1.msra.mxu0 0.0
  %3976 = vmatprep.subr.mxu0 0.0
  %3977 = vmatpush1.msra.mxu0 0.0
  %3978 = vmatprep.subr.mxu0 0.0
  %3979 = vmatpush1.msra.mxu0 0.0
  %3980 = vmatprep.subr.mxu0 0.0
  %3981 = vmatpush1.msra.mxu0 0.0
  %3982 = vmatprep.subr.mxu0 0.0
  %3983 = vmatpush1.msra.mxu0 0.0
  %3984 = vmatprep.subr.mxu0 0.0
  %3985 = vmatpush1.msra.mxu0 0.0
  %3986 = vmatprep.subr.mxu0 0.0
  %3987 = vmatpush1.msra.mxu0 0.0
  %3988 = vmatprep.subr.mxu0 0.0
  %3989 = vmatpush1.msra.mxu0 0.0
  %3990 = vmatprep.mubr.f32.mxu0 0.0
  %3991 = vmatmul.mubr.f32.gmra.mrb[0].mxu0 %v3464
  %v3992 = vpop.f32.mrb[0].mxu0
  %v3993 = vadd.f32 0.0, %v3992
  %v3994 = vpop.f32.mrb[0].mxu0
  %v3995 = vadd.f32 0.0, %v3994
  %3996 = vdwg.mxu0
  %3997 = vmatprep.subr.mxu0 %v3430
  %3998 = vmatpush1.msra.mxu0 %v3429
  %3999 = vmatprep.subr.mxu0 %v3496
  %4000 = vmatpush1.msra.mxu0 %v3494
  %4001 = vmatprep.subr.mxu0 0.0
  %4002 = vmatpush1.msra.mxu0 0.0
  %4003 = vmatprep.subr.mxu0 0.0
  %4004 = vmatpush1.msra.mxu0 0.0
  %4005 = vmatprep.subr.mxu0 0.0
  %4006 = vmatpush1.msra.mxu0 0.0
  %4007 = vmatprep.subr.mxu0 0.0
  %4008 = vmatpush1.msra.mxu0 0.0
  %4009 = vmatprep.subr.mxu0 0.0
  %4010 = vmatpush1.msra.mxu0 0.0
  %4011 = vmatprep.subr.mxu0 0.0
  %4012 = vmatpush1.msra.mxu0 0.0
  %4013 = vmatprep.subr.mxu0 0.0
  %4014 = vmatpush1.msra.mxu0 0.0
  %4015 = vmatprep.subr.mxu0 0.0
  %4016 = vmatpush1.msra.mxu0 0.0
  %4017 = vmatprep.subr.mxu0 0.0
  %4018 = vmatpush1.msra.mxu0 0.0
  %4019 = vmatprep.subr.mxu0 0.0
  %4020 = vmatpush1.msra.mxu0 0.0
  %4021 = vmatprep.subr.mxu0 0.0
  %4022 = vmatpush1.msra.mxu0 0.0
  %4023 = vmatprep.subr.mxu0 0.0
  %4024 = vmatpush1.msra.mxu0 0.0
  %4025 = vmatprep.subr.mxu0 0.0
  %4026 = vmatpush1.msra.mxu0 0.0
  %4027 = vmatprep.subr.mxu0 0.0
  %4028 = vmatpush1.msra.mxu0 0.0
  %4029 = vmatprep.subr.mxu0 0.0
  %4030 = vmatpush1.msra.mxu0 0.0
  %4031 = vmatprep.subr.mxu0 0.0
  %4032 = vmatpush1.msra.mxu0 0.0
  %4033 = vmatprep.subr.mxu0 0.0
  %4034 = vmatpush1.msra.mxu0 0.0
  %4035 = vmatprep.subr.mxu0 0.0
  %4036 = vmatpush1.msra.mxu0 0.0
  %4037 = vmatprep.subr.mxu0 0.0
  %4038 = vmatpush1.msra.mxu0 0.0
  %4039 = vmatprep.subr.mxu0 0.0
  %4040 = vmatpush1.msra.mxu0 0.0
  %4041 = vmatprep.subr.mxu0 0.0
  %4042 = vmatpush1.msra.mxu0 0.0
  %4043 = vmatprep.subr.mxu0 0.0
  %4044 = vmatpush1.msra.mxu0 0.0
  %4045 = vmatprep.subr.mxu0 0.0
  %4046 = vmatpush1.msra.mxu0 0.0
  %4047 = vmatprep.subr.mxu0 0.0
  %4048 = vmatpush1.msra.mxu0 0.0
  %4049 = vmatprep.subr.mxu0 0.0
  %4050 = vmatpush1.msra.mxu0 0.0
  %4051 = vmatprep.subr.mxu0 0.0
  %4052 = vmatpush1.msra.mxu0 0.0
  %4053 = vmatprep.subr.mxu0 0.0
  %4054 = vmatpush1.msra.mxu0 0.0
  %4055 = vmatprep.subr.mxu0 0.0
  %4056 = vmatpush1.msra.mxu0 0.0
  %4057 = vmatprep.subr.mxu0 0.0
  %4058 = vmatpush1.msra.mxu0 0.0
  %4059 = vmatprep.subr.mxu0 0.0
  %4060 = vmatpush1.msra.mxu0 0.0
  %4061 = vmatprep.mubr.f32.mxu0 0.0
  %4062 = vmatmul.mubr.f32.gmra.mrb[0].mxu0 %v3464
  %v4063 = vpop.f32.mrb[0].mxu0
  %v4064 = vadd.f32 0.0, %v4063
  %v4065 = vpop.f32.mrb[0].mxu0
  %v4066 = vadd.f32 0.0, %v4065
  %4067 = vdwg.mxu0
  %4068 = vmatprep.subr.mxu0 0.0
  %4069 = vmatpush1.msra.mxu0 %v3379
  %4070 = vmatprep.subr.mxu0 0.0
  %4071 = vmatpush1.msra.mxu0 %v3498
  %4072 = vmatprep.subr.mxu0 0.0
  %4073 = vmatpush1.msra.mxu0 0.0
  %4074 = vmatprep.subr.mxu0 0.0
  %4075 = vmatpush1.msra.mxu0 0.0
  %4076 = vmatprep.subr.mxu0 0.0
  %4077 = vmatpush1.msra.mxu0 0.0
  %4078 = vmatprep.subr.mxu0 0.0
  %4079 = vmatpush1.msra.mxu0 0.0
  %4080 = vmatprep.subr.mxu0 0.0
  %4081 = vmatpush1.msra.mxu0 0.0
  %4082 = vmatprep.subr.mxu0 0.0
  %4083 = vmatpush1.msra.mxu0 0.0
  %4084 = vmatprep.subr.mxu0 0.0
  %4085 = vmatpush1.msra.mxu0 0.0
  %4086 = vmatprep.subr.mxu0 0.0
  %4087 = vmatpush1.msra.mxu0 0.0
  %4088 = vmatprep.subr.mxu0 0.0
  %4089 = vmatpush1.msra.mxu0 0.0
  %4090 = vmatprep.subr.mxu0 0.0
  %4091 = vmatpush1.msra.mxu0 0.0
  %4092 = vmatprep.subr.mxu0 0.0
  %4093 = vmatpush1.msra.mxu0 0.0
  %4094 = vmatprep.subr.mxu0 0.0
  %4095 = vmatpush1.msra.mxu0 0.0
  %4096 = vmatprep.subr.mxu0 0.0
  %4097 = vmatpush1.msra.mxu0 0.0
  %4098 = vmatprep.subr.mxu0 0.0
  %4099 = vmatpush1.msra.mxu0 0.0
  %4100 = vmatprep.subr.mxu0 0.0
  %4101 = vmatpush1.msra.mxu0 0.0
  %4102 = vmatprep.subr.mxu0 0.0
  %4103 = vmatpush1.msra.mxu0 0.0
  %4104 = vmatprep.subr.mxu0 0.0
  %4105 = vmatpush1.msra.mxu0 0.0
  %4106 = vmatprep.subr.mxu0 0.0
  %4107 = vmatpush1.msra.mxu0 0.0
  %4108 = vmatprep.subr.mxu0 0.0
  %4109 = vmatpush1.msra.mxu0 0.0
  %4110 = vmatprep.subr.mxu0 0.0
  %4111 = vmatpush1.msra.mxu0 0.0
  %4112 = vmatprep.subr.mxu0 0.0
  %4113 = vmatpush1.msra.mxu0 0.0
  %4114 = vmatprep.subr.mxu0 0.0
  %4115 = vmatpush1.msra.mxu0 0.0
  %4116 = vmatprep.subr.mxu0 0.0
  %4117 = vmatpush1.msra.mxu0 0.0
  %4118 = vmatprep.subr.mxu0 0.0
  %4119 = vmatpush1.msra.mxu0 0.0
  %4120 = vmatprep.subr.mxu0 0.0
  %4121 = vmatpush1.msra.mxu0 0.0
  %4122 = vmatprep.subr.mxu0 0.0
  %4123 = vmatpush1.msra.mxu0 0.0
  %4124 = vmatprep.subr.mxu0 0.0
  %4125 = vmatpush1.msra.mxu0 0.0
  %4126 = vmatprep.subr.mxu0 0.0
  %4127 = vmatpush1.msra.mxu0 0.0
  %4128 = vmatprep.subr.mxu0 0.0
  %4129 = vmatpush1.msra.mxu0 0.0
  %4130 = vmatprep.subr.mxu0 0.0
  %4131 = vmatpush1.msra.mxu0 0.0
  %4132 = vmatprep.mubr.f32.mxu0 0.0
  %4133 = vmatmul.mubr.f32.gmra.mrb[0].mxu0 %v3464
  %v4134 = vpop.f32.mrb[0].mxu0
  %v4135 = vadd.f32 0.0, %v4134
  %v4136 = vpop.f32.mrb[0].mxu0
  %4137 = vdwg.mxu0
  %v4138 = vadd.f32 %v2745, %v3567
  %v4139 = vadd.f32 %v2747, %v3569
  %v4140 = vadd.f32 %v2816, %v3638
  %v4141 = vadd.f32 %v2818, %v3640
  %v4142 = vadd.f32 %v2887, %v3709
  %v4143 = vadd.f32 %v2889, %v3711
  %v4144 = vadd.f32 %v2958, %v3780
  %v4145 = vadd.f32 %v2960, %v3782
  %v4146 = vadd.f32 %v3029, %v3851
  %v4147 = vadd.f32 %v3031, %v3853
  %v4148 = vadd.f32 %v3100, %v3922
  %v4149 = vadd.f32 %v3102, %v3924
  %v4150 = vadd.f32 %v3171, %v3993
  %v4151 = vadd.f32 %v3173, %v3995
  %v4152 = vadd.f32 %v3242, %v4064
  %v4153 = vadd.f32 %v3244, %v4066
  %v4154 = vadd.f32 %v3313, %v4135
  %v4160 = vsel %vm1738, %v3316, %v3319
  %v4161 = vsel %vm1756, %v4160, %v3324
  %v4162 = vsel %vm1774, %v3324, %v3329
  %v4163 = vsel %vm1792, %v4162, %v3333
  %v4164 = vld [vmem:[%s1] sm:$0x3f]
  %4166 = vrot.lane.b32.xlu0 %v4164, 83
  %v4167 = vpop.permute.xlu0 %4166
  %4170 = vrot.lane.b32.xlu0 %v1757, 32
  %v4171 = vpop.permute.xlu0 %4170
  %4172 = vrot.lane.b32.xlu0 %v1758, 32
  %v4173 = vpop.permute.xlu0 %4172
  %4174 = vrot.lane.b32.xlu0 %v1759, 32
  %v4175 = vpop.permute.xlu0 %4174
  %4176 = vrot.lane.b32.xlu0 %v1760, 32
  %v4177 = vpop.permute.xlu0 %4176
  %4178 = vrot.lane.b32.xlu0 %v1761, 32
  %v4179 = vpop.permute.xlu0 %4178
  %4180 = vrot.lane.b32.xlu0 %v1762, 32
  %v4181 = vpop.permute.xlu0 %4180
  %4182 = vrot.lane.b32.xlu0 %v1763, 32
  %v4183 = vpop.permute.xlu0 %4182
  %4184 = vrot.lane.b32.xlu0 %v1764, 32
  %v4185 = vpop.permute.xlu0 %4184
  %4186 = vrot.lane.b32.xlu0 %v1765, 32
  %v4187 = vpop.permute.xlu0 %4186
  %4188 = vrot.lane.b32.xlu0 %v1766, 32
  %v4189 = vpop.permute.xlu0 %4188
  %4190 = vrot.lane.b32.xlu0 %v1767, 32
  %v4191 = vpop.permute.xlu0 %4190
  %4192 = vrot.lane.b32.xlu0 %v1768, 32
  %v4193 = vpop.permute.xlu0 %4192
  %4194 = vrot.lane.b32.xlu0 %v1769, 32
  %v4195 = vpop.permute.xlu0 %4194
  %4196 = vrot.lane.b32.xlu0 %v1770, 32
  %v4197 = vpop.permute.xlu0 %4196
  %4198 = vrot.lane.b32.xlu0 %v1771, 32
  %v4199 = vpop.permute.xlu0 %4198
  %4200 = vrot.lane.b32.xlu0 %v1772, 32
  %v4201 = vpop.permute.xlu0 %4200
  %4202 = vrot.lane.b32.xlu0 %v3337, 32
  %v4203 = vpop.permute.xlu0 %4202
  %4204 = vrot.lane.b32.xlu0 %v4161, 32
  %v4205 = vpop.permute.xlu0 %4204
  %4206 = vrot.lane.b32.xlu0 %v1793, 32
  %v4207 = vpop.permute.xlu0 %4206
  %4208 = vrot.lane.b32.xlu0 %v1794, 32
  %v4209 = vpop.permute.xlu0 %4208
  %4210 = vrot.lane.b32.xlu0 %v1795, 32
  %v4211 = vpop.permute.xlu0 %4210
  %4212 = vrot.lane.b32.xlu0 %v1796, 32
  %v4213 = vpop.permute.xlu0 %4212
  %4214 = vrot.lane.b32.xlu0 %v1797, 32
  %v4215 = vpop.permute.xlu0 %4214
  %4216 = vrot.lane.b32.xlu0 %v1798, 32
  %v4217 = vpop.permute.xlu0 %4216
  %4218 = vrot.lane.b32.xlu0 %v1799, 32
  %v4219 = vpop.permute.xlu0 %4218
  %4220 = vrot.lane.b32.xlu0 %v1800, 32
  %v4221 = vpop.permute.xlu0 %4220
  %4222 = vrot.lane.b32.xlu0 %v1801, 32
  %v4223 = vpop.permute.xlu0 %4222
  %4224 = vrot.lane.b32.xlu0 %v1802, 32
  %v4225 = vpop.permute.xlu0 %4224
  %4226 = vrot.lane.b32.xlu0 %v1803, 32
  %v4227 = vpop.permute.xlu0 %4226
  %4228 = vrot.lane.b32.xlu0 %v1804, 32
  %v4229 = vpop.permute.xlu0 %4228
  %4230 = vrot.lane.b32.xlu0 %v1805, 32
  %v4231 = vpop.permute.xlu0 %4230
  %4232 = vrot.lane.b32.xlu0 %v1806, 32
  %v4233 = vpop.permute.xlu0 %4232
  %4234 = vrot.lane.b32.xlu0 %v1807, 32
  %v4235 = vpop.permute.xlu0 %4234
  %4236 = vrot.lane.b32.xlu0 %v1808, 32
  %v4237 = vpop.permute.xlu0 %4236
  %4238 = vrot.lane.b32.xlu0 %v3339, 32
  %v4239 = vpop.permute.xlu0 %4238
  %4240 = vrot.lane.b32.xlu0 %v4163, 32
  %v4241 = vpop.permute.xlu0 %4240
  %vm4242 = vcmask 261120
  %v4243 = vsel %vm4242, %v4171, %v4173
  %v4244 = vsel %vm4242, %v4173, %v4175
  %v4245 = vsel %vm4242, %v4175, %v4177
  %v4246 = vsel %vm4242, %v4177, %v4179
  %v4247 = vsel %vm4242, %v4179, %v4181
  %v4248 = vsel %vm4242, %v4181, %v4183
  %v4249 = vsel %vm4242, %v4183, %v4185
  %v4250 = vsel %vm4242, %v4185, %v4187
  %v4251 = vsel %vm4242, %v4187, %v4189
  %v4252 = vsel %vm4242, %v4189, %v4191
  %v4253 = vsel %vm4242, %v4191, %v4193
  %v4254 = vsel %vm4242, %v4193, %v4195
  %v4255 = vsel %vm4242, %v4195, %v4197
  %v4256 = vsel %vm4242, %v4197, %v4199
  %v4257 = vsel %vm4242, %v4199, %v4201
  %v4258 = vsel %vm4242, %v4201, %v4203
  %v4259 = vsel %vm4242, %v4203, %v4205
  %v4260 = vsel %vm4242, %v4207, %v4209
  %v4261 = vsel %vm4242, %v4209, %v4211
  %v4262 = vsel %vm4242, %v4211, %v4213
  %v4263 = vsel %vm4242, %v4213, %v4215
  %v4264 = vsel %vm4242, %v4215, %v4217
  %v4265 = vsel %vm4242, %v4217, %v4219
  %v4266 = vsel %vm4242, %v4219, %v4221
  %v4267 = vsel %vm4242, %v4221, %v4223
  %v4268 = vsel %vm4242, %v4223, %v4225
  %v4269 = vsel %vm4242, %v4225, %v4227
  %v4270 = vsel %vm4242, %v4227, %v4229
  %v4271 = vsel %vm4242, %v4229, %v4231
  %v4272 = vsel %vm4242, %v4231, %v4233
  %v4273 = vsel %vm4242, %v4233, %v4235
  %v4274 = vsel %vm4242, %v4235, %v4237
  %v4275 = vsel %vm4242, %v4237, %v4239
  %v4276 = vsel %vm4242, %v4239, %v4241
  %v4294 = vsel %vm1966, %v4167, 0
  %v4296 = vsel %vm1969, %v4260, 0
  %v4298 = vsel %vm1969, %v4261, 0
  %v4300 = vsel %vm1969, %v4262, 0
  %v4302 = vsel %vm1969, %v4263, 0
  %v4304 = vsel %vm1969, %v4264, 0
  %v4306 = vsel %vm1969, %v4265, 0
  %v4308 = vsel %vm1969, %v4266, 0
  %v4310 = vsel %vm1969, %v4267, 0
  %v4312 = vsel %vm1969, %v4268, 0
  %v4314 = vsel %vm1969, %v4269, 0
  %v4316 = vsel %vm1969, %v4270, 0
  %v4318 = vsel %vm1969, %v4271, 0
  %v4320 = vsel %vm1969, %v4272, 0
  %v4322 = vsel %vm1969, %v4273, 0
  %v4324 = vsel %vm1969, %v4274, 0
  %v4326 = vsel %vm1969, %v4275, 0
  %v4328 = vsel %vm1969, %v4276, 0
  %4330 = vmatprep.subr.mxu0 %v4244
  %4331 = vmatpush1.msra.mxu0 %v4243
  %4332 = vmatprep.subr.mxu0 %v4298
  %4333 = vmatpush1.msra.mxu0 %v4296
  %4334 = vmatprep.subr.mxu0 0.0
  %4335 = vmatpush1.msra.mxu0 0.0
  %4336 = vmatprep.subr.mxu0 0.0
  %4337 = vmatpush1.msra.mxu0 0.0
  %4338 = vmatprep.subr.mxu0 0.0
  %4339 = vmatpush1.msra.mxu0 0.0
  %4340 = vmatprep.subr.mxu0 0.0
  %4341 = vmatpush1.msra.mxu0 0.0
  %4342 = vmatprep.subr.mxu0 0.0
  %4343 = vmatpush1.msra.mxu0 0.0
  %4344 = vmatprep.subr.mxu0 0.0
  %4345 = vmatpush1.msra.mxu0 0.0
  %4346 = vmatprep.subr.mxu0 0.0
  %4347 = vmatpush1.msra.mxu0 0.0
  %4348 = vmatprep.subr.mxu0 0.0
  %4349 = vmatpush1.msra.mxu0 0.0
  %4350 = vmatprep.subr.mxu0 0.0
  %4351 = vmatpush1.msra.mxu0 0.0
  %4352 = vmatprep.subr.mxu0 0.0
  %4353 = vmatpush1.msra.mxu0 0.0
  %4354 = vmatprep.subr.mxu0 0.0
  %4355 = vmatpush1.msra.mxu0 0.0
  %4356 = vmatprep.subr.mxu0 0.0
  %4357 = vmatpush1.msra.mxu0 0.0
  %4358 = vmatprep.subr.mxu0 0.0
  %4359 = vmatpush1.msra.mxu0 0.0
  %4360 = vmatprep.subr.mxu0 0.0
  %4361 = vmatpush1.msra.mxu0 0.0
  %4362 = vmatprep.subr.mxu0 0.0
  %4363 = vmatpush1.msra.mxu0 0.0
  %4364 = vmatprep.subr.mxu0 0.0
  %4365 = vmatpush1.msra.mxu0 0.0
  %4366 = vmatprep.subr.mxu0 0.0
  %4367 = vmatpush1.msra.mxu0 0.0
  %4368 = vmatprep.subr.mxu0 0.0
  %4369 = vmatpush1.msra.mxu0 0.0
  %4370 = vmatprep.subr.mxu0 0.0
  %4371 = vmatpush1.msra.mxu0 0.0
  %4372 = vmatprep.subr.mxu0 0.0
  %4373 = vmatpush1.msra.mxu0 0.0
  %4374 = vmatprep.subr.mxu0 0.0
  %4375 = vmatpush1.msra.mxu0 0.0
  %4376 = vmatprep.subr.mxu0 0.0
  %4377 = vmatpush1.msra.mxu0 0.0
  %4378 = vmatprep.subr.mxu0 0.0
  %4379 = vmatpush1.msra.mxu0 0.0
  %4380 = vmatprep.subr.mxu0 0.0
  %4381 = vmatpush1.msra.mxu0 0.0
  %4382 = vmatprep.subr.mxu0 0.0
  %4383 = vmatpush1.msra.mxu0 0.0
  %4384 = vmatprep.subr.mxu0 0.0
  %4385 = vmatpush1.msra.mxu0 0.0
  %4386 = vmatprep.subr.mxu0 0.0
  %4387 = vmatpush1.msra.mxu0 0.0
  %4388 = vmatprep.subr.mxu0 0.0
  %4389 = vmatpush1.msra.mxu0 0.0
  %4390 = vmatprep.subr.mxu0 0.0
  %4391 = vmatpush1.msra.mxu0 0.0
  %4392 = vmatprep.subr.mxu0 0.0
  %4393 = vmatpush1.msra.mxu0 0.0
  %4394 = vmatprep.mubr.f32.mxu0 0.0
  %4395 = vmatmul.mubr.f32.gmra.mrb[0].mxu0 %v4294
  %v4396 = vpop.f32.mrb[0].mxu0
  %v4397 = vadd.f32 0.0, %v4396
  %v4398 = vpop.f32.mrb[0].mxu0
  %v4399 = vadd.f32 0.0, %v4398
  %4400 = vdwg.mxu0
  %4401 = vmatprep.subr.mxu0 %v4246
  %4402 = vmatpush1.msra.mxu0 %v4245
  %4403 = vmatprep.subr.mxu0 %v4302
  %4404 = vmatpush1.msra.mxu0 %v4300
  %4405 = vmatprep.subr.mxu0 0.0
  %4406 = vmatpush1.msra.mxu0 0.0
  %4407 = vmatprep.subr.mxu0 0.0
  %4408 = vmatpush1.msra.mxu0 0.0
  %4409 = vmatprep.subr.mxu0 0.0
  %4410 = vmatpush1.msra.mxu0 0.0
  %4411 = vmatprep.subr.mxu0 0.0
  %4412 = vmatpush1.msra.mxu0 0.0
  %4413 = vmatprep.subr.mxu0 0.0
  %4414 = vmatpush1.msra.mxu0 0.0
  %4415 = vmatprep.subr.mxu0 0.0
  %4416 = vmatpush1.msra.mxu0 0.0
  %4417 = vmatprep.subr.mxu0 0.0
  %4418 = vmatpush1.msra.mxu0 0.0
  %4419 = vmatprep.subr.mxu0 0.0
  %4420 = vmatpush1.msra.mxu0 0.0
  %4421 = vmatprep.subr.mxu0 0.0
  %4422 = vmatpush1.msra.mxu0 0.0
  %4423 = vmatprep.subr.mxu0 0.0
  %4424 = vmatpush1.msra.mxu0 0.0
  %4425 = vmatprep.subr.mxu0 0.0
  %4426 = vmatpush1.msra.mxu0 0.0
  %4427 = vmatprep.subr.mxu0 0.0
  %4428 = vmatpush1.msra.mxu0 0.0
  %4429 = vmatprep.subr.mxu0 0.0
  %4430 = vmatpush1.msra.mxu0 0.0
  %4431 = vmatprep.subr.mxu0 0.0
  %4432 = vmatpush1.msra.mxu0 0.0
  %4433 = vmatprep.subr.mxu0 0.0
  %4434 = vmatpush1.msra.mxu0 0.0
  %4435 = vmatprep.subr.mxu0 0.0
  %4436 = vmatpush1.msra.mxu0 0.0
  %4437 = vmatprep.subr.mxu0 0.0
  %4438 = vmatpush1.msra.mxu0 0.0
  %4439 = vmatprep.subr.mxu0 0.0
  %4440 = vmatpush1.msra.mxu0 0.0
  %4441 = vmatprep.subr.mxu0 0.0
  %4442 = vmatpush1.msra.mxu0 0.0
  %4443 = vmatprep.subr.mxu0 0.0
  %4444 = vmatpush1.msra.mxu0 0.0
  %4445 = vmatprep.subr.mxu0 0.0
  %4446 = vmatpush1.msra.mxu0 0.0
  %4447 = vmatprep.subr.mxu0 0.0
  %4448 = vmatpush1.msra.mxu0 0.0
  %4449 = vmatprep.subr.mxu0 0.0
  %4450 = vmatpush1.msra.mxu0 0.0
  %4451 = vmatprep.subr.mxu0 0.0
  %4452 = vmatpush1.msra.mxu0 0.0
  %4453 = vmatprep.subr.mxu0 0.0
  %4454 = vmatpush1.msra.mxu0 0.0
  %4455 = vmatprep.subr.mxu0 0.0
  %4456 = vmatpush1.msra.mxu0 0.0
  %4457 = vmatprep.subr.mxu0 0.0
  %4458 = vmatpush1.msra.mxu0 0.0
  %4459 = vmatprep.subr.mxu0 0.0
  %4460 = vmatpush1.msra.mxu0 0.0
  %4461 = vmatprep.subr.mxu0 0.0
  %4462 = vmatpush1.msra.mxu0 0.0
  %4463 = vmatprep.subr.mxu0 0.0
  %4464 = vmatpush1.msra.mxu0 0.0
  %4465 = vmatprep.mubr.f32.mxu0 0.0
  %4466 = vmatmul.mubr.f32.gmra.mrb[0].mxu0 %v4294
  %v4467 = vpop.f32.mrb[0].mxu0
  %v4468 = vadd.f32 0.0, %v4467
  %v4469 = vpop.f32.mrb[0].mxu0
  %v4470 = vadd.f32 0.0, %v4469
  %4471 = vdwg.mxu0
  %4472 = vmatprep.subr.mxu0 %v4248
  %4473 = vmatpush1.msra.mxu0 %v4247
  %4474 = vmatprep.subr.mxu0 %v4306
  %4475 = vmatpush1.msra.mxu0 %v4304
  %4476 = vmatprep.subr.mxu0 0.0
  %4477 = vmatpush1.msra.mxu0 0.0
  %4478 = vmatprep.subr.mxu0 0.0
  %4479 = vmatpush1.msra.mxu0 0.0
  %4480 = vmatprep.subr.mxu0 0.0
  %4481 = vmatpush1.msra.mxu0 0.0
  %4482 = vmatprep.subr.mxu0 0.0
  %4483 = vmatpush1.msra.mxu0 0.0
  %4484 = vmatprep.subr.mxu0 0.0
  %4485 = vmatpush1.msra.mxu0 0.0
  %4486 = vmatprep.subr.mxu0 0.0
  %4487 = vmatpush1.msra.mxu0 0.0
  %4488 = vmatprep.subr.mxu0 0.0
  %4489 = vmatpush1.msra.mxu0 0.0
  %4490 = vmatprep.subr.mxu0 0.0
  %4491 = vmatpush1.msra.mxu0 0.0
  %4492 = vmatprep.subr.mxu0 0.0
  %4493 = vmatpush1.msra.mxu0 0.0
  %4494 = vmatprep.subr.mxu0 0.0
  %4495 = vmatpush1.msra.mxu0 0.0
  %4496 = vmatprep.subr.mxu0 0.0
  %4497 = vmatpush1.msra.mxu0 0.0
  %4498 = vmatprep.subr.mxu0 0.0
  %4499 = vmatpush1.msra.mxu0 0.0
  %4500 = vmatprep.subr.mxu0 0.0
  %4501 = vmatpush1.msra.mxu0 0.0
  %4502 = vmatprep.subr.mxu0 0.0
  %4503 = vmatpush1.msra.mxu0 0.0
  %4504 = vmatprep.subr.mxu0 0.0
  %4505 = vmatpush1.msra.mxu0 0.0
  %4506 = vmatprep.subr.mxu0 0.0
  %4507 = vmatpush1.msra.mxu0 0.0
  %4508 = vmatprep.subr.mxu0 0.0
  %4509 = vmatpush1.msra.mxu0 0.0
  %4510 = vmatprep.subr.mxu0 0.0
  %4511 = vmatpush1.msra.mxu0 0.0
  %4512 = vmatprep.subr.mxu0 0.0
  %4513 = vmatpush1.msra.mxu0 0.0
  %4514 = vmatprep.subr.mxu0 0.0
  %4515 = vmatpush1.msra.mxu0 0.0
  %4516 = vmatprep.subr.mxu0 0.0
  %4517 = vmatpush1.msra.mxu0 0.0
  %4518 = vmatprep.subr.mxu0 0.0
  %4519 = vmatpush1.msra.mxu0 0.0
  %4520 = vmatprep.subr.mxu0 0.0
  %4521 = vmatpush1.msra.mxu0 0.0
  %4522 = vmatprep.subr.mxu0 0.0
  %4523 = vmatpush1.msra.mxu0 0.0
  %4524 = vmatprep.subr.mxu0 0.0
  %4525 = vmatpush1.msra.mxu0 0.0
  %4526 = vmatprep.subr.mxu0 0.0
  %4527 = vmatpush1.msra.mxu0 0.0
  %4528 = vmatprep.subr.mxu0 0.0
  %4529 = vmatpush1.msra.mxu0 0.0
  %4530 = vmatprep.subr.mxu0 0.0
  %4531 = vmatpush1.msra.mxu0 0.0
  %4532 = vmatprep.subr.mxu0 0.0
  %4533 = vmatpush1.msra.mxu0 0.0
  %4534 = vmatprep.subr.mxu0 0.0
  %4535 = vmatpush1.msra.mxu0 0.0
  %4536 = vmatprep.mubr.f32.mxu0 0.0
  %4537 = vmatmul.mubr.f32.gmra.mrb[0].mxu0 %v4294
  %v4538 = vpop.f32.mrb[0].mxu0
  %v4539 = vadd.f32 0.0, %v4538
  %v4540 = vpop.f32.mrb[0].mxu0
  %v4541 = vadd.f32 0.0, %v4540
  %4542 = vdwg.mxu0
  %4543 = vmatprep.subr.mxu0 %v4250
  %4544 = vmatpush1.msra.mxu0 %v4249
  %4545 = vmatprep.subr.mxu0 %v4310
  %4546 = vmatpush1.msra.mxu0 %v4308
  %4547 = vmatprep.subr.mxu0 0.0
  %4548 = vmatpush1.msra.mxu0 0.0
  %4549 = vmatprep.subr.mxu0 0.0
  %4550 = vmatpush1.msra.mxu0 0.0
  %4551 = vmatprep.subr.mxu0 0.0
  %4552 = vmatpush1.msra.mxu0 0.0
  %4553 = vmatprep.subr.mxu0 0.0
  %4554 = vmatpush1.msra.mxu0 0.0
  %4555 = vmatprep.subr.mxu0 0.0
  %4556 = vmatpush1.msra.mxu0 0.0
  %4557 = vmatprep.subr.mxu0 0.0
  %4558 = vmatpush1.msra.mxu0 0.0
  %4559 = vmatprep.subr.mxu0 0.0
  %4560 = vmatpush1.msra.mxu0 0.0
  %4561 = vmatprep.subr.mxu0 0.0
  %4562 = vmatpush1.msra.mxu0 0.0
  %4563 = vmatprep.subr.mxu0 0.0
  %4564 = vmatpush1.msra.mxu0 0.0
  %4565 = vmatprep.subr.mxu0 0.0
  %4566 = vmatpush1.msra.mxu0 0.0
  %4567 = vmatprep.subr.mxu0 0.0
  %4568 = vmatpush1.msra.mxu0 0.0
  %4569 = vmatprep.subr.mxu0 0.0
  %4570 = vmatpush1.msra.mxu0 0.0
  %4571 = vmatprep.subr.mxu0 0.0
  %4572 = vmatpush1.msra.mxu0 0.0
  %4573 = vmatprep.subr.mxu0 0.0
  %4574 = vmatpush1.msra.mxu0 0.0
  %4575 = vmatprep.subr.mxu0 0.0
  %4576 = vmatpush1.msra.mxu0 0.0
  %4577 = vmatprep.subr.mxu0 0.0
  %4578 = vmatpush1.msra.mxu0 0.0
  %4579 = vmatprep.subr.mxu0 0.0
  %4580 = vmatpush1.msra.mxu0 0.0
  %4581 = vmatprep.subr.mxu0 0.0
  %4582 = vmatpush1.msra.mxu0 0.0
  %4583 = vmatprep.subr.mxu0 0.0
  %4584 = vmatpush1.msra.mxu0 0.0
  %4585 = vmatprep.subr.mxu0 0.0
  %4586 = vmatpush1.msra.mxu0 0.0
  %4587 = vmatprep.subr.mxu0 0.0
  %4588 = vmatpush1.msra.mxu0 0.0
  %4589 = vmatprep.subr.mxu0 0.0
  %4590 = vmatpush1.msra.mxu0 0.0
  %4591 = vmatprep.subr.mxu0 0.0
  %4592 = vmatpush1.msra.mxu0 0.0
  %4593 = vmatprep.subr.mxu0 0.0
  %4594 = vmatpush1.msra.mxu0 0.0
  %4595 = vmatprep.subr.mxu0 0.0
  %4596 = vmatpush1.msra.mxu0 0.0
  %4597 = vmatprep.subr.mxu0 0.0
  %4598 = vmatpush1.msra.mxu0 0.0
  %4599 = vmatprep.subr.mxu0 0.0
  %4600 = vmatpush1.msra.mxu0 0.0
  %4601 = vmatprep.subr.mxu0 0.0
  %4602 = vmatpush1.msra.mxu0 0.0
  %4603 = vmatprep.subr.mxu0 0.0
  %4604 = vmatpush1.msra.mxu0 0.0
  %4605 = vmatprep.subr.mxu0 0.0
  %4606 = vmatpush1.msra.mxu0 0.0
  %4607 = vmatprep.mubr.f32.mxu0 0.0
  %4608 = vmatmul.mubr.f32.gmra.mrb[0].mxu0 %v4294
  %v4609 = vpop.f32.mrb[0].mxu0
  %v4610 = vadd.f32 0.0, %v4609
  %v4611 = vpop.f32.mrb[0].mxu0
  %v4612 = vadd.f32 0.0, %v4611
  %4613 = vdwg.mxu0
  %4614 = vmatprep.subr.mxu0 %v4252
  %4615 = vmatpush1.msra.mxu0 %v4251
  %4616 = vmatprep.subr.mxu0 %v4314
  %4617 = vmatpush1.msra.mxu0 %v4312
  %4618 = vmatprep.subr.mxu0 0.0
  %4619 = vmatpush1.msra.mxu0 0.0
  %4620 = vmatprep.subr.mxu0 0.0
  %4621 = vmatpush1.msra.mxu0 0.0
  %4622 = vmatprep.subr.mxu0 0.0
  %4623 = vmatpush1.msra.mxu0 0.0
  %4624 = vmatprep.subr.mxu0 0.0
  %4625 = vmatpush1.msra.mxu0 0.0
  %4626 = vmatprep.subr.mxu0 0.0
  %4627 = vmatpush1.msra.mxu0 0.0
  %4628 = vmatprep.subr.mxu0 0.0
  %4629 = vmatpush1.msra.mxu0 0.0
  %4630 = vmatprep.subr.mxu0 0.0
  %4631 = vmatpush1.msra.mxu0 0.0
  %4632 = vmatprep.subr.mxu0 0.0
  %4633 = vmatpush1.msra.mxu0 0.0
  %4634 = vmatprep.subr.mxu0 0.0
  %4635 = vmatpush1.msra.mxu0 0.0
  %4636 = vmatprep.subr.mxu0 0.0
  %4637 = vmatpush1.msra.mxu0 0.0
  %4638 = vmatprep.subr.mxu0 0.0
  %4639 = vmatpush1.msra.mxu0 0.0
  %4640 = vmatprep.subr.mxu0 0.0
  %4641 = vmatpush1.msra.mxu0 0.0
  %4642 = vmatprep.subr.mxu0 0.0
  %4643 = vmatpush1.msra.mxu0 0.0
  %4644 = vmatprep.subr.mxu0 0.0
  %4645 = vmatpush1.msra.mxu0 0.0
  %4646 = vmatprep.subr.mxu0 0.0
  %4647 = vmatpush1.msra.mxu0 0.0
  %4648 = vmatprep.subr.mxu0 0.0
  %4649 = vmatpush1.msra.mxu0 0.0
  %4650 = vmatprep.subr.mxu0 0.0
  %4651 = vmatpush1.msra.mxu0 0.0
  %4652 = vmatprep.subr.mxu0 0.0
  %4653 = vmatpush1.msra.mxu0 0.0
  %4654 = vmatprep.subr.mxu0 0.0
  %4655 = vmatpush1.msra.mxu0 0.0
  %4656 = vmatprep.subr.mxu0 0.0
  %4657 = vmatpush1.msra.mxu0 0.0
  %4658 = vmatprep.subr.mxu0 0.0
  %4659 = vmatpush1.msra.mxu0 0.0
  %4660 = vmatprep.subr.mxu0 0.0
  %4661 = vmatpush1.msra.mxu0 0.0
  %4662 = vmatprep.subr.mxu0 0.0
  %4663 = vmatpush1.msra.mxu0 0.0
  %4664 = vmatprep.subr.mxu0 0.0
  %4665 = vmatpush1.msra.mxu0 0.0
  %4666 = vmatprep.subr.mxu0 0.0
  %4667 = vmatpush1.msra.mxu0 0.0
  %4668 = vmatprep.subr.mxu0 0.0
  %4669 = vmatpush1.msra.mxu0 0.0
  %4670 = vmatprep.subr.mxu0 0.0
  %4671 = vmatpush1.msra.mxu0 0.0
  %4672 = vmatprep.subr.mxu0 0.0
  %4673 = vmatpush1.msra.mxu0 0.0
  %4674 = vmatprep.subr.mxu0 0.0
  %4675 = vmatpush1.msra.mxu0 0.0
  %4676 = vmatprep.subr.mxu0 0.0
  %4677 = vmatpush1.msra.mxu0 0.0
  %4678 = vmatprep.mubr.f32.mxu0 0.0
  %4679 = vmatmul.mubr.f32.gmra.mrb[0].mxu0 %v4294
  %v4680 = vpop.f32.mrb[0].mxu0
  %v4681 = vadd.f32 0.0, %v4680
  %v4682 = vpop.f32.mrb[0].mxu0
  %v4683 = vadd.f32 0.0, %v4682
  %4684 = vdwg.mxu0
  %4685 = vmatprep.subr.mxu0 %v4254
  %4686 = vmatpush1.msra.mxu0 %v4253
  %4687 = vmatprep.subr.mxu0 %v4318
  %4688 = vmatpush1.msra.mxu0 %v4316
  %4689 = vmatprep.subr.mxu0 0.0
  %4690 = vmatpush1.msra.mxu0 0.0
  %4691 = vmatprep.subr.mxu0 0.0
  %4692 = vmatpush1.msra.mxu0 0.0
  %4693 = vmatprep.subr.mxu0 0.0
  %4694 = vmatpush1.msra.mxu0 0.0
  %4695 = vmatprep.subr.mxu0 0.0
  %4696 = vmatpush1.msra.mxu0 0.0
  %4697 = vmatprep.subr.mxu0 0.0
  %4698 = vmatpush1.msra.mxu0 0.0
  %4699 = vmatprep.subr.mxu0 0.0
  %4700 = vmatpush1.msra.mxu0 0.0
  %4701 = vmatprep.subr.mxu0 0.0
  %4702 = vmatpush1.msra.mxu0 0.0
  %4703 = vmatprep.subr.mxu0 0.0
  %4704 = vmatpush1.msra.mxu0 0.0
  %4705 = vmatprep.subr.mxu0 0.0
  %4706 = vmatpush1.msra.mxu0 0.0
  %4707 = vmatprep.subr.mxu0 0.0
  %4708 = vmatpush1.msra.mxu0 0.0
  %4709 = vmatprep.subr.mxu0 0.0
  %4710 = vmatpush1.msra.mxu0 0.0
  %4711 = vmatprep.subr.mxu0 0.0
  %4712 = vmatpush1.msra.mxu0 0.0
  %4713 = vmatprep.subr.mxu0 0.0
  %4714 = vmatpush1.msra.mxu0 0.0
  %4715 = vmatprep.subr.mxu0 0.0
  %4716 = vmatpush1.msra.mxu0 0.0
  %4717 = vmatprep.subr.mxu0 0.0
  %4718 = vmatpush1.msra.mxu0 0.0
  %4719 = vmatprep.subr.mxu0 0.0
  %4720 = vmatpush1.msra.mxu0 0.0
  %4721 = vmatprep.subr.mxu0 0.0
  %4722 = vmatpush1.msra.mxu0 0.0
  %4723 = vmatprep.subr.mxu0 0.0
  %4724 = vmatpush1.msra.mxu0 0.0
  %4725 = vmatprep.subr.mxu0 0.0
  %4726 = vmatpush1.msra.mxu0 0.0
  %4727 = vmatprep.subr.mxu0 0.0
  %4728 = vmatpush1.msra.mxu0 0.0
  %4729 = vmatprep.subr.mxu0 0.0
  %4730 = vmatpush1.msra.mxu0 0.0
  %4731 = vmatprep.subr.mxu0 0.0
  %4732 = vmatpush1.msra.mxu0 0.0
  %4733 = vmatprep.subr.mxu0 0.0
  %4734 = vmatpush1.msra.mxu0 0.0
  %4735 = vmatprep.subr.mxu0 0.0
  %4736 = vmatpush1.msra.mxu0 0.0
  %4737 = vmatprep.subr.mxu0 0.0
  %4738 = vmatpush1.msra.mxu0 0.0
  %4739 = vmatprep.subr.mxu0 0.0
  %4740 = vmatpush1.msra.mxu0 0.0
  %4741 = vmatprep.subr.mxu0 0.0
  %4742 = vmatpush1.msra.mxu0 0.0
  %4743 = vmatprep.subr.mxu0 0.0
  %4744 = vmatpush1.msra.mxu0 0.0
  %4745 = vmatprep.subr.mxu0 0.0
  %4746 = vmatpush1.msra.mxu0 0.0
  %4747 = vmatprep.subr.mxu0 0.0
  %4748 = vmatpush1.msra.mxu0 0.0
  %4749 = vmatprep.mubr.f32.mxu0 0.0
  %4750 = vmatmul.mubr.f32.gmra.mrb[0].mxu0 %v4294
  %v4751 = vpop.f32.mrb[0].mxu0
  %v4752 = vadd.f32 0.0, %v4751
  %v4753 = vpop.f32.mrb[0].mxu0
  %v4754 = vadd.f32 0.0, %v4753
  %4755 = vdwg.mxu0
  %4756 = vmatprep.subr.mxu0 %v4256
  %4757 = vmatpush1.msra.mxu0 %v4255
  %4758 = vmatprep.subr.mxu0 %v4322
  %4759 = vmatpush1.msra.mxu0 %v4320
  %4760 = vmatprep.subr.mxu0 0.0
  %4761 = vmatpush1.msra.mxu0 0.0
  %4762 = vmatprep.subr.mxu0 0.0
  %4763 = vmatpush1.msra.mxu0 0.0
  %4764 = vmatprep.subr.mxu0 0.0
  %4765 = vmatpush1.msra.mxu0 0.0
  %4766 = vmatprep.subr.mxu0 0.0
  %4767 = vmatpush1.msra.mxu0 0.0
  %4768 = vmatprep.subr.mxu0 0.0
  %4769 = vmatpush1.msra.mxu0 0.0
  %4770 = vmatprep.subr.mxu0 0.0
  %4771 = vmatpush1.msra.mxu0 0.0
  %4772 = vmatprep.subr.mxu0 0.0
  %4773 = vmatpush1.msra.mxu0 0.0
  %4774 = vmatprep.subr.mxu0 0.0
  %4775 = vmatpush1.msra.mxu0 0.0
  %4776 = vmatprep.subr.mxu0 0.0
  %4777 = vmatpush1.msra.mxu0 0.0
  %4778 = vmatprep.subr.mxu0 0.0
  %4779 = vmatpush1.msra.mxu0 0.0
  %4780 = vmatprep.subr.mxu0 0.0
  %4781 = vmatpush1.msra.mxu0 0.0
  %4782 = vmatprep.subr.mxu0 0.0
  %4783 = vmatpush1.msra.mxu0 0.0
  %4784 = vmatprep.subr.mxu0 0.0
  %4785 = vmatpush1.msra.mxu0 0.0
  %4786 = vmatprep.subr.mxu0 0.0
  %4787 = vmatpush1.msra.mxu0 0.0
  %4788 = vmatprep.subr.mxu0 0.0
  %4789 = vmatpush1.msra.mxu0 0.0
  %4790 = vmatprep.subr.mxu0 0.0
  %4791 = vmatpush1.msra.mxu0 0.0
  %4792 = vmatprep.subr.mxu0 0.0
  %4793 = vmatpush1.msra.mxu0 0.0
  %4794 = vmatprep.subr.mxu0 0.0
  %4795 = vmatpush1.msra.mxu0 0.0
  %4796 = vmatprep.subr.mxu0 0.0
  %4797 = vmatpush1.msra.mxu0 0.0
  %4798 = vmatprep.subr.mxu0 0.0
  %4799 = vmatpush1.msra.mxu0 0.0
  %4800 = vmatprep.subr.mxu0 0.0
  %4801 = vmatpush1.msra.mxu0 0.0
  %4802 = vmatprep.subr.mxu0 0.0
  %4803 = vmatpush1.msra.mxu0 0.0
  %4804 = vmatprep.subr.mxu0 0.0
  %4805 = vmatpush1.msra.mxu0 0.0
  %4806 = vmatprep.subr.mxu0 0.0
  %4807 = vmatpush1.msra.mxu0 0.0
  %4808 = vmatprep.subr.mxu0 0.0
  %4809 = vmatpush1.msra.mxu0 0.0
  %4810 = vmatprep.subr.mxu0 0.0
  %4811 = vmatpush1.msra.mxu0 0.0
  %4812 = vmatprep.subr.mxu0 0.0
  %4813 = vmatpush1.msra.mxu0 0.0
  %4814 = vmatprep.subr.mxu0 0.0
  %4815 = vmatpush1.msra.mxu0 0.0
  %4816 = vmatprep.subr.mxu0 0.0
  %4817 = vmatpush1.msra.mxu0 0.0
  %4818 = vmatprep.subr.mxu0 0.0
  %4819 = vmatpush1.msra.mxu0 0.0
  %4820 = vmatprep.mubr.f32.mxu0 0.0
  %4821 = vmatmul.mubr.f32.gmra.mrb[0].mxu0 %v4294
  %v4822 = vpop.f32.mrb[0].mxu0
  %v4823 = vadd.f32 0.0, %v4822
  %v4824 = vpop.f32.mrb[0].mxu0
  %v4825 = vadd.f32 0.0, %v4824
  %4826 = vdwg.mxu0
  %4827 = vmatprep.subr.mxu0 %v4258
  %4828 = vmatpush1.msra.mxu0 %v4257
  %4829 = vmatprep.subr.mxu0 %v4326
  %4830 = vmatpush1.msra.mxu0 %v4324
  %4831 = vmatprep.subr.mxu0 0.0
  %4832 = vmatpush1.msra.mxu0 0.0
  %4833 = vmatprep.subr.mxu0 0.0
  %4834 = vmatpush1.msra.mxu0 0.0
  %4835 = vmatprep.subr.mxu0 0.0
  %4836 = vmatpush1.msra.mxu0 0.0
  %4837 = vmatprep.subr.mxu0 0.0
  %4838 = vmatpush1.msra.mxu0 0.0
  %4839 = vmatprep.subr.mxu0 0.0
  %4840 = vmatpush1.msra.mxu0 0.0
  %4841 = vmatprep.subr.mxu0 0.0
  %4842 = vmatpush1.msra.mxu0 0.0
  %4843 = vmatprep.subr.mxu0 0.0
  %4844 = vmatpush1.msra.mxu0 0.0
  %4845 = vmatprep.subr.mxu0 0.0
  %4846 = vmatpush1.msra.mxu0 0.0
  %4847 = vmatprep.subr.mxu0 0.0
  %4848 = vmatpush1.msra.mxu0 0.0
  %4849 = vmatprep.subr.mxu0 0.0
  %4850 = vmatpush1.msra.mxu0 0.0
  %4851 = vmatprep.subr.mxu0 0.0
  %4852 = vmatpush1.msra.mxu0 0.0
  %4853 = vmatprep.subr.mxu0 0.0
  %4854 = vmatpush1.msra.mxu0 0.0
  %4855 = vmatprep.subr.mxu0 0.0
  %4856 = vmatpush1.msra.mxu0 0.0
  %4857 = vmatprep.subr.mxu0 0.0
  %4858 = vmatpush1.msra.mxu0 0.0
  %4859 = vmatprep.subr.mxu0 0.0
  %4860 = vmatpush1.msra.mxu0 0.0
  %4861 = vmatprep.subr.mxu0 0.0
  %4862 = vmatpush1.msra.mxu0 0.0
  %4863 = vmatprep.subr.mxu0 0.0
  %4864 = vmatpush1.msra.mxu0 0.0
  %4865 = vmatprep.subr.mxu0 0.0
  %4866 = vmatpush1.msra.mxu0 0.0
  %4867 = vmatprep.subr.mxu0 0.0
  %4868 = vmatpush1.msra.mxu0 0.0
  %4869 = vmatprep.subr.mxu0 0.0
  %4870 = vmatpush1.msra.mxu0 0.0
  %4871 = vmatprep.subr.mxu0 0.0
  %4872 = vmatpush1.msra.mxu0 0.0
  %4873 = vmatprep.subr.mxu0 0.0
  %4874 = vmatpush1.msra.mxu0 0.0
  %4875 = vmatprep.subr.mxu0 0.0
  %4876 = vmatpush1.msra.mxu0 0.0
  %4877 = vmatprep.subr.mxu0 0.0
  %4878 = vmatpush1.msra.mxu0 0.0
  %4879 = vmatprep.subr.mxu0 0.0
  %4880 = vmatpush1.msra.mxu0 0.0
  %4881 = vmatprep.subr.mxu0 0.0
  %4882 = vmatpush1.msra.mxu0 0.0
  %4883 = vmatprep.subr.mxu0 0.0
  %4884 = vmatpush1.msra.mxu0 0.0
  %4885 = vmatprep.subr.mxu0 0.0
  %4886 = vmatpush1.msra.mxu0 0.0
  %4887 = vmatprep.subr.mxu0 0.0
  %4888 = vmatpush1.msra.mxu0 0.0
  %4889 = vmatprep.subr.mxu0 0.0
  %4890 = vmatpush1.msra.mxu0 0.0
  %4891 = vmatprep.mubr.f32.mxu0 0.0
  %4892 = vmatmul.mubr.f32.gmra.mrb[0].mxu0 %v4294
  %v4893 = vpop.f32.mrb[0].mxu0
  %v4894 = vadd.f32 0.0, %v4893
  %v4895 = vpop.f32.mrb[0].mxu0
  %v4896 = vadd.f32 0.0, %v4895
  %4897 = vdwg.mxu0
  %4898 = vmatprep.subr.mxu0 0.0
  %4899 = vmatpush1.msra.mxu0 %v4259
  %4900 = vmatprep.subr.mxu0 0.0
  %4901 = vmatpush1.msra.mxu0 %v4328
  %4902 = vmatprep.subr.mxu0 0.0
  %4903 = vmatpush1.msra.mxu0 0.0
  %4904 = vmatprep.subr.mxu0 0.0
  %4905 = vmatpush1.msra.mxu0 0.0
  %4906 = vmatprep.subr.mxu0 0.0
  %4907 = vmatpush1.msra.mxu0 0.0
  %4908 = vmatprep.subr.mxu0 0.0
  %4909 = vmatpush1.msra.mxu0 0.0
  %4910 = vmatprep.subr.mxu0 0.0
  %4911 = vmatpush1.msra.mxu0 0.0
  %4912 = vmatprep.subr.mxu0 0.0
  %4913 = vmatpush1.msra.mxu0 0.0
  %4914 = vmatprep.subr.mxu0 0.0
  %4915 = vmatpush1.msra.mxu0 0.0
  %4916 = vmatprep.subr.mxu0 0.0
  %4917 = vmatpush1.msra.mxu0 0.0
  %4918 = vmatprep.subr.mxu0 0.0
  %4919 = vmatpush1.msra.mxu0 0.0
  %4920 = vmatprep.subr.mxu0 0.0
  %4921 = vmatpush1.msra.mxu0 0.0
  %4922 = vmatprep.subr.mxu0 0.0
  %4923 = vmatpush1.msra.mxu0 0.0
  %4924 = vmatprep.subr.mxu0 0.0
  %4925 = vmatpush1.msra.mxu0 0.0
  %4926 = vmatprep.subr.mxu0 0.0
  %4927 = vmatpush1.msra.mxu0 0.0
  %4928 = vmatprep.subr.mxu0 0.0
  %4929 = vmatpush1.msra.mxu0 0.0
  %4930 = vmatprep.subr.mxu0 0.0
  %4931 = vmatpush1.msra.mxu0 0.0
  %4932 = vmatprep.subr.mxu0 0.0
  %4933 = vmatpush1.msra.mxu0 0.0
  %4934 = vmatprep.subr.mxu0 0.0
  %4935 = vmatpush1.msra.mxu0 0.0
  %4936 = vmatprep.subr.mxu0 0.0
  %4937 = vmatpush1.msra.mxu0 0.0
  %4938 = vmatprep.subr.mxu0 0.0
  %4939 = vmatpush1.msra.mxu0 0.0
  %4940 = vmatprep.subr.mxu0 0.0
  %4941 = vmatpush1.msra.mxu0 0.0
  %4942 = vmatprep.subr.mxu0 0.0
  %4943 = vmatpush1.msra.mxu0 0.0
  %4944 = vmatprep.subr.mxu0 0.0
  %4945 = vmatpush1.msra.mxu0 0.0
  %4946 = vmatprep.subr.mxu0 0.0
  %4947 = vmatpush1.msra.mxu0 0.0
  %4948 = vmatprep.subr.mxu0 0.0
  %4949 = vmatpush1.msra.mxu0 0.0
  %4950 = vmatprep.subr.mxu0 0.0
  %4951 = vmatpush1.msra.mxu0 0.0
  %4952 = vmatprep.subr.mxu0 0.0
  %4953 = vmatpush1.msra.mxu0 0.0
  %4954 = vmatprep.subr.mxu0 0.0
  %4955 = vmatpush1.msra.mxu0 0.0
  %4956 = vmatprep.subr.mxu0 0.0
  %4957 = vmatpush1.msra.mxu0 0.0
  %4958 = vmatprep.subr.mxu0 0.0
  %4959 = vmatpush1.msra.mxu0 0.0
  %4960 = vmatprep.subr.mxu0 0.0
  %4961 = vmatpush1.msra.mxu0 0.0
  %4962 = vmatprep.mubr.f32.mxu0 0.0
  %4963 = vmatmul.mubr.f32.gmra.mrb[0].mxu0 %v4294
  %v4964 = vpop.f32.mrb[0].mxu0
  %v4965 = vadd.f32 0.0, %v4964
  %v4966 = vpop.f32.mrb[0].mxu0
  %4967 = vdwg.mxu0
  %v4968 = vadd.f32 %v4138, %v4397
  %v4969 = vadd.f32 %v4139, %v4399
  %v4970 = vadd.f32 %v4140, %v4468
  %v4971 = vadd.f32 %v4141, %v4470
  %v4972 = vadd.f32 %v4142, %v4539
  %v4973 = vadd.f32 %v4143, %v4541
  %v4974 = vadd.f32 %v4144, %v4610
  %v4975 = vadd.f32 %v4145, %v4612
  %v4976 = vadd.f32 %v4146, %v4681
  %v4977 = vadd.f32 %v4147, %v4683
  %v4978 = vadd.f32 %v4148, %v4752
  %v4979 = vadd.f32 %v4149, %v4754
  %v4980 = vadd.f32 %v4150, %v4823
  %v4981 = vadd.f32 %v4151, %v4825
  %v4982 = vadd.f32 %v4152, %v4894
  %v4983 = vadd.f32 %v4153, %v4896
  %v4984 = vadd.f32 %v4154, %v4965
  %v4985 = vld [vmem:[%s1] sm:$0x3f]
  %4987 = vrot.lane.b32.xlu0 %v4985, 68
  %v4988 = vpop.permute.xlu0 %4987
  %v4989 = vsel %vm1966, %v4988, 0
  %v4991 = vsel %vm1969, %v3339, 0
  %v4993 = vsel %vm1969, %v4163, 0
  %4995 = vmatprep.subr.mxu0 %v1759
  %4996 = vmatpush1.msra.mxu0 %v1758
  %4997 = vmatprep.subr.mxu0 %v2648
  %4998 = vmatpush1.msra.mxu0 %v2646
  %4999 = vmatprep.subr.mxu0 0.0
  %5000 = vmatpush1.msra.mxu0 0.0
  %5001 = vmatprep.subr.mxu0 0.0
  %5002 = vmatpush1.msra.mxu0 0.0
  %5003 = vmatprep.subr.mxu0 0.0
  %5004 = vmatpush1.msra.mxu0 0.0
  %5005 = vmatprep.subr.mxu0 0.0
  %5006 = vmatpush1.msra.mxu0 0.0
  %5007 = vmatprep.subr.mxu0 0.0
  %5008 = vmatpush1.msra.mxu0 0.0
  %5009 = vmatprep.subr.mxu0 0.0
  %5010 = vmatpush1.msra.mxu0 0.0
  %5011 = vmatprep.subr.mxu0 0.0
  %5012 = vmatpush1.msra.mxu0 0.0
  %5013 = vmatprep.subr.mxu0 0.0
  %5014 = vmatpush1.msra.mxu0 0.0
  %5015 = vmatprep.subr.mxu0 0.0
  %5016 = vmatpush1.msra.mxu0 0.0
  %5017 = vmatprep.subr.mxu0 0.0
  %5018 = vmatpush1.msra.mxu0 0.0
  %5019 = vmatprep.subr.mxu0 0.0
  %5020 = vmatpush1.msra.mxu0 0.0
  %5021 = vmatprep.subr.mxu0 0.0
  %5022 = vmatpush1.msra.mxu0 0.0
  %5023 = vmatprep.subr.mxu0 0.0
  %5024 = vmatpush1.msra.mxu0 0.0
  %5025 = vmatprep.subr.mxu0 0.0
  %5026 = vmatpush1.msra.mxu0 0.0
  %5027 = vmatprep.subr.mxu0 0.0
  %5028 = vmatpush1.msra.mxu0 0.0
  %5029 = vmatprep.subr.mxu0 0.0
  %5030 = vmatpush1.msra.mxu0 0.0
  %5031 = vmatprep.subr.mxu0 0.0
  %5032 = vmatpush1.msra.mxu0 0.0
  %5033 = vmatprep.subr.mxu0 0.0
  %5034 = vmatpush1.msra.mxu0 0.0
  %5035 = vmatprep.subr.mxu0 0.0
  %5036 = vmatpush1.msra.mxu0 0.0
  %5037 = vmatprep.subr.mxu0 0.0
  %5038 = vmatpush1.msra.mxu0 0.0
  %5039 = vmatprep.subr.mxu0 0.0
  %5040 = vmatpush1.msra.mxu0 0.0
  %5041 = vmatprep.subr.mxu0 0.0
  %5042 = vmatpush1.msra.mxu0 0.0
  %5043 = vmatprep.subr.mxu0 0.0
  %5044 = vmatpush1.msra.mxu0 0.0
  %5045 = vmatprep.subr.mxu0 0.0
  %5046 = vmatpush1.msra.mxu0 0.0
  %5047 = vmatprep.subr.mxu0 0.0
  %5048 = vmatpush1.msra.mxu0 0.0
  %5049 = vmatprep.subr.mxu0 0.0
  %5050 = vmatpush1.msra.mxu0 0.0
  %5051 = vmatprep.subr.mxu0 0.0
  %5052 = vmatpush1.msra.mxu0 0.0
  %5053 = vmatprep.subr.mxu0 0.0
  %5054 = vmatpush1.msra.mxu0 0.0
  %5055 = vmatprep.subr.mxu0 0.0
  %5056 = vmatpush1.msra.mxu0 0.0
  %5057 = vmatprep.subr.mxu0 0.0
  %5058 = vmatpush1.msra.mxu0 0.0
  %5059 = vmatprep.mubr.f32.mxu0 0.0
  %5060 = vmatmul.mubr.f32.gmra.mrb[0].mxu0 %v4989
  %v5061 = vpop.f32.mrb[0].mxu0
  %v5062 = vadd.f32 0.0, %v5061
  %v5063 = vpop.f32.mrb[0].mxu0
  %v5064 = vadd.f32 0.0, %v5063
  %5065 = vdwg.mxu0
  %5066 = vmatprep.subr.mxu0 %v1761
  %5067 = vmatpush1.msra.mxu0 %v1760
  %5068 = vmatprep.subr.mxu0 %v2652
  %5069 = vmatpush1.msra.mxu0 %v2650
  %5070 = vmatprep.subr.mxu0 0.0
  %5071 = vmatpush1.msra.mxu0 0.0
  %5072 = vmatprep.subr.mxu0 0.0
  %5073 = vmatpush1.msra.mxu0 0.0
  %5074 = vmatprep.subr.mxu0 0.0
  %5075 = vmatpush1.msra.mxu0 0.0
  %5076 = vmatprep.subr.mxu0 0.0
  %5077 = vmatpush1.msra.mxu0 0.0
  %5078 = vmatprep.subr.mxu0 0.0
  %5079 = vmatpush1.msra.mxu0 0.0
  %5080 = vmatprep.subr.mxu0 0.0
  %5081 = vmatpush1.msra.mxu0 0.0
  %5082 = vmatprep.subr.mxu0 0.0
  %5083 = vmatpush1.msra.mxu0 0.0
  %5084 = vmatprep.subr.mxu0 0.0
  %5085 = vmatpush1.msra.mxu0 0.0
  %5086 = vmatprep.subr.mxu0 0.0
  %5087 = vmatpush1.msra.mxu0 0.0
  %5088 = vmatprep.subr.mxu0 0.0
  %5089 = vmatpush1.msra.mxu0 0.0
  %5090 = vmatprep.subr.mxu0 0.0
  %5091 = vmatpush1.msra.mxu0 0.0
  %5092 = vmatprep.subr.mxu0 0.0
  %5093 = vmatpush1.msra.mxu0 0.0
  %5094 = vmatprep.subr.mxu0 0.0
  %5095 = vmatpush1.msra.mxu0 0.0
  %5096 = vmatprep.subr.mxu0 0.0
  %5097 = vmatpush1.msra.mxu0 0.0
  %5098 = vmatprep.subr.mxu0 0.0
  %5099 = vmatpush1.msra.mxu0 0.0
  %5100 = vmatprep.subr.mxu0 0.0
  %5101 = vmatpush1.msra.mxu0 0.0
  %5102 = vmatprep.subr.mxu0 0.0
  %5103 = vmatpush1.msra.mxu0 0.0
  %5104 = vmatprep.subr.mxu0 0.0
  %5105 = vmatpush1.msra.mxu0 0.0
  %5106 = vmatprep.subr.mxu0 0.0
  %5107 = vmatpush1.msra.mxu0 0.0
  %5108 = vmatprep.subr.mxu0 0.0
  %5109 = vmatpush1.msra.mxu0 0.0
  %5110 = vmatprep.subr.mxu0 0.0
  %5111 = vmatpush1.msra.mxu0 0.0
  %5112 = vmatprep.subr.mxu0 0.0
  %5113 = vmatpush1.msra.mxu0 0.0
  %5114 = vmatprep.subr.mxu0 0.0
  %5115 = vmatpush1.msra.mxu0 0.0
  %5116 = vmatprep.subr.mxu0 0.0
  %5117 = vmatpush1.msra.mxu0 0.0
  %5118 = vmatprep.subr.mxu0 0.0
  %5119 = vmatpush1.msra.mxu0 0.0
  %5120 = vmatprep.subr.mxu0 0.0
  %5121 = vmatpush1.msra.mxu0 0.0
  %5122 = vmatprep.subr.mxu0 0.0
  %5123 = vmatpush1.msra.mxu0 0.0
  %5124 = vmatprep.subr.mxu0 0.0
  %5125 = vmatpush1.msra.mxu0 0.0
  %5126 = vmatprep.subr.mxu0 0.0
  %5127 = vmatpush1.msra.mxu0 0.0
  %5128 = vmatprep.subr.mxu0 0.0
  %5129 = vmatpush1.msra.mxu0 0.0
  %5130 = vmatprep.mubr.f32.mxu0 0.0
  %5131 = vmatmul.mubr.f32.gmra.mrb[0].mxu0 %v4989
  %v5132 = vpop.f32.mrb[0].mxu0
  %v5133 = vadd.f32 0.0, %v5132
  %v5134 = vpop.f32.mrb[0].mxu0
  %v5135 = vadd.f32 0.0, %v5134
  %5136 = vdwg.mxu0
  %5137 = vmatprep.subr.mxu0 %v1763
  %5138 = vmatpush1.msra.mxu0 %v1762
  %5139 = vmatprep.subr.mxu0 %v2656
  %5140 = vmatpush1.msra.mxu0 %v2654
  %5141 = vmatprep.subr.mxu0 0.0
  %5142 = vmatpush1.msra.mxu0 0.0
  %5143 = vmatprep.subr.mxu0 0.0
  %5144 = vmatpush1.msra.mxu0 0.0
  %5145 = vmatprep.subr.mxu0 0.0
  %5146 = vmatpush1.msra.mxu0 0.0
  %5147 = vmatprep.subr.mxu0 0.0
  %5148 = vmatpush1.msra.mxu0 0.0
  %5149 = vmatprep.subr.mxu0 0.0
  %5150 = vmatpush1.msra.mxu0 0.0
  %5151 = vmatprep.subr.mxu0 0.0
  %5152 = vmatpush1.msra.mxu0 0.0
  %5153 = vmatprep.subr.mxu0 0.0
  %5154 = vmatpush1.msra.mxu0 0.0
  %5155 = vmatprep.subr.mxu0 0.0
  %5156 = vmatpush1.msra.mxu0 0.0
  %5157 = vmatprep.subr.mxu0 0.0
  %5158 = vmatpush1.msra.mxu0 0.0
  %5159 = vmatprep.subr.mxu0 0.0
  %5160 = vmatpush1.msra.mxu0 0.0
  %5161 = vmatprep.subr.mxu0 0.0
  %5162 = vmatpush1.msra.mxu0 0.0
  %5163 = vmatprep.subr.mxu0 0.0
  %5164 = vmatpush1.msra.mxu0 0.0
  %5165 = vmatprep.subr.mxu0 0.0
  %5166 = vmatpush1.msra.mxu0 0.0
  %5167 = vmatprep.subr.mxu0 0.0
  %5168 = vmatpush1.msra.mxu0 0.0
  %5169 = vmatprep.subr.mxu0 0.0
  %5170 = vmatpush1.msra.mxu0 0.0
  %5171 = vmatprep.subr.mxu0 0.0
  %5172 = vmatpush1.msra.mxu0 0.0
  %5173 = vmatprep.subr.mxu0 0.0
  %5174 = vmatpush1.msra.mxu0 0.0
  %5175 = vmatprep.subr.mxu0 0.0
  %5176 = vmatpush1.msra.mxu0 0.0
  %5177 = vmatprep.subr.mxu0 0.0
  %5178 = vmatpush1.msra.mxu0 0.0
  %5179 = vmatprep.subr.mxu0 0.0
  %5180 = vmatpush1.msra.mxu0 0.0
  %5181 = vmatprep.subr.mxu0 0.0
  %5182 = vmatpush1.msra.mxu0 0.0
  %5183 = vmatprep.subr.mxu0 0.0
  %5184 = vmatpush1.msra.mxu0 0.0
  %5185 = vmatprep.subr.mxu0 0.0
  %5186 = vmatpush1.msra.mxu0 0.0
  %5187 = vmatprep.subr.mxu0 0.0
  %5188 = vmatpush1.msra.mxu0 0.0
  %5189 = vmatprep.subr.mxu0 0.0
  %5190 = vmatpush1.msra.mxu0 0.0
  %5191 = vmatprep.subr.mxu0 0.0
  %5192 = vmatpush1.msra.mxu0 0.0
  %5193 = vmatprep.subr.mxu0 0.0
  %5194 = vmatpush1.msra.mxu0 0.0
  %5195 = vmatprep.subr.mxu0 0.0
  %5196 = vmatpush1.msra.mxu0 0.0
  %5197 = vmatprep.subr.mxu0 0.0
  %5198 = vmatpush1.msra.mxu0 0.0
  %5199 = vmatprep.subr.mxu0 0.0
  %5200 = vmatpush1.msra.mxu0 0.0
  %5201 = vmatprep.mubr.f32.mxu0 0.0
  %5202 = vmatmul.mubr.f32.gmra.mrb[0].mxu0 %v4989
  %v5203 = vpop.f32.mrb[0].mxu0
  %v5204 = vadd.f32 0.0, %v5203
  %v5205 = vpop.f32.mrb[0].mxu0
  %v5206 = vadd.f32 0.0, %v5205
  %5207 = vdwg.mxu0
  %5208 = vmatprep.subr.mxu0 %v1765
  %5209 = vmatpush1.msra.mxu0 %v1764
  %5210 = vmatprep.subr.mxu0 %v2660
  %5211 = vmatpush1.msra.mxu0 %v2658
  %5212 = vmatprep.subr.mxu0 0.0
  %5213 = vmatpush1.msra.mxu0 0.0
  %5214 = vmatprep.subr.mxu0 0.0
  %5215 = vmatpush1.msra.mxu0 0.0
  %5216 = vmatprep.subr.mxu0 0.0
  %5217 = vmatpush1.msra.mxu0 0.0
  %5218 = vmatprep.subr.mxu0 0.0
  %5219 = vmatpush1.msra.mxu0 0.0
  %5220 = vmatprep.subr.mxu0 0.0
  %5221 = vmatpush1.msra.mxu0 0.0
  %5222 = vmatprep.subr.mxu0 0.0
  %5223 = vmatpush1.msra.mxu0 0.0
  %5224 = vmatprep.subr.mxu0 0.0
  %5225 = vmatpush1.msra.mxu0 0.0
  %5226 = vmatprep.subr.mxu0 0.0
  %5227 = vmatpush1.msra.mxu0 0.0
  %5228 = vmatprep.subr.mxu0 0.0
  %5229 = vmatpush1.msra.mxu0 0.0
  %5230 = vmatprep.subr.mxu0 0.0
  %5231 = vmatpush1.msra.mxu0 0.0
  %5232 = vmatprep.subr.mxu0 0.0
  %5233 = vmatpush1.msra.mxu0 0.0
  %5234 = vmatprep.subr.mxu0 0.0
  %5235 = vmatpush1.msra.mxu0 0.0
  %5236 = vmatprep.subr.mxu0 0.0
  %5237 = vmatpush1.msra.mxu0 0.0
  %5238 = vmatprep.subr.mxu0 0.0
  %5239 = vmatpush1.msra.mxu0 0.0
  %5240 = vmatprep.subr.mxu0 0.0
  %5241 = vmatpush1.msra.mxu0 0.0
  %5242 = vmatprep.subr.mxu0 0.0
  %5243 = vmatpush1.msra.mxu0 0.0
  %5244 = vmatprep.subr.mxu0 0.0
  %5245 = vmatpush1.msra.mxu0 0.0
  %5246 = vmatprep.subr.mxu0 0.0
  %5247 = vmatpush1.msra.mxu0 0.0
  %5248 = vmatprep.subr.mxu0 0.0
  %5249 = vmatpush1.msra.mxu0 0.0
  %5250 = vmatprep.subr.mxu0 0.0
  %5251 = vmatpush1.msra.mxu0 0.0
  %5252 = vmatprep.subr.mxu0 0.0
  %5253 = vmatpush1.msra.mxu0 0.0
  %5254 = vmatprep.subr.mxu0 0.0
  %5255 = vmatpush1.msra.mxu0 0.0
  %5256 = vmatprep.subr.mxu0 0.0
  %5257 = vmatpush1.msra.mxu0 0.0
  %5258 = vmatprep.subr.mxu0 0.0
  %5259 = vmatpush1.msra.mxu0 0.0
  %5260 = vmatprep.subr.mxu0 0.0
  %5261 = vmatpush1.msra.mxu0 0.0
  %5262 = vmatprep.subr.mxu0 0.0
  %5263 = vmatpush1.msra.mxu0 0.0
  %5264 = vmatprep.subr.mxu0 0.0
  %5265 = vmatpush1.msra.mxu0 0.0
  %5266 = vmatprep.subr.mxu0 0.0
  %5267 = vmatpush1.msra.mxu0 0.0
  %5268 = vmatprep.subr.mxu0 0.0
  %5269 = vmatpush1.msra.mxu0 0.0
  %5270 = vmatprep.subr.mxu0 0.0
  %5271 = vmatpush1.msra.mxu0 0.0
  %5272 = vmatprep.mubr.f32.mxu0 0.0
  %5273 = vmatmul.mubr.f32.gmra.mrb[0].mxu0 %v4989
  %v5274 = vpop.f32.mrb[0].mxu0
  %v5275 = vadd.f32 0.0, %v5274
  %v5276 = vpop.f32.mrb[0].mxu0
  %v5277 = vadd.f32 0.0, %v5276
  %5278 = vdwg.mxu0
  %5279 = vmatprep.subr.mxu0 %v1767
  %5280 = vmatpush1.msra.mxu0 %v1766
  %5281 = vmatprep.subr.mxu0 %v2664
  %5282 = vmatpush1.msra.mxu0 %v2662
  %5283 = vmatprep.subr.mxu0 0.0
  %5284 = vmatpush1.msra.mxu0 0.0
  %5285 = vmatprep.subr.mxu0 0.0
  %5286 = vmatpush1.msra.mxu0 0.0
  %5287 = vmatprep.subr.mxu0 0.0
  %5288 = vmatpush1.msra.mxu0 0.0
  %5289 = vmatprep.subr.mxu0 0.0
  %5290 = vmatpush1.msra.mxu0 0.0
  %5291 = vmatprep.subr.mxu0 0.0
  %5292 = vmatpush1.msra.mxu0 0.0
  %5293 = vmatprep.subr.mxu0 0.0
  %5294 = vmatpush1.msra.mxu0 0.0
  %5295 = vmatprep.subr.mxu0 0.0
  %5296 = vmatpush1.msra.mxu0 0.0
  %5297 = vmatprep.subr.mxu0 0.0
  %5298 = vmatpush1.msra.mxu0 0.0
  %5299 = vmatprep.subr.mxu0 0.0
  %5300 = vmatpush1.msra.mxu0 0.0
  %5301 = vmatprep.subr.mxu0 0.0
  %5302 = vmatpush1.msra.mxu0 0.0
  %5303 = vmatprep.subr.mxu0 0.0
  %5304 = vmatpush1.msra.mxu0 0.0
  %5305 = vmatprep.subr.mxu0 0.0
  %5306 = vmatpush1.msra.mxu0 0.0
  %5307 = vmatprep.subr.mxu0 0.0
  %5308 = vmatpush1.msra.mxu0 0.0
  %5309 = vmatprep.subr.mxu0 0.0
  %5310 = vmatpush1.msra.mxu0 0.0
  %5311 = vmatprep.subr.mxu0 0.0
  %5312 = vmatpush1.msra.mxu0 0.0
  %5313 = vmatprep.subr.mxu0 0.0
  %5314 = vmatpush1.msra.mxu0 0.0
  %5315 = vmatprep.subr.mxu0 0.0
  %5316 = vmatpush1.msra.mxu0 0.0
  %5317 = vmatprep.subr.mxu0 0.0
  %5318 = vmatpush1.msra.mxu0 0.0
  %5319 = vmatprep.subr.mxu0 0.0
  %5320 = vmatpush1.msra.mxu0 0.0
  %5321 = vmatprep.subr.mxu0 0.0
  %5322 = vmatpush1.msra.mxu0 0.0
  %5323 = vmatprep.subr.mxu0 0.0
  %5324 = vmatpush1.msra.mxu0 0.0
  %5325 = vmatprep.subr.mxu0 0.0
  %5326 = vmatpush1.msra.mxu0 0.0
  %5327 = vmatprep.subr.mxu0 0.0
  %5328 = vmatpush1.msra.mxu0 0.0
  %5329 = vmatprep.subr.mxu0 0.0
  %5330 = vmatpush1.msra.mxu0 0.0
  %5331 = vmatprep.subr.mxu0 0.0
  %5332 = vmatpush1.msra.mxu0 0.0
  %5333 = vmatprep.subr.mxu0 0.0
  %5334 = vmatpush1.msra.mxu0 0.0
  %5335 = vmatprep.subr.mxu0 0.0
  %5336 = vmatpush1.msra.mxu0 0.0
  %5337 = vmatprep.subr.mxu0 0.0
  %5338 = vmatpush1.msra.mxu0 0.0
  %5339 = vmatprep.subr.mxu0 0.0
  %5340 = vmatpush1.msra.mxu0 0.0
  %5341 = vmatprep.subr.mxu0 0.0
  %5342 = vmatpush1.msra.mxu0 0.0
  %5343 = vmatprep.mubr.f32.mxu0 0.0
  %5344 = vmatmul.mubr.f32.gmra.mrb[0].mxu0 %v4989
  %v5345 = vpop.f32.mrb[0].mxu0
  %v5346 = vadd.f32 0.0, %v5345
  %v5347 = vpop.f32.mrb[0].mxu0
  %v5348 = vadd.f32 0.0, %v5347
  %5349 = vdwg.mxu0
  %5350 = vmatprep.subr.mxu0 %v1769
  %5351 = vmatpush1.msra.mxu0 %v1768
  %5352 = vmatprep.subr.mxu0 %v2668
  %5353 = vmatpush1.msra.mxu0 %v2666
  %5354 = vmatprep.subr.mxu0 0.0
  %5355 = vmatpush1.msra.mxu0 0.0
  %5356 = vmatprep.subr.mxu0 0.0
  %5357 = vmatpush1.msra.mxu0 0.0
  %5358 = vmatprep.subr.mxu0 0.0
  %5359 = vmatpush1.msra.mxu0 0.0
  %5360 = vmatprep.subr.mxu0 0.0
  %5361 = vmatpush1.msra.mxu0 0.0
  %5362 = vmatprep.subr.mxu0 0.0
  %5363 = vmatpush1.msra.mxu0 0.0
  %5364 = vmatprep.subr.mxu0 0.0
  %5365 = vmatpush1.msra.mxu0 0.0
  %5366 = vmatprep.subr.mxu0 0.0
  %5367 = vmatpush1.msra.mxu0 0.0
  %5368 = vmatprep.subr.mxu0 0.0
  %5369 = vmatpush1.msra.mxu0 0.0
  %5370 = vmatprep.subr.mxu0 0.0
  %5371 = vmatpush1.msra.mxu0 0.0
  %5372 = vmatprep.subr.mxu0 0.0
  %5373 = vmatpush1.msra.mxu0 0.0
  %5374 = vmatprep.subr.mxu0 0.0
  %5375 = vmatpush1.msra.mxu0 0.0
  %5376 = vmatprep.subr.mxu0 0.0
  %5377 = vmatpush1.msra.mxu0 0.0
  %5378 = vmatprep.subr.mxu0 0.0
  %5379 = vmatpush1.msra.mxu0 0.0
  %5380 = vmatprep.subr.mxu0 0.0
  %5381 = vmatpush1.msra.mxu0 0.0
  %5382 = vmatprep.subr.mxu0 0.0
  %5383 = vmatpush1.msra.mxu0 0.0
  %5384 = vmatprep.subr.mxu0 0.0
  %5385 = vmatpush1.msra.mxu0 0.0
  %5386 = vmatprep.subr.mxu0 0.0
  %5387 = vmatpush1.msra.mxu0 0.0
  %5388 = vmatprep.subr.mxu0 0.0
  %5389 = vmatpush1.msra.mxu0 0.0
  %5390 = vmatprep.subr.mxu0 0.0
  %5391 = vmatpush1.msra.mxu0 0.0
  %5392 = vmatprep.subr.mxu0 0.0
  %5393 = vmatpush1.msra.mxu0 0.0
  %5394 = vmatprep.subr.mxu0 0.0
  %5395 = vmatpush1.msra.mxu0 0.0
  %5396 = vmatprep.subr.mxu0 0.0
  %5397 = vmatpush1.msra.mxu0 0.0
  %5398 = vmatprep.subr.mxu0 0.0
  %5399 = vmatpush1.msra.mxu0 0.0
  %5400 = vmatprep.subr.mxu0 0.0
  %5401 = vmatpush1.msra.mxu0 0.0
  %5402 = vmatprep.subr.mxu0 0.0
  %5403 = vmatpush1.msra.mxu0 0.0
  %5404 = vmatprep.subr.mxu0 0.0
  %5405 = vmatpush1.msra.mxu0 0.0
  %5406 = vmatprep.subr.mxu0 0.0
  %5407 = vmatpush1.msra.mxu0 0.0
  %5408 = vmatprep.subr.mxu0 0.0
  %5409 = vmatpush1.msra.mxu0 0.0
  %5410 = vmatprep.subr.mxu0 0.0
  %5411 = vmatpush1.msra.mxu0 0.0
  %5412 = vmatprep.subr.mxu0 0.0
  %5413 = vmatpush1.msra.mxu0 0.0
  %5414 = vmatprep.mubr.f32.mxu0 0.0
  %5415 = vmatmul.mubr.f32.gmra.mrb[0].mxu0 %v4989
  %v5416 = vpop.f32.mrb[0].mxu0
  %v5417 = vadd.f32 0.0, %v5416
  %v5418 = vpop.f32.mrb[0].mxu0
  %v5419 = vadd.f32 0.0, %v5418
  %5420 = vdwg.mxu0
  %5421 = vmatprep.subr.mxu0 %v1771
  %5422 = vmatpush1.msra.mxu0 %v1770
  %5423 = vmatprep.subr.mxu0 %v2672
  %5424 = vmatpush1.msra.mxu0 %v2670
  %5425 = vmatprep.subr.mxu0 0.0
  %5426 = vmatpush1.msra.mxu0 0.0
  %5427 = vmatprep.subr.mxu0 0.0
  %5428 = vmatpush1.msra.mxu0 0.0
  %5429 = vmatprep.subr.mxu0 0.0
  %5430 = vmatpush1.msra.mxu0 0.0
  %5431 = vmatprep.subr.mxu0 0.0
  %5432 = vmatpush1.msra.mxu0 0.0
  %5433 = vmatprep.subr.mxu0 0.0
  %5434 = vmatpush1.msra.mxu0 0.0
  %5435 = vmatprep.subr.mxu0 0.0
  %5436 = vmatpush1.msra.mxu0 0.0
  %5437 = vmatprep.subr.mxu0 0.0
  %5438 = vmatpush1.msra.mxu0 0.0
  %5439 = vmatprep.subr.mxu0 0.0
  %5440 = vmatpush1.msra.mxu0 0.0
  %5441 = vmatprep.subr.mxu0 0.0
  %5442 = vmatpush1.msra.mxu0 0.0
  %5443 = vmatprep.subr.mxu0 0.0
  %5444 = vmatpush1.msra.mxu0 0.0
  %5445 = vmatprep.subr.mxu0 0.0
  %5446 = vmatpush1.msra.mxu0 0.0
  %5447 = vmatprep.subr.mxu0 0.0
  %5448 = vmatpush1.msra.mxu0 0.0
  %5449 = vmatprep.subr.mxu0 0.0
  %5450 = vmatpush1.msra.mxu0 0.0
  %5451 = vmatprep.subr.mxu0 0.0
  %5452 = vmatpush1.msra.mxu0 0.0
  %5453 = vmatprep.subr.mxu0 0.0
  %5454 = vmatpush1.msra.mxu0 0.0
  %5455 = vmatprep.subr.mxu0 0.0
  %5456 = vmatpush1.msra.mxu0 0.0
  %5457 = vmatprep.subr.mxu0 0.0
  %5458 = vmatpush1.msra.mxu0 0.0
  %5459 = vmatprep.subr.mxu0 0.0
  %5460 = vmatpush1.msra.mxu0 0.0
  %5461 = vmatprep.subr.mxu0 0.0
  %5462 = vmatpush1.msra.mxu0 0.0
  %5463 = vmatprep.subr.mxu0 0.0
  %5464 = vmatpush1.msra.mxu0 0.0
  %5465 = vmatprep.subr.mxu0 0.0
  %5466 = vmatpush1.msra.mxu0 0.0
  %5467 = vmatprep.subr.mxu0 0.0
  %5468 = vmatpush1.msra.mxu0 0.0
  %5469 = vmatprep.subr.mxu0 0.0
  %5470 = vmatpush1.msra.mxu0 0.0
  %5471 = vmatprep.subr.mxu0 0.0
  %5472 = vmatpush1.msra.mxu0 0.0
  %5473 = vmatprep.subr.mxu0 0.0
  %5474 = vmatpush1.msra.mxu0 0.0
  %5475 = vmatprep.subr.mxu0 0.0
  %5476 = vmatpush1.msra.mxu0 0.0
  %5477 = vmatprep.subr.mxu0 0.0
  %5478 = vmatpush1.msra.mxu0 0.0
  %5479 = vmatprep.subr.mxu0 0.0
  %5480 = vmatpush1.msra.mxu0 0.0
  %5481 = vmatprep.subr.mxu0 0.0
  %5482 = vmatpush1.msra.mxu0 0.0
  %5483 = vmatprep.subr.mxu0 0.0
  %5484 = vmatpush1.msra.mxu0 0.0
  %5485 = vmatprep.mubr.f32.mxu0 0.0
  %5486 = vmatmul.mubr.f32.gmra.mrb[0].mxu0 %v4989
  %v5487 = vpop.f32.mrb[0].mxu0
  %v5488 = vadd.f32 0.0, %v5487
  %v5489 = vpop.f32.mrb[0].mxu0
  %v5490 = vadd.f32 0.0, %v5489
  %5491 = vdwg.mxu0
  %5492 = vmatprep.subr.mxu0 %v3337
  %5493 = vmatpush1.msra.mxu0 %v1772
  %5494 = vmatprep.subr.mxu0 %v4991
  %5495 = vmatpush1.msra.mxu0 %v2674
  %5496 = vmatprep.subr.mxu0 0.0
  %5497 = vmatpush1.msra.mxu0 0.0
  %5498 = vmatprep.subr.mxu0 0.0
  %5499 = vmatpush1.msra.mxu0 0.0
  %5500 = vmatprep.subr.mxu0 0.0
  %5501 = vmatpush1.msra.mxu0 0.0
  %5502 = vmatprep.subr.mxu0 0.0
  %5503 = vmatpush1.msra.mxu0 0.0
  %5504 = vmatprep.subr.mxu0 0.0
  %5505 = vmatpush1.msra.mxu0 0.0
  %5506 = vmatprep.subr.mxu0 0.0
  %5507 = vmatpush1.msra.mxu0 0.0
  %5508 = vmatprep.subr.mxu0 0.0
  %5509 = vmatpush1.msra.mxu0 0.0
  %5510 = vmatprep.subr.mxu0 0.0
  %5511 = vmatpush1.msra.mxu0 0.0
  %5512 = vmatprep.subr.mxu0 0.0
  %5513 = vmatpush1.msra.mxu0 0.0
  %5514 = vmatprep.subr.mxu0 0.0
  %5515 = vmatpush1.msra.mxu0 0.0
  %5516 = vmatprep.subr.mxu0 0.0
  %5517 = vmatpush1.msra.mxu0 0.0
  %5518 = vmatprep.subr.mxu0 0.0
  %5519 = vmatpush1.msra.mxu0 0.0
  %5520 = vmatprep.subr.mxu0 0.0
  %5521 = vmatpush1.msra.mxu0 0.0
  %5522 = vmatprep.subr.mxu0 0.0
  %5523 = vmatpush1.msra.mxu0 0.0
  %5524 = vmatprep.subr.mxu0 0.0
  %5525 = vmatpush1.msra.mxu0 0.0
  %5526 = vmatprep.subr.mxu0 0.0
  %5527 = vmatpush1.msra.mxu0 0.0
  %5528 = vmatprep.subr.mxu0 0.0
  %5529 = vmatpush1.msra.mxu0 0.0
  %5530 = vmatprep.subr.mxu0 0.0
  %5531 = vmatpush1.msra.mxu0 0.0
  %5532 = vmatprep.subr.mxu0 0.0
  %5533 = vmatpush1.msra.mxu0 0.0
  %5534 = vmatprep.subr.mxu0 0.0
  %5535 = vmatpush1.msra.mxu0 0.0
  %5536 = vmatprep.subr.mxu0 0.0
  %5537 = vmatpush1.msra.mxu0 0.0
  %5538 = vmatprep.subr.mxu0 0.0
  %5539 = vmatpush1.msra.mxu0 0.0
  %5540 = vmatprep.subr.mxu0 0.0
  %5541 = vmatpush1.msra.mxu0 0.0
  %5542 = vmatprep.subr.mxu0 0.0
  %5543 = vmatpush1.msra.mxu0 0.0
  %5544 = vmatprep.subr.mxu0 0.0
  %5545 = vmatpush1.msra.mxu0 0.0
  %5546 = vmatprep.subr.mxu0 0.0
  %5547 = vmatpush1.msra.mxu0 0.0
  %5548 = vmatprep.subr.mxu0 0.0
  %5549 = vmatpush1.msra.mxu0 0.0
  %5550 = vmatprep.subr.mxu0 0.0
  %5551 = vmatpush1.msra.mxu0 0.0
  %5552 = vmatprep.subr.mxu0 0.0
  %5553 = vmatpush1.msra.mxu0 0.0
  %5554 = vmatprep.subr.mxu0 0.0
  %5555 = vmatpush1.msra.mxu0 0.0
  %5556 = vmatprep.mubr.f32.mxu0 0.0
  %5557 = vmatmul.mubr.f32.gmra.mrb[0].mxu0 %v4989
  %v5558 = vpop.f32.mrb[0].mxu0
  %v5559 = vadd.f32 0.0, %v5558
  %v5560 = vpop.f32.mrb[0].mxu0
  %v5561 = vadd.f32 0.0, %v5560
  %5562 = vdwg.mxu0
  %5563 = vmatprep.subr.mxu0 0.0
  %5564 = vmatpush1.msra.mxu0 %v4161
  %5565 = vmatprep.subr.mxu0 0.0
  %5566 = vmatpush1.msra.mxu0 %v4993
  %5567 = vmatprep.subr.mxu0 0.0
  %5568 = vmatpush1.msra.mxu0 0.0
  %5569 = vmatprep.subr.mxu0 0.0
  %5570 = vmatpush1.msra.mxu0 0.0
  %5571 = vmatprep.subr.mxu0 0.0
  %5572 = vmatpush1.msra.mxu0 0.0
  %5573 = vmatprep.subr.mxu0 0.0
  %5574 = vmatpush1.msra.mxu0 0.0
  %5575 = vmatprep.subr.mxu0 0.0
  %5576 = vmatpush1.msra.mxu0 0.0
  %5577 = vmatprep.subr.mxu0 0.0
  %5578 = vmatpush1.msra.mxu0 0.0
  %5579 = vmatprep.subr.mxu0 0.0
  %5580 = vmatpush1.msra.mxu0 0.0
  %5581 = vmatprep.subr.mxu0 0.0
  %5582 = vmatpush1.msra.mxu0 0.0
  %5583 = vmatprep.subr.mxu0 0.0
  %5584 = vmatpush1.msra.mxu0 0.0
  %5585 = vmatprep.subr.mxu0 0.0
  %5586 = vmatpush1.msra.mxu0 0.0
  %5587 = vmatprep.subr.mxu0 0.0
  %5588 = vmatpush1.msra.mxu0 0.0
  %5589 = vmatprep.subr.mxu0 0.0
  %5590 = vmatpush1.msra.mxu0 0.0
  %5591 = vmatprep.subr.mxu0 0.0
  %5592 = vmatpush1.msra.mxu0 0.0
  %5593 = vmatprep.subr.mxu0 0.0
  %5594 = vmatpush1.msra.mxu0 0.0
  %5595 = vmatprep.subr.mxu0 0.0
  %5596 = vmatpush1.msra.mxu0 0.0
  %5597 = vmatprep.subr.mxu0 0.0
  %5598 = vmatpush1.msra.mxu0 0.0
  %5599 = vmatprep.subr.mxu0 0.0
  %5600 = vmatpush1.msra.mxu0 0.0
  %5601 = vmatprep.subr.mxu0 0.0
  %5602 = vmatpush1.msra.mxu0 0.0
  %5603 = vmatprep.subr.mxu0 0.0
  %5604 = vmatpush1.msra.mxu0 0.0
  %5605 = vmatprep.subr.mxu0 0.0
  %5606 = vmatpush1.msra.mxu0 0.0
  %5607 = vmatprep.subr.mxu0 0.0
  %5608 = vmatpush1.msra.mxu0 0.0
  %5609 = vmatprep.subr.mxu0 0.0
  %5610 = vmatpush1.msra.mxu0 0.0
  %5611 = vmatprep.subr.mxu0 0.0
  %5612 = vmatpush1.msra.mxu0 0.0
  %5613 = vmatprep.subr.mxu0 0.0
  %5614 = vmatpush1.msra.mxu0 0.0
  %5615 = vmatprep.subr.mxu0 0.0
  %5616 = vmatpush1.msra.mxu0 0.0
  %5617 = vmatprep.subr.mxu0 0.0
  %5618 = vmatpush1.msra.mxu0 0.0
  %5619 = vmatprep.subr.mxu0 0.0
  %5620 = vmatpush1.msra.mxu0 0.0
  %5621 = vmatprep.subr.mxu0 0.0
  %5622 = vmatpush1.msra.mxu0 0.0
  %5623 = vmatprep.subr.mxu0 0.0
  %5624 = vmatpush1.msra.mxu0 0.0
  %5625 = vmatprep.subr.mxu0 0.0
  %5626 = vmatpush1.msra.mxu0 0.0
  %5627 = vmatprep.mubr.f32.mxu0 0.0
  %5628 = vmatmul.mubr.f32.gmra.mrb[0].mxu0 %v4989
  %v5629 = vpop.f32.mrb[0].mxu0
  %v5630 = vadd.f32 0.0, %v5629
  %v5631 = vpop.f32.mrb[0].mxu0
  %5632 = vdwg.mxu0
  %v5633 = vadd.f32 %v4968, %v5062
  %v5634 = vadd.f32 %v4969, %v5064
  %v5635 = vadd.f32 %v4970, %v5133
  %v5636 = vadd.f32 %v4971, %v5135
  %v5637 = vadd.f32 %v4972, %v5204
  %v5638 = vadd.f32 %v4973, %v5206
  %v5639 = vadd.f32 %v4974, %v5275
  %v5640 = vadd.f32 %v4975, %v5277
  %v5641 = vadd.f32 %v4976, %v5346
  %v5642 = vadd.f32 %v4977, %v5348
  %v5643 = vadd.f32 %v4978, %v5417
  %v5644 = vadd.f32 %v4979, %v5419
  %v5645 = vadd.f32 %v4980, %v5488
  %v5646 = vadd.f32 %v4981, %v5490
  %v5647 = vadd.f32 %v4982, %v5559
  %v5648 = vadd.f32 %v4983, %v5561
  %v5649 = vadd.f32 %v4984, %v5630
  %v5650 = vld [vmem:[%s2] sm:$0x3f]
  %5652 = vset.pattern.permute.xlu0 0
  %5653 = vperm.xlu0 %5652, %v5650
  %v5654 = vpop.permute.xlu0 %5653
  %v5656 = vadd.f32 %v5633, %v5654
  %v5657 = vadd.f32 %v5634, %v5654
  %v5658 = vadd.f32 %v5635, %v5654
  %v5659 = vadd.f32 %v5636, %v5654
  %v5660 = vadd.f32 %v5637, %v5654
  %v5661 = vadd.f32 %v5638, %v5654
  %v5662 = vadd.f32 %v5639, %v5654
  %v5663 = vadd.f32 %v5640, %v5654
  %v5664 = vadd.f32 %v5641, %v5654
  %v5665 = vadd.f32 %v5642, %v5654
  %v5666 = vadd.f32 %v5643, %v5654
  %v5667 = vadd.f32 %v5644, %v5654
  %v5668 = vadd.f32 %v5645, %v5654
  %v5669 = vadd.f32 %v5646, %v5654
  %v5670 = vadd.f32 %v5647, %v5654
  %v5671 = vadd.f32 %v5648, %v5654
  %v5672 = vadd.f32 %v5649, %v5654
  %v5673 = vmax.f32 %v5656, 0.0
  %v5674 = vmax.f32 %v5657, 0.0
  %v5675 = vmax.f32 %v5658, 0.0
  %v5676 = vmax.f32 %v5659, 0.0
  %v5677 = vmax.f32 %v5660, 0.0
  %v5678 = vmax.f32 %v5661, 0.0
  %v5679 = vmax.f32 %v5662, 0.0
  %v5680 = vmax.f32 %v5663, 0.0
  %v5681 = vmax.f32 %v5664, 0.0
  %v5682 = vmax.f32 %v5665, 0.0
  %v5683 = vmax.f32 %v5666, 0.0
  %v5684 = vmax.f32 %v5667, 0.0
  %v5685 = vmax.f32 %v5668, 0.0
  %v5686 = vmax.f32 %v5669, 0.0
  %v5687 = vmax.f32 %v5670, 0.0
  %v5688 = vmax.f32 %v5671, 0.0
  %v5689 = vmax.f32 %v5672, 0.0
  %5707 = vrot.lane.b32.xlu0 %v5673, 127
  %v5708 = vpop.permute.xlu0 %5707
  %5709 = vrot.lane.b32.xlu0 %v5674, 127
  %v5710 = vpop.permute.xlu0 %5709
  %5711 = vrot.lane.b32.xlu0 %v5675, 127
  %v5712 = vpop.permute.xlu0 %5711
  %5713 = vrot.lane.b32.xlu0 %v5676, 127
  %v5714 = vpop.permute.xlu0 %5713
  %5715 = vrot.lane.b32.xlu0 %v5677, 127
  %v5716 = vpop.permute.xlu0 %5715
  %5717 = vrot.lane.b32.xlu0 %v5678, 127
  %v5718 = vpop.permute.xlu0 %5717
  %5719 = vrot.lane.b32.xlu0 %v5679, 127
  %v5720 = vpop.permute.xlu0 %5719
  %5721 = vrot.lane.b32.xlu0 %v5680, 127
  %v5722 = vpop.permute.xlu0 %5721
  %5723 = vrot.lane.b32.xlu0 %v5681, 127
  %v5724 = vpop.permute.xlu0 %5723
  %5725 = vrot.lane.b32.xlu0 %v5682, 127
  %v5726 = vpop.permute.xlu0 %5725
  %5727 = vrot.lane.b32.xlu0 %v5683, 127
  %v5728 = vpop.permute.xlu0 %5727
  %5729 = vrot.lane.b32.xlu0 %v5684, 127
  %v5730 = vpop.permute.xlu0 %5729
  %5731 = vrot.lane.b32.xlu0 %v5685, 127
  %v5732 = vpop.permute.xlu0 %5731
  %5733 = vrot.lane.b32.xlu0 %v5686, 127
  %v5734 = vpop.permute.xlu0 %5733
  %5735 = vrot.lane.b32.xlu0 %v5687, 127
  %v5736 = vpop.permute.xlu0 %5735
  %5737 = vrot.lane.b32.xlu0 %v5688, 127
  %v5738 = vpop.permute.xlu0 %5737
  %5739 = vrot.lane.b32.xlu0 %v5689, 127
  %v5740 = vpop.permute.xlu0 %5739
  %v5741 = vsel %vm1457, %v5708, %v5710
  %v5742 = vsel %vm1457, %v5710, %v5712
  %v5743 = vsel %vm1457, %v5712, %v5714
  %v5744 = vsel %vm1457, %v5714, %v5716
  %v5745 = vsel %vm1457, %v5716, %v5718
  %v5746 = vsel %vm1457, %v5718, %v5720
  %v5747 = vsel %vm1457, %v5720, %v5722
  %v5748 = vsel %vm1457, %v5722, %v5724
  %v5749 = vsel %vm1457, %v5724, %v5726
  %v5750 = vsel %vm1457, %v5726, %v5728
  %v5751 = vsel %vm1457, %v5728, %v5730
  %v5752 = vsel %vm1457, %v5730, %v5732
  %v5753 = vsel %vm1457, %v5732, %v5734
  %v5754 = vsel %vm1457, %v5734, %v5736
  %v5755 = vsel %vm1457, %v5736, %v5738
  %v5756 = vsel %vm1457, %v5738, %v5740
  %v5773 = vmax.f32 %v5673, %v5741
  %v5774 = vmax.f32 %v5674, %v5742
  %v5775 = vmax.f32 %v5675, %v5743
  %v5776 = vmax.f32 %v5676, %v5744
  %v5777 = vmax.f32 %v5677, %v5745
  %v5778 = vmax.f32 %v5678, %v5746
  %v5779 = vmax.f32 %v5679, %v5747
  %v5780 = vmax.f32 %v5680, %v5748
  %v5781 = vmax.f32 %v5681, %v5749
  %v5782 = vmax.f32 %v5682, %v5750
  %v5783 = vmax.f32 %v5683, %v5751
  %v5784 = vmax.f32 %v5684, %v5752
  %v5785 = vmax.f32 %v5685, %v5753
  %v5786 = vmax.f32 %v5686, %v5754
  %v5787 = vmax.f32 %v5687, %v5755
  %v5788 = vmax.f32 %v5688, %v5756
  %v5790 = vmax.f32 %v5689, %v5740
  %5808 = vrot.lane.b32.xlu0 %v5773, 96
  %v5809 = vpop.permute.xlu0 %5808
  %5810 = vrot.lane.b32.xlu0 %v5774, 96
  %v5811 = vpop.permute.xlu0 %5810
  %5812 = vrot.lane.b32.xlu0 %v5775, 96
  %v5813 = vpop.permute.xlu0 %5812
  %5814 = vrot.lane.b32.xlu0 %v5776, 96
  %v5815 = vpop.permute.xlu0 %5814
  %5816 = vrot.lane.b32.xlu0 %v5777, 96
  %v5817 = vpop.permute.xlu0 %5816
  %5818 = vrot.lane.b32.xlu0 %v5778, 96
  %v5819 = vpop.permute.xlu0 %5818
  %5820 = vrot.lane.b32.xlu0 %v5779, 96
  %v5821 = vpop.permute.xlu0 %5820
  %5822 = vrot.lane.b32.xlu0 %v5780, 96
  %v5823 = vpop.permute.xlu0 %5822
  %5824 = vrot.lane.b32.xlu0 %v5781, 96
  %v5825 = vpop.permute.xlu0 %5824
  %5826 = vrot.lane.b32.xlu0 %v5782, 96
  %v5827 = vpop.permute.xlu0 %5826
  %5828 = vrot.lane.b32.xlu0 %v5783, 96
  %v5829 = vpop.permute.xlu0 %5828
  %5830 = vrot.lane.b32.xlu0 %v5784, 96
  %v5831 = vpop.permute.xlu0 %5830
  %5832 = vrot.lane.b32.xlu0 %v5785, 96
  %v5833 = vpop.permute.xlu0 %5832
  %5834 = vrot.lane.b32.xlu0 %v5786, 96
  %v5835 = vpop.permute.xlu0 %5834
  %5836 = vrot.lane.b32.xlu0 %v5787, 96
  %v5837 = vpop.permute.xlu0 %5836
  %5838 = vrot.lane.b32.xlu0 %v5788, 96
  %v5839 = vpop.permute.xlu0 %5838
  %5840 = vrot.lane.b32.xlu0 %v5790, 96
  %v5841 = vpop.permute.xlu0 %5840
  %v5842 = vsel %vm1916, %v5809, %v5811
  %v5843 = vsel %vm1916, %v5811, %v5813
  %v5844 = vsel %vm1916, %v5813, %v5815
  %v5845 = vsel %vm1916, %v5815, %v5817
  %v5846 = vsel %vm1916, %v5817, %v5819
  %v5847 = vsel %vm1916, %v5819, %v5821
  %v5848 = vsel %vm1916, %v5821, %v5823
  %v5849 = vsel %vm1916, %v5823, %v5825
  %v5850 = vsel %vm1916, %v5825, %v5827
  %v5851 = vsel %vm1916, %v5827, %v5829
  %v5852 = vsel %vm1916, %v5829, %v5831
  %v5853 = vsel %vm1916, %v5831, %v5833
  %v5854 = vsel %vm1916, %v5833, %v5835
  %v5855 = vsel %vm1916, %v5835, %v5837
  %v5856 = vsel %vm1916, %v5837, %v5839
  %v5857 = vsel %vm1916, %v5839, %v5841
  %v5874 = vmax.f32 %v5773, %v5842
  %v5875 = vmax.f32 %v5774, %v5843
  %v5876 = vmax.f32 %v5775, %v5844
  %v5877 = vmax.f32 %v5776, %v5845
  %v5878 = vmax.f32 %v5777, %v5846
  %v5879 = vmax.f32 %v5778, %v5847
  %v5880 = vmax.f32 %v5779, %v5848
  %v5881 = vmax.f32 %v5780, %v5849
  %v5882 = vmax.f32 %v5781, %v5850
  %v5883 = vmax.f32 %v5782, %v5851
  %v5884 = vmax.f32 %v5783, %v5852
  %v5885 = vmax.f32 %v5784, %v5853
  %v5886 = vmax.f32 %v5785, %v5854
  %v5887 = vmax.f32 %v5786, %v5855
  %v5888 = vmax.f32 %v5787, %v5856
  %v5889 = vmax.f32 %v5788, %v5857
  %s5890 = smul.u32 4, 128
  %s5891 = smul.u32 %s5890, 2
  %s5892 = sshll.u32 %s5891, 4
  %5893 = dma.done [#allocation7], %s5892
  %v5894 = vld [vmem:[#allocation4] sm:$0xff]
  %v5895 = vld [vmem:[#allocation4 + $0x8] sm:$0xff]
  %v5896 = vld [vmem:[#allocation4 + $0x10] sm:$0xff]
  %v5897 = vld [vmem:[#allocation4 + $0x18] sm:$0xff]
  %v5898 = vld [vmem:[#allocation4 + $0x20] sm:$0xff]
  %v5899 = vld [vmem:[#allocation4 + $0x28] sm:$0xff]
  %v5900 = vld [vmem:[#allocation4 + $0x30] sm:$0xff]
  %v5901 = vld [vmem:[#allocation4 + $0x38] sm:$0xff]
  %v5902 = vld [vmem:[#allocation4 + $0x40] sm:$0xff]
  %v5903 = vld [vmem:[#allocation4 + $0x48] sm:$0xff]
  %v5904 = vld [vmem:[#allocation4 + $0x50] sm:$0xff]
  %v5905 = vld [vmem:[#allocation4 + $0x58] sm:$0xff]
  %v5906 = vld [vmem:[#allocation4 + $0x60] sm:$0xff]
  %v5907 = vld [vmem:[#allocation4 + $0x68] sm:$0xff]
  %v5908 = vld [vmem:[#allocation4 + $0x70] sm:$0xff]
  %v5909 = vld [vmem:[#allocation4 + $0x78] sm:$0xff]
  %v5910 = vld [vmem:[#allocation4 + $0x80] sm:$0xff]
  %v5911 = vld [vmem:[#allocation4 + $0x88] sm:$0xff]
  %v5912 = vld [vmem:[#allocation4 + $0x90] sm:$0xff]
  %v5913 = vld [vmem:[#allocation4 + $0x98] sm:$0xff]
  %v5914 = vld [vmem:[#allocation4 + $0xa0] sm:$0xff]
  %v5915 = vld [vmem:[#allocation4 + $0xa8] sm:$0xff]
  %v5916 = vld [vmem:[#allocation4 + $0xb0] sm:$0xff]
  %v5917 = vld [vmem:[#allocation4 + $0xb8] sm:$0xff]
  %v5918 = vld [vmem:[#allocation4 + $0xc0] sm:$0xff]
  %v5919 = vld [vmem:[#allocation4 + $0xc8] sm:$0xff]
  %v5920 = vld [vmem:[#allocation4 + $0xd0] sm:$0xff]
  %v5921 = vld [vmem:[#allocation4 + $0xd8] sm:$0xff]
  %v5922 = vld [vmem:[#allocation4 + $0xe0] sm:$0xff]
  %v5923 = vld [vmem:[#allocation4 + $0xe8] sm:$0xff]
  %v5924 = vld [vmem:[#allocation4 + $0xf0] sm:$0xff]
  %v5925 = vld [vmem:[#allocation4 + $0xf8] sm:$0xff]
  %v5926 = vld [vmem:[#allocation4 + $0x100] sm:$0xff]
  %v5927 = vld [vmem:[#allocation4 + $0x108] sm:$0xff]
  %v5928 = vld [vmem:[#allocation4 + $0x110] sm:$0xff]
  %v5929 = vld [vmem:[#allocation4 + $0x118] sm:$0xff]
  %v5930 = vld [vmem:[#allocation4 + $0x120] sm:$0xff]
  %v5931 = vld [vmem:[#allocation4 + $0x128] sm:$0xff]
  %v5932 = vld [vmem:[#allocation4 + $0x130] sm:$0xff]
  %v5933 = vld [vmem:[#allocation4 + $0x138] sm:$0xff]
  %v5934 = vld [vmem:[#allocation4 + $0x140] sm:$0xff]
  %v5935 = vld [vmem:[#allocation4 + $0x148] sm:$0xff]
  %v5936 = vld [vmem:[#allocation4 + $0x150] sm:$0xff]
  %v5937 = vld [vmem:[#allocation4 + $0x158] sm:$0xff]
  %v5938 = vld [vmem:[#allocation4 + $0x160] sm:$0xff]
  %v5939 = vld [vmem:[#allocation4 + $0x168] sm:$0xff]
  %v5940 = vld [vmem:[#allocation4 + $0x170] sm:$0xff]
  %v5941 = vld [vmem:[#allocation4 + $0x178] sm:$0xff]
  %v5942 = vld [vmem:[#allocation4 + $0x180] sm:$0xff]
  %v5943 = vld [vmem:[#allocation4 + $0x188] sm:$0xff]
  %v5944 = vld [vmem:[#allocation4 + $0x190] sm:$0xff]
  %v5945 = vld [vmem:[#allocation4 + $0x198] sm:$0xff]
  %v5946 = vld [vmem:[#allocation4 + $0x1a0] sm:$0xff]
  %v5947 = vld [vmem:[#allocation4 + $0x1a8] sm:$0xff]
  %v5948 = vld [vmem:[#allocation4 + $0x1b0] sm:$0xff]
  %v5949 = vld [vmem:[#allocation4 + $0x1b8] sm:$0xff]
  %v5950 = vld [vmem:[#allocation4 + $0x1c0] sm:$0xff]
  %v5951 = vld [vmem:[#allocation4 + $0x1c8] sm:$0xff]
  %v5952 = vld [vmem:[#allocation4 + $0x1d0] sm:$0xff]
  %v5953 = vld [vmem:[#allocation4 + $0x1d8] sm:$0xff]
  %v5954 = vld [vmem:[#allocation4 + $0x1e0] sm:$0xff]
  %v5955 = vld [vmem:[#allocation4 + $0x1e8] sm:$0xff]
  %v5956 = vld [vmem:[#allocation4 + $0x1f0] sm:$0xff]
  %v5957 = vld [vmem:[#allocation4 + $0x1f8] sm:$0xff]
  %v5958 = vld [vmem:[#allocation4 + $0x200] sm:$0xff]
  %v5959 = vld [vmem:[#allocation4 + $0x208] sm:$0xff]
  %v5960 = vld [vmem:[#allocation4 + $0x210] sm:$0xff]
  %v5961 = vld [vmem:[#allocation4 + $0x218] sm:$0xff]
  %v5962 = vld [vmem:[#allocation4 + $0x220] sm:$0xff]
  %v5963 = vld [vmem:[#allocation4 + $0x228] sm:$0xff]
  %v5964 = vld [vmem:[#allocation4 + $0x230] sm:$0xff]
  %v5965 = vld [vmem:[#allocation4 + $0x238] sm:$0xff]
  %v5966 = vld [vmem:[#allocation4 + $0x240] sm:$0xff]
  %v5967 = vld [vmem:[#allocation4 + $0x248] sm:$0xff]
  %v5968 = vld [vmem:[#allocation4 + $0x250] sm:$0xff]
  %v5969 = vld [vmem:[#allocation4 + $0x258] sm:$0xff]
  %v5970 = vld [vmem:[#allocation4 + $0x260] sm:$0xff]
  %v5971 = vld [vmem:[#allocation4 + $0x268] sm:$0xff]
  %v5972 = vld [vmem:[#allocation4 + $0x270] sm:$0xff]
  %v5973 = vld [vmem:[#allocation4 + $0x278] sm:$0xff]
  %v5974 = vld [vmem:[#allocation4 + $0x280] sm:$0xff]
  %v5975 = vld [vmem:[#allocation4 + $0x288] sm:$0xff]
  %v5976 = vld [vmem:[#allocation4 + $0x290] sm:$0xff]
  %v5977 = vld [vmem:[#allocation4 + $0x298] sm:$0xff]
  %v5978 = vld [vmem:[#allocation4 + $0x2a0] sm:$0xff]
  %v5979 = vld [vmem:[#allocation4 + $0x2a8] sm:$0xff]
  %v5980 = vld [vmem:[#allocation4 + $0x2b0] sm:$0xff]
  %v5981 = vld [vmem:[#allocation4 + $0x2b8] sm:$0xff]
  %v5982 = vld [vmem:[#allocation4 + $0x2c0] sm:$0xff]
  %v5983 = vld [vmem:[#allocation4 + $0x2c8] sm:$0xff]
  %v5984 = vld [vmem:[#allocation4 + $0x2d0] sm:$0xff]
  %v5985 = vld [vmem:[#allocation4 + $0x2d8] sm:$0xff]
  %v5986 = vld [vmem:[#allocation4 + $0x2e0] sm:$0xff]
  %v5987 = vld [vmem:[#allocation4 + $0x2e8] sm:$0xff]
  %v5988 = vld [vmem:[#allocation4 + $0x2f0] sm:$0xff]
  %v5989 = vld [vmem:[#allocation4 + $0x2f8] sm:$0xff]
  %v5990 = vld [vmem:[#allocation4 + $0x300] sm:$0xff]
  %v5991 = vld [vmem:[#allocation4 + $0x308] sm:$0xff]
  %v5992 = vld [vmem:[#allocation4 + $0x310] sm:$0xff]
  %v5993 = vld [vmem:[#allocation4 + $0x318] sm:$0xff]
  %v5994 = vld [vmem:[#allocation4 + $0x320] sm:$0xff]
  %v5995 = vld [vmem:[#allocation4 + $0x328] sm:$0xff]
  %v5996 = vld [vmem:[#allocation4 + $0x330] sm:$0xff]
  %v5997 = vld [vmem:[#allocation4 + $0x338] sm:$0xff]
  %v5998 = vld [vmem:[#allocation4 + $0x340] sm:$0xff]
  %v5999 = vld [vmem:[#allocation4 + $0x348] sm:$0xff]
  %v6000 = vld [vmem:[#allocation4 + $0x350] sm:$0xff]
  %v6001 = vld [vmem:[#allocation4 + $0x358] sm:$0xff]
  %v6002 = vld [vmem:[#allocation4 + $0x360] sm:$0xff]
  %v6003 = vld [vmem:[#allocation4 + $0x368] sm:$0xff]
  %v6004 = vld [vmem:[#allocation4 + $0x370] sm:$0xff]
  %v6005 = vld [vmem:[#allocation4 + $0x378] sm:$0xff]
  %v6006 = vld [vmem:[#allocation4 + $0x380] sm:$0xff]
  %v6007 = vld [vmem:[#allocation4 + $0x388] sm:$0xff]
  %v6008 = vld [vmem:[#allocation4 + $0x390] sm:$0xff]
  %v6009 = vld [vmem:[#allocation4 + $0x398] sm:$0xff]
  %v6010 = vld [vmem:[#allocation4 + $0x3a0] sm:$0xff]
  %v6011 = vld [vmem:[#allocation4 + $0x3a8] sm:$0xff]
  %v6012 = vld [vmem:[#allocation4 + $0x3b0] sm:$0xff]
  %v6013 = vld [vmem:[#allocation4 + $0x3b8] sm:$0xff]
  %v6014 = vld [vmem:[#allocation4 + $0x3c0] sm:$0xff]
  %v6015 = vld [vmem:[#allocation4 + $0x3c8] sm:$0xff]
  %v6016 = vld [vmem:[#allocation4 + $0x3d0] sm:$0xff]
  %v6017 = vld [vmem:[#allocation4 + $0x3d8] sm:$0xff]
  %v6018 = vld [vmem:[#allocation4 + $0x3e0] sm:$0xff]
  %v6019 = vld [vmem:[#allocation4 + $0x3e8] sm:$0xff]
  %v6020 = vld [vmem:[#allocation4 + $0x3f0] sm:$0xff]
  %v6021 = vld [vmem:[#allocation4 + $0x3f8] sm:$0xff]
  %v6022 = vunpack.c.l.bf16 %v5894
  %v6023 = vunpack.c.l.bf16 %v5895
  %v6024 = vunpack.c.h.bf16 %v5894
  %v6025 = vunpack.c.h.bf16 %v5895
  %v6026 = vunpack.c.l.bf16 %v5896
  %v6027 = vunpack.c.l.bf16 %v5897
  %v6028 = vunpack.c.h.bf16 %v5896
  %v6029 = vunpack.c.h.bf16 %v5897
  %v6030 = vunpack.c.l.bf16 %v5898
  %v6031 = vunpack.c.l.bf16 %v5899
  %v6032 = vunpack.c.h.bf16 %v5898
  %v6033 = vunpack.c.h.bf16 %v5899
  %v6034 = vunpack.c.l.bf16 %v5900
  %v6035 = vunpack.c.l.bf16 %v5901
  %v6036 = vunpack.c.h.bf16 %v5900
  %v6037 = vunpack.c.h.bf16 %v5901
  %v6038 = vunpack.c.l.bf16 %v5902
  %v6039 = vunpack.c.l.bf16 %v5903
  %v6040 = vunpack.c.h.bf16 %v5902
  %v6041 = vunpack.c.h.bf16 %v5903
  %v6042 = vunpack.c.l.bf16 %v5904
  %v6043 = vunpack.c.l.bf16 %v5905
  %v6044 = vunpack.c.h.bf16 %v5904
  %v6045 = vunpack.c.h.bf16 %v5905
  %v6046 = vunpack.c.l.bf16 %v5906
  %v6047 = vunpack.c.l.bf16 %v5907
  %v6048 = vunpack.c.h.bf16 %v5906
  %v6049 = vunpack.c.h.bf16 %v5907
  %v6050 = vunpack.c.l.bf16 %v5908
  %v6051 = vunpack.c.l.bf16 %v5909
  %v6052 = vunpack.c.h.bf16 %v5908
  %v6053 = vunpack.c.h.bf16 %v5909
  %v6054 = vunpack.c.l.bf16 %v5910
  %v6055 = vunpack.c.l.bf16 %v5911
  %v6056 = vunpack.c.h.bf16 %v5910
  %v6057 = vunpack.c.h.bf16 %v5911
  %v6058 = vunpack.c.l.bf16 %v5912
  %v6059 = vunpack.c.l.bf16 %v5913
  %v6060 = vunpack.c.h.bf16 %v5912
  %v6061 = vunpack.c.h.bf16 %v5913
  %v6062 = vunpack.c.l.bf16 %v5914
  %v6063 = vunpack.c.l.bf16 %v5915
  %v6064 = vunpack.c.h.bf16 %v5914
  %v6065 = vunpack.c.h.bf16 %v5915
  %v6066 = vunpack.c.l.bf16 %v5916
  %v6067 = vunpack.c.l.bf16 %v5917
  %v6068 = vunpack.c.h.bf16 %v5916
  %v6069 = vunpack.c.h.bf16 %v5917
  %v6070 = vunpack.c.l.bf16 %v5918
  %v6071 = vunpack.c.l.bf16 %v5919
  %v6072 = vunpack.c.h.bf16 %v5918
  %v6073 = vunpack.c.h.bf16 %v5919
  %v6074 = vunpack.c.l.bf16 %v5920
  %v6075 = vunpack.c.l.bf16 %v5921
  %v6076 = vunpack.c.h.bf16 %v5920
  %v6077 = vunpack.c.h.bf16 %v5921
  %v6078 = vunpack.c.l.bf16 %v5922
  %v6079 = vunpack.c.l.bf16 %v5923
  %v6080 = vunpack.c.h.bf16 %v5922
  %v6081 = vunpack.c.h.bf16 %v5923
  %v6082 = vunpack.c.l.bf16 %v5924
  %v6083 = vunpack.c.l.bf16 %v5925
  %v6084 = vunpack.c.h.bf16 %v5924
  %v6085 = vunpack.c.h.bf16 %v5925
  %v6086 = vunpack.c.l.bf16 %v5926
  %v6087 = vunpack.c.l.bf16 %v5927
  %v6088 = vunpack.c.h.bf16 %v5926
  %v6089 = vunpack.c.h.bf16 %v5927
  %v6090 = vunpack.c.l.bf16 %v5928
  %v6091 = vunpack.c.l.bf16 %v5929
  %v6092 = vunpack.c.h.bf16 %v5928
  %v6093 = vunpack.c.h.bf16 %v5929
  %v6094 = vunpack.c.l.bf16 %v5930
  %v6095 = vunpack.c.l.bf16 %v5931
  %v6096 = vunpack.c.h.bf16 %v5930
  %v6097 = vunpack.c.h.bf16 %v5931
  %v6098 = vunpack.c.l.bf16 %v5932
  %v6099 = vunpack.c.l.bf16 %v5933
  %v6100 = vunpack.c.h.bf16 %v5932
  %v6101 = vunpack.c.h.bf16 %v5933
  %v6102 = vunpack.c.l.bf16 %v5934
  %v6103 = vunpack.c.l.bf16 %v5935
  %v6104 = vunpack.c.h.bf16 %v5934
  %v6105 = vunpack.c.h.bf16 %v5935
  %v6106 = vunpack.c.l.bf16 %v5936
  %v6107 = vunpack.c.l.bf16 %v5937
  %v6108 = vunpack.c.h.bf16 %v5936
  %v6109 = vunpack.c.h.bf16 %v5937
  %v6110 = vunpack.c.l.bf16 %v5938
  %v6111 = vunpack.c.l.bf16 %v5939
  %v6112 = vunpack.c.h.bf16 %v5938
  %v6113 = vunpack.c.h.bf16 %v5939
  %v6114 = vunpack.c.l.bf16 %v5940
  %v6115 = vunpack.c.l.bf16 %v5941
  %v6116 = vunpack.c.h.bf16 %v5940
  %v6117 = vunpack.c.h.bf16 %v5941
  %v6118 = vunpack.c.l.bf16 %v5942
  %v6119 = vunpack.c.l.bf16 %v5943
  %v6120 = vunpack.c.h.bf16 %v5942
  %v6121 = vunpack.c.h.bf16 %v5943
  %v6122 = vunpack.c.l.bf16 %v5944
  %v6123 = vunpack.c.l.bf16 %v5945
  %v6124 = vunpack.c.h.bf16 %v5944
  %v6125 = vunpack.c.h.bf16 %v5945
  %v6126 = vunpack.c.l.bf16 %v5946
  %v6127 = vunpack.c.l.bf16 %v5947
  %v6128 = vunpack.c.h.bf16 %v5946
  %v6129 = vunpack.c.h.bf16 %v5947
  %v6130 = vunpack.c.l.bf16 %v5948
  %v6131 = vunpack.c.l.bf16 %v5949
  %v6132 = vunpack.c.h.bf16 %v5948
  %v6133 = vunpack.c.h.bf16 %v5949
  %v6134 = vunpack.c.l.bf16 %v5950
  %v6135 = vunpack.c.l.bf16 %v5951
  %v6136 = vunpack.c.h.bf16 %v5950
  %v6137 = vunpack.c.h.bf16 %v5951
  %v6138 = vunpack.c.l.bf16 %v5952
  %v6139 = vunpack.c.l.bf16 %v5953
  %v6140 = vunpack.c.h.bf16 %v5952
  %v6141 = vunpack.c.h.bf16 %v5953
  %v6142 = vunpack.c.l.bf16 %v5954
  %v6143 = vunpack.c.l.bf16 %v5955
  %v6144 = vunpack.c.h.bf16 %v5954
  %v6145 = vunpack.c.h.bf16 %v5955
  %v6146 = vunpack.c.l.bf16 %v5956
  %v6147 = vunpack.c.l.bf16 %v5957
  %v6148 = vunpack.c.h.bf16 %v5956
  %v6149 = vunpack.c.h.bf16 %v5957
  %v6150 = vunpack.c.l.bf16 %v5958
  %v6151 = vunpack.c.l.bf16 %v5959
  %v6152 = vunpack.c.h.bf16 %v5958
  %v6153 = vunpack.c.h.bf16 %v5959
  %v6154 = vunpack.c.l.bf16 %v5960
  %v6155 = vunpack.c.l.bf16 %v5961
  %v6156 = vunpack.c.h.bf16 %v5960
  %v6157 = vunpack.c.h.bf16 %v5961
  %v6158 = vunpack.c.l.bf16 %v5962
  %v6159 = vunpack.c.l.bf16 %v5963
  %v6160 = vunpack.c.h.bf16 %v5962
  %v6161 = vunpack.c.h.bf16 %v5963
  %v6162 = vunpack.c.l.bf16 %v5964
  %v6163 = vunpack.c.l.bf16 %v5965
  %v6164 = vunpack.c.h.bf16 %v5964
  %v6165 = vunpack.c.h.bf16 %v5965
  %v6166 = vunpack.c.l.bf16 %v5966
  %v6167 = vunpack.c.l.bf16 %v5967
  %v6168 = vunpack.c.h.bf16 %v5966
  %v6169 = vunpack.c.h.bf16 %v5967
  %v6170 = vunpack.c.l.bf16 %v5968
  %v6171 = vunpack.c.l.bf16 %v5969
  %v6172 = vunpack.c.h.bf16 %v5968
  %v6173 = vunpack.c.h.bf16 %v5969
  %v6174 = vunpack.c.l.bf16 %v5970
  %v6175 = vunpack.c.l.bf16 %v5971
  %v6176 = vunpack.c.h.bf16 %v5970
  %v6177 = vunpack.c.h.bf16 %v5971
  %v6178 = vunpack.c.l.bf16 %v5972
  %v6179 = vunpack.c.l.bf16 %v5973
  %v6180 = vunpack.c.h.bf16 %v5972
  %v6181 = vunpack.c.h.bf16 %v5973
  %v6182 = vunpack.c.l.bf16 %v5974
  %v6183 = vunpack.c.l.bf16 %v5975
  %v6184 = vunpack.c.h.bf16 %v5974
  %v6185 = vunpack.c.h.bf16 %v5975
  %v6186 = vunpack.c.l.bf16 %v5976
  %v6187 = vunpack.c.l.bf16 %v5977
  %v6188 = vunpack.c.h.bf16 %v5976
  %v6189 = vunpack.c.h.bf16 %v5977
  %v6190 = vunpack.c.l.bf16 %v5978
  %v6191 = vunpack.c.l.bf16 %v5979
  %v6192 = vunpack.c.h.bf16 %v5978
  %v6193 = vunpack.c.h.bf16 %v5979
  %v6194 = vunpack.c.l.bf16 %v5980
  %v6195 = vunpack.c.l.bf16 %v5981
  %v6196 = vunpack.c.h.bf16 %v5980
  %v6197 = vunpack.c.h.bf16 %v5981
  %v6198 = vunpack.c.l.bf16 %v5982
  %v6199 = vunpack.c.l.bf16 %v5983
  %v6200 = vunpack.c.h.bf16 %v5982
  %v6201 = vunpack.c.h.bf16 %v5983
  %v6202 = vunpack.c.l.bf16 %v5984
  %v6203 = vunpack.c.l.bf16 %v5985
  %v6204 = vunpack.c.h.bf16 %v5984
  %v6205 = vunpack.c.h.bf16 %v5985
  %v6206 = vunpack.c.l.bf16 %v5986
  %v6207 = vunpack.c.l.bf16 %v5987
  %v6208 = vunpack.c.h.bf16 %v5986
  %v6209 = vunpack.c.h.bf16 %v5987
  %v6210 = vunpack.c.l.bf16 %v5988
  %v6211 = vunpack.c.l.bf16 %v5989
  %v6212 = vunpack.c.h.bf16 %v5988
  %v6213 = vunpack.c.h.bf16 %v5989
  %v6214 = vunpack.c.l.bf16 %v5990
  %v6215 = vunpack.c.l.bf16 %v5991
  %v6216 = vunpack.c.h.bf16 %v5990
  %v6217 = vunpack.c.h.bf16 %v5991
  %v6218 = vunpack.c.l.bf16 %v5992
  %v6219 = vunpack.c.l.bf16 %v5993
  %v6220 = vunpack.c.h.bf16 %v5992
  %v6221 = vunpack.c.h.bf16 %v5993
  %v6222 = vunpack.c.l.bf16 %v5994
  %v6223 = vunpack.c.l.bf16 %v5995
  %v6224 = vunpack.c.h.bf16 %v5994
  %v6225 = vunpack.c.h.bf16 %v5995
  %v6226 = vunpack.c.l.bf16 %v5996
  %v6227 = vunpack.c.l.bf16 %v5997
  %v6228 = vunpack.c.h.bf16 %v5996
  %v6229 = vunpack.c.h.bf16 %v5997
  %v6230 = vunpack.c.l.bf16 %v5998
  %v6231 = vunpack.c.l.bf16 %v5999
  %v6232 = vunpack.c.h.bf16 %v5998
  %v6233 = vunpack.c.h.bf16 %v5999
  %v6234 = vunpack.c.l.bf16 %v6000
  %v6235 = vunpack.c.l.bf16 %v6001
  %v6236 = vunpack.c.h.bf16 %v6000
  %v6237 = vunpack.c.h.bf16 %v6001
  %v6238 = vunpack.c.l.bf16 %v6002
  %v6239 = vunpack.c.l.bf16 %v6003
  %v6240 = vunpack.c.h.bf16 %v6002
  %v6241 = vunpack.c.h.bf16 %v6003
  %v6242 = vunpack.c.l.bf16 %v6004
  %v6243 = vunpack.c.l.bf16 %v6005
  %v6244 = vunpack.c.h.bf16 %v6004
  %v6245 = vunpack.c.h.bf16 %v6005
  %v6246 = vunpack.c.l.bf16 %v6006
  %v6247 = vunpack.c.l.bf16 %v6007
  %v6248 = vunpack.c.h.bf16 %v6006
  %v6249 = vunpack.c.h.bf16 %v6007
  %v6250 = vunpack.c.l.bf16 %v6008
  %v6251 = vunpack.c.l.bf16 %v6009
  %v6252 = vunpack.c.h.bf16 %v6008
  %v6253 = vunpack.c.h.bf16 %v6009
  %v6254 = vunpack.c.l.bf16 %v6010
  %v6255 = vunpack.c.l.bf16 %v6011
  %v6256 = vunpack.c.h.bf16 %v6010
  %v6257 = vunpack.c.h.bf16 %v6011
  %v6258 = vunpack.c.l.bf16 %v6012
  %v6259 = vunpack.c.l.bf16 %v6013
  %v6260 = vunpack.c.h.bf16 %v6012
  %v6261 = vunpack.c.h.bf16 %v6013
  %v6262 = vunpack.c.l.bf16 %v6014
  %v6263 = vunpack.c.l.bf16 %v6015
  %v6264 = vunpack.c.h.bf16 %v6014
  %v6265 = vunpack.c.h.bf16 %v6015
  %v6266 = vunpack.c.l.bf16 %v6016
  %v6267 = vunpack.c.l.bf16 %v6017
  %v6268 = vunpack.c.h.bf16 %v6016
  %v6269 = vunpack.c.h.bf16 %v6017
  %v6270 = vunpack.c.l.bf16 %v6018
  %v6271 = vunpack.c.l.bf16 %v6019
  %v6272 = vunpack.c.h.bf16 %v6018
  %v6273 = vunpack.c.h.bf16 %v6019
  %v6274 = vunpack.c.l.bf16 %v6020
  %v6275 = vunpack.c.l.bf16 %v6021
  %v6276 = vunpack.c.h.bf16 %v6020
  %v6277 = vunpack.c.h.bf16 %v6021
  %v6286 = vrot.slane %v5882, 2
  %v6287 = vrot.slane %v5883, 2
  %v6288 = vrot.slane %v5884, 2
  %v6289 = vrot.slane %v5885, 2
  %v6290 = vrot.slane %v5886, 2
  %v6291 = vrot.slane %v5887, 2
  %v6292 = vrot.slane %v5888, 2
  %v6293 = vrot.slane %v5889, 2
  %v6302 = vsel %vm1756, %v5874, %v6286
  %v6303 = vsel %vm1756, %v5875, %v6287
  %v6304 = vsel %vm1756, %v5876, %v6288
  %v6305 = vsel %vm1756, %v5877, %v6289
  %v6306 = vsel %vm1756, %v5878, %v6290
  %v6307 = vsel %vm1756, %v5879, %v6291
  %v6308 = vsel %vm1756, %v5880, %v6292
  %v6309 = vsel %vm1756, %v5881, %v6293
  %6310 = vmatprep.subr.mxu0 %v6023
  %6311 = vmatpush1.msra.mxu0 %v6022
  %6312 = vmatprep.subr.mxu0 %v6025
  %6313 = vmatpush1.msra.mxu0 %v6024
  %6314 = vmatprep.subr.mxu0 %v6027
  %6315 = vmatpush1.msra.mxu0 %v6026
  %6316 = vmatprep.subr.mxu0 %v6029
  %6317 = vmatpush1.msra.mxu0 %v6028
  %6318 = vmatprep.subr.mxu0 %v6031
  %6319 = vmatpush1.msra.mxu0 %v6030
  %6320 = vmatprep.subr.mxu0 %v6033
  %6321 = vmatpush1.msra.mxu0 %v6032
  %6322 = vmatprep.subr.mxu0 %v6035
  %6323 = vmatpush1.msra.mxu0 %v6034
  %6324 = vmatprep.subr.mxu0 %v6037
  %6325 = vmatpush1.msra.mxu0 %v6036
  %6326 = vmatprep.subr.mxu0 %v6039
  %6327 = vmatpush1.msra.mxu0 %v6038
  %6328 = vmatprep.subr.mxu0 %v6041
  %6329 = vmatpush1.msra.mxu0 %v6040
  %6330 = vmatprep.subr.mxu0 %v6043
  %6331 = vmatpush1.msra.mxu0 %v6042
  %6332 = vmatprep.subr.mxu0 %v6045
  %6333 = vmatpush1.msra.mxu0 %v6044
  %6334 = vmatprep.subr.mxu0 %v6047
  %6335 = vmatpush1.msra.mxu0 %v6046
  %6336 = vmatprep.subr.mxu0 %v6049
  %6337 = vmatpush1.msra.mxu0 %v6048
  %6338 = vmatprep.subr.mxu0 %v6051
  %6339 = vmatpush1.msra.mxu0 %v6050
  %6340 = vmatprep.subr.mxu0 %v6053
  %6341 = vmatpush1.msra.mxu0 %v6052
  %6342 = vmatprep.subr.mxu0 %v6055
  %6343 = vmatpush1.msra.mxu0 %v6054
  %6344 = vmatprep.subr.mxu0 %v6057
  %6345 = vmatpush1.msra.mxu0 %v6056
  %6346 = vmatprep.subr.mxu0 %v6059
  %6347 = vmatpush1.msra.mxu0 %v6058
  %6348 = vmatprep.subr.mxu0 %v6061
  %6349 = vmatpush1.msra.mxu0 %v6060
  %6350 = vmatprep.subr.mxu0 %v6063
  %6351 = vmatpush1.msra.mxu0 %v6062
  %6352 = vmatprep.subr.mxu0 %v6065
  %6353 = vmatpush1.msra.mxu0 %v6064
  %6354 = vmatprep.subr.mxu0 %v6067
  %6355 = vmatpush1.msra.mxu0 %v6066
  %6356 = vmatprep.subr.mxu0 %v6069
  %6357 = vmatpush1.msra.mxu0 %v6068
  %6358 = vmatprep.subr.mxu0 %v6071
  %6359 = vmatpush1.msra.mxu0 %v6070
  %6360 = vmatprep.subr.mxu0 %v6073
  %6361 = vmatpush1.msra.mxu0 %v6072
  %6362 = vmatprep.subr.mxu0 %v6075
  %6363 = vmatpush1.msra.mxu0 %v6074
  %6364 = vmatprep.subr.mxu0 %v6077
  %6365 = vmatpush1.msra.mxu0 %v6076
  %6366 = vmatprep.subr.mxu0 %v6079
  %6367 = vmatpush1.msra.mxu0 %v6078
  %6368 = vmatprep.subr.mxu0 %v6081
  %6369 = vmatpush1.msra.mxu0 %v6080
  %6370 = vmatprep.subr.mxu0 %v6083
  %6371 = vmatpush1.msra.mxu0 %v6082
  %6372 = vmatprep.subr.mxu0 %v6085
  %6373 = vmatpush1.msra.mxu0 %v6084
  %6374 = vmatprep.mubr.f32.mxu0 %v6303
  %6375 = vmatmul.mubr.f32.gmra.mrb[0].mxu0 %v6302
  %v6376 = vpop.f32.mrb[0].mxu0
  %v6377 = vadd.f32 0.0, %v6376
  %v6378 = vpop.f32.mrb[0].mxu0
  %v6379 = vadd.f32 0.0, %v6378
  %6380 = vmatprep.mubr.f32.mxu0 %v6287
  %6381 = vmatmul.mubr.f32.gmra.mrb[0].mxu0 %v6286
  %v6382 = vpop.f32.mrb[0].mxu0
  %v6383 = vadd.f32 0.0, %v6382
  %v6384 = vpop.f32.mrb[0].mxu0
  %v6385 = vadd.f32 0.0, %v6384
  %6386 = vdwg.mxu0
  %6387 = vmatprep.subr.mxu0 %v6087
  %6388 = vmatpush1.msra.mxu0 %v6086
  %6389 = vmatprep.subr.mxu0 %v6089
  %6390 = vmatpush1.msra.mxu0 %v6088
  %6391 = vmatprep.subr.mxu0 %v6091
  %6392 = vmatpush1.msra.mxu0 %v6090
  %6393 = vmatprep.subr.mxu0 %v6093
  %6394 = vmatpush1.msra.mxu0 %v6092
  %6395 = vmatprep.subr.mxu0 %v6095
  %6396 = vmatpush1.msra.mxu0 %v6094
  %6397 = vmatprep.subr.mxu0 %v6097
  %6398 = vmatpush1.msra.mxu0 %v6096
  %6399 = vmatprep.subr.mxu0 %v6099
  %6400 = vmatpush1.msra.mxu0 %v6098
  %6401 = vmatprep.subr.mxu0 %v6101
  %6402 = vmatpush1.msra.mxu0 %v6100
  %6403 = vmatprep.subr.mxu0 %v6103
  %6404 = vmatpush1.msra.mxu0 %v6102
  %6405 = vmatprep.subr.mxu0 %v6105
  %6406 = vmatpush1.msra.mxu0 %v6104
  %6407 = vmatprep.subr.mxu0 %v6107
  %6408 = vmatpush1.msra.mxu0 %v6106
  %6409 = vmatprep.subr.mxu0 %v6109
  %6410 = vmatpush1.msra.mxu0 %v6108
  %6411 = vmatprep.subr.mxu0 %v6111
  %6412 = vmatpush1.msra.mxu0 %v6110
  %6413 = vmatprep.subr.mxu0 %v6113
  %6414 = vmatpush1.msra.mxu0 %v6112
  %6415 = vmatprep.subr.mxu0 %v6115
  %6416 = vmatpush1.msra.mxu0 %v6114
  %6417 = vmatprep.subr.mxu0 %v6117
  %6418 = vmatpush1.msra.mxu0 %v6116
  %6419 = vmatprep.subr.mxu0 %v6119
  %6420 = vmatpush1.msra.mxu0 %v6118
  %6421 = vmatprep.subr.mxu0 %v6121
  %6422 = vmatpush1.msra.mxu0 %v6120
  %6423 = vmatprep.subr.mxu0 %v6123
  %6424 = vmatpush1.msra.mxu0 %v6122
  %6425 = vmatprep.subr.mxu0 %v6125
  %6426 = vmatpush1.msra.mxu0 %v6124
  %6427 = vmatprep.subr.mxu0 %v6127
  %6428 = vmatpush1.msra.mxu0 %v6126
  %6429 = vmatprep.subr.mxu0 %v6129
  %6430 = vmatpush1.msra.mxu0 %v6128
  %6431 = vmatprep.subr.mxu0 %v6131
  %6432 = vmatpush1.msra.mxu0 %v6130
  %6433 = vmatprep.subr.mxu0 %v6133
  %6434 = vmatpush1.msra.mxu0 %v6132
  %6435 = vmatprep.subr.mxu0 %v6135
  %6436 = vmatpush1.msra.mxu0 %v6134
  %6437 = vmatprep.subr.mxu0 %v6137
  %6438 = vmatpush1.msra.mxu0 %v6136
  %6439 = vmatprep.subr.mxu0 %v6139
  %6440 = vmatpush1.msra.mxu0 %v6138
  %6441 = vmatprep.subr.mxu0 %v6141
  %6442 = vmatpush1.msra.mxu0 %v6140
  %6443 = vmatprep.subr.mxu0 %v6143
  %6444 = vmatpush1.msra.mxu0 %v6142
  %6445 = vmatprep.subr.mxu0 %v6145
  %6446 = vmatpush1.msra.mxu0 %v6144
  %6447 = vmatprep.subr.mxu0 %v6147
  %6448 = vmatpush1.msra.mxu0 %v6146
  %6449 = vmatprep.subr.mxu0 %v6149
  %6450 = vmatpush1.msra.mxu0 %v6148
  %6451 = vmatprep.mubr.f32.mxu0 %v6305
  %6452 = vmatmul.mubr.f32.gmra.mrb[0].mxu0 %v6304
  %v6453 = vpop.f32.mrb[0].mxu0
  %v6454 = vadd.f32 %v6377, %v6453
  %v6455 = vpop.f32.mrb[0].mxu0
  %v6456 = vadd.f32 %v6379, %v6455
  %6457 = vmatprep.mubr.f32.mxu0 %v6289
  %6458 = vmatmul.mubr.f32.gmra.mrb[0].mxu0 %v6288
  %v6459 = vpop.f32.mrb[0].mxu0
  %v6460 = vadd.f32 %v6383, %v6459
  %v6461 = vpop.f32.mrb[0].mxu0
  %v6462 = vadd.f32 %v6385, %v6461
  %6463 = vdwg.mxu0
  %6464 = vmatprep.subr.mxu0 %v6151
  %6465 = vmatpush1.msra.mxu0 %v6150
  %6466 = vmatprep.subr.mxu0 %v6153
  %6467 = vmatpush1.msra.mxu0 %v6152
  %6468 = vmatprep.subr.mxu0 %v6155
  %6469 = vmatpush1.msra.mxu0 %v6154
  %6470 = vmatprep.subr.mxu0 %v6157
  %6471 = vmatpush1.msra.mxu0 %v6156
  %6472 = vmatprep.subr.mxu0 %v6159
  %6473 = vmatpush1.msra.mxu0 %v6158
  %6474 = vmatprep.subr.mxu0 %v6161
  %6475 = vmatpush1.msra.mxu0 %v6160
  %6476 = vmatprep.subr.mxu0 %v6163
  %6477 = vmatpush1.msra.mxu0 %v6162
  %6478 = vmatprep.subr.mxu0 %v6165
  %6479 = vmatpush1.msra.mxu0 %v6164
  %6480 = vmatprep.subr.mxu0 %v6167
  %6481 = vmatpush1.msra.mxu0 %v6166
  %6482 = vmatprep.subr.mxu0 %v6169
  %6483 = vmatpush1.msra.mxu0 %v6168
  %6484 = vmatprep.subr.mxu0 %v6171
  %6485 = vmatpush1.msra.mxu0 %v6170
  %6486 = vmatprep.subr.mxu0 %v6173
  %6487 = vmatpush1.msra.mxu0 %v6172
  %6488 = vmatprep.subr.mxu0 %v6175
  %6489 = vmatpush1.msra.mxu0 %v6174
  %6490 = vmatprep.subr.mxu0 %v6177
  %6491 = vmatpush1.msra.mxu0 %v6176
  %6492 = vmatprep.subr.mxu0 %v6179
  %6493 = vmatpush1.msra.mxu0 %v6178
  %6494 = vmatprep.subr.mxu0 %v6181
  %6495 = vmatpush1.msra.mxu0 %v6180
  %6496 = vmatprep.subr.mxu0 %v6183
  %6497 = vmatpush1.msra.mxu0 %v6182
  %6498 = vmatprep.subr.mxu0 %v6185
  %6499 = vmatpush1.msra.mxu0 %v6184
  %6500 = vmatprep.subr.mxu0 %v6187
  %6501 = vmatpush1.msra.mxu0 %v6186
  %6502 = vmatprep.subr.mxu0 %v6189
  %6503 = vmatpush1.msra.mxu0 %v6188
  %6504 = vmatprep.subr.mxu0 %v6191
  %6505 = vmatpush1.msra.mxu0 %v6190
  %6506 = vmatprep.subr.mxu0 %v6193
  %6507 = vmatpush1.msra.mxu0 %v6192
  %6508 = vmatprep.subr.mxu0 %v6195
  %6509 = vmatpush1.msra.mxu0 %v6194
  %6510 = vmatprep.subr.mxu0 %v6197
  %6511 = vmatpush1.msra.mxu0 %v6196
  %6512 = vmatprep.subr.mxu0 %v6199
  %6513 = vmatpush1.msra.mxu0 %v6198
  %6514 = vmatprep.subr.mxu0 %v6201
  %6515 = vmatpush1.msra.mxu0 %v6200
  %6516 = vmatprep.subr.mxu0 %v6203
  %6517 = vmatpush1.msra.mxu0 %v6202
  %6518 = vmatprep.subr.mxu0 %v6205
  %6519 = vmatpush1.msra.mxu0 %v6204
  %6520 = vmatprep.subr.mxu0 %v6207
  %6521 = vmatpush1.msra.mxu0 %v6206
  %6522 = vmatprep.subr.mxu0 %v6209
  %6523 = vmatpush1.msra.mxu0 %v6208
  %6524 = vmatprep.subr.mxu0 %v6211
  %6525 = vmatpush1.msra.mxu0 %v6210
  %6526 = vmatprep.subr.mxu0 %v6213
  %6527 = vmatpush1.msra.mxu0 %v6212
  %6528 = vmatprep.mubr.f32.mxu0 %v6307
  %6529 = vmatmul.mubr.f32.gmra.mrb[0].mxu0 %v6306
  %v6530 = vpop.f32.mrb[0].mxu0
  %v6531 = vadd.f32 %v6454, %v6530
  %v6532 = vpop.f32.mrb[0].mxu0
  %v6533 = vadd.f32 %v6456, %v6532
  %6534 = vmatprep.mubr.f32.mxu0 %v6291
  %6535 = vmatmul.mubr.f32.gmra.mrb[0].mxu0 %v6290
  %v6536 = vpop.f32.mrb[0].mxu0
  %v6537 = vadd.f32 %v6460, %v6536
  %v6538 = vpop.f32.mrb[0].mxu0
  %v6539 = vadd.f32 %v6462, %v6538
  %6540 = vdwg.mxu0
  %6541 = vmatprep.subr.mxu0 %v6215
  %6542 = vmatpush1.msra.mxu0 %v6214
  %6543 = vmatprep.subr.mxu0 %v6217
  %6544 = vmatpush1.msra.mxu0 %v6216
  %6545 = vmatprep.subr.mxu0 %v6219
  %6546 = vmatpush1.msra.mxu0 %v6218
  %6547 = vmatprep.subr.mxu0 %v6221
  %6548 = vmatpush1.msra.mxu0 %v6220
  %6549 = vmatprep.subr.mxu0 %v6223
  %6550 = vmatpush1.msra.mxu0 %v6222
  %6551 = vmatprep.subr.mxu0 %v6225
  %6552 = vmatpush1.msra.mxu0 %v6224
  %6553 = vmatprep.subr.mxu0 %v6227
  %6554 = vmatpush1.msra.mxu0 %v6226
  %6555 = vmatprep.subr.mxu0 %v6229
  %6556 = vmatpush1.msra.mxu0 %v6228
  %6557 = vmatprep.subr.mxu0 %v6231
  %6558 = vmatpush1.msra.mxu0 %v6230
  %6559 = vmatprep.subr.mxu0 %v6233
  %6560 = vmatpush1.msra.mxu0 %v6232
  %6561 = vmatprep.subr.mxu0 %v6235
  %6562 = vmatpush1.msra.mxu0 %v6234
  %6563 = vmatprep.subr.mxu0 %v6237
  %6564 = vmatpush1.msra.mxu0 %v6236
  %6565 = vmatprep.subr.mxu0 %v6239
  %6566 = vmatpush1.msra.mxu0 %v6238
  %6567 = vmatprep.subr.mxu0 %v6241
  %6568 = vmatpush1.msra.mxu0 %v6240
  %6569 = vmatprep.subr.mxu0 %v6243
  %6570 = vmatpush1.msra.mxu0 %v6242
  %6571 = vmatprep.subr.mxu0 %v6245
  %6572 = vmatpush1.msra.mxu0 %v6244
  %6573 = vmatprep.subr.mxu0 %v6247
  %6574 = vmatpush1.msra.mxu0 %v6246
  %6575 = vmatprep.subr.mxu0 %v6249
  %6576 = vmatpush1.msra.mxu0 %v6248
  %6577 = vmatprep.subr.mxu0 %v6251
  %6578 = vmatpush1.msra.mxu0 %v6250
  %6579 = vmatprep.subr.mxu0 %v6253
  %6580 = vmatpush1.msra.mxu0 %v6252
  %6581 = vmatprep.subr.mxu0 %v6255
  %6582 = vmatpush1.msra.mxu0 %v6254
  %6583 = vmatprep.subr.mxu0 %v6257
  %6584 = vmatpush1.msra.mxu0 %v6256
  %6585 = vmatprep.subr.mxu0 %v6259
  %6586 = vmatpush1.msra.mxu0 %v6258
  %6587 = vmatprep.subr.mxu0 %v6261
  %6588 = vmatpush1.msra.mxu0 %v6260
  %6589 = vmatprep.subr.mxu0 %v6263
  %6590 = vmatpush1.msra.mxu0 %v6262
  %6591 = vmatprep.subr.mxu0 %v6265
  %6592 = vmatpush1.msra.mxu0 %v6264
  %6593 = vmatprep.subr.mxu0 %v6267
  %6594 = vmatpush1.msra.mxu0 %v6266
  %6595 = vmatprep.subr.mxu0 %v6269
  %6596 = vmatpush1.msra.mxu0 %v6268
  %6597 = vmatprep.subr.mxu0 %v6271
  %6598 = vmatpush1.msra.mxu0 %v6270
  %6599 = vmatprep.subr.mxu0 %v6273
  %6600 = vmatpush1.msra.mxu0 %v6272
  %6601 = vmatprep.subr.mxu0 %v6275
  %6602 = vmatpush1.msra.mxu0 %v6274
  %6603 = vmatprep.subr.mxu0 %v6277
  %6604 = vmatpush1.msra.mxu0 %v6276
  %6605 = vmatprep.mubr.f32.mxu0 %v6309
  %6606 = vmatmul.mubr.f32.gmra.mrb[0].mxu0 %v6308
  %v6607 = vpop.f32.mrb[0].mxu0
  %v6608 = vadd.f32 %v6531, %v6607
  %v6609 = vpop.f32.mrb[0].mxu0
  %v6610 = vadd.f32 %v6533, %v6609
  %6611 = vmatprep.mubr.f32.mxu0 %v6293
  %6612 = vmatmul.mubr.f32.gmra.mrb[0].mxu0 %v6292
  %v6613 = vpop.f32.mrb[0].mxu0
  %v6614 = vadd.f32 %v6537, %v6613
  %v6615 = vpop.f32.mrb[0].mxu0
  %v6616 = vadd.f32 %v6539, %v6615
  %6617 = vdwg.mxu0
  %6618 = vst [vmem:[#allocation2] sm:$0x3f] %v6608
  %vm6619 = vcmask 553984
  %6620 = vst.msk [vmem:[#allocation2 + $0x8] sm:$0x3f] %vm6619, %v6610
  %vm6625 = vcmask 1041408
  %v6626 = vrot.slane %v6608, 6
  %v6627 = vrot.slane %v6614, 6
  %v6628 = vsel %vm6625, %v6626, %v6627
  %v6629 = vrot.slane %v6610, 6
  %v6630 = vrot.slane %v6616, 6
  %v6631 = vsel %vm6625, %v6629, %v6630
  %6632 = vrot.lane.b32.xlu0 %v6628, 68
  %v6633 = vpop.permute.xlu0 %6632
  %6634 = vrot.lane.b32.xlu0 %v6631, 68
  %v6635 = vpop.permute.xlu0 %6634
  %vm6636 = vcmask 556032
  %v6637 = vsel %vm6636, %v6633, %v6635
  %vm6641 = vcmask 1046048
  %6642 = vst.msk [vmem:[#allocation2 + $0x8] sm:$0x3f] %vm6641, %v6633
  %6643 = vst [vmem:[#allocation2 + $0x10] sm:$0x3f] %v6637
  %vm6644 = vcmask 62464
  %6645 = vst.msk [vmem:[#allocation2 + $0x18] sm:$0x3f] %vm6644, %v6635
  %vm6646 = vcmask 783424
  %6647 = vst.msk [vmem:[#allocation2 + $0x18] sm:$0x3f] %vm6646, 0.0
  %v6648 = vld [vmem:[#allocation2] sm:$0x3f]
  %v6649 = vld [vmem:[#allocation2 + $0x8] sm:$0x3f]
  %v6650 = vld [vmem:[#allocation2 + $0x10] sm:$0x3f]
  %v6651 = vld [vmem:[#allocation2 + $0x18] sm:$0x3f]
  %v6656 = vrot.slane %v6648, 2
  %v6657 = vrot.slane %v6649, 2
  %v6658 = vrot.slane %v6650, 2
  %v6659 = vrot.slane %v6651, 2
  %6660 = vrot.lane.b32.xlu0 %v6656, 127
  %v6661 = vpop.permute.xlu0 %6660
  %6662 = vrot.lane.b32.xlu0 %v6657, 127
  %v6663 = vpop.permute.xlu0 %6662
  %6664 = vrot.lane.b32.xlu0 %v6658, 127
  %v6665 = vpop.permute.xlu0 %6664
  %6666 = vrot.lane.b32.xlu0 %v6659, 127
  %v6667 = vpop.permute.xlu0 %6666
  %v6668 = vsel %vm1457, %v6661, %v6663
  %v6669 = vsel %vm1457, %v6663, %v6665
  %v6670 = vsel %vm1457, %v6665, %v6667
  %v6675 = vrot.slane %v6648, 4
  %v6676 = vrot.slane %v6649, 4
  %v6677 = vrot.slane %v6650, 4
  %v6678 = vrot.slane %v6651, 4
  %6679 = vrot.lane.b32.xlu0 %v6675, 126
  %v6680 = vpop.permute.xlu0 %6679
  %6681 = vrot.lane.b32.xlu0 %v6676, 126
  %v6682 = vpop.permute.xlu0 %6681
  %6683 = vrot.lane.b32.xlu0 %v6677, 126
  %v6684 = vpop.permute.xlu0 %6683
  %6685 = vrot.lane.b32.xlu0 %v6678, 126
  %v6686 = vpop.permute.xlu0 %6685
  %v6687 = vsel %vm1542, %v6680, %v6682
  %v6688 = vsel %vm1542, %v6682, %v6684
  %v6689 = vsel %vm1542, %v6684, %v6686
  %v6694 = vrot.slane %v6648, 6
  %v6695 = vrot.slane %v6649, 6
  %v6696 = vrot.slane %v6650, 6
  %v6697 = vrot.slane %v6651, 6
  %6698 = vrot.lane.b32.xlu0 %v6694, 125
  %v6699 = vpop.permute.xlu0 %6698
  %6700 = vrot.lane.b32.xlu0 %v6695, 125
  %v6701 = vpop.permute.xlu0 %6700
  %6702 = vrot.lane.b32.xlu0 %v6696, 125
  %v6703 = vpop.permute.xlu0 %6702
  %6704 = vrot.lane.b32.xlu0 %v6697, 125
  %v6705 = vpop.permute.xlu0 %6704
  %v6706 = vsel %vm1627, %v6699, %v6701
  %v6707 = vsel %vm1627, %v6701, %v6703
  %v6708 = vsel %vm1627, %v6703, %v6705
  %6713 = vrot.lane.b32.xlu0 %v6648, 124
  %v6714 = vpop.permute.xlu0 %6713
  %6715 = vrot.lane.b32.xlu0 %v6649, 124
  %v6716 = vpop.permute.xlu0 %6715
  %6717 = vrot.lane.b32.xlu0 %v6650, 124
  %v6718 = vpop.permute.xlu0 %6717
  %6719 = vrot.lane.b32.xlu0 %v6651, 124
  %v6720 = vpop.permute.xlu0 %6719
  %v6721 = vsel %vm1704, %v6714, %v6716
  %v6722 = vsel %vm1704, %v6716, %v6718
  %v6723 = vsel %vm1704, %v6718, %v6720
  %v6724 = vsel %vm1756, %v6648, %v6668
  %v6725 = vsel %vm1756, %v6649, %v6669
  %v6726 = vsel %vm1756, %v6650, %v6670
  %v6727 = vsel %vm1756, %v6651, %v6667
  %v6728 = vsel %vm1792, %v6668, %v6687
  %v6729 = vsel %vm1792, %v6669, %v6688
  %v6730 = vsel %vm1792, %v6670, %v6689
  %v6731 = vsel %vm1792, %v6667, %v6686
  %v6732 = vsel %vm6625, %v6687, %v6706
  %v6733 = vsel %vm6625, %v6688, %v6707
  %v6734 = vsel %vm6625, %v6689, %v6708
  %v6735 = vsel %vm6625, %v6686, %v6705
  %v6736 = vld [vmem:[%s3] sm:$0xff]
  %v6737 = vld [vmem:[%s3 + $0x10] sm:$0xff]
  %6740 = vrot.lane.b32.xlu0 %v6736, 98
  %v6741 = vpop.permute.xlu0 %6740
  %6742 = vrot.lane.b32.xlu0 %v6737, 98
  %v6743 = vpop.permute.xlu0 %6742
  %6756 = vrot.lane.b32.xlu0 %v6724, 114
  %v6757 = vpop.permute.xlu0 %6756
  %6758 = vrot.lane.b32.xlu0 %v6725, 114
  %v6759 = vpop.permute.xlu0 %6758
  %6760 = vrot.lane.b32.xlu0 %v6726, 114
  %v6761 = vpop.permute.xlu0 %6760
  %6762 = vrot.lane.b32.xlu0 %v6727, 114
  %v6763 = vpop.permute.xlu0 %6762
  %6764 = vrot.lane.b32.xlu0 %v6728, 114
  %v6765 = vpop.permute.xlu0 %6764
  %6766 = vrot.lane.b32.xlu0 %v6729, 114
  %v6767 = vpop.permute.xlu0 %6766
  %6768 = vrot.lane.b32.xlu0 %v6730, 114
  %v6769 = vpop.permute.xlu0 %6768
  %6770 = vrot.lane.b32.xlu0 %v6731, 114
  %v6771 = vpop.permute.xlu0 %6770
  %6772 = vrot.lane.b32.xlu0 %v6732, 114
  %v6773 = vpop.permute.xlu0 %6772
  %6774 = vrot.lane.b32.xlu0 %v6733, 114
  %v6775 = vpop.permute.xlu0 %6774
  %6776 = vrot.lane.b32.xlu0 %v6734, 114
  %v6777 = vpop.permute.xlu0 %6776
  %6778 = vrot.lane.b32.xlu0 %v6735, 114
  %v6779 = vpop.permute.xlu0 %6778
  %6780 = vrot.lane.b32.xlu0 %v6721, 114
  %v6781 = vpop.permute.xlu0 %6780
  %6782 = vrot.lane.b32.xlu0 %v6722, 114
  %v6783 = vpop.permute.xlu0 %6782
  %6784 = vrot.lane.b32.xlu0 %v6723, 114
  %v6785 = vpop.permute.xlu0 %6784
  %6786 = vrot.lane.b32.xlu0 %v6720, 114
  %v6787 = vpop.permute.xlu0 %6786
  %vm6788 = vcmask 932864
  %v6789 = vsel %vm6788, %v6757, %v6759
  %v6790 = vsel %vm6788, %v6759, %v6761
  %v6791 = vsel %vm6788, %v6761, %v6763
  %v6792 = vsel %vm6788, %v6765, %v6767
  %v6793 = vsel %vm6788, %v6767, %v6769
  %v6794 = vsel %vm6788, %v6769, %v6771
  %v6795 = vsel %vm6788, %v6773, %v6775
  %v6796 = vsel %vm6788, %v6775, %v6777
  %v6797 = vsel %vm6788, %v6777, %v6779
  %v6798 = vsel %vm6788, %v6781, %v6783
  %v6799 = vsel %vm6788, %v6783, %v6785
  %v6800 = vsel %vm6788, %v6785, %v6787
  %vm6813 = vcmask 244736
  %v6814 = vsel %vm6813, %v6741, 0
  %v6816 = vsel %vm6813, %v6743, 0
  %v6818 = vsel %vm1756, %v6798, 0
  %v6820 = vsel %vm1756, %v6799, 0
  %v6822 = vsel %vm1756, %v6800, 0
  %v6824 = vsel %vm1756, %v6787, 0
  %6826 = vmatprep.subr.mxu0 %v6790
  %6827 = vmatpush1.msra.mxu0 %v6789
  %6828 = vmatprep.subr.mxu0 %v6793
  %6829 = vmatpush1.msra.mxu0 %v6792
  %6830 = vmatprep.subr.mxu0 %v6796
  %6831 = vmatpush1.msra.mxu0 %v6795
  %6832 = vmatprep.subr.mxu0 %v6820
  %6833 = vmatpush1.msra.mxu0 %v6818
  %6834 = vmatprep.subr.mxu0 0.0
  %6835 = vmatpush1.msra.mxu0 0.0
  %6836 = vmatprep.subr.mxu0 0.0
  %6837 = vmatpush1.msra.mxu0 0.0
  %6838 = vmatprep.subr.mxu0 0.0
  %6839 = vmatpush1.msra.mxu0 0.0
  %6840 = vmatprep.subr.mxu0 0.0
  %6841 = vmatpush1.msra.mxu0 0.0
  %6842 = vmatprep.subr.mxu0 0.0
  %6843 = vmatpush1.msra.mxu0 0.0
  %6844 = vmatprep.subr.mxu0 0.0
  %6845 = vmatpush1.msra.mxu0 0.0
  %6846 = vmatprep.subr.mxu0 0.0
  %6847 = vmatpush1.msra.mxu0 0.0
  %6848 = vmatprep.subr.mxu0 0.0
  %6849 = vmatpush1.msra.mxu0 0.0
  %6850 = vmatprep.subr.mxu0 0.0
  %6851 = vmatpush1.msra.mxu0 0.0
  %6852 = vmatprep.subr.mxu0 0.0
  %6853 = vmatpush1.msra.mxu0 0.0
  %6854 = vmatprep.subr.mxu0 0.0
  %6855 = vmatpush1.msra.mxu0 0.0
  %6856 = vmatprep.subr.mxu0 0.0
  %6857 = vmatpush1.msra.mxu0 0.0
  %6858 = vmatprep.subr.mxu0 0.0
  %6859 = vmatpush1.msra.mxu0 0.0
  %6860 = vmatprep.subr.mxu0 0.0
  %6861 = vmatpush1.msra.mxu0 0.0
  %6862 = vmatprep.subr.mxu0 0.0
  %6863 = vmatpush1.msra.mxu0 0.0
  %6864 = vmatprep.subr.mxu0 0.0
  %6865 = vmatpush1.msra.mxu0 0.0
  %6866 = vmatprep.subr.mxu0 0.0
  %6867 = vmatpush1.msra.mxu0 0.0
  %6868 = vmatprep.subr.mxu0 0.0
  %6869 = vmatpush1.msra.mxu0 0.0
  %6870 = vmatprep.subr.mxu0 0.0
  %6871 = vmatpush1.msra.mxu0 0.0
  %6872 = vmatprep.subr.mxu0 0.0
  %6873 = vmatpush1.msra.mxu0 0.0
  %6874 = vmatprep.subr.mxu0 0.0
  %6875 = vmatpush1.msra.mxu0 0.0
  %6876 = vmatprep.subr.mxu0 0.0
  %6877 = vmatpush1.msra.mxu0 0.0
  %6878 = vmatprep.subr.mxu0 0.0
  %6879 = vmatpush1.msra.mxu0 0.0
  %6880 = vmatprep.subr.mxu0 0.0
  %6881 = vmatpush1.msra.mxu0 0.0
  %6882 = vmatprep.subr.mxu0 0.0
  %6883 = vmatpush1.msra.mxu0 0.0
  %6884 = vmatprep.subr.mxu0 0.0
  %6885 = vmatpush1.msra.mxu0 0.0
  %6886 = vmatprep.subr.mxu0 0.0
  %6887 = vmatpush1.msra.mxu0 0.0
  %6888 = vmatprep.subr.mxu0 0.0
  %6889 = vmatpush1.msra.mxu0 0.0
  %6890 = vmatprep.mubr.f32.mxu0 0.0
  %6891 = vmatmul.mubr.f32.gmra.mrb[0].mxu0 %v6814
  %v6892 = vpop.f32.mrb[0].mxu0
  %v6893 = vadd.f32 0.0, %v6892
  %v6894 = vpop.f32.mrb[0].mxu0
  %v6895 = vadd.f32 0.0, %v6894
  %6896 = vmatprep.mubr.f32.mxu0 0.0
  %6897 = vmatmul.mubr.f32.gmra.mrb[0].mxu0 %v6816
  %v6898 = vpop.f32.mrb[0].mxu0
  %v6899 = vadd.f32 0.0, %v6898
  %v6900 = vpop.f32.mrb[0].mxu0
  %v6901 = vadd.f32 0.0, %v6900
  %6902 = vdwg.mxu0
  %6903 = vmatprep.subr.mxu0 %v6763
  %6904 = vmatpush1.msra.mxu0 %v6791
  %6905 = vmatprep.subr.mxu0 %v6771
  %6906 = vmatpush1.msra.mxu0 %v6794
  %6907 = vmatprep.subr.mxu0 %v6779
  %6908 = vmatpush1.msra.mxu0 %v6797
  %6909 = vmatprep.subr.mxu0 %v6824
  %6910 = vmatpush1.msra.mxu0 %v6822
  %6911 = vmatprep.subr.mxu0 0.0
  %6912 = vmatpush1.msra.mxu0 0.0
  %6913 = vmatprep.subr.mxu0 0.0
  %6914 = vmatpush1.msra.mxu0 0.0
  %6915 = vmatprep.subr.mxu0 0.0
  %6916 = vmatpush1.msra.mxu0 0.0
  %6917 = vmatprep.subr.mxu0 0.0
  %6918 = vmatpush1.msra.mxu0 0.0
  %6919 = vmatprep.subr.mxu0 0.0
  %6920 = vmatpush1.msra.mxu0 0.0
  %6921 = vmatprep.subr.mxu0 0.0
  %6922 = vmatpush1.msra.mxu0 0.0
  %6923 = vmatprep.subr.mxu0 0.0
  %6924 = vmatpush1.msra.mxu0 0.0
  %6925 = vmatprep.subr.mxu0 0.0
  %6926 = vmatpush1.msra.mxu0 0.0
  %6927 = vmatprep.subr.mxu0 0.0
  %6928 = vmatpush1.msra.mxu0 0.0
  %6929 = vmatprep.subr.mxu0 0.0
  %6930 = vmatpush1.msra.mxu0 0.0
  %6931 = vmatprep.subr.mxu0 0.0
  %6932 = vmatpush1.msra.mxu0 0.0
  %6933 = vmatprep.subr.mxu0 0.0
  %6934 = vmatpush1.msra.mxu0 0.0
  %6935 = vmatprep.subr.mxu0 0.0
  %6936 = vmatpush1.msra.mxu0 0.0
  %6937 = vmatprep.subr.mxu0 0.0
  %6938 = vmatpush1.msra.mxu0 0.0
  %6939 = vmatprep.subr.mxu0 0.0
  %6940 = vmatpush1.msra.mxu0 0.0
  %6941 = vmatprep.subr.mxu0 0.0
  %6942 = vmatpush1.msra.mxu0 0.0
  %6943 = vmatprep.subr.mxu0 0.0
  %6944 = vmatpush1.msra.mxu0 0.0
  %6945 = vmatprep.subr.mxu0 0.0
  %6946 = vmatpush1.msra.mxu0 0.0
  %6947 = vmatprep.subr.mxu0 0.0
  %6948 = vmatpush1.msra.mxu0 0.0
  %6949 = vmatprep.subr.mxu0 0.0
  %6950 = vmatpush1.msra.mxu0 0.0
  %6951 = vmatprep.subr.mxu0 0.0
  %6952 = vmatpush1.msra.mxu0 0.0
  %6953 = vmatprep.subr.mxu0 0.0
  %6954 = vmatpush1.msra.mxu0 0.0
  %6955 = vmatprep.subr.mxu0 0.0
  %6956 = vmatpush1.msra.mxu0 0.0
  %6957 = vmatprep.subr.mxu0 0.0
  %6958 = vmatpush1.msra.mxu0 0.0
  %6959 = vmatprep.subr.mxu0 0.0
  %6960 = vmatpush1.msra.mxu0 0.0
  %6961 = vmatprep.subr.mxu0 0.0
  %6962 = vmatpush1.msra.mxu0 0.0
  %6963 = vmatprep.subr.mxu0 0.0
  %6964 = vmatpush1.msra.mxu0 0.0
  %6965 = vmatprep.subr.mxu0 0.0
  %6966 = vmatpush1.msra.mxu0 0.0
  %6967 = vmatprep.mubr.f32.mxu0 0.0
  %6968 = vmatmul.mubr.f32.gmra.mrb[0].mxu0 %v6814
  %v6969 = vpop.f32.mrb[0].mxu0
  %v6970 = vadd.f32 0.0, %v6969
  %v6971 = vpop.f32.mrb[0].mxu0
  %v6972 = vadd.f32 0.0, %v6971
  %6973 = vmatprep.mubr.f32.mxu0 0.0
  %6974 = vmatmul.mubr.f32.gmra.mrb[0].mxu0 %v6816
  %v6975 = vpop.f32.mrb[0].mxu0
  %v6976 = vadd.f32 0.0, %v6975
  %v6977 = vpop.f32.mrb[0].mxu0
  %v6978 = vadd.f32 0.0, %v6977
  %6979 = vdwg.mxu0
  %v6980 = vsel %vm6813, %v6736, 0
  %v6982 = vsel %vm6813, %v6737, 0
  %v6984 = vsel %vm1756, %v6721, 0
  %v6986 = vsel %vm1756, %v6722, 0
  %v6988 = vsel %vm1756, %v6723, 0
  %v6990 = vsel %vm1756, %v6720, 0
  %6992 = vmatprep.subr.mxu0 %v6725
  %6993 = vmatpush1.msra.mxu0 %v6724
  %6994 = vmatprep.subr.mxu0 %v6729
  %6995 = vmatpush1.msra.mxu0 %v6728
  %6996 = vmatprep.subr.mxu0 %v6733
  %6997 = vmatpush1.msra.mxu0 %v6732
  %6998 = vmatprep.subr.mxu0 %v6986
  %6999 = vmatpush1.msra.mxu0 %v6984
  %7000 = vmatprep.subr.mxu0 0.0
  %7001 = vmatpush1.msra.mxu0 0.0
  %7002 = vmatprep.subr.mxu0 0.0
  %7003 = vmatpush1.msra.mxu0 0.0
  %7004 = vmatprep.subr.mxu0 0.0
  %7005 = vmatpush1.msra.mxu0 0.0
  %7006 = vmatprep.subr.mxu0 0.0
  %7007 = vmatpush1.msra.mxu0 0.0
  %7008 = vmatprep.subr.mxu0 0.0
  %7009 = vmatpush1.msra.mxu0 0.0
  %7010 = vmatprep.subr.mxu0 0.0
  %7011 = vmatpush1.msra.mxu0 0.0
  %7012 = vmatprep.subr.mxu0 0.0
  %7013 = vmatpush1.msra.mxu0 0.0
  %7014 = vmatprep.subr.mxu0 0.0
  %7015 = vmatpush1.msra.mxu0 0.0
  %7016 = vmatprep.subr.mxu0 0.0
  %7017 = vmatpush1.msra.mxu0 0.0
  %7018 = vmatprep.subr.mxu0 0.0
  %7019 = vmatpush1.msra.mxu0 0.0
  %7020 = vmatprep.subr.mxu0 0.0
  %7021 = vmatpush1.msra.mxu0 0.0
  %7022 = vmatprep.subr.mxu0 0.0
  %7023 = vmatpush1.msra.mxu0 0.0
  %7024 = vmatprep.subr.mxu0 0.0
  %7025 = vmatpush1.msra.mxu0 0.0
  %7026 = vmatprep.subr.mxu0 0.0
  %7027 = vmatpush1.msra.mxu0 0.0
  %7028 = vmatprep.subr.mxu0 0.0
  %7029 = vmatpush1.msra.mxu0 0.0
  %7030 = vmatprep.subr.mxu0 0.0
  %7031 = vmatpush1.msra.mxu0 0.0
  %7032 = vmatprep.subr.mxu0 0.0
  %7033 = vmatpush1.msra.mxu0 0.0
  %7034 = vmatprep.subr.mxu0 0.0
  %7035 = vmatpush1.msra.mxu0 0.0
  %7036 = vmatprep.subr.mxu0 0.0
  %7037 = vmatpush1.msra.mxu0 0.0
  %7038 = vmatprep.subr.mxu0 0.0
  %7039 = vmatpush1.msra.mxu0 0.0
  %7040 = vmatprep.subr.mxu0 0.0
  %7041 = vmatpush1.msra.mxu0 0.0
  %7042 = vmatprep.subr.mxu0 0.0
  %7043 = vmatpush1.msra.mxu0 0.0
  %7044 = vmatprep.subr.mxu0 0.0
  %7045 = vmatpush1.msra.mxu0 0.0
  %7046 = vmatprep.subr.mxu0 0.0
  %7047 = vmatpush1.msra.mxu0 0.0
  %7048 = vmatprep.subr.mxu0 0.0
  %7049 = vmatpush1.msra.mxu0 0.0
  %7050 = vmatprep.subr.mxu0 0.0
  %7051 = vmatpush1.msra.mxu0 0.0
  %7052 = vmatprep.subr.mxu0 0.0
  %7053 = vmatpush1.msra.mxu0 0.0
  %7054 = vmatprep.subr.mxu0 0.0
  %7055 = vmatpush1.msra.mxu0 0.0
  %7056 = vmatprep.mubr.f32.mxu0 0.0
  %7057 = vmatmul.mubr.f32.gmra.mrb[0].mxu0 %v6980
  %v7058 = vpop.f32.mrb[0].mxu0
  %v7059 = vadd.f32 %v6893, %v7058
  %v7060 = vpop.f32.mrb[0].mxu0
  %v7061 = vadd.f32 %v6895, %v7060
  %7062 = vmatprep.mubr.f32.mxu0 0.0
  %7063 = vmatmul.mubr.f32.gmra.mrb[0].mxu0 %v6982
  %v7064 = vpop.f32.mrb[0].mxu0
  %v7065 = vadd.f32 %v6899, %v7064
  %v7066 = vpop.f32.mrb[0].mxu0
  %v7067 = vadd.f32 %v6901, %v7066
  %7068 = vdwg.mxu0
  %7069 = vmatprep.subr.mxu0 %v6727
  %7070 = vmatpush1.msra.mxu0 %v6726
  %7071 = vmatprep.subr.mxu0 %v6731
  %7072 = vmatpush1.msra.mxu0 %v6730
  %7073 = vmatprep.subr.mxu0 %v6735
  %7074 = vmatpush1.msra.mxu0 %v6734
  %7075 = vmatprep.subr.mxu0 %v6990
  %7076 = vmatpush1.msra.mxu0 %v6988
  %7077 = vmatprep.subr.mxu0 0.0
  %7078 = vmatpush1.msra.mxu0 0.0
  %7079 = vmatprep.subr.mxu0 0.0
  %7080 = vmatpush1.msra.mxu0 0.0
  %7081 = vmatprep.subr.mxu0 0.0
  %7082 = vmatpush1.msra.mxu0 0.0
  %7083 = vmatprep.subr.mxu0 0.0
  %7084 = vmatpush1.msra.mxu0 0.0
  %7085 = vmatprep.subr.mxu0 0.0
  %7086 = vmatpush1.msra.mxu0 0.0
  %7087 = vmatprep.subr.mxu0 0.0
  %7088 = vmatpush1.msra.mxu0 0.0
  %7089 = vmatprep.subr.mxu0 0.0
  %7090 = vmatpush1.msra.mxu0 0.0
  %7091 = vmatprep.subr.mxu0 0.0
  %7092 = vmatpush1.msra.mxu0 0.0
  %7093 = vmatprep.subr.mxu0 0.0
  %7094 = vmatpush1.msra.mxu0 0.0
  %7095 = vmatprep.subr.mxu0 0.0
  %7096 = vmatpush1.msra.mxu0 0.0
  %7097 = vmatprep.subr.mxu0 0.0
  %7098 = vmatpush1.msra.mxu0 0.0
  %7099 = vmatprep.subr.mxu0 0.0
  %7100 = vmatpush1.msra.mxu0 0.0
  %7101 = vmatprep.subr.mxu0 0.0
  %7102 = vmatpush1.msra.mxu0 0.0
  %7103 = vmatprep.subr.mxu0 0.0
  %7104 = vmatpush1.msra.mxu0 0.0
  %7105 = vmatprep.subr.mxu0 0.0
  %7106 = vmatpush1.msra.mxu0 0.0
  %7107 = vmatprep.subr.mxu0 0.0
  %7108 = vmatpush1.msra.mxu0 0.0
  %7109 = vmatprep.subr.mxu0 0.0
  %7110 = vmatpush1.msra.mxu0 0.0
  %7111 = vmatprep.subr.mxu0 0.0
  %7112 = vmatpush1.msra.mxu0 0.0
  %7113 = vmatprep.subr.mxu0 0.0
  %7114 = vmatpush1.msra.mxu0 0.0
  %7115 = vmatprep.subr.mxu0 0.0
  %7116 = vmatpush1.msra.mxu0 0.0
  %7117 = vmatprep.subr.mxu0 0.0
  %7118 = vmatpush1.msra.mxu0 0.0
  %7119 = vmatprep.subr.mxu0 0.0
  %7120 = vmatpush1.msra.mxu0 0.0
  %7121 = vmatprep.subr.mxu0 0.0
  %7122 = vmatpush1.msra.mxu0 0.0
  %7123 = vmatprep.subr.mxu0 0.0
  %7124 = vmatpush1.msra.mxu0 0.0
  %7125 = vmatprep.subr.mxu0 0.0
  %7126 = vmatpush1.msra.mxu0 0.0
  %7127 = vmatprep.subr.mxu0 0.0
  %7128 = vmatpush1.msra.mxu0 0.0
  %7129 = vmatprep.subr.mxu0 0.0
  %7130 = vmatpush1.msra.mxu0 0.0
  %7131 = vmatprep.subr.mxu0 0.0
  %7132 = vmatpush1.msra.mxu0 0.0
  %7133 = vmatprep.mubr.f32.mxu0 0.0
  %7134 = vmatmul.mubr.f32.gmra.mrb[0].mxu0 %v6980
  %v7135 = vpop.f32.mrb[0].mxu0
  %v7136 = vadd.f32 %v6970, %v7135
  %v7137 = vpop.f32.mrb[0].mxu0
  %v7138 = vadd.f32 %v6972, %v7137
  %7139 = vmatprep.mubr.f32.mxu0 0.0
  %7140 = vmatmul.mubr.f32.gmra.mrb[0].mxu0 %v6982
  %v7141 = vpop.f32.mrb[0].mxu0
  %v7142 = vadd.f32 %v6976, %v7141
  %v7143 = vpop.f32.mrb[0].mxu0
  %v7144 = vadd.f32 %v6978, %v7143
  %7145 = vdwg.mxu0
  %7146 = vrot.lane.b32.xlu0 %v6736, 68
  %v7147 = vpop.permute.xlu0 %7146
  %7148 = vrot.lane.b32.xlu0 %v6737, 68
  %v7149 = vpop.permute.xlu0 %7148
  %7150 = vrot.lane.b32.xlu0 %v6724, 100
  %v7151 = vpop.permute.xlu0 %7150
  %7152 = vrot.lane.b32.xlu0 %v6725, 100
  %v7153 = vpop.permute.xlu0 %7152
  %7154 = vrot.lane.b32.xlu0 %v6726, 100
  %v7155 = vpop.permute.xlu0 %7154
  %7156 = vrot.lane.b32.xlu0 %v6727, 100
  %v7157 = vpop.permute.xlu0 %7156
  %7158 = vrot.lane.b32.xlu0 %v6728, 100
  %v7159 = vpop.permute.xlu0 %7158
  %7160 = vrot.lane.b32.xlu0 %v6729, 100
  %v7161 = vpop.permute.xlu0 %7160
  %7162 = vrot.lane.b32.xlu0 %v6730, 100
  %v7163 = vpop.permute.xlu0 %7162
  %7164 = vrot.lane.b32.xlu0 %v6731, 100
  %v7165 = vpop.permute.xlu0 %7164
  %7166 = vrot.lane.b32.xlu0 %v6732, 100
  %v7167 = vpop.permute.xlu0 %7166
  %7168 = vrot.lane.b32.xlu0 %v6733, 100
  %v7169 = vpop.permute.xlu0 %7168
  %7170 = vrot.lane.b32.xlu0 %v6734, 100
  %v7171 = vpop.permute.xlu0 %7170
  %7172 = vrot.lane.b32.xlu0 %v6735, 100
  %v7173 = vpop.permute.xlu0 %7172
  %7174 = vrot.lane.b32.xlu0 %v6721, 100
  %v7175 = vpop.permute.xlu0 %7174
  %7176 = vrot.lane.b32.xlu0 %v6722, 100
  %v7177 = vpop.permute.xlu0 %7176
  %7178 = vrot.lane.b32.xlu0 %v6723, 100
  %v7179 = vpop.permute.xlu0 %7178
  %7180 = vrot.lane.b32.xlu0 %v6720, 100
  %v7181 = vpop.permute.xlu0 %7180
  %vm7182 = vcmask 818176
  %v7183 = vsel %vm7182, %v7151, %v7153
  %v7184 = vsel %vm7182, %v7153, %v7155
  %v7185 = vsel %vm7182, %v7155, %v7157
  %v7186 = vsel %vm7182, %v7159, %v7161
  %v7187 = vsel %vm7182, %v7161, %v7163
  %v7188 = vsel %vm7182, %v7163, %v7165
  %v7189 = vsel %vm7182, %v7167, %v7169
  %v7190 = vsel %vm7182, %v7169, %v7171
  %v7191 = vsel %vm7182, %v7171, %v7173
  %v7192 = vsel %vm7182, %v7175, %v7177
  %v7193 = vsel %vm7182, %v7177, %v7179
  %v7194 = vsel %vm7182, %v7179, %v7181
  %v7207 = vsel %vm6813, %v7147, 0
  %v7209 = vsel %vm6813, %v7149, 0
  %v7211 = vsel %vm1756, %v7192, 0
  %v7213 = vsel %vm1756, %v7193, 0
  %v7215 = vsel %vm1756, %v7194, 0
  %v7217 = vsel %vm1756, %v7181, 0
  %7219 = vmatprep.subr.mxu0 %v7184
  %7220 = vmatpush1.msra.mxu0 %v7183
  %7221 = vmatprep.subr.mxu0 %v7187
  %7222 = vmatpush1.msra.mxu0 %v7186
  %7223 = vmatprep.subr.mxu0 %v7190
  %7224 = vmatpush1.msra.mxu0 %v7189
  %7225 = vmatprep.subr.mxu0 %v7213
  %7226 = vmatpush1.msra.mxu0 %v7211
  %7227 = vmatprep.subr.mxu0 0.0
  %7228 = vmatpush1.msra.mxu0 0.0
  %7229 = vmatprep.subr.mxu0 0.0
  %7230 = vmatpush1.msra.mxu0 0.0
  %7231 = vmatprep.subr.mxu0 0.0
  %7232 = vmatpush1.msra.mxu0 0.0
  %7233 = vmatprep.subr.mxu0 0.0
  %7234 = vmatpush1.msra.mxu0 0.0
  %7235 = vmatprep.subr.mxu0 0.0
  %7236 = vmatpush1.msra.mxu0 0.0
  %7237 = vmatprep.subr.mxu0 0.0
  %7238 = vmatpush1.msra.mxu0 0.0
  %7239 = vmatprep.subr.mxu0 0.0
  %7240 = vmatpush1.msra.mxu0 0.0
  %7241 = vmatprep.subr.mxu0 0.0
  %7242 = vmatpush1.msra.mxu0 0.0
  %7243 = vmatprep.subr.mxu0 0.0
  %7244 = vmatpush1.msra.mxu0 0.0
  %7245 = vmatprep.subr.mxu0 0.0
  %7246 = vmatpush1.msra.mxu0 0.0
  %7247 = vmatprep.subr.mxu0 0.0
  %7248 = vmatpush1.msra.mxu0 0.0
  %7249 = vmatprep.subr.mxu0 0.0
  %7250 = vmatpush1.msra.mxu0 0.0
  %7251 = vmatprep.subr.mxu0 0.0
  %7252 = vmatpush1.msra.mxu0 0.0
  %7253 = vmatprep.subr.mxu0 0.0
  %7254 = vmatpush1.msra.mxu0 0.0
  %7255 = vmatprep.subr.mxu0 0.0
  %7256 = vmatpush1.msra.mxu0 0.0
  %7257 = vmatprep.subr.mxu0 0.0
  %7258 = vmatpush1.msra.mxu0 0.0
  %7259 = vmatprep.subr.mxu0 0.0
  %7260 = vmatpush1.msra.mxu0 0.0
  %7261 = vmatprep.subr.mxu0 0.0
  %7262 = vmatpush1.msra.mxu0 0.0
  %7263 = vmatprep.subr.mxu0 0.0
  %7264 = vmatpush1.msra.mxu0 0.0
  %7265 = vmatprep.subr.mxu0 0.0
  %7266 = vmatpush1.msra.mxu0 0.0
  %7267 = vmatprep.subr.mxu0 0.0
  %7268 = vmatpush1.msra.mxu0 0.0
  %7269 = vmatprep.subr.mxu0 0.0
  %7270 = vmatpush1.msra.mxu0 0.0
  %7271 = vmatprep.subr.mxu0 0.0
  %7272 = vmatpush1.msra.mxu0 0.0
  %7273 = vmatprep.subr.mxu0 0.0
  %7274 = vmatpush1.msra.mxu0 0.0
  %7275 = vmatprep.subr.mxu0 0.0
  %7276 = vmatpush1.msra.mxu0 0.0
  %7277 = vmatprep.subr.mxu0 0.0
  %7278 = vmatpush1.msra.mxu0 0.0
  %7279 = vmatprep.subr.mxu0 0.0
  %7280 = vmatpush1.msra.mxu0 0.0
  %7281 = vmatprep.subr.mxu0 0.0
  %7282 = vmatpush1.msra.mxu0 0.0
  %7283 = vmatprep.mubr.f32.mxu0 0.0
  %7284 = vmatmul.mubr.f32.gmra.mrb[0].mxu0 %v7207
  %v7285 = vpop.f32.mrb[0].mxu0
  %v7286 = vadd.f32 0.0, %v7285
  %v7287 = vpop.f32.mrb[0].mxu0
  %v7288 = vadd.f32 0.0, %v7287
  %7289 = vmatprep.mubr.f32.mxu0 0.0
  %7290 = vmatmul.mubr.f32.gmra.mrb[0].mxu0 %v7209
  %v7291 = vpop.f32.mrb[0].mxu0
  %v7292 = vadd.f32 0.0, %v7291
  %v7293 = vpop.f32.mrb[0].mxu0
  %v7294 = vadd.f32 0.0, %v7293
  %7295 = vdwg.mxu0
  %7296 = vmatprep.subr.mxu0 %v7157
  %7297 = vmatpush1.msra.mxu0 %v7185
  %7298 = vmatprep.subr.mxu0 %v7165
  %7299 = vmatpush1.msra.mxu0 %v7188
  %7300 = vmatprep.subr.mxu0 %v7173
  %7301 = vmatpush1.msra.mxu0 %v7191
  %7302 = vmatprep.subr.mxu0 %v7217
  %7303 = vmatpush1.msra.mxu0 %v7215
  %7304 = vmatprep.subr.mxu0 0.0
  %7305 = vmatpush1.msra.mxu0 0.0
  %7306 = vmatprep.subr.mxu0 0.0
  %7307 = vmatpush1.msra.mxu0 0.0
  %7308 = vmatprep.subr.mxu0 0.0
  %7309 = vmatpush1.msra.mxu0 0.0
  %7310 = vmatprep.subr.mxu0 0.0
  %7311 = vmatpush1.msra.mxu0 0.0
  %7312 = vmatprep.subr.mxu0 0.0
  %7313 = vmatpush1.msra.mxu0 0.0
  %7314 = vmatprep.subr.mxu0 0.0
  %7315 = vmatpush1.msra.mxu0 0.0
  %7316 = vmatprep.subr.mxu0 0.0
  %7317 = vmatpush1.msra.mxu0 0.0
  %7318 = vmatprep.subr.mxu0 0.0
  %7319 = vmatpush1.msra.mxu0 0.0
  %7320 = vmatprep.subr.mxu0 0.0
  %7321 = vmatpush1.msra.mxu0 0.0
  %7322 = vmatprep.subr.mxu0 0.0
  %7323 = vmatpush1.msra.mxu0 0.0
  %7324 = vmatprep.subr.mxu0 0.0
  %7325 = vmatpush1.msra.mxu0 0.0
  %7326 = vmatprep.subr.mxu0 0.0
  %7327 = vmatpush1.msra.mxu0 0.0
  %7328 = vmatprep.subr.mxu0 0.0
  %7329 = vmatpush1.msra.mxu0 0.0
  %7330 = vmatprep.subr.mxu0 0.0
  %7331 = vmatpush1.msra.mxu0 0.0
  %7332 = vmatprep.subr.mxu0 0.0
  %7333 = vmatpush1.msra.mxu0 0.0
  %7334 = vmatprep.subr.mxu0 0.0
  %7335 = vmatpush1.msra.mxu0 0.0
  %7336 = vmatprep.subr.mxu0 0.0
  %7337 = vmatpush1.msra.mxu0 0.0
  %7338 = vmatprep.subr.mxu0 0.0
  %7339 = vmatpush1.msra.mxu0 0.0
  %7340 = vmatprep.subr.mxu0 0.0
  %7341 = vmatpush1.msra.mxu0 0.0
  %7342 = vmatprep.subr.mxu0 0.0
  %7343 = vmatpush1.msra.mxu0 0.0
  %7344 = vmatprep.subr.mxu0 0.0
  %7345 = vmatpush1.msra.mxu0 0.0
  %7346 = vmatprep.subr.mxu0 0.0
  %7347 = vmatpush1.msra.mxu0 0.0
  %7348 = vmatprep.subr.mxu0 0.0
  %7349 = vmatpush1.msra.mxu0 0.0
  %7350 = vmatprep.subr.mxu0 0.0
  %7351 = vmatpush1.msra.mxu0 0.0
  %7352 = vmatprep.subr.mxu0 0.0
  %7353 = vmatpush1.msra.mxu0 0.0
  %7354 = vmatprep.subr.mxu0 0.0
  %7355 = vmatpush1.msra.mxu0 0.0
  %7356 = vmatprep.subr.mxu0 0.0
  %7357 = vmatpush1.msra.mxu0 0.0
  %7358 = vmatprep.subr.mxu0 0.0
  %7359 = vmatpush1.msra.mxu0 0.0
  %7360 = vmatprep.mubr.f32.mxu0 0.0
  %7361 = vmatmul.mubr.f32.gmra.mrb[0].mxu0 %v7207
  %v7362 = vpop.f32.mrb[0].mxu0
  %v7363 = vadd.f32 0.0, %v7362
  %v7364 = vpop.f32.mrb[0].mxu0
  %v7365 = vadd.f32 0.0, %v7364
  %7366 = vmatprep.mubr.f32.mxu0 0.0
  %7367 = vmatmul.mubr.f32.gmra.mrb[0].mxu0 %v7209
  %v7368 = vpop.f32.mrb[0].mxu0
  %v7369 = vadd.f32 0.0, %v7368
  %v7370 = vpop.f32.mrb[0].mxu0
  %v7371 = vadd.f32 0.0, %v7370
  %7372 = vdwg.mxu0
  %v7373 = vadd.f32 %v7059, %v7286
  %v7374 = vadd.f32 %v7061, %v7288
  %v7375 = vadd.f32 %v7136, %v7363
  %v7376 = vadd.f32 %v7138, %v7365
  %v7377 = vadd.f32 %v7065, %v7292
  %v7378 = vadd.f32 %v7067, %v7294
  %v7379 = vadd.f32 %v7142, %v7369
  %v7380 = vadd.f32 %v7144, %v7371
  %7381 = vrot.lane.b32.xlu0 %v6736, 38
  %v7382 = vpop.permute.xlu0 %7381
  %7383 = vrot.lane.b32.xlu0 %v6737, 38
  %v7384 = vpop.permute.xlu0 %7383
  %7385 = vrot.lane.b32.xlu0 %v6724, 86
  %v7386 = vpop.permute.xlu0 %7385
  %7387 = vrot.lane.b32.xlu0 %v6725, 86
  %v7388 = vpop.permute.xlu0 %7387
  %7389 = vrot.lane.b32.xlu0 %v6726, 86
  %v7390 = vpop.permute.xlu0 %7389
  %7391 = vrot.lane.b32.xlu0 %v6727, 86
  %v7392 = vpop.permute.xlu0 %7391
  %7393 = vrot.lane.b32.xlu0 %v6728, 86
  %v7394 = vpop.permute.xlu0 %7393
  %7395 = vrot.lane.b32.xlu0 %v6729, 86
  %v7396 = vpop.permute.xlu0 %7395
  %7397 = vrot.lane.b32.xlu0 %v6730, 86
  %v7398 = vpop.permute.xlu0 %7397
  %7399 = vrot.lane.b32.xlu0 %v6731, 86
  %v7400 = vpop.permute.xlu0 %7399
  %7401 = vrot.lane.b32.xlu0 %v6732, 86
  %v7402 = vpop.permute.xlu0 %7401
  %7403 = vrot.lane.b32.xlu0 %v6733, 86
  %v7404 = vpop.permute.xlu0 %7403
  %7405 = vrot.lane.b32.xlu0 %v6734, 86
  %v7406 = vpop.permute.xlu0 %7405
  %7407 = vrot.lane.b32.xlu0 %v6735, 86
  %v7408 = vpop.permute.xlu0 %7407
  %7409 = vrot.lane.b32.xlu0 %v6721, 86
  %v7410 = vpop.permute.xlu0 %7409
  %7411 = vrot.lane.b32.xlu0 %v6722, 86
  %v7412 = vpop.permute.xlu0 %7411
  %7413 = vrot.lane.b32.xlu0 %v6723, 86
  %v7414 = vpop.permute.xlu0 %7413
  %7415 = vrot.lane.b32.xlu0 %v6720, 86
  %v7416 = vpop.permute.xlu0 %7415
  %vm7417 = vcmask 703488
  %v7418 = vsel %vm7417, %v7386, %v7388
  %v7419 = vsel %vm7417, %v7388, %v7390
  %v7420 = vsel %vm7417, %v7390, %v7392
  %v7421 = vsel %vm7417, %v7394, %v7396
  %v7422 = vsel %vm7417, %v7396, %v7398
  %v7423 = vsel %vm7417, %v7398, %v7400
  %v7424 = vsel %vm7417, %v7402, %v7404
  %v7425 = vsel %vm7417, %v7404, %v7406
  %v7426 = vsel %vm7417, %v7406, %v7408
  %v7427 = vsel %vm7417, %v7410, %v7412
  %v7428 = vsel %vm7417, %v7412, %v7414
  %v7429 = vsel %vm7417, %v7414, %v7416
  %v7442 = vsel %vm6813, %v7382, 0
  %v7444 = vsel %vm6813, %v7384, 0
  %v7446 = vsel %vm1756, %v7427, 0
  %v7448 = vsel %vm1756, %v7428, 0
  %v7450 = vsel %vm1756, %v7429, 0
  %v7452 = vsel %vm1756, %v7416, 0
  %7454 = vmatprep.subr.mxu0 %v7419
  %7455 = vmatpush1.msra.mxu0 %v7418
  %7456 = vmatprep.subr.mxu0 %v7422
  %7457 = vmatpush1.msra.mxu0 %v7421
  %7458 = vmatprep.subr.mxu0 %v7425
  %7459 = vmatpush1.msra.mxu0 %v7424
  %7460 = vmatprep.subr.mxu0 %v7448
  %7461 = vmatpush1.msra.mxu0 %v7446
  %7462 = vmatprep.subr.mxu0 0.0
  %7463 = vmatpush1.msra.mxu0 0.0
  %7464 = vmatprep.subr.mxu0 0.0
  %7465 = vmatpush1.msra.mxu0 0.0
  %7466 = vmatprep.subr.mxu0 0.0
  %7467 = vmatpush1.msra.mxu0 0.0
  %7468 = vmatprep.subr.mxu0 0.0
  %7469 = vmatpush1.msra.mxu0 0.0
  %7470 = vmatprep.subr.mxu0 0.0
  %7471 = vmatpush1.msra.mxu0 0.0
  %7472 = vmatprep.subr.mxu0 0.0
  %7473 = vmatpush1.msra.mxu0 0.0
  %7474 = vmatprep.subr.mxu0 0.0
  %7475 = vmatpush1.msra.mxu0 0.0
  %7476 = vmatprep.subr.mxu0 0.0
  %7477 = vmatpush1.msra.mxu0 0.0
  %7478 = vmatprep.subr.mxu0 0.0
  %7479 = vmatpush1.msra.mxu0 0.0
  %7480 = vmatprep.subr.mxu0 0.0
  %7481 = vmatpush1.msra.mxu0 0.0
  %7482 = vmatprep.subr.mxu0 0.0
  %7483 = vmatpush1.msra.mxu0 0.0
  %7484 = vmatprep.subr.mxu0 0.0
  %7485 = vmatpush1.msra.mxu0 0.0
  %7486 = vmatprep.subr.mxu0 0.0
  %7487 = vmatpush1.msra.mxu0 0.0
  %7488 = vmatprep.subr.mxu0 0.0
  %7489 = vmatpush1.msra.mxu0 0.0
  %7490 = vmatprep.subr.mxu0 0.0
  %7491 = vmatpush1.msra.mxu0 0.0
  %7492 = vmatprep.subr.mxu0 0.0
  %7493 = vmatpush1.msra.mxu0 0.0
  %7494 = vmatprep.subr.mxu0 0.0
  %7495 = vmatpush1.msra.mxu0 0.0
  %7496 = vmatprep.subr.mxu0 0.0
  %7497 = vmatpush1.msra.mxu0 0.0
  %7498 = vmatprep.subr.mxu0 0.0
  %7499 = vmatpush1.msra.mxu0 0.0
  %7500 = vmatprep.subr.mxu0 0.0
  %7501 = vmatpush1.msra.mxu0 0.0
  %7502 = vmatprep.subr.mxu0 0.0
  %7503 = vmatpush1.msra.mxu0 0.0
  %7504 = vmatprep.subr.mxu0 0.0
  %7505 = vmatpush1.msra.mxu0 0.0
  %7506 = vmatprep.subr.mxu0 0.0
  %7507 = vmatpush1.msra.mxu0 0.0
  %7508 = vmatprep.subr.mxu0 0.0
  %7509 = vmatpush1.msra.mxu0 0.0
  %7510 = vmatprep.subr.mxu0 0.0
  %7511 = vmatpush1.msra.mxu0 0.0
  %7512 = vmatprep.subr.mxu0 0.0
  %7513 = vmatpush1.msra.mxu0 0.0
  %7514 = vmatprep.subr.mxu0 0.0
  %7515 = vmatpush1.msra.mxu0 0.0
  %7516 = vmatprep.subr.mxu0 0.0
  %7517 = vmatpush1.msra.mxu0 0.0
  %7518 = vmatprep.mubr.f32.mxu0 0.0
  %7519 = vmatmul.mubr.f32.gmra.mrb[0].mxu0 %v7442
  %v7520 = vpop.f32.mrb[0].mxu0
  %v7521 = vadd.f32 0.0, %v7520
  %v7522 = vpop.f32.mrb[0].mxu0
  %v7523 = vadd.f32 0.0, %v7522
  %7524 = vmatprep.mubr.f32.mxu0 0.0
  %7525 = vmatmul.mubr.f32.gmra.mrb[0].mxu0 %v7444
  %v7526 = vpop.f32.mrb[0].mxu0
  %v7527 = vadd.f32 0.0, %v7526
  %v7528 = vpop.f32.mrb[0].mxu0
  %v7529 = vadd.f32 0.0, %v7528
  %7530 = vdwg.mxu0
  %7531 = vmatprep.subr.mxu0 %v7392
  %7532 = vmatpush1.msra.mxu0 %v7420
  %7533 = vmatprep.subr.mxu0 %v7400
  %7534 = vmatpush1.msra.mxu0 %v7423
  %7535 = vmatprep.subr.mxu0 %v7408
  %7536 = vmatpush1.msra.mxu0 %v7426
  %7537 = vmatprep.subr.mxu0 %v7452
  %7538 = vmatpush1.msra.mxu0 %v7450
  %7539 = vmatprep.subr.mxu0 0.0
  %7540 = vmatpush1.msra.mxu0 0.0
  %7541 = vmatprep.subr.mxu0 0.0
  %7542 = vmatpush1.msra.mxu0 0.0
  %7543 = vmatprep.subr.mxu0 0.0
  %7544 = vmatpush1.msra.mxu0 0.0
  %7545 = vmatprep.subr.mxu0 0.0
  %7546 = vmatpush1.msra.mxu0 0.0
  %7547 = vmatprep.subr.mxu0 0.0
  %7548 = vmatpush1.msra.mxu0 0.0
  %7549 = vmatprep.subr.mxu0 0.0
  %7550 = vmatpush1.msra.mxu0 0.0
  %7551 = vmatprep.subr.mxu0 0.0
  %7552 = vmatpush1.msra.mxu0 0.0
  %7553 = vmatprep.subr.mxu0 0.0
  %7554 = vmatpush1.msra.mxu0 0.0
  %7555 = vmatprep.subr.mxu0 0.0
  %7556 = vmatpush1.msra.mxu0 0.0
  %7557 = vmatprep.subr.mxu0 0.0
  %7558 = vmatpush1.msra.mxu0 0.0
  %7559 = vmatprep.subr.mxu0 0.0
  %7560 = vmatpush1.msra.mxu0 0.0
  %7561 = vmatprep.subr.mxu0 0.0
  %7562 = vmatpush1.msra.mxu0 0.0
  %7563 = vmatprep.subr.mxu0 0.0
  %7564 = vmatpush1.msra.mxu0 0.0
  %7565 = vmatprep.subr.mxu0 0.0
  %7566 = vmatpush1.msra.mxu0 0.0
  %7567 = vmatprep.subr.mxu0 0.0
  %7568 = vmatpush1.msra.mxu0 0.0
  %7569 = vmatprep.subr.mxu0 0.0
  %7570 = vmatpush1.msra.mxu0 0.0
  %7571 = vmatprep.subr.mxu0 0.0
  %7572 = vmatpush1.msra.mxu0 0.0
  %7573 = vmatprep.subr.mxu0 0.0
  %7574 = vmatpush1.msra.mxu0 0.0
  %7575 = vmatprep.subr.mxu0 0.0
  %7576 = vmatpush1.msra.mxu0 0.0
  %7577 = vmatprep.subr.mxu0 0.0
  %7578 = vmatpush1.msra.mxu0 0.0
  %7579 = vmatprep.subr.mxu0 0.0
  %7580 = vmatpush1.msra.mxu0 0.0
  %7581 = vmatprep.subr.mxu0 0.0
  %7582 = vmatpush1.msra.mxu0 0.0
  %7583 = vmatprep.subr.mxu0 0.0
  %7584 = vmatpush1.msra.mxu0 0.0
  %7585 = vmatprep.subr.mxu0 0.0
  %7586 = vmatpush1.msra.mxu0 0.0
  %7587 = vmatprep.subr.mxu0 0.0
  %7588 = vmatpush1.msra.mxu0 0.0
  %7589 = vmatprep.subr.mxu0 0.0
  %7590 = vmatpush1.msra.mxu0 0.0
  %7591 = vmatprep.subr.mxu0 0.0
  %7592 = vmatpush1.msra.mxu0 0.0
  %7593 = vmatprep.subr.mxu0 0.0
  %7594 = vmatpush1.msra.mxu0 0.0
  %7595 = vmatprep.mubr.f32.mxu0 0.0
  %7596 = vmatmul.mubr.f32.gmra.mrb[0].mxu0 %v7442
  %v7597 = vpop.f32.mrb[0].mxu0
  %v7598 = vadd.f32 0.0, %v7597
  %v7599 = vpop.f32.mrb[0].mxu0
  %v7600 = vadd.f32 0.0, %v7599
  %7601 = vmatprep.mubr.f32.mxu0 0.0
  %7602 = vmatmul.mubr.f32.gmra.mrb[0].mxu0 %v7444
  %v7603 = vpop.f32.mrb[0].mxu0
  %v7604 = vadd.f32 0.0, %v7603
  %v7605 = vpop.f32.mrb[0].mxu0
  %v7606 = vadd.f32 0.0, %v7605
  %7607 = vdwg.mxu0
  %v7608 = vadd.f32 %v7373, %v7521
  %v7609 = vadd.f32 %v7374, %v7523
  %v7610 = vadd.f32 %v7375, %v7598
  %v7611 = vadd.f32 %v7376, %v7600
  %v7612 = vadd.f32 %v7377, %v7527
  %v7613 = vadd.f32 %v7378, %v7529
  %v7614 = vadd.f32 %v7379, %v7604
  %v7615 = vadd.f32 %v7380, %v7606
  %v7616 = vld [vmem:[%s3] sm:$0xff]
  %v7617 = vld [vmem:[%s3 + $0x8] sm:$0xff]
  %v7618 = vld [vmem:[%s3 + $0x10] sm:$0xff]
  %v7619 = vld [vmem:[%s3 + $0x18] sm:$0xff]
  %7624 = vrot.lane.b32.xlu0 %v7616, 8
  %v7625 = vpop.permute.xlu0 %7624
  %7626 = vrot.lane.b32.xlu0 %v7617, 8
  %v7627 = vpop.permute.xlu0 %7626
  %7628 = vrot.lane.b32.xlu0 %v7618, 8
  %v7629 = vpop.permute.xlu0 %7628
  %7630 = vrot.lane.b32.xlu0 %v7619, 8
  %v7631 = vpop.permute.xlu0 %7630
  %vm7632 = vcmask 64512
  %v7633 = vsel %vm7632, %v7625, %v7627
  %v7634 = vsel %vm7632, %v7629, %v7631
  %7635 = vrot.lane.b32.xlu0 %v6724, 72
  %v7636 = vpop.permute.xlu0 %7635
  %7637 = vrot.lane.b32.xlu0 %v6725, 72
  %v7638 = vpop.permute.xlu0 %7637
  %7639 = vrot.lane.b32.xlu0 %v6726, 72
  %v7640 = vpop.permute.xlu0 %7639
  %7641 = vrot.lane.b32.xlu0 %v6727, 72
  %v7642 = vpop.permute.xlu0 %7641
  %7643 = vrot.lane.b32.xlu0 %v6728, 72
  %v7644 = vpop.permute.xlu0 %7643
  %7645 = vrot.lane.b32.xlu0 %v6729, 72
  %v7646 = vpop.permute.xlu0 %7645
  %7647 = vrot.lane.b32.xlu0 %v6730, 72
  %v7648 = vpop.permute.xlu0 %7647
  %7649 = vrot.lane.b32.xlu0 %v6731, 72
  %v7650 = vpop.permute.xlu0 %7649
  %7651 = vrot.lane.b32.xlu0 %v6732, 72
  %v7652 = vpop.permute.xlu0 %7651
  %7653 = vrot.lane.b32.xlu0 %v6733, 72
  %v7654 = vpop.permute.xlu0 %7653
  %7655 = vrot.lane.b32.xlu0 %v6734, 72
  %v7656 = vpop.permute.xlu0 %7655
  %7657 = vrot.lane.b32.xlu0 %v6735, 72
  %v7658 = vpop.permute.xlu0 %7657
  %7659 = vrot.lane.b32.xlu0 %v6721, 72
  %v7660 = vpop.permute.xlu0 %7659
  %7661 = vrot.lane.b32.xlu0 %v6722, 72
  %v7662 = vpop.permute.xlu0 %7661
  %7663 = vrot.lane.b32.xlu0 %v6723, 72
  %v7664 = vpop.permute.xlu0 %7663
  %7665 = vrot.lane.b32.xlu0 %v6720, 72
  %v7666 = vpop.permute.xlu0 %7665
  %vm7667 = vcmask 588800
  %v7668 = vsel %vm7667, %v7636, %v7638
  %v7669 = vsel %vm7667, %v7638, %v7640
  %v7670 = vsel %vm7667, %v7640, %v7642
  %v7671 = vsel %vm7667, %v7644, %v7646
  %v7672 = vsel %vm7667, %v7646, %v7648
  %v7673 = vsel %vm7667, %v7648, %v7650
  %v7674 = vsel %vm7667, %v7652, %v7654
  %v7675 = vsel %vm7667, %v7654, %v7656
  %v7676 = vsel %vm7667, %v7656, %v7658
  %v7677 = vsel %vm7667, %v7660, %v7662
  %v7678 = vsel %vm7667, %v7662, %v7664
  %v7679 = vsel %vm7667, %v7664, %v7666
  %v7692 = vsel %vm6813, %v7633, 0
  %v7694 = vsel %vm6813, %v7634, 0
  %v7696 = vsel %vm1756, %v7677, 0
  %v7698 = vsel %vm1756, %v7678, 0
  %v7700 = vsel %vm1756, %v7679, 0
  %v7702 = vsel %vm1756, %v7666, 0
  %7704 = vmatprep.subr.mxu0 %v7669
  %7705 = vmatpush1.msra.mxu0 %v7668
  %7706 = vmatprep.subr.mxu0 %v7672
  %7707 = vmatpush1.msra.mxu0 %v7671
  %7708 = vmatprep.subr.mxu0 %v7675
  %7709 = vmatpush1.msra.mxu0 %v7674
  %7710 = vmatprep.subr.mxu0 %v7698
  %7711 = vmatpush1.msra.mxu0 %v7696
  %7712 = vmatprep.subr.mxu0 0.0
  %7713 = vmatpush1.msra.mxu0 0.0
  %7714 = vmatprep.subr.mxu0 0.0
  %7715 = vmatpush1.msra.mxu0 0.0
  %7716 = vmatprep.subr.mxu0 0.0
  %7717 = vmatpush1.msra.mxu0 0.0
  %7718 = vmatprep.subr.mxu0 0.0
  %7719 = vmatpush1.msra.mxu0 0.0
  %7720 = vmatprep.subr.mxu0 0.0
  %7721 = vmatpush1.msra.mxu0 0.0
  %7722 = vmatprep.subr.mxu0 0.0
  %7723 = vmatpush1.msra.mxu0 0.0
  %7724 = vmatprep.subr.mxu0 0.0
  %7725 = vmatpush1.msra.mxu0 0.0
  %7726 = vmatprep.subr.mxu0 0.0
  %7727 = vmatpush1.msra.mxu0 0.0
  %7728 = vmatprep.subr.mxu0 0.0
  %7729 = vmatpush1.msra.mxu0 0.0
  %7730 = vmatprep.subr.mxu0 0.0
  %7731 = vmatpush1.msra.mxu0 0.0
  %7732 = vmatprep.subr.mxu0 0.0
  %7733 = vmatpush1.msra.mxu0 0.0
  %7734 = vmatprep.subr.mxu0 0.0
  %7735 = vmatpush1.msra.mxu0 0.0
  %7736 = vmatprep.subr.mxu0 0.0
  %7737 = vmatpush1.msra.mxu0 0.0
  %7738 = vmatprep.subr.mxu0 0.0
  %7739 = vmatpush1.msra.mxu0 0.0
  %7740 = vmatprep.subr.mxu0 0.0
  %7741 = vmatpush1.msra.mxu0 0.0
  %7742 = vmatprep.subr.mxu0 0.0
  %7743 = vmatpush1.msra.mxu0 0.0
  %7744 = vmatprep.subr.mxu0 0.0
  %7745 = vmatpush1.msra.mxu0 0.0
  %7746 = vmatprep.subr.mxu0 0.0
  %7747 = vmatpush1.msra.mxu0 0.0
  %7748 = vmatprep.subr.mxu0 0.0
  %7749 = vmatpush1.msra.mxu0 0.0
  %7750 = vmatprep.subr.mxu0 0.0
  %7751 = vmatpush1.msra.mxu0 0.0
  %7752 = vmatprep.subr.mxu0 0.0
  %7753 = vmatpush1.msra.mxu0 0.0
  %7754 = vmatprep.subr.mxu0 0.0
  %7755 = vmatpush1.msra.mxu0 0.0
  %7756 = vmatprep.subr.mxu0 0.0
  %7757 = vmatpush1.msra.mxu0 0.0
  %7758 = vmatprep.subr.mxu0 0.0
  %7759 = vmatpush1.msra.mxu0 0.0
  %7760 = vmatprep.subr.mxu0 0.0
  %7761 = vmatpush1.msra.mxu0 0.0
  %7762 = vmatprep.subr.mxu0 0.0
  %7763 = vmatpush1.msra.mxu0 0.0
  %7764 = vmatprep.subr.mxu0 0.0
  %7765 = vmatpush1.msra.mxu0 0.0
  %7766 = vmatprep.subr.mxu0 0.0
  %7767 = vmatpush1.msra.mxu0 0.0
  %7768 = vmatprep.mubr.f32.mxu0 0.0
  %7769 = vmatmul.mubr.f32.gmra.mrb[0].mxu0 %v7692
  %v7770 = vpop.f32.mrb[0].mxu0
  %v7771 = vadd.f32 0.0, %v7770
  %v7772 = vpop.f32.mrb[0].mxu0
  %v7773 = vadd.f32 0.0, %v7772
  %7774 = vmatprep.mubr.f32.mxu0 0.0
  %7775 = vmatmul.mubr.f32.gmra.mrb[0].mxu0 %v7694
  %v7776 = vpop.f32.mrb[0].mxu0
  %v7777 = vadd.f32 0.0, %v7776
  %v7778 = vpop.f32.mrb[0].mxu0
  %v7779 = vadd.f32 0.0, %v7778
  %7780 = vdwg.mxu0
  %7781 = vmatprep.subr.mxu0 %v7642
  %7782 = vmatpush1.msra.mxu0 %v7670
  %7783 = vmatprep.subr.mxu0 %v7650
  %7784 = vmatpush1.msra.mxu0 %v7673
  %7785 = vmatprep.subr.mxu0 %v7658
  %7786 = vmatpush1.msra.mxu0 %v7676
  %7787 = vmatprep.subr.mxu0 %v7702
  %7788 = vmatpush1.msra.mxu0 %v7700
  %7789 = vmatprep.subr.mxu0 0.0
  %7790 = vmatpush1.msra.mxu0 0.0
  %7791 = vmatprep.subr.mxu0 0.0
  %7792 = vmatpush1.msra.mxu0 0.0
  %7793 = vmatprep.subr.mxu0 0.0
  %7794 = vmatpush1.msra.mxu0 0.0
  %7795 = vmatprep.subr.mxu0 0.0
  %7796 = vmatpush1.msra.mxu0 0.0
  %7797 = vmatprep.subr.mxu0 0.0
  %7798 = vmatpush1.msra.mxu0 0.0
  %7799 = vmatprep.subr.mxu0 0.0
  %7800 = vmatpush1.msra.mxu0 0.0
  %7801 = vmatprep.subr.mxu0 0.0
  %7802 = vmatpush1.msra.mxu0 0.0
  %7803 = vmatprep.subr.mxu0 0.0
  %7804 = vmatpush1.msra.mxu0 0.0
  %7805 = vmatprep.subr.mxu0 0.0
  %7806 = vmatpush1.msra.mxu0 0.0
  %7807 = vmatprep.subr.mxu0 0.0
  %7808 = vmatpush1.msra.mxu0 0.0
  %7809 = vmatprep.subr.mxu0 0.0
  %7810 = vmatpush1.msra.mxu0 0.0
  %7811 = vmatprep.subr.mxu0 0.0
  %7812 = vmatpush1.msra.mxu0 0.0
  %7813 = vmatprep.subr.mxu0 0.0
  %7814 = vmatpush1.msra.mxu0 0.0
  %7815 = vmatprep.subr.mxu0 0.0
  %7816 = vmatpush1.msra.mxu0 0.0
  %7817 = vmatprep.subr.mxu0 0.0
  %7818 = vmatpush1.msra.mxu0 0.0
  %7819 = vmatprep.subr.mxu0 0.0
  %7820 = vmatpush1.msra.mxu0 0.0
  %7821 = vmatprep.subr.mxu0 0.0
  %7822 = vmatpush1.msra.mxu0 0.0
  %7823 = vmatprep.subr.mxu0 0.0
  %7824 = vmatpush1.msra.mxu0 0.0
  %7825 = vmatprep.subr.mxu0 0.0
  %7826 = vmatpush1.msra.mxu0 0.0
  %7827 = vmatprep.subr.mxu0 0.0
  %7828 = vmatpush1.msra.mxu0 0.0
  %7829 = vmatprep.subr.mxu0 0.0
  %7830 = vmatpush1.msra.mxu0 0.0
  %7831 = vmatprep.subr.mxu0 0.0
  %7832 = vmatpush1.msra.mxu0 0.0
  %7833 = vmatprep.subr.mxu0 0.0
  %7834 = vmatpush1.msra.mxu0 0.0
  %7835 = vmatprep.subr.mxu0 0.0
  %7836 = vmatpush1.msra.mxu0 0.0
  %7837 = vmatprep.subr.mxu0 0.0
  %7838 = vmatpush1.msra.mxu0 0.0
  %7839 = vmatprep.subr.mxu0 0.0
  %7840 = vmatpush1.msra.mxu0 0.0
  %7841 = vmatprep.subr.mxu0 0.0
  %7842 = vmatpush1.msra.mxu0 0.0
  %7843 = vmatprep.subr.mxu0 0.0
  %7844 = vmatpush1.msra.mxu0 0.0
  %7845 = vmatprep.mubr.f32.mxu0 0.0
  %7846 = vmatmul.mubr.f32.gmra.mrb[0].mxu0 %v7692
  %v7847 = vpop.f32.mrb[0].mxu0
  %v7848 = vadd.f32 0.0, %v7847
  %v7849 = vpop.f32.mrb[0].mxu0
  %v7850 = vadd.f32 0.0, %v7849
  %7851 = vmatprep.mubr.f32.mxu0 0.0
  %7852 = vmatmul.mubr.f32.gmra.mrb[0].mxu0 %v7694
  %v7853 = vpop.f32.mrb[0].mxu0
  %v7854 = vadd.f32 0.0, %v7853
  %v7855 = vpop.f32.mrb[0].mxu0
  %v7856 = vadd.f32 0.0, %v7855
  %7857 = vdwg.mxu0
  %v7858 = vadd.f32 %v7608, %v7771
  %v7859 = vadd.f32 %v7609, %v7773
  %v7860 = vadd.f32 %v7610, %v7848
  %v7861 = vadd.f32 %v7611, %v7850
  %v7862 = vadd.f32 %v7612, %v7777
  %v7863 = vadd.f32 %v7613, %v7779
  %v7864 = vadd.f32 %v7614, %v7854
  %v7865 = vadd.f32 %v7615, %v7856
  %v7866 = vld [vmem:[%s4] sm:$0xff]
  %v7867 = vld [vmem:[%s4 + $0x8] sm:$0xff]
  %7869 = vset.pattern.permute.xlu0 0
  %7870 = vperm.xlu0 %7869, %v7866
  %v7871 = vpop.permute.xlu0 %7870
  %7874 = vset.pattern.permute.xlu0 0
  %7875 = vperm.xlu0 %7874, %v7867
  %v7876 = vpop.permute.xlu0 %7875
  %v7878 = vadd.f32 %v7858, %v7871
  %v7879 = vadd.f32 %v7859, %v7871
  %v7880 = vadd.f32 %v7860, %v7871
  %v7881 = vadd.f32 %v7861, %v7871
  %v7882 = vadd.f32 %v7862, %v7876
  %v7883 = vadd.f32 %v7863, %v7876
  %v7884 = vadd.f32 %v7864, %v7876
  %v7885 = vadd.f32 %v7865, %v7876
  %v7886 = vmax.f32 %v7878, 0.0
  %v7887 = vmax.f32 %v7879, 0.0
  %v7888 = vmax.f32 %v7880, 0.0
  %v7889 = vmax.f32 %v7881, 0.0
  %v7890 = vmax.f32 %v7882, 0.0
  %v7891 = vmax.f32 %v7883, 0.0
  %v7892 = vmax.f32 %v7884, 0.0
  %v7893 = vmax.f32 %v7885, 0.0
  %7902 = vrot.lane.b32.xlu0 %v7886, 127
  %v7903 = vpop.permute.xlu0 %7902
  %7904 = vrot.lane.b32.xlu0 %v7887, 127
  %v7905 = vpop.permute.xlu0 %7904
  %7906 = vrot.lane.b32.xlu0 %v7888, 127
  %v7907 = vpop.permute.xlu0 %7906
  %7908 = vrot.lane.b32.xlu0 %v7889, 127
  %v7909 = vpop.permute.xlu0 %7908
  %7910 = vrot.lane.b32.xlu0 %v7890, 127
  %v7911 = vpop.permute.xlu0 %7910
  %7912 = vrot.lane.b32.xlu0 %v7891, 127
  %v7913 = vpop.permute.xlu0 %7912
  %7914 = vrot.lane.b32.xlu0 %v7892, 127
  %v7915 = vpop.permute.xlu0 %7914
  %7916 = vrot.lane.b32.xlu0 %v7893, 127
  %v7917 = vpop.permute.xlu0 %7916
  %v7918 = vsel %vm1457, %v7903, %v7905
  %v7919 = vsel %vm1457, %v7905, %v7907
  %v7920 = vsel %vm1457, %v7907, %v7909
  %v7921 = vsel %vm1457, %v7911, %v7913
  %v7922 = vsel %vm1457, %v7913, %v7915
  %v7923 = vsel %vm1457, %v7915, %v7917
  %v7932 = vmax.f32 %v7886, %v7918
  %v7933 = vmax.f32 %v7887, %v7919
  %v7934 = vmax.f32 %v7888, %v7920
  %v7935 = vmax.f32 %v7889, %v7909
  %v7936 = vmax.f32 %v7890, %v7921
  %v7937 = vmax.f32 %v7891, %v7922
  %v7938 = vmax.f32 %v7892, %v7923
  %v7939 = vmax.f32 %v7893, %v7917
  %7948 = vrot.lane.b32.xlu0 %v7932, 114
  %v7949 = vpop.permute.xlu0 %7948
  %7950 = vrot.lane.b32.xlu0 %v7933, 114
  %v7951 = vpop.permute.xlu0 %7950
  %7952 = vrot.lane.b32.xlu0 %v7934, 114
  %v7953 = vpop.permute.xlu0 %7952
  %7954 = vrot.lane.b32.xlu0 %v7935, 114
  %v7955 = vpop.permute.xlu0 %7954
  %7956 = vrot.lane.b32.xlu0 %v7936, 114
  %v7957 = vpop.permute.xlu0 %7956
  %7958 = vrot.lane.b32.xlu0 %v7937, 114
  %v7959 = vpop.permute.xlu0 %7958
  %7960 = vrot.lane.b32.xlu0 %v7938, 114
  %v7961 = vpop.permute.xlu0 %7960
  %7962 = vrot.lane.b32.xlu0 %v7939, 114
  %v7963 = vpop.permute.xlu0 %7962
  %v7964 = vsel %vm6788, %v7949, %v7951
  %v7965 = vsel %vm6788, %v7951, %v7953
  %v7966 = vsel %vm6788, %v7953, %v7955
  %v7967 = vsel %vm6788, %v7957, %v7959
  %v7968 = vsel %vm6788, %v7959, %v7961
  %v7969 = vsel %vm6788, %v7961, %v7963
  %v7978 = vmax.f32 %v7932, %v7964
  %v7979 = vmax.f32 %v7933, %v7965
  %v7980 = vmax.f32 %v7934, %v7966
  %v7981 = vmax.f32 %v7935, %v7955
  %v7982 = vmax.f32 %v7936, %v7967
  %v7983 = vmax.f32 %v7937, %v7968
  %v7984 = vmax.f32 %v7938, %v7969
  %v7985 = vmax.f32 %v7939, %v7963
  %s7986 = smul.u32 4, 49
  %s7987 = smul.u32 %s7986, 1
  %s7988 = sshll.u32 %s7987, 4
  %7989 = dma.done %s1110, %s7988
  %v7990 = vld [vmem:[#allocation5] sm:$0xf]
  %v7991 = vld [vmem:[#allocation5 + $0x4] sm:$0xf]
  %v7992 = vld [vmem:[#allocation5 + $0x8] sm:$0xf]
  %v7993 = vld [vmem:[#allocation5 + $0xc] sm:$0xf]
  %v7994 = vld [vmem:[#allocation5 + $0x10] sm:$0xf]
  %v7995 = vld [vmem:[#allocation5 + $0x14] sm:$0xf]
  %v7996 = vld [vmem:[#allocation5 + $0x18] sm:$0xf]
  %v7997 = vld [vmem:[#allocation5 + $0x1c] sm:$0xf]
  %v7998 = vld [vmem:[#allocation5 + $0x20] sm:$0xf]
  %v7999 = vld [vmem:[#allocation5 + $0x24] sm:$0xf]
  %v8000 = vld [vmem:[#allocation5 + $0x28] sm:$0xf]
  %v8001 = vld [vmem:[#allocation5 + $0x2c] sm:$0xf]
  %v8002 = vld [vmem:[#allocation5 + $0x30] sm:$0xf]
  %v8003 = vld [vmem:[#allocation5 + $0x34] sm:$0xf]
  %v8004 = vld [vmem:[#allocation5 + $0x38] sm:$0xf]
  %v8005 = vld [vmem:[#allocation5 + $0x3c] sm:$0xf]
  %v8006 = vld [vmem:[#allocation5 + $0x40] sm:$0xf]
  %v8007 = vld [vmem:[#allocation5 + $0x44] sm:$0xf]
  %v8008 = vld [vmem:[#allocation5 + $0x48] sm:$0xf]
  %v8009 = vld [vmem:[#allocation5 + $0x4c] sm:$0xf]
  %v8010 = vld [vmem:[#allocation5 + $0x50] sm:$0xf]
  %v8011 = vld [vmem:[#allocation5 + $0x54] sm:$0xf]
  %v8012 = vld [vmem:[#allocation5 + $0x58] sm:$0xf]
  %v8013 = vld [vmem:[#allocation5 + $0x5c] sm:$0xf]
  %v8014 = vld [vmem:[#allocation5 + $0x60] sm:$0xf]
  %v8015 = vld [vmem:[#allocation5 + $0x64] sm:$0xf]
  %v8016 = vld [vmem:[#allocation5 + $0x68] sm:$0xf]
  %v8017 = vld [vmem:[#allocation5 + $0x6c] sm:$0xf]
  %v8018 = vld [vmem:[#allocation5 + $0x70] sm:$0xf]
  %v8019 = vld [vmem:[#allocation5 + $0x74] sm:$0xf]
  %v8020 = vld [vmem:[#allocation5 + $0x78] sm:$0xf]
  %v8021 = vld [vmem:[#allocation5 + $0x7c] sm:$0xf]
  %v8022 = vld [vmem:[#allocation5 + $0x80] sm:$0xf]
  %v8023 = vld [vmem:[#allocation5 + $0x84] sm:$0xf]
  %v8024 = vld [vmem:[#allocation5 + $0x88] sm:$0xf]
  %v8025 = vld [vmem:[#allocation5 + $0x8c] sm:$0xf]
  %v8026 = vld [vmem:[#allocation5 + $0x90] sm:$0xf]
  %v8027 = vld [vmem:[#allocation5 + $0x94] sm:$0xf]
  %v8028 = vld [vmem:[#allocation5 + $0x98] sm:$0xf]
  %v8029 = vld [vmem:[#allocation5 + $0x9c] sm:$0xf]
  %v8030 = vld [vmem:[#allocation5 + $0xa0] sm:$0xf]
  %v8031 = vld [vmem:[#allocation5 + $0xa4] sm:$0xf]
  %v8032 = vld [vmem:[#allocation5 + $0xa8] sm:$0xf]
  %v8033 = vld [vmem:[#allocation5 + $0xac] sm:$0xf]
  %v8034 = vld [vmem:[#allocation5 + $0xb0] sm:$0xf]
  %v8035 = vld [vmem:[#allocation5 + $0xb4] sm:$0xf]
  %v8036 = vld [vmem:[#allocation5 + $0xb8] sm:$0xf]
  %v8037 = vld [vmem:[#allocation5 + $0xbc] sm:$0xf]
  %v8038 = vld [vmem:[#allocation5 + $0xc0] sm:$0xf]
  %v8039 = vunpack.c.l.bf16 %v7990
  %v8040 = vunpack.c.l.bf16 %v7991
  %v8041 = vunpack.c.l.bf16 %v7992
  %v8042 = vunpack.c.l.bf16 %v7993
  %v8043 = vunpack.c.l.bf16 %v7994
  %v8044 = vunpack.c.l.bf16 %v7995
  %v8045 = vunpack.c.l.bf16 %v7996
  %v8046 = vunpack.c.l.bf16 %v7997
  %v8047 = vunpack.c.l.bf16 %v7998
  %v8048 = vunpack.c.l.bf16 %v7999
  %v8049 = vunpack.c.l.bf16 %v8000
  %v8050 = vunpack.c.l.bf16 %v8001
  %v8051 = vunpack.c.l.bf16 %v8002
  %v8052 = vunpack.c.l.bf16 %v8003
  %v8053 = vunpack.c.l.bf16 %v8004
  %v8054 = vunpack.c.l.bf16 %v8005
  %v8055 = vunpack.c.l.bf16 %v8006
  %v8056 = vunpack.c.l.bf16 %v8007
  %v8057 = vunpack.c.l.bf16 %v8008
  %v8058 = vunpack.c.l.bf16 %v8009
  %v8059 = vunpack.c.l.bf16 %v8010
  %v8060 = vunpack.c.l.bf16 %v8011
  %v8061 = vunpack.c.l.bf16 %v8012
  %v8062 = vunpack.c.l.bf16 %v8013
  %v8063 = vunpack.c.l.bf16 %v8014
  %v8064 = vunpack.c.l.bf16 %v8015
  %v8065 = vunpack.c.l.bf16 %v8016
  %v8066 = vunpack.c.l.bf16 %v8017
  %v8067 = vunpack.c.l.bf16 %v8018
  %v8068 = vunpack.c.l.bf16 %v8019
  %v8069 = vunpack.c.l.bf16 %v8020
  %v8070 = vunpack.c.l.bf16 %v8021
  %v8071 = vunpack.c.l.bf16 %v8022
  %v8072 = vunpack.c.l.bf16 %v8023
  %v8073 = vunpack.c.l.bf16 %v8024
  %v8074 = vunpack.c.l.bf16 %v8025
  %v8075 = vunpack.c.l.bf16 %v8026
  %v8076 = vunpack.c.l.bf16 %v8027
  %v8077 = vunpack.c.l.bf16 %v8028
  %v8078 = vunpack.c.l.bf16 %v8029
  %v8079 = vunpack.c.l.bf16 %v8030
  %v8080 = vunpack.c.l.bf16 %v8031
  %v8081 = vunpack.c.l.bf16 %v8032
  %v8082 = vunpack.c.l.bf16 %v8033
  %v8083 = vunpack.c.l.bf16 %v8034
  %v8084 = vunpack.c.l.bf16 %v8035
  %v8085 = vunpack.c.l.bf16 %v8036
  %v8086 = vunpack.c.l.bf16 %v8037
  %v8087 = vunpack.c.l.bf16 %v8038
  %v8089 = vsel %vm7632, %v7981, 0
  %v8092 = vsel %vm7632, %v7985, 0
  %8094 = vmatprep.subr.mxu0 0.0
  %8095 = vmatpush1.msra.mxu0 %v8039
  %8096 = vmatprep.subr.mxu0 0.0
  %8097 = vmatpush1.msra.mxu0 %v8040
  %8098 = vmatprep.subr.mxu0 0.0
  %8099 = vmatpush1.msra.mxu0 %v8041
  %8100 = vmatprep.subr.mxu0 0.0
  %8101 = vmatpush1.msra.mxu0 %v8042
  %8102 = vmatprep.subr.mxu0 0.0
  %8103 = vmatpush1.msra.mxu0 %v8043
  %8104 = vmatprep.subr.mxu0 0.0
  %8105 = vmatpush1.msra.mxu0 %v8044
  %8106 = vmatprep.subr.mxu0 0.0
  %8107 = vmatpush1.msra.mxu0 %v8045
  %8108 = vmatprep.subr.mxu0 0.0
  %8109 = vmatpush1.msra.mxu0 %v8046
  %8110 = vmatprep.subr.mxu0 0.0
  %8111 = vmatpush1.msra.mxu0 %v8047
  %8112 = vmatprep.subr.mxu0 0.0
  %8113 = vmatpush1.msra.mxu0 %v8048
  %8114 = vmatprep.subr.mxu0 0.0
  %8115 = vmatpush1.msra.mxu0 %v8049
  %8116 = vmatprep.subr.mxu0 0.0
  %8117 = vmatpush1.msra.mxu0 %v8050
  %8118 = vmatprep.subr.mxu0 0.0
  %8119 = vmatpush1.msra.mxu0 %v8051
  %8120 = vmatprep.subr.mxu0 0.0
  %8121 = vmatpush1.msra.mxu0 %v8052
  %8122 = vmatprep.subr.mxu0 0.0
  %8123 = vmatpush1.msra.mxu0 %v8053
  %8124 = vmatprep.subr.mxu0 0.0
  %8125 = vmatpush1.msra.mxu0 %v8054
  %8126 = vmatprep.subr.mxu0 0.0
  %8127 = vmatpush1.msra.mxu0 %v8055
  %8128 = vmatprep.subr.mxu0 0.0
  %8129 = vmatpush1.msra.mxu0 %v8056
  %8130 = vmatprep.subr.mxu0 0.0
  %8131 = vmatpush1.msra.mxu0 %v8057
  %8132 = vmatprep.subr.mxu0 0.0
  %8133 = vmatpush1.msra.mxu0 %v8058
  %8134 = vmatprep.subr.mxu0 0.0
  %8135 = vmatpush1.msra.mxu0 %v8059
  %8136 = vmatprep.subr.mxu0 0.0
  %8137 = vmatpush1.msra.mxu0 %v8060
  %8138 = vmatprep.subr.mxu0 0.0
  %8139 = vmatpush1.msra.mxu0 %v8061
  %8140 = vmatprep.subr.mxu0 0.0
  %8141 = vmatpush1.msra.mxu0 %v8062
  %8142 = vmatprep.subr.mxu0 0.0
  %8143 = vmatpush1.msra.mxu0 %v8063
  %8144 = vmatprep.subr.mxu0 0.0
  %8145 = vmatpush1.msra.mxu0 %v8064
  %8146 = vmatprep.subr.mxu0 0.0
  %8147 = vmatpush1.msra.mxu0 %v8065
  %8148 = vmatprep.subr.mxu0 0.0
  %8149 = vmatpush1.msra.mxu0 %v8066
  %8150 = vmatprep.subr.mxu0 0.0
  %8151 = vmatpush1.msra.mxu0 %v8067
  %8152 = vmatprep.subr.mxu0 0.0
  %8153 = vmatpush1.msra.mxu0 %v8068
  %8154 = vmatprep.subr.mxu0 0.0
  %8155 = vmatpush1.msra.mxu0 %v8069
  %8156 = vmatprep.subr.mxu0 0.0
  %8157 = vmatpush1.msra.mxu0 %v8070
  %8158 = vmatprep.mubr.f32.mxu0 %v7979
  %8159 = vmatmul.mubr.f32.gmra.mrb[0].mxu0 %v7978
  %v8160 = vpop.f32.mrb[0].mxu0
  %v8161 = vadd.f32 0.0, %v8160
  %v8162 = vpop.f32.mrb[0].mxu0
  %8163 = vmatprep.mubr.f32.mxu0 %v7983
  %8164 = vmatmul.mubr.f32.gmra.mrb[0].mxu0 %v7982
  %v8165 = vpop.f32.mrb[0].mxu0
  %v8166 = vadd.f32 0.0, %v8165
  %v8167 = vpop.f32.mrb[0].mxu0
  %8168 = vdwg.mxu0
  %8169 = vmatprep.subr.mxu0 0.0
  %8170 = vmatpush1.msra.mxu0 %v8071
  %8171 = vmatprep.subr.mxu0 0.0
  %8172 = vmatpush1.msra.mxu0 %v8072
  %8173 = vmatprep.subr.mxu0 0.0
  %8174 = vmatpush1.msra.mxu0 %v8073
  %8175 = vmatprep.subr.mxu0 0.0
  %8176 = vmatpush1.msra.mxu0 %v8074
  %8177 = vmatprep.subr.mxu0 0.0
  %8178 = vmatpush1.msra.mxu0 %v8075
  %8179 = vmatprep.subr.mxu0 0.0
  %8180 = vmatpush1.msra.mxu0 %v8076
  %8181 = vmatprep.subr.mxu0 0.0
  %8182 = vmatpush1.msra.mxu0 %v8077
  %8183 = vmatprep.subr.mxu0 0.0
  %8184 = vmatpush1.msra.mxu0 %v8078
  %8185 = vmatprep.subr.mxu0 0.0
  %8186 = vmatpush1.msra.mxu0 %v8079
  %8187 = vmatprep.subr.mxu0 0.0
  %8188 = vmatpush1.msra.mxu0 %v8080
  %8189 = vmatprep.subr.mxu0 0.0
  %8190 = vmatpush1.msra.mxu0 %v8081
  %8191 = vmatprep.subr.mxu0 0.0
  %8192 = vmatpush1.msra.mxu0 %v8082
  %8193 = vmatprep.subr.mxu0 0.0
  %8194 = vmatpush1.msra.mxu0 %v8083
  %8195 = vmatprep.subr.mxu0 0.0
  %8196 = vmatpush1.msra.mxu0 %v8084
  %8197 = vmatprep.subr.mxu0 0.0
  %8198 = vmatpush1.msra.mxu0 %v8085
  %8199 = vmatprep.subr.mxu0 0.0
  %8200 = vmatpush1.msra.mxu0 %v8086
  %8201 = vmatprep.subr.mxu0 0.0
  %8202 = vmatpush1.msra.mxu0 %v8087
  %8203 = vmatprep.subr.mxu0 0.0
  %8204 = vmatpush1.msra.mxu0 0.0
  %8205 = vmatprep.subr.mxu0 0.0
  %8206 = vmatpush1.msra.mxu0 0.0
  %8207 = vmatprep.subr.mxu0 0.0
  %8208 = vmatpush1.msra.mxu0 0.0
  %8209 = vmatprep.subr.mxu0 0.0
  %8210 = vmatpush1.msra.mxu0 0.0
  %8211 = vmatprep.subr.mxu0 0.0
  %8212 = vmatpush1.msra.mxu0 0.0
  %8213 = vmatprep.subr.mxu0 0.0
  %8214 = vmatpush1.msra.mxu0 0.0
  %8215 = vmatprep.subr.mxu0 0.0
  %8216 = vmatpush1.msra.mxu0 0.0
  %8217 = vmatprep.subr.mxu0 0.0
  %8218 = vmatpush1.msra.mxu0 0.0
  %8219 = vmatprep.subr.mxu0 0.0
  %8220 = vmatpush1.msra.mxu0 0.0
  %8221 = vmatprep.subr.mxu0 0.0
  %8222 = vmatpush1.msra.mxu0 0.0
  %8223 = vmatprep.subr.mxu0 0.0
  %8224 = vmatpush1.msra.mxu0 0.0
  %8225 = vmatprep.subr.mxu0 0.0
  %8226 = vmatpush1.msra.mxu0 0.0
  %8227 = vmatprep.subr.mxu0 0.0
  %8228 = vmatpush1.msra.mxu0 0.0
  %8229 = vmatprep.subr.mxu0 0.0
  %8230 = vmatpush1.msra.mxu0 0.0
  %8231 = vmatprep.subr.mxu0 0.0
  %8232 = vmatpush1.msra.mxu0 0.0
  %8233 = vmatprep.mubr.f32.mxu0 %v8089
  %8234 = vmatmul.mubr.f32.gmra.mrb[0].mxu0 %v7980
  %v8235 = vpop.f32.mrb[0].mxu0
  %v8236 = vadd.f32 %v8161, %v8235
  %v8237 = vpop.f32.mrb[0].mxu0
  %8238 = vmatprep.mubr.f32.mxu0 %v8092
  %8239 = vmatmul.mubr.f32.gmra.mrb[0].mxu0 %v7984
  %v8240 = vpop.f32.mrb[0].mxu0
  %v8241 = vadd.f32 %v8166, %v8240
  %v8242 = vpop.f32.mrb[0].mxu0
  %8243 = vdwg.mxu0
  %vm8244 = vcmask 15360
  %8245 = vst.msk [vmem:[#allocation3] sm:$0xff] %vm8244, %v8236
  %8246 = vst.msk [vmem:[#allocation3 + $0x8] sm:$0xff] %vm8244, %v8241
  %8249 = vrot.lane.b32.xlu0 %v8236, 126
  %v8250 = vpop.permute.xlu0 %8249
  %8251 = vrot.lane.b32.xlu0 %v8241, 126
  %v8252 = vpop.permute.xlu0 %8251
  %8255 = vst.msk [vmem:[#allocation3 + $0x10] sm:$0xff] %vm8244, %v8250
  %8256 = vst.msk [vmem:[#allocation3 + $0x18] sm:$0xff] %vm8244, %v8252
  %8257 = vrot.lane.b32.xlu0 %v8236, 124
  %v8258 = vpop.permute.xlu0 %8257
  %8259 = vrot.lane.b32.xlu0 %v8241, 124
  %v8260 = vpop.permute.xlu0 %8259
  %8263 = vst.msk [vmem:[#allocation3 + $0x20] sm:$0xff] %vm8244, %v8258
  %8264 = vst.msk [vmem:[#allocation3 + $0x28] sm:$0xff] %vm8244, %v8260
  %8265 = vrot.lane.b32.xlu0 %v8236, 122
  %v8266 = vpop.permute.xlu0 %8265
  %8267 = vrot.lane.b32.xlu0 %v8241, 122
  %v8268 = vpop.permute.xlu0 %8267
  %8271 = vst.msk [vmem:[#allocation3 + $0x30] sm:$0xff] %vm8244, %v8266
  %8272 = vst.msk [vmem:[#allocation3 + $0x38] sm:$0xff] %vm8244, %v8268
  %8273 = vrot.lane.b32.xlu0 %v8236, 120
  %v8274 = vpop.permute.xlu0 %8273
  %8275 = vrot.lane.b32.xlu0 %v8241, 120
  %v8276 = vpop.permute.xlu0 %8275
  %8279 = vst.msk [vmem:[#allocation3 + $0x40] sm:$0xff] %vm8244, %v8274
  %8280 = vst.msk [vmem:[#allocation3 + $0x48] sm:$0xff] %vm8244, %v8276
  %8281 = vrot.lane.b32.xlu0 %v8236, 118
  %v8282 = vpop.permute.xlu0 %8281
  %8283 = vrot.lane.b32.xlu0 %v8241, 118
  %v8284 = vpop.permute.xlu0 %8283
  %8287 = vst.msk [vmem:[#allocation3 + $0x50] sm:$0xff] %vm8244, %v8282
  %8288 = vst.msk [vmem:[#allocation3 + $0x58] sm:$0xff] %vm8244, %v8284
  %8289 = vrot.lane.b32.xlu0 %v8236, 116
  %v8290 = vpop.permute.xlu0 %8289
  %8291 = vrot.lane.b32.xlu0 %v8241, 116
  %v8292 = vpop.permute.xlu0 %8291
  %8295 = vst.msk [vmem:[#allocation3 + $0x60] sm:$0xff] %vm8244, %v8290
  %8296 = vst.msk [vmem:[#allocation3 + $0x68] sm:$0xff] %vm8244, %v8292
  %8297 = vrot.lane.b32.xlu0 %v8236, 114
  %v8298 = vpop.permute.xlu0 %8297
  %8299 = vrot.lane.b32.xlu0 %v8241, 114
  %v8300 = vpop.permute.xlu0 %8299
  %8303 = vst.msk [vmem:[#allocation3 + $0x70] sm:$0xff] %vm8244, %v8298
  %8304 = vst.msk [vmem:[#allocation3 + $0x78] sm:$0xff] %vm8244, %v8300
  %8305 = vrot.lane.b32.xlu0 %v8236, 112
  %v8306 = vpop.permute.xlu0 %8305
  %8307 = vrot.lane.b32.xlu0 %v8241, 112
  %v8308 = vpop.permute.xlu0 %8307
  %8311 = vst.msk [vmem:[#allocation3 + $0x80] sm:$0xff] %vm8244, %v8306
  %8312 = vst.msk [vmem:[#allocation3 + $0x88] sm:$0xff] %vm8244, %v8308
  %8313 = vrot.lane.b32.xlu0 %v8236, 110
  %v8314 = vpop.permute.xlu0 %8313
  %8315 = vrot.lane.b32.xlu0 %v8241, 110
  %v8316 = vpop.permute.xlu0 %8315
  %8319 = vst.msk [vmem:[#allocation3 + $0x90] sm:$0xff] %vm8244, %v8314
  %8320 = vst.msk [vmem:[#allocation3 + $0x98] sm:$0xff] %vm8244, %v8316
  %8321 = vrot.lane.b32.xlu0 %v8236, 108
  %v8322 = vpop.permute.xlu0 %8321
  %8323 = vrot.lane.b32.xlu0 %v8241, 108
  %v8324 = vpop.permute.xlu0 %8323
  %8327 = vst.msk [vmem:[#allocation3 + $0xa0] sm:$0xff] %vm8244, %v8322
  %8328 = vst.msk [vmem:[#allocation3 + $0xa8] sm:$0xff] %vm8244, %v8324
  %8329 = vrot.lane.b32.xlu0 %v8236, 106
  %v8330 = vpop.permute.xlu0 %8329
  %8331 = vrot.lane.b32.xlu0 %v8241, 106
  %v8332 = vpop.permute.xlu0 %8331
  %8335 = vst.msk [vmem:[#allocation3 + $0xb0] sm:$0xff] %vm8244, %v8330
  %8336 = vst.msk [vmem:[#allocation3 + $0xb8] sm:$0xff] %vm8244, %v8332
  %8337 = vrot.lane.b32.xlu0 %v8236, 104
  %v8338 = vpop.permute.xlu0 %8337
  %8339 = vrot.lane.b32.xlu0 %v8241, 104
  %v8340 = vpop.permute.xlu0 %8339
  %8343 = vst.msk [vmem:[#allocation3 + $0xc0] sm:$0xff] %vm8244, %v8338
  %8344 = vst.msk [vmem:[#allocation3 + $0xc8] sm:$0xff] %vm8244, %v8340
  %8345 = vrot.lane.b32.xlu0 %v8236, 102
  %v8346 = vpop.permute.xlu0 %8345
  %8347 = vrot.lane.b32.xlu0 %v8241, 102
  %v8348 = vpop.permute.xlu0 %8347
  %8351 = vst.msk [vmem:[#allocation3 + $0xd0] sm:$0xff] %vm8244, %v8346
  %8352 = vst.msk [vmem:[#allocation3 + $0xd8] sm:$0xff] %vm8244, %v8348
  %8353 = vrot.lane.b32.xlu0 %v8236, 100
  %v8354 = vpop.permute.xlu0 %8353
  %8355 = vrot.lane.b32.xlu0 %v8241, 100
  %v8356 = vpop.permute.xlu0 %8355
  %8359 = vst.msk [vmem:[#allocation3 + $0xe0] sm:$0xff] %vm8244, %v8354
  %8360 = vst.msk [vmem:[#allocation3 + $0xe8] sm:$0xff] %vm8244, %v8356
  %8361 = vrot.lane.b32.xlu0 %v8236, 98
  %v8362 = vpop.permute.xlu0 %8361
  %8363 = vrot.lane.b32.xlu0 %v8241, 98
  %v8364 = vpop.permute.xlu0 %8363
  %8367 = vst.msk [vmem:[#allocation3 + $0xf0] sm:$0xff] %vm8244, %v8362
  %8368 = vst.msk [vmem:[#allocation3 + $0xf8] sm:$0xff] %vm8244, %v8364
  %8369 = vrot.lane.b32.xlu0 %v8236, 96
  %v8370 = vpop.permute.xlu0 %8369
  %8371 = vrot.lane.b32.xlu0 %v8241, 96
  %v8372 = vpop.permute.xlu0 %8371
  %8375 = vst.msk [vmem:[#allocation3 + $0x100] sm:$0xff] %vm8244, %v8370
  %8376 = vst.msk [vmem:[#allocation3 + $0x108] sm:$0xff] %vm8244, %v8372
  %8377 = vrot.lane.b32.xlu0 %v8236, 94
  %v8378 = vpop.permute.xlu0 %8377
  %8379 = vrot.lane.b32.xlu0 %v8241, 94
  %v8380 = vpop.permute.xlu0 %8379
  %8383 = vst.msk [vmem:[#allocation3 + $0x110] sm:$0xff] %vm8244, %v8378
  %8384 = vst.msk [vmem:[#allocation3 + $0x118] sm:$0xff] %vm8244, %v8380
  %8385 = vrot.lane.b32.xlu0 %v8236, 92
  %v8386 = vpop.permute.xlu0 %8385
  %8387 = vrot.lane.b32.xlu0 %v8241, 92
  %v8388 = vpop.permute.xlu0 %8387
  %8391 = vst.msk [vmem:[#allocation3 + $0x120] sm:$0xff] %vm8244, %v8386
  %8392 = vst.msk [vmem:[#allocation3 + $0x128] sm:$0xff] %vm8244, %v8388
  %8393 = vrot.lane.b32.xlu0 %v8236, 90
  %v8394 = vpop.permute.xlu0 %8393
  %8395 = vrot.lane.b32.xlu0 %v8241, 90
  %v8396 = vpop.permute.xlu0 %8395
  %8399 = vst.msk [vmem:[#allocation3 + $0x130] sm:$0xff] %vm8244, %v8394
  %8400 = vst.msk [vmem:[#allocation3 + $0x138] sm:$0xff] %vm8244, %v8396
  %8401 = vrot.lane.b32.xlu0 %v8236, 88
  %v8402 = vpop.permute.xlu0 %8401
  %8403 = vrot.lane.b32.xlu0 %v8241, 88
  %v8404 = vpop.permute.xlu0 %8403
  %8407 = vst.msk [vmem:[#allocation3 + $0x140] sm:$0xff] %vm8244, %v8402
  %8408 = vst.msk [vmem:[#allocation3 + $0x148] sm:$0xff] %vm8244, %v8404
  %8409 = vrot.lane.b32.xlu0 %v8236, 86
  %v8410 = vpop.permute.xlu0 %8409
  %8411 = vrot.lane.b32.xlu0 %v8241, 86
  %v8412 = vpop.permute.xlu0 %8411
  %8415 = vst.msk [vmem:[#allocation3 + $0x150] sm:$0xff] %vm8244, %v8410
  %8416 = vst.msk [vmem:[#allocation3 + $0x158] sm:$0xff] %vm8244, %v8412
  %8417 = vrot.lane.b32.xlu0 %v8236, 84
  %v8418 = vpop.permute.xlu0 %8417
  %8419 = vrot.lane.b32.xlu0 %v8241, 84
  %v8420 = vpop.permute.xlu0 %8419
  %8423 = vst.msk [vmem:[#allocation3 + $0x160] sm:$0xff] %vm8244, %v8418
  %8424 = vst.msk [vmem:[#allocation3 + $0x168] sm:$0xff] %vm8244, %v8420
  %8425 = vrot.lane.b32.xlu0 %v8236, 82
  %v8426 = vpop.permute.xlu0 %8425
  %8427 = vrot.lane.b32.xlu0 %v8241, 82
  %v8428 = vpop.permute.xlu0 %8427
  %8431 = vst.msk [vmem:[#allocation3 + $0x170] sm:$0xff] %vm8244, %v8426
  %8432 = vst.msk [vmem:[#allocation3 + $0x178] sm:$0xff] %vm8244, %v8428
  %8433 = vrot.lane.b32.xlu0 %v8236, 80
  %v8434 = vpop.permute.xlu0 %8433
  %8435 = vrot.lane.b32.xlu0 %v8241, 80
  %v8436 = vpop.permute.xlu0 %8435
  %8439 = vst.msk [vmem:[#allocation3 + $0x180] sm:$0xff] %vm8244, %v8434
  %8440 = vst.msk [vmem:[#allocation3 + $0x188] sm:$0xff] %vm8244, %v8436
  %s8441 = smul.u32 8, 15
  %s8442 = smul.u32 %s8441, 4
  %s8443 = sshll.u32 %s8442, 4
  %8444 = dma.done %s1211, %s8443
  %v8445 = vld [vmem:[#allocation6] sm:$0xff]
  %v8446 = vld [vmem:[#allocation6 + $0x8] sm:$0xff]
  %v8447 = vld [vmem:[#allocation6 + $0x10] sm:$0xff]
  %v8448 = vld [vmem:[#allocation6 + $0x18] sm:$0xff]
  %v8449 = vld [vmem:[#allocation6 + $0x20] sm:$0xff]
  %v8450 = vld [vmem:[#allocation6 + $0x28] sm:$0xff]
  %v8451 = vld [vmem:[#allocation6 + $0x30] sm:$0xff]
  %v8452 = vld [vmem:[#allocation6 + $0x38] sm:$0xff]
  %v8453 = vld [vmem:[#allocation6 + $0x40] sm:$0xff]
  %v8454 = vld [vmem:[#allocation6 + $0x48] sm:$0xff]
  %v8455 = vld [vmem:[#allocation6 + $0x50] sm:$0xff]
  %v8456 = vld [vmem:[#allocation6 + $0x58] sm:$0xff]
  %v8457 = vld [vmem:[#allocation6 + $0x60] sm:$0xff]
  %v8458 = vld [vmem:[#allocation6 + $0x68] sm:$0xff]
  %v8459 = vld [vmem:[#allocation6 + $0x70] sm:$0xff]
  %v8460 = vld [vmem:[#allocation6 + $0x78] sm:$0xff]
  %v8461 = vld [vmem:[#allocation6 + $0x80] sm:$0xff]
  %v8462 = vld [vmem:[#allocation6 + $0x88] sm:$0xff]
  %v8463 = vld [vmem:[#allocation6 + $0x90] sm:$0xff]
  %v8464 = vld [vmem:[#allocation6 + $0x98] sm:$0xff]
  %v8465 = vld [vmem:[#allocation6 + $0xa0] sm:$0xff]
  %v8466 = vld [vmem:[#allocation6 + $0xa8] sm:$0xff]
  %v8467 = vld [vmem:[#allocation6 + $0xb0] sm:$0xff]
  %v8468 = vld [vmem:[#allocation6 + $0xb8] sm:$0xff]
  %v8469 = vld [vmem:[#allocation6 + $0xc0] sm:$0xff]
  %v8470 = vld [vmem:[#allocation6 + $0xc8] sm:$0xff]
  %v8471 = vld [vmem:[#allocation6 + $0xd0] sm:$0xff]
  %v8472 = vld [vmem:[#allocation6 + $0xd8] sm:$0xff]
  %v8473 = vld [vmem:[#allocation6 + $0xe0] sm:$0xff]
  %v8474 = vld [vmem:[#allocation6 + $0xe8] sm:$0xff]
  %v8475 = vld [vmem:[#allocation6 + $0xf0] sm:$0xff]
  %v8476 = vld [vmem:[#allocation6 + $0xf8] sm:$0xff]
  %v8477 = vld [vmem:[#allocation6 + $0x100] sm:$0xff]
  %v8478 = vld [vmem:[#allocation6 + $0x108] sm:$0xff]
  %v8479 = vld [vmem:[#allocation6 + $0x110] sm:$0xff]
  %v8480 = vld [vmem:[#allocation6 + $0x118] sm:$0xff]
  %v8481 = vld [vmem:[#allocation6 + $0x120] sm:$0xff]
  %v8482 = vld [vmem:[#allocation6 + $0x128] sm:$0xff]
  %v8483 = vld [vmem:[#allocation6 + $0x130] sm:$0xff]
  %v8484 = vld [vmem:[#allocation6 + $0x138] sm:$0xff]
  %v8485 = vld [vmem:[#allocation6 + $0x140] sm:$0xff]
  %v8486 = vld [vmem:[#allocation6 + $0x148] sm:$0xff]
  %v8487 = vld [vmem:[#allocation6 + $0x150] sm:$0xff]
  %v8488 = vld [vmem:[#allocation6 + $0x158] sm:$0xff]
  %v8489 = vld [vmem:[#allocation6 + $0x160] sm:$0xff]
  %v8490 = vld [vmem:[#allocation6 + $0x168] sm:$0xff]
  %v8491 = vld [vmem:[#allocation6 + $0x170] sm:$0xff]
  %v8492 = vld [vmem:[#allocation6 + $0x178] sm:$0xff]
  %v8493 = vld [vmem:[#allocation6 + $0x180] sm:$0xff]
  %v8494 = vld [vmem:[#allocation6 + $0x188] sm:$0xff]
  %v8495 = vld [vmem:[#allocation6 + $0x190] sm:$0xff]
  %v8496 = vld [vmem:[#allocation6 + $0x198] sm:$0xff]
  %v8497 = vld [vmem:[#allocation6 + $0x1a0] sm:$0xff]
  %v8498 = vld [vmem:[#allocation6 + $0x1a8] sm:$0xff]
  %v8499 = vld [vmem:[#allocation6 + $0x1b0] sm:$0xff]
  %v8500 = vld [vmem:[#allocation6 + $0x1b8] sm:$0xff]
  %v8501 = vld [vmem:[#allocation6 + $0x1c0] sm:$0xff]
  %v8502 = vld [vmem:[#allocation6 + $0x1c8] sm:$0xff]
  %v8503 = vld [vmem:[#allocation6 + $0x1d0] sm:$0xff]
  %v8504 = vld [vmem:[#allocation6 + $0x1d8] sm:$0xff]
  %v8505 = vld [vmem:[#allocation3] sm:$0xff]
  %v8506 = vld [vmem:[#allocation3 + $0x8] sm:$0xff]
  %v8507 = vld [vmem:[#allocation3 + $0x10] sm:$0xff]
  %v8508 = vld [vmem:[#allocation3 + $0x18] sm:$0xff]
  %v8509 = vld [vmem:[#allocation3 + $0x20] sm:$0xff]
  %v8510 = vld [vmem:[#allocation3 + $0x28] sm:$0xff]
  %v8511 = vld [vmem:[#allocation3 + $0x30] sm:$0xff]
  %v8512 = vld [vmem:[#allocation3 + $0x38] sm:$0xff]
  %v8513 = vld [vmem:[#allocation3 + $0x40] sm:$0xff]
  %v8514 = vld [vmem:[#allocation3 + $0x48] sm:$0xff]
  %v8515 = vld [vmem:[#allocation3 + $0x50] sm:$0xff]
  %v8516 = vld [vmem:[#allocation3 + $0x58] sm:$0xff]
  %v8517 = vld [vmem:[#allocation3 + $0x60] sm:$0xff]
  %v8518 = vld [vmem:[#allocation3 + $0x68] sm:$0xff]
  %v8519 = vld [vmem:[#allocation3 + $0x70] sm:$0xff]
  %v8520 = vld [vmem:[#allocation3 + $0x78] sm:$0xff]
  %v8521 = vld [vmem:[#allocation3 + $0x80] sm:$0xff]
  %v8522 = vld [vmem:[#allocation3 + $0x88] sm:$0xff]
  %v8523 = vld [vmem:[#allocation3 + $0x90] sm:$0xff]
  %v8524 = vld [vmem:[#allocation3 + $0x98] sm:$0xff]
  %v8525 = vld [vmem:[#allocation3 + $0xa0] sm:$0xff]
  %v8526 = vld [vmem:[#allocation3 + $0xa8] sm:$0xff]
  %v8527 = vld [vmem:[#allocation3 + $0xb0] sm:$0xff]
  %v8528 = vld [vmem:[#allocation3 + $0xb8] sm:$0xff]
  %v8529 = vld [vmem:[#allocation3 + $0xc0] sm:$0xff]
  %v8530 = vld [vmem:[#allocation3 + $0xc8] sm:$0xff]
  %v8531 = vld [vmem:[#allocation3 + $0xd0] sm:$0xff]
  %v8532 = vld [vmem:[#allocation3 + $0xd8] sm:$0xff]
  %v8533 = vld [vmem:[#allocation3 + $0xe0] sm:$0xff]
  %v8534 = vld [vmem:[#allocation3 + $0xe8] sm:$0xff]
  %v8535 = vld [vmem:[#allocation3 + $0xf0] sm:$0xff]
  %v8536 = vld [vmem:[#allocation3 + $0xf8] sm:$0xff]
  %v8537 = vld [vmem:[#allocation3 + $0x100] sm:$0xff]
  %v8538 = vld [vmem:[#allocation3 + $0x108] sm:$0xff]
  %v8539 = vld [vmem:[#allocation3 + $0x110] sm:$0xff]
  %v8540 = vld [vmem:[#allocation3 + $0x118] sm:$0xff]
  %v8541 = vld [vmem:[#allocation3 + $0x120] sm:$0xff]
  %v8542 = vld [vmem:[#allocation3 + $0x128] sm:$0xff]
  %v8543 = vld [vmem:[#allocation3 + $0x130] sm:$0xff]
  %v8544 = vld [vmem:[#allocation3 + $0x138] sm:$0xff]
  %v8545 = vld [vmem:[#allocation3 + $0x140] sm:$0xff]
  %v8546 = vld [vmem:[#allocation3 + $0x148] sm:$0xff]
  %v8547 = vld [vmem:[#allocation3 + $0x150] sm:$0xff]
  %v8548 = vld [vmem:[#allocation3 + $0x158] sm:$0xff]
  %v8549 = vld [vmem:[#allocation3 + $0x160] sm:$0xff]
  %v8550 = vld [vmem:[#allocation3 + $0x168] sm:$0xff]
  %v8551 = vld [vmem:[#allocation3 + $0x170] sm:$0xff]
  %v8552 = vld [vmem:[#allocation3 + $0x178] sm:$0xff]
  %v8553 = vld [vmem:[#allocation3 + $0x180] sm:$0xff]
  %v8554 = vld [vmem:[#allocation3 + $0x188] sm:$0xff]
  %v8555 = vld [vmem:[%s5] sm:$0xff]
  %v8556 = vld [vmem:[%s5 + $0x8] sm:$0xff]
  %v8557 = vld [vmem:[%s5 + $0x10] sm:$0xff]
  %v8558 = vld [vmem:[%s5 + $0x18] sm:$0xff]
  %v8559 = vld [vmem:[%s5 + $0x20] sm:$0xff]
  %v8560 = vld [vmem:[%s5 + $0x28] sm:$0xff]
  %v8561 = vld [vmem:[%s5 + $0x30] sm:$0xff]
  %v8562 = vld [vmem:[%s5 + $0x38] sm:$0xff]
  %v8563 = vld [vmem:[%s5 + $0x40] sm:$0xff]
  %v8564 = vld [vmem:[%s5 + $0x48] sm:$0xff]
  %v8565 = vld [vmem:[%s5 + $0x50] sm:$0xff]
  %v8566 = vld [vmem:[%s5 + $0x58] sm:$0xff]
  %v8567 = vld [vmem:[%s5 + $0x60] sm:$0xff]
  %v8568 = vld [vmem:[%s5 + $0x68] sm:$0xff]
  %v8569 = vld [vmem:[%s5 + $0x70] sm:$0xff]
  %8571 = vset.pattern.permute.xlu0 0
  %8572 = vperm.xlu0 %8571, %v8555
  %v8573 = vpop.permute.xlu0 %8572
  %8576 = vset.pattern.permute.xlu0 0
  %8577 = vperm.xlu0 %8576, %v8556
  %v8578 = vpop.permute.xlu0 %8577
  %8581 = vset.pattern.permute.xlu0 0
  %8582 = vperm.xlu0 %8581, %v8557
  %v8583 = vpop.permute.xlu0 %8582
  %8586 = vset.pattern.permute.xlu0 0
  %8587 = vperm.xlu0 %8586, %v8558
  %v8588 = vpop.permute.xlu0 %8587
  %8591 = vset.pattern.permute.xlu0 0
  %8592 = vperm.xlu0 %8591, %v8559
  %v8593 = vpop.permute.xlu0 %8592
  %8596 = vset.pattern.permute.xlu0 0
  %8597 = vperm.xlu0 %8596, %v8560
  %v8598 = vpop.permute.xlu0 %8597
  %8601 = vset.pattern.permute.xlu0 0
  %8602 = vperm.xlu0 %8601, %v8561
  %v8603 = vpop.permute.xlu0 %8602
  %8606 = vset.pattern.permute.xlu0 0
  %8607 = vperm.xlu0 %8606, %v8562
  %v8608 = vpop.permute.xlu0 %8607
  %8611 = vset.pattern.permute.xlu0 0
  %8612 = vperm.xlu0 %8611, %v8563
  %v8613 = vpop.permute.xlu0 %8612
  %8616 = vset.pattern.permute.xlu0 0
  %8617 = vperm.xlu0 %8616, %v8564
  %v8618 = vpop.permute.xlu0 %8617
  %8621 = vset.pattern.permute.xlu0 0
  %8622 = vperm.xlu0 %8621, %v8565
  %v8623 = vpop.permute.xlu0 %8622
  %8626 = vset.pattern.permute.xlu0 0
  %8627 = vperm.xlu0 %8626, %v8566
  %v8628 = vpop.permute.xlu0 %8627
  %8631 = vset.pattern.permute.xlu0 0
  %8632 = vperm.xlu0 %8631, %v8567
  %v8633 = vpop.permute.xlu0 %8632
  %8636 = vset.pattern.permute.xlu0 0
  %8637 = vperm.xlu0 %8636, %v8568
  %v8638 = vpop.permute.xlu0 %8637
  %8641 = vset.pattern.permute.xlu0 0
  %8642 = vperm.xlu0 %8641, %v8569
  %v8643 = vpop.permute.xlu0 %8642
  %vm8645 = vcmask 130048
  %v8647 = vsel %vm8645, %v8448, 0
  %v8650 = vsel %vm8645, %v8452, 0
  %v8653 = vsel %vm8645, %v8456, 0
  %v8656 = vsel %vm8645, %v8460, 0
  %v8659 = vsel %vm8645, %v8464, 0
  %v8662 = vsel %vm8645, %v8468, 0
  %v8665 = vsel %vm8645, %v8472, 0
  %v8668 = vsel %vm8645, %v8476, 0
  %v8671 = vsel %vm8645, %v8480, 0
  %v8674 = vsel %vm8645, %v8484, 0
  %v8677 = vsel %vm8645, %v8488, 0
  %v8680 = vsel %vm8645, %v8492, 0
  %v8683 = vsel %vm8645, %v8496, 0
  %v8686 = vsel %vm8645, %v8500, 0
  %v8689 = vsel %vm8645, %v8504, 0
  %8691 = vmatprep.subr.mxu0 0.0
  %8692 = vmatpush1.msra.mxu0 %v8505
  %8693 = vmatprep.subr.mxu0 0.0
  %8694 = vmatpush1.msra.mxu0 %v8506
  %8695 = vmatprep.subr.mxu0 0.0
  %8696 = vmatpush1.msra.mxu0 %v8507
  %8697 = vmatprep.subr.mxu0 0.0
  %8698 = vmatpush1.msra.mxu0 %v8508
  %8699 = vmatprep.subr.mxu0 0.0
  %8700 = vmatpush1.msra.mxu0 %v8509
  %8701 = vmatprep.subr.mxu0 0.0
  %8702 = vmatpush1.msra.mxu0 %v8510
  %8703 = vmatprep.subr.mxu0 0.0
  %8704 = vmatpush1.msra.mxu0 %v8511
  %8705 = vmatprep.subr.mxu0 0.0
  %8706 = vmatpush1.msra.mxu0 %v8512
  %8707 = vmatprep.subr.mxu0 0.0
  %8708 = vmatpush1.msra.mxu0 %v8513
  %8709 = vmatprep.subr.mxu0 0.0
  %8710 = vmatpush1.msra.mxu0 %v8514
  %8711 = vmatprep.subr.mxu0 0.0
  %8712 = vmatpush1.msra.mxu0 %v8515
  %8713 = vmatprep.subr.mxu0 0.0
  %8714 = vmatpush1.msra.mxu0 %v8516
  %8715 = vmatprep.subr.mxu0 0.0
  %8716 = vmatpush1.msra.mxu0 %v8517
  %8717 = vmatprep.subr.mxu0 0.0
  %8718 = vmatpush1.msra.mxu0 %v8518
  %8719 = vmatprep.subr.mxu0 0.0
  %8720 = vmatpush1.msra.mxu0 %v8519
  %8721 = vmatprep.subr.mxu0 0.0
  %8722 = vmatpush1.msra.mxu0 %v8520
  %8723 = vmatprep.subr.mxu0 0.0
  %8724 = vmatpush1.msra.mxu0 %v8521
  %8725 = vmatprep.subr.mxu0 0.0
  %8726 = vmatpush1.msra.mxu0 %v8522
  %8727 = vmatprep.subr.mxu0 0.0
  %8728 = vmatpush1.msra.mxu0 %v8523
  %8729 = vmatprep.subr.mxu0 0.0
  %8730 = vmatpush1.msra.mxu0 %v8524
  %8731 = vmatprep.subr.mxu0 0.0
  %8732 = vmatpush1.msra.mxu0 %v8525
  %8733 = vmatprep.subr.mxu0 0.0
  %8734 = vmatpush1.msra.mxu0 %v8526
  %8735 = vmatprep.subr.mxu0 0.0
  %8736 = vmatpush1.msra.mxu0 %v8527
  %8737 = vmatprep.subr.mxu0 0.0
  %8738 = vmatpush1.msra.mxu0 %v8528
  %8739 = vmatprep.subr.mxu0 0.0
  %8740 = vmatpush1.msra.mxu0 %v8529
  %8741 = vmatprep.subr.mxu0 0.0
  %8742 = vmatpush1.msra.mxu0 %v8530
  %8743 = vmatprep.subr.mxu0 0.0
  %8744 = vmatpush1.msra.mxu0 %v8531
  %8745 = vmatprep.subr.mxu0 0.0
  %8746 = vmatpush1.msra.mxu0 %v8532
  %8747 = vmatprep.subr.mxu0 0.0
  %8748 = vmatpush1.msra.mxu0 %v8533
  %8749 = vmatprep.subr.mxu0 0.0
  %8750 = vmatpush1.msra.mxu0 %v8534
  %8751 = vmatprep.subr.mxu0 0.0
  %8752 = vmatpush1.msra.mxu0 %v8535
  %8753 = vmatprep.subr.mxu0 0.0
  %8754 = vmatpush1.msra.mxu0 %v8536
  %8755 = vmatprep.mubr.f32.mxu0 %v8446
  %8756 = vmatmul.mubr.f32.gmra.mrb[0].mxu0 %v8445
  %v8757 = vpop.f32.mrb[0].mxu0
  %v8758 = vadd.f32 %v8573, %v8757
  %v8759 = vpop.f32.mrb[0].mxu0
  %8760 = vmatprep.mubr.f32.mxu0 %v8450
  %8761 = vmatmul.mubr.f32.gmra.mrb[0].mxu0 %v8449
  %v8762 = vpop.f32.mrb[0].mxu0
  %v8763 = vadd.f32 %v8578, %v8762
  %v8764 = vpop.f32.mrb[0].mxu0
  %8765 = vmatprep.mubr.f32.mxu0 %v8454
  %8766 = vmatmul.mubr.f32.gmra.mrb[0].mxu0 %v8453
  %v8767 = vpop.f32.mrb[0].mxu0
  %v8768 = vadd.f32 %v8583, %v8767
  %v8769 = vpop.f32.mrb[0].mxu0
  %8770 = vmatprep.mubr.f32.mxu0 %v8458
  %8771 = vmatmul.mubr.f32.gmra.mrb[0].mxu0 %v8457
  %v8772 = vpop.f32.mrb[0].mxu0
  %v8773 = vadd.f32 %v8588, %v8772
  %v8774 = vpop.f32.mrb[0].mxu0
  %8775 = vmatprep.mubr.f32.mxu0 %v8462
  %8776 = vmatmul.mubr.f32.gmra.mrb[0].mxu0 %v8461
  %v8777 = vpop.f32.mrb[0].mxu0
  %v8778 = vadd.f32 %v8593, %v8777
  %v8779 = vpop.f32.mrb[0].mxu0
  %8780 = vmatprep.mubr.f32.mxu0 %v8466
  %8781 = vmatmul.mubr.f32.gmra.mrb[0].mxu0 %v8465
  %v8782 = vpop.f32.mrb[0].mxu0
  %v8783 = vadd.f32 %v8598, %v8782
  %v8784 = vpop.f32.mrb[0].mxu0
  %8785 = vmatprep.mubr.f32.mxu0 %v8470
  %8786 = vmatmul.mubr.f32.gmra.mrb[0].mxu0 %v8469
  %v8787 = vpop.f32.mrb[0].mxu0
  %v8788 = vadd.f32 %v8603, %v8787
  %v8789 = vpop.f32.mrb[0].mxu0
  %8790 = vmatprep.mubr.f32.mxu0 %v8474
  %8791 = vmatmul.mubr.f32.gmra.mrb[0].mxu0 %v8473
  %v8792 = vpop.f32.mrb[0].mxu0
  %v8793 = vadd.f32 %v8608, %v8792
  %v8794 = vpop.f32.mrb[0].mxu0
  %8795 = vmatprep.mubr.f32.mxu0 %v8478
  %8796 = vmatmul.mubr.f32.gmra.mrb[0].mxu0 %v8477
  %v8797 = vpop.f32.mrb[0].mxu0
  %v8798 = vadd.f32 %v8613, %v8797
  %v8799 = vpop.f32.mrb[0].mxu0
  %8800 = vmatprep.mubr.f32.mxu0 %v8482
  %8801 = vmatmul.mubr.f32.gmra.mrb[0].mxu0 %v8481
  %v8802 = vpop.f32.mrb[0].mxu0
  %v8803 = vadd.f32 %v8618, %v8802
  %v8804 = vpop.f32.mrb[0].mxu0
  %8805 = vmatprep.mubr.f32.mxu0 %v8486
  %8806 = vmatmul.mubr.f32.gmra.mrb[0].mxu0 %v8485
  %v8807 = vpop.f32.mrb[0].mxu0
  %v8808 = vadd.f32 %v8623, %v8807
  %v8809 = vpop.f32.mrb[0].mxu0
  %8810 = vmatprep.mubr.f32.mxu0 %v8490
  %8811 = vmatmul.mubr.f32.gmra.mrb[0].mxu0 %v8489
  %v8812 = vpop.f32.mrb[0].mxu0
  %v8813 = vadd.f32 %v8628, %v8812
  %v8814 = vpop.f32.mrb[0].mxu0
  %8815 = vmatprep.mubr.f32.mxu0 %v8494
  %8816 = vmatmul.mubr.f32.gmra.mrb[0].mxu0 %v8493
  %v8817 = vpop.f32.mrb[0].mxu0
  %v8818 = vadd.f32 %v8633, %v8817
  %v8819 = vpop.f32.mrb[0].mxu0
  %8820 = vmatprep.mubr.f32.mxu0 %v8498
  %8821 = vmatmul.mubr.f32.gmra.mrb[0].mxu0 %v8497
  %v8822 = vpop.f32.mrb[0].mxu0
  %v8823 = vadd.f32 %v8638, %v8822
  %v8824 = vpop.f32.mrb[0].mxu0
  %8825 = vmatprep.mubr.f32.mxu0 %v8502
  %8826 = vmatmul.mubr.f32.gmra.mrb[0].mxu0 %v8501
  %v8827 = vpop.f32.mrb[0].mxu0
  %v8828 = vadd.f32 %v8643, %v8827
  %v8829 = vpop.f32.mrb[0].mxu0
  %8830 = vdwg.mxu0
  %8831 = vmatprep.subr.mxu0 0.0
  %8832 = vmatpush1.msra.mxu0 %v8537
  %8833 = vmatprep.subr.mxu0 0.0
  %8834 = vmatpush1.msra.mxu0 %v8538
  %8835 = vmatprep.subr.mxu0 0.0
  %8836 = vmatpush1.msra.mxu0 %v8539
  %8837 = vmatprep.subr.mxu0 0.0
  %8838 = vmatpush1.msra.mxu0 %v8540
  %8839 = vmatprep.subr.mxu0 0.0
  %8840 = vmatpush1.msra.mxu0 %v8541
  %8841 = vmatprep.subr.mxu0 0.0
  %8842 = vmatpush1.msra.mxu0 %v8542
  %8843 = vmatprep.subr.mxu0 0.0
  %8844 = vmatpush1.msra.mxu0 %v8543
  %8845 = vmatprep.subr.mxu0 0.0
  %8846 = vmatpush1.msra.mxu0 %v8544
  %8847 = vmatprep.subr.mxu0 0.0
  %8848 = vmatpush1.msra.mxu0 %v8545
  %8849 = vmatprep.subr.mxu0 0.0
  %8850 = vmatpush1.msra.mxu0 %v8546
  %8851 = vmatprep.subr.mxu0 0.0
  %8852 = vmatpush1.msra.mxu0 %v8547
  %8853 = vmatprep.subr.mxu0 0.0
  %8854 = vmatpush1.msra.mxu0 %v8548
  %8855 = vmatprep.subr.mxu0 0.0
  %8856 = vmatpush1.msra.mxu0 %v8549
  %8857 = vmatprep.subr.mxu0 0.0
  %8858 = vmatpush1.msra.mxu0 %v8550
  %8859 = vmatprep.subr.mxu0 0.0
  %8860 = vmatpush1.msra.mxu0 %v8551
  %8861 = vmatprep.subr.mxu0 0.0
  %8862 = vmatpush1.msra.mxu0 %v8552
  %8863 = vmatprep.subr.mxu0 0.0
  %8864 = vmatpush1.msra.mxu0 %v8553
  %8865 = vmatprep.subr.mxu0 0.0
  %8866 = vmatpush1.msra.mxu0 %v8554
  %8867 = vmatprep.subr.mxu0 0.0
  %8868 = vmatpush1.msra.mxu0 0.0
  %8869 = vmatprep.subr.mxu0 0.0
  %8870 = vmatpush1.msra.mxu0 0.0
  %8871 = vmatprep.subr.mxu0 0.0
  %8872 = vmatpush1.msra.mxu0 0.0
  %8873 = vmatprep.subr.mxu0 0.0
  %8874 = vmatpush1.msra.mxu0 0.0
  %8875 = vmatprep.subr.mxu0 0.0
  %8876 = vmatpush1.msra.mxu0 0.0
  %8877 = vmatprep.subr.mxu0 0.0
  %8878 = vmatpush1.msra.mxu0 0.0
  %8879 = vmatprep.subr.mxu0 0.0
  %8880 = vmatpush1.msra.mxu0 0.0
  %8881 = vmatprep.subr.mxu0 0.0
  %8882 = vmatpush1.msra.mxu0 0.0
  %8883 = vmatprep.subr.mxu0 0.0
  %8884 = vmatpush1.msra.mxu0 0.0
  %8885 = vmatprep.subr.mxu0 0.0
  %8886 = vmatpush1.msra.mxu0 0.0
  %8887 = vmatprep.subr.mxu0 0.0
  %8888 = vmatpush1.msra.mxu0 0.0
  %8889 = vmatprep.subr.mxu0 0.0
  %8890 = vmatpush1.msra.mxu0 0.0
  %8891 = vmatprep.subr.mxu0 0.0
  %8892 = vmatpush1.msra.mxu0 0.0
  %8893 = vmatprep.subr.mxu0 0.0
  %8894 = vmatpush1.msra.mxu0 0.0
  %8895 = vmatprep.mubr.f32.mxu0 %v8647
  %8896 = vmatmul.mubr.f32.gmra.mrb[0].mxu0 %v8447
  %v8897 = vpop.f32.mrb[0].mxu0
  %v8898 = vadd.f32 %v8758, %v8897
  %v8899 = vpop.f32.mrb[0].mxu0
  %8900 = vmatprep.mubr.f32.mxu0 %v8650
  %8901 = vmatmul.mubr.f32.gmra.mrb[0].mxu0 %v8451
  %v8902 = vpop.f32.mrb[0].mxu0
  %v8903 = vadd.f32 %v8763, %v8902
  %v8904 = vpop.f32.mrb[0].mxu0
  %8905 = vmatprep.mubr.f32.mxu0 %v8653
  %8906 = vmatmul.mubr.f32.gmra.mrb[0].mxu0 %v8455
  %v8907 = vpop.f32.mrb[0].mxu0
  %v8908 = vadd.f32 %v8768, %v8907
  %v8909 = vpop.f32.mrb[0].mxu0
  %8910 = vmatprep.mubr.f32.mxu0 %v8656
  %8911 = vmatmul.mubr.f32.gmra.mrb[0].mxu0 %v8459
  %v8912 = vpop.f32.mrb[0].mxu0
  %v8913 = vadd.f32 %v8773, %v8912
  %v8914 = vpop.f32.mrb[0].mxu0
  %8915 = vmatprep.mubr.f32.mxu0 %v8659
  %8916 = vmatmul.mubr.f32.gmra.mrb[0].mxu0 %v8463
  %v8917 = vpop.f32.mrb[0].mxu0
  %v8918 = vadd.f32 %v8778, %v8917
  %v8919 = vpop.f32.mrb[0].mxu0
  %8920 = vmatprep.mubr.f32.mxu0 %v8662
  %8921 = vmatmul.mubr.f32.gmra.mrb[0].mxu0 %v8467
  %v8922 = vpop.f32.mrb[0].mxu0
  %v8923 = vadd.f32 %v8783, %v8922
  %v8924 = vpop.f32.mrb[0].mxu0
  %8925 = vmatprep.mubr.f32.mxu0 %v8665
  %8926 = vmatmul.mubr.f32.gmra.mrb[0].mxu0 %v8471
  %v8927 = vpop.f32.mrb[0].mxu0
  %v8928 = vadd.f32 %v8788, %v8927
  %v8929 = vpop.f32.mrb[0].mxu0
  %8930 = vmatprep.mubr.f32.mxu0 %v8668
  %8931 = vmatmul.mubr.f32.gmra.mrb[0].mxu0 %v8475
  %v8932 = vpop.f32.mrb[0].mxu0
  %v8933 = vadd.f32 %v8793, %v8932
  %v8934 = vpop.f32.mrb[0].mxu0
  %8935 = vmatprep.mubr.f32.mxu0 %v8671
  %8936 = vmatmul.mubr.f32.gmra.mrb[0].mxu0 %v8479
  %v8937 = vpop.f32.mrb[0].mxu0
  %v8938 = vadd.f32 %v8798, %v8937
  %v8939 = vpop.f32.mrb[0].mxu0
  %8940 = vmatprep.mubr.f32.mxu0 %v8674
  %8941 = vmatmul.mubr.f32.gmra.mrb[0].mxu0 %v8483
  %v8942 = vpop.f32.mrb[0].mxu0
  %v8943 = vadd.f32 %v8803, %v8942
  %v8944 = vpop.f32.mrb[0].mxu0
  %8945 = vmatprep.mubr.f32.mxu0 %v8677
  %8946 = vmatmul.mubr.f32.gmra.mrb[0].mxu0 %v8487
  %v8947 = vpop.f32.mrb[0].mxu0
  %v8948 = vadd.f32 %v8808, %v8947
  %v8949 = vpop.f32.mrb[0].mxu0
  %8950 = vmatprep.mubr.f32.mxu0 %v8680
  %8951 = vmatmul.mubr.f32.gmra.mrb[0].mxu0 %v8491
  %v8952 = vpop.f32.mrb[0].mxu0
  %v8953 = vadd.f32 %v8813, %v8952
  %v8954 = vpop.f32.mrb[0].mxu0
  %8955 = vmatprep.mubr.f32.mxu0 %v8683
  %8956 = vmatmul.mubr.f32.gmra.mrb[0].mxu0 %v8495
  %v8957 = vpop.f32.mrb[0].mxu0
  %v8958 = vadd.f32 %v8818, %v8957
  %v8959 = vpop.f32.mrb[0].mxu0
  %8960 = vmatprep.mubr.f32.mxu0 %v8686
  %8961 = vmatmul.mubr.f32.gmra.mrb[0].mxu0 %v8499
  %v8962 = vpop.f32.mrb[0].mxu0
  %v8963 = vadd.f32 %v8823, %v8962
  %v8964 = vpop.f32.mrb[0].mxu0
  %8965 = vmatprep.mubr.f32.mxu0 %v8689
  %8966 = vmatmul.mubr.f32.gmra.mrb[0].mxu0 %v8503
  %v8967 = vpop.f32.mrb[0].mxu0
  %v8968 = vadd.f32 %v8828, %v8967
  %v8969 = vpop.f32.mrb[0].mxu0
  %8970 = vdwg.mxu0
  %v8971 = vmax.f32 %v8898, 0.0
  %v8972 = vmax.f32 %v8903, 0.0
  %v8973 = vmax.f32 %v8908, 0.0
  %v8974 = vmax.f32 %v8913, 0.0
  %v8975 = vmax.f32 %v8918, 0.0
  %v8976 = vmax.f32 %v8923, 0.0
  %v8977 = vmax.f32 %v8928, 0.0
  %v8978 = vmax.f32 %v8933, 0.0
  %v8979 = vmax.f32 %v8938, 0.0
  %v8980 = vmax.f32 %v8943, 0.0
  %v8981 = vmax.f32 %v8948, 0.0
  %v8982 = vmax.f32 %v8953, 0.0
  %v8983 = vmax.f32 %v8958, 0.0
  %v8984 = vmax.f32 %v8963, 0.0
  %v8985 = vmax.f32 %v8968, 0.0
  %v8986 = vld [vmem:[%s6] sm:$0xff]
  %v8987 = vld [vmem:[%s6 + $0x8] sm:$0xff]
  %v8988 = vld [vmem:[%s6 + $0x10] sm:$0xff]
  %v8989 = vld [vmem:[%s6 + $0x18] sm:$0xff]
  %v8990 = vld [vmem:[%s6 + $0x20] sm:$0xff]
  %v8991 = vld [vmem:[%s6 + $0x28] sm:$0xff]
  %v8992 = vld [vmem:[%s6 + $0x30] sm:$0xff]
  %v8993 = vld [vmem:[%s6 + $0x38] sm:$0xff]
  %v8994 = vld [vmem:[%s6 + $0x40] sm:$0xff]
  %v8995 = vld [vmem:[%s6 + $0x48] sm:$0xff]
  %v8996 = vld [vmem:[%s6 + $0x50] sm:$0xf]
  %v8997 = vld [vmem:[%s7] sm:$0xff]
  %v8998 = vld [vmem:[%s7 + $0x8] sm:$0xff]
  %v8999 = vld [vmem:[%s7 + $0x10] sm:$0xff]
  %v9000 = vld [vmem:[%s7 + $0x18] sm:$0xff]
  %v9001 = vld [vmem:[%s7 + $0x20] sm:$0xff]
  %v9002 = vld [vmem:[%s7 + $0x28] sm:$0xff]
  %v9003 = vld [vmem:[%s7 + $0x30] sm:$0xff]
  %v9004 = vld [vmem:[%s7 + $0x38] sm:$0xff]
  %v9005 = vld [vmem:[%s7 + $0x40] sm:$0xff]
  %v9006 = vld [vmem:[%s7 + $0x48] sm:$0xff]
  %v9007 = vld [vmem:[%s7 + $0x50] sm:$0xf]
  %9009 = vset.pattern.permute.xlu0 0
  %9010 = vperm.xlu0 %9009, %v8997
  %v9011 = vpop.permute.xlu0 %9010
  %9014 = vset.pattern.permute.xlu0 0
  %9015 = vperm.xlu0 %9014, %v8998
  %v9016 = vpop.permute.xlu0 %9015
  %9019 = vset.pattern.permute.xlu0 0
  %9020 = vperm.xlu0 %9019, %v8999
  %v9021 = vpop.permute.xlu0 %9020
  %9024 = vset.pattern.permute.xlu0 0
  %9025 = vperm.xlu0 %9024, %v9000
  %v9026 = vpop.permute.xlu0 %9025
  %9029 = vset.pattern.permute.xlu0 0
  %9030 = vperm.xlu0 %9029, %v9001
  %v9031 = vpop.permute.xlu0 %9030
  %9034 = vset.pattern.permute.xlu0 0
  %9035 = vperm.xlu0 %9034, %v9002
  %v9036 = vpop.permute.xlu0 %9035
  %9039 = vset.pattern.permute.xlu0 0
  %9040 = vperm.xlu0 %9039, %v9003
  %v9041 = vpop.permute.xlu0 %9040
  %9044 = vset.pattern.permute.xlu0 0
  %9045 = vperm.xlu0 %9044, %v9004
  %v9046 = vpop.permute.xlu0 %9045
  %9049 = vset.pattern.permute.xlu0 0
  %9050 = vperm.xlu0 %9049, %v9005
  %v9051 = vpop.permute.xlu0 %9050
  %9054 = vset.pattern.permute.xlu0 0
  %9055 = vperm.xlu0 %9054, %v9006
  %v9056 = vpop.permute.xlu0 %9055
  %9059 = vset.pattern.permute.xlu0 0
  %9060 = vperm.xlu0 %9059, %v9007
  %v9061 = vpop.permute.xlu0 %9060
  %vm9063 = vcmask 982016
  %v9065 = vsel %vm9063, %v8986, 0
  %v9068 = vsel %vm9063, %v8987, 0
  %v9071 = vsel %vm9063, %v8988, 0
  %v9074 = vsel %vm9063, %v8989, 0
  %v9077 = vsel %vm9063, %v8990, 0
  %v9080 = vsel %vm9063, %v8991, 0
  %v9083 = vsel %vm9063, %v8992, 0
  %v9086 = vsel %vm9063, %v8993, 0
  %v9089 = vsel %vm9063, %v8994, 0
  %v9092 = vsel %vm9063, %v8995, 0
  %v9095 = vsel %vm9063, %v8996, 0
  %9097 = vmatprep.subr.mxu0 0.0
  %9098 = vmatpush1.msra.mxu0 %v8971
  %9099 = vmatprep.subr.mxu0 0.0
  %9100 = vmatpush1.msra.mxu0 %v8972
  %9101 = vmatprep.subr.mxu0 0.0
  %9102 = vmatpush1.msra.mxu0 %v8973
  %9103 = vmatprep.subr.mxu0 0.0
  %9104 = vmatpush1.msra.mxu0 %v8974
  %9105 = vmatprep.subr.mxu0 0.0
  %9106 = vmatpush1.msra.mxu0 %v8975
  %9107 = vmatprep.subr.mxu0 0.0
  %9108 = vmatpush1.msra.mxu0 %v8976
  %9109 = vmatprep.subr.mxu0 0.0
  %9110 = vmatpush1.msra.mxu0 %v8977
  %9111 = vmatprep.subr.mxu0 0.0
  %9112 = vmatpush1.msra.mxu0 %v8978
  %9113 = vmatprep.subr.mxu0 0.0
  %9114 = vmatpush1.msra.mxu0 %v8979
  %9115 = vmatprep.subr.mxu0 0.0
  %9116 = vmatpush1.msra.mxu0 %v8980
  %9117 = vmatprep.subr.mxu0 0.0
  %9118 = vmatpush1.msra.mxu0 %v8981
  %9119 = vmatprep.subr.mxu0 0.0
  %9120 = vmatpush1.msra.mxu0 %v8982
  %9121 = vmatprep.subr.mxu0 0.0
  %9122 = vmatpush1.msra.mxu0 %v8983
  %9123 = vmatprep.subr.mxu0 0.0
  %9124 = vmatpush1.msra.mxu0 %v8984
  %9125 = vmatprep.subr.mxu0 0.0
  %9126 = vmatpush1.msra.mxu0 %v8985
  %9127 = vmatprep.subr.mxu0 0.0
  %9128 = vmatpush1.msra.mxu0 0.0
  %9129 = vmatprep.subr.mxu0 0.0
  %9130 = vmatpush1.msra.mxu0 0.0
  %9131 = vmatprep.subr.mxu0 0.0
  %9132 = vmatpush1.msra.mxu0 0.0
  %9133 = vmatprep.subr.mxu0 0.0
  %9134 = vmatpush1.msra.mxu0 0.0
  %9135 = vmatprep.subr.mxu0 0.0
  %9136 = vmatpush1.msra.mxu0 0.0
  %9137 = vmatprep.subr.mxu0 0.0
  %9138 = vmatpush1.msra.mxu0 0.0
  %9139 = vmatprep.subr.mxu0 0.0
  %9140 = vmatpush1.msra.mxu0 0.0
  %9141 = vmatprep.subr.mxu0 0.0
  %9142 = vmatpush1.msra.mxu0 0.0
  %9143 = vmatprep.subr.mxu0 0.0
  %9144 = vmatpush1.msra.mxu0 0.0
  %9145 = vmatprep.subr.mxu0 0.0
  %9146 = vmatpush1.msra.mxu0 0.0
  %9147 = vmatprep.subr.mxu0 0.0
  %9148 = vmatpush1.msra.mxu0 0.0
  %9149 = vmatprep.subr.mxu0 0.0
  %9150 = vmatpush1.msra.mxu0 0.0
  %9151 = vmatprep.subr.mxu0 0.0
  %9152 = vmatpush1.msra.mxu0 0.0
  %9153 = vmatprep.subr.mxu0 0.0
  %9154 = vmatpush1.msra.mxu0 0.0
  %9155 = vmatprep.subr.mxu0 0.0
  %9156 = vmatpush1.msra.mxu0 0.0
  %9157 = vmatprep.subr.mxu0 0.0
  %9158 = vmatpush1.msra.mxu0 0.0
  %9159 = vmatprep.subr.mxu0 0.0
  %9160 = vmatpush1.msra.mxu0 0.0
  %9161 = vmatprep.mubr.f32.mxu0 0.0
  %9162 = vmatmul.mubr.f32.gmra.mrb[0].mxu0 %v9065
  %v9163 = vpop.f32.mrb[0].mxu0
  %v9164 = vadd.f32 %v9011, %v9163
  %v9165 = vpop.f32.mrb[0].mxu0
  %9166 = vmatprep.mubr.f32.mxu0 0.0
  %9167 = vmatmul.mubr.f32.gmra.mrb[0].mxu0 %v9068
  %v9168 = vpop.f32.mrb[0].mxu0
  %v9169 = vadd.f32 %v9016, %v9168
  %v9170 = vpop.f32.mrb[0].mxu0
  %9171 = vmatprep.mubr.f32.mxu0 0.0
  %9172 = vmatmul.mubr.f32.gmra.mrb[0].mxu0 %v9071
  %v9173 = vpop.f32.mrb[0].mxu0
  %v9174 = vadd.f32 %v9021, %v9173
  %v9175 = vpop.f32.mrb[0].mxu0
  %9176 = vmatprep.mubr.f32.mxu0 0.0
  %9177 = vmatmul.mubr.f32.gmra.mrb[0].mxu0 %v9074
  %v9178 = vpop.f32.mrb[0].mxu0
  %v9179 = vadd.f32 %v9026, %v9178
  %v9180 = vpop.f32.mrb[0].mxu0
  %9181 = vmatprep.mubr.f32.mxu0 0.0
  %9182 = vmatmul.mubr.f32.gmra.mrb[0].mxu0 %v9077
  %v9183 = vpop.f32.mrb[0].mxu0
  %v9184 = vadd.f32 %v9031, %v9183
  %v9185 = vpop.f32.mrb[0].mxu0
  %9186 = vmatprep.mubr.f32.mxu0 0.0
  %9187 = vmatmul.mubr.f32.gmra.mrb[0].mxu0 %v9080
  %v9188 = vpop.f32.mrb[0].mxu0
  %v9189 = vadd.f32 %v9036, %v9188
  %v9190 = vpop.f32.mrb[0].mxu0
  %9191 = vmatprep.mubr.f32.mxu0 0.0
  %9192 = vmatmul.mubr.f32.gmra.mrb[0].mxu0 %v9083
  %v9193 = vpop.f32.mrb[0].mxu0
  %v9194 = vadd.f32 %v9041, %v9193
  %v9195 = vpop.f32.mrb[0].mxu0
  %9196 = vmatprep.mubr.f32.mxu0 0.0
  %9197 = vmatmul.mubr.f32.gmra.mrb[0].mxu0 %v9086
  %v9198 = vpop.f32.mrb[0].mxu0
  %v9199 = vadd.f32 %v9046, %v9198
  %v9200 = vpop.f32.mrb[0].mxu0
  %9201 = vmatprep.mubr.f32.mxu0 0.0
  %9202 = vmatmul.mubr.f32.gmra.mrb[0].mxu0 %v9089
  %v9203 = vpop.f32.mrb[0].mxu0
  %v9204 = vadd.f32 %v9051, %v9203
  %v9205 = vpop.f32.mrb[0].mxu0
  %9206 = vmatprep.mubr.f32.mxu0 0.0
  %9207 = vmatmul.mubr.f32.gmra.mrb[0].mxu0 %v9092
  %v9208 = vpop.f32.mrb[0].mxu0
  %v9209 = vadd.f32 %v9056, %v9208
  %v9210 = vpop.f32.mrb[0].mxu0
  %9211 = vmatprep.mubr.f32.mxu0 0.0
  %9212 = vmatmul.mubr.f32.gmra.mrb[0].mxu0 %v9095
  %v9213 = vpop.f32.mrb[0].mxu0
  %v9214 = vadd.f32 %v9061, %v9213
  %v9215 = vpop.f32.mrb[0].mxu0
  %9216 = vdwg.mxu0
  %v9217 = vmax.f32 %v9164, 0.0
  %v9218 = vmax.f32 %v9169, 0.0
  %v9219 = vmax.f32 %v9174, 0.0
  %v9220 = vmax.f32 %v9179, 0.0
  %v9221 = vmax.f32 %v9184, 0.0
  %v9222 = vmax.f32 %v9189, 0.0
  %v9223 = vmax.f32 %v9194, 0.0
  %v9224 = vmax.f32 %v9199, 0.0
  %v9225 = vmax.f32 %v9204, 0.0
  %v9226 = vmax.f32 %v9209, 0.0
  %v9227 = vmax.f32 %v9214, 0.0
  %v9228 = vld [vmem:[%s8] sm:$0xff]
  %v9229 = vld [vmem:[%s8 + $0x8] sm:$0x3]
  %v9230 = vld [vmem:[%s9] sm:$0xff]
  %v9231 = vld [vmem:[%s9 + $0x8] sm:$0x3]
  %9233 = vset.pattern.permute.xlu0 0
  %9234 = vperm.xlu0 %9233, %v9230
  %v9235 = vpop.permute.xlu0 %9234
  %9238 = vset.pattern.permute.xlu0 0
  %9239 = vperm.xlu0 %9238, %v9231
  %v9240 = vpop.permute.xlu0 %9239
  %vm9242 = vcmask 687104
  %v9244 = vsel %vm9242, %v9228, 0
  %v9247 = vsel %vm9242, %v9229, 0
  %v9250 = vsel %vm1792, %v9227, 0
  %9252 = vmatprep.subr.mxu0 0.0
  %9253 = vmatpush1.msra.mxu0 %v9217
  %9254 = vmatprep.subr.mxu0 0.0
  %9255 = vmatpush1.msra.mxu0 %v9218
  %9256 = vmatprep.subr.mxu0 0.0
  %9257 = vmatpush1.msra.mxu0 %v9219
  %9258 = vmatprep.subr.mxu0 0.0
  %9259 = vmatpush1.msra.mxu0 %v9220
  %9260 = vmatprep.subr.mxu0 0.0
  %9261 = vmatpush1.msra.mxu0 %v9221
  %9262 = vmatprep.subr.mxu0 0.0
  %9263 = vmatpush1.msra.mxu0 %v9222
  %9264 = vmatprep.subr.mxu0 0.0
  %9265 = vmatpush1.msra.mxu0 %v9223
  %9266 = vmatprep.subr.mxu0 0.0
  %9267 = vmatpush1.msra.mxu0 %v9224
  %9268 = vmatprep.subr.mxu0 0.0
  %9269 = vmatpush1.msra.mxu0 %v9225
  %9270 = vmatprep.subr.mxu0 0.0
  %9271 = vmatpush1.msra.mxu0 %v9226
  %9272 = vmatprep.subr.mxu0 0.0
  %9273 = vmatpush1.msra.mxu0 %v9250
  %9274 = vmatprep.subr.mxu0 0.0
  %9275 = vmatpush1.msra.mxu0 0.0
  %9276 = vmatprep.subr.mxu0 0.0
  %9277 = vmatpush1.msra.mxu0 0.0
  %9278 = vmatprep.subr.mxu0 0.0
  %9279 = vmatpush1.msra.mxu0 0.0
  %9280 = vmatprep.subr.mxu0 0.0
  %9281 = vmatpush1.msra.mxu0 0.0
  %9282 = vmatprep.subr.mxu0 0.0
  %9283 = vmatpush1.msra.mxu0 0.0
  %9284 = vmatprep.subr.mxu0 0.0
  %9285 = vmatpush1.msra.mxu0 0.0
  %9286 = vmatprep.subr.mxu0 0.0
  %9287 = vmatpush1.msra.mxu0 0.0
  %9288 = vmatprep.subr.mxu0 0.0
  %9289 = vmatpush1.msra.mxu0 0.0
  %9290 = vmatprep.subr.mxu0 0.0
  %9291 = vmatpush1.msra.mxu0 0.0
  %9292 = vmatprep.subr.mxu0 0.0
  %9293 = vmatpush1.msra.mxu0 0.0
  %9294 = vmatprep.subr.mxu0 0.0
  %9295 = vmatpush1.msra.mxu0 0.0
  %9296 = vmatprep.subr.mxu0 0.0
  %9297 = vmatpush1.msra.mxu0 0.0
  %9298 = vmatprep.subr.mxu0 0.0
  %9299 = vmatpush1.msra.mxu0 0.0
  %9300 = vmatprep.subr.mxu0 0.0
  %9301 = vmatpush1.msra.mxu0 0.0
  %9302 = vmatprep.subr.mxu0 0.0
  %9303 = vmatpush1.msra.mxu0 0.0
  %9304 = vmatprep.subr.mxu0 0.0
  %9305 = vmatpush1.msra.mxu0 0.0
  %9306 = vmatprep.subr.mxu0 0.0
  %9307 = vmatpush1.msra.mxu0 0.0
  %9308 = vmatprep.subr.mxu0 0.0
  %9309 = vmatpush1.msra.mxu0 0.0
  %9310 = vmatprep.subr.mxu0 0.0
  %9311 = vmatpush1.msra.mxu0 0.0
  %9312 = vmatprep.subr.mxu0 0.0
  %9313 = vmatpush1.msra.mxu0 0.0
  %9314 = vmatprep.subr.mxu0 0.0
  %9315 = vmatpush1.msra.mxu0 0.0
  %9316 = vmatprep.mubr.f32.mxu0 0.0
  %9317 = vmatmul.mubr.f32.gmra.mrb[0].mxu0 %v9244
  %v9318 = vpop.f32.mrb[0].mxu0
  %v9319 = vadd.f32 %v9235, %v9318
  %v9320 = vpop.f32.mrb[0].mxu0
  %9321 = vmatprep.mubr.f32.mxu0 0.0
  %9322 = vmatmul.mubr.f32.gmra.mrb[0].mxu0 %v9247
  %v9323 = vpop.f32.mrb[0].mxu0
  %v9324 = vadd.f32 %v9240, %v9323
  %v9325 = vpop.f32.mrb[0].mxu0
  %9326 = vdwg.mxu0
  %9327 = vst.msk [vmem:[%s13] sm:$0xff] %vm8244, %v9319
  %vm9328 = vcmask 9216
  %9329 = vst.msk [vmem:[%s13 + $0x8] sm:$0x3] %vm9328, %v9324
  // Predicated region
  $region150: #{net_forward.1} parent=0 // pred_check
    _
  $region151: #{net_forward.1} parent=0 // pred_check_branch
    %9331 = sbr.rel (0) target = $region153
  $region152: #{net_forward.1} parent=0 // pred_region
    _
  $region153: #{net_forward.1} parent=0 // pred_fallthru
    _
  // Predicated region
  $region154: #{net_forward.1} parent=0 // pred_check
    _
  $region155: #{net_forward.1} parent=0 // pred_check_branch
    %9333 = sbr.rel (0) target = $region157
  $region156: #{net_forward.1} parent=0 // pred_region
    _
  $region157: #{net_forward.1} parent=0 // pred_fallthru
    _
  %9334 = vsyncmov [#allocation7]
  %s9335 = vpop.sfrf %9334
  %p9336 = scmp.eq.s32.totalorder %s9335, 0
  %p9337 = pneg %p9336
  %9339 = shalt.err (%p9337)
  %s9340 = scalar_lea.sflag [#allocation7], 1
  %9341 = vsyncmov %s9340
  %s9342 = vpop.sfrf %9341
  %p9343 = scmp.eq.s32.totalorder %s9342, 0
  %p9344 = pneg %p9343
  %9346 = shalt.err (%p9344)
  %s9347 = scalar_lea.sflag [#allocation7], 2
  %9348 = vsyncmov %s9347
  %s9349 = vpop.sfrf %9348
  %p9350 = scmp.eq.s32.totalorder %s9349, 0
  %p9351 = pneg %p9350
  %9353 = shalt.err (%p9351)

</llo_original>
